<compile_context>
chip_gen: v7x
topology: tpu7x:2x2x1
jax: 0.10.0
libtpu: 0.0.40
codegen_flags: <defaults>
</compile_context>

<pallas_src>
import functools

import numpy as np
import jax
import jax.numpy as jnp
from jax import lax
from jax.experimental import pallas as pl
from jax.experimental.pallas import tpu as pltpu


def _round_up(x, m):
    return (x + m - 1) // m * m


# ----------------------------------------------------------------------------
# Pallas kernel: full DiscBlock forward for one block of BB batch elements.
# ----------------------------------------------------------------------------
def _disc_block_kernel(xcol_ref, x0_ref, w1_ref, b1_ref, w2_ref, b2_ref,
                       w0_ref, b0_ref, mask_ref, out_ref, h1p_ref, acc_ref, *,
                       BB, Wp, W, H, nb, Lseg, downsample, conv_shortcut,
                       lane_pack):
    f32 = jnp.float32
    bf16 = jnp.bfloat16
    Cout = acc_ref.shape[-1]
    Mfull = BB * Lseg
    Nwin = Mfull - 2 * nb        # rows whose full 3x3 window lies inside the scratch

    # ---- conv1(relu(x)) as ONE im2col matmul (K = 9*Cin, bf16 ops, f32 acc) ----
    h1 = jnp.dot(xcol_ref[...], w1_ref[...], preferred_element_type=f32)  # (Mfull, Cout)
    # bias + relu; the mask zeroes the inter-image border rows and the left/right
    # pad-column rows so they act as conv2's zero padding.
    h1p_ref[...] = jnp.maximum(h1 + b1_ref[...], 0.0) * mask_ref[...]

    # ---- conv2: 9 shifted-window matmuls accumulated into a VMEM scratch ----
    acc_ref[...] = jnp.zeros_like(acc_ref)
    for t in range(9):
        off = (t // 3 - 1) * Wp + (t % 3 - 1)              # static python int
        acc_ref[pl.ds(nb, Nwin), :] += jnp.dot(
            h1p_ref[pl.ds(nb + off, Nwin), :].astype(bf16), w2_ref[t],
            preferred_element_type=f32)

    # ---- shortcut on raw x0 (1x1 conv, or identity when Cin == Cout) + b2 ----
    if conv_shortcut:
        resid = jnp.dot(x0_ref[...], w0_ref[...],
                        preferred_element_type=f32) + b0_ref[...]
    else:
        resid = x0_ref[...]                                 # identity (f32)
    acc_ref[...] += resid + b2_ref[...]        # acc now holds s = conv2 + b2 + shortcut

    # ---- epilogue ----
    if downsample:
        # 2x2 average pool: stride-2 ref reads + VPU adds (no tiny matmuls).
        Po, Qo = H // 2, W // 2
        blocks = []
        for b in range(BB):
            for p in range(Po):
                r0 = b * Lseg + nb + 2 * p * Wp
                tl = acc_ref[pl.ds(r0,          Qo, stride=2), :]
                tr = acc_ref[pl.ds(r0 + 1,      Qo, stride=2), :]
                bl = acc_ref[pl.ds(r0 + Wp,     Qo, stride=2), :]
                br = acc_ref[pl.ds(r0 + Wp + 1, Qo, stride=2), :]
                blocks.append((tl + tr + bl + br) * 0.25)
        pooled = jnp.concatenate(blocks, axis=0)            # (BB*Po*Qo, Cout)
    else:
        # Emit the whole segmented slab; the wrapper crops borders / pad columns.
        pooled = acc_ref[...]                               # (Mfull, Cout)

    if lane_pack:
        # Lane-dense packed output (Cout, M) via one identity "NT" matmul
        # (avoids a materialised transpose and masked narrow stores).
        ri = lax.broadcasted_iota(jnp.int32, (Cout, Cout), 0)
        ci = lax.broadcasted_iota(jnp.int32, (Cout, Cout), 1)
        eye = (ri == ci).astype(f32)
        out_ref[...] = lax.dot_general(eye, pooled, (((1,), (1,)), ((), ())),
                                       preferred_element_type=f32)
    else:
        out_ref[...] = pooled


# ----------------------------------------------------------------------------
# Wrapper: layout glue, weight prep, pallas_call.
# ----------------------------------------------------------------------------
def disc_block_forward(x_nchw, params, downsample=True, block_batch=8):
    W1, b1, W2, b2, W0, b0 = (params["W1"], params["b1"], params["W2"],
                              params["b2"], params["W0"], params["b0"])
    B, Cin, H, W = x_nchw.shape
    Cout = W1.shape[0]
    ch_mismatch = (Cin != Cout)
    conv_shortcut = bool(downsample or ch_mismatch)
    lane_pack = Cout < 128                     # pack output lane-dense when narrow

    # Batch blocking: largest divisor of B that is <= block_batch.
    BB = max(d for d in range(1, min(block_batch, B) + 1) if B % d == 0)
    nG = B // BB

    Wp = W + 2
    L = H * Wp                                 # flat interior rows per image
    nb_x = Wp + 1                              # interior offset in the padded input
    Np_ext = (H + 3) * Wp                      # 1 top + 2 bottom pad rows
    nb = _round_up(Wp + 1, 8)                  # per-image border rows (sublane aligned)
    Lseg = L + 2 * nb                          # rows per image segment in the kernel
    Mfull = BB * Lseg

    f32, bf16 = jnp.float32, jnp.bfloat16

    # NCHW -> NHWC -> single fused zero-pad (top 1, bottom 2, left/right 1) -> flat
    x_nhwc = jnp.transpose(x_nchw, (0, 2, 3, 1)).astype(f32)
    x_flat = jnp.pad(x_nhwc, ((0, 0), (1, 2), (1, 1), (0, 0))).reshape(B, Np_ext, Cin)

    # im2col for conv1 (K = 9*Cin); relu and bf16 cast folded in here.
    offs = [(kh - 1) * Wp + (kw - 1) for kh in range(3) for kw in range(3)]
    xcol = jnp.concatenate([x_flat[:, nb_x + o: nb_x + o + L, :] for o in offs],
                           axis=-1)                         # (B, L, 9*Cin)
    xcol = jnp.maximum(xcol, 0.0).astype(bf16)
    xcol_seg = jnp.pad(xcol, ((0, 0), (nb, nb), (0, 0))).reshape(nG, Mfull, 9 * Cin)

    # raw x0 (shortcut input) in the same segmented layout
    x0_dtype = bf16 if conv_shortcut else f32
    x0 = x_flat[:, nb_x: nb_x + L, :].astype(x0_dtype)
    x0_seg = jnp.pad(x0, ((0, 0), (nb, nb), (0, 0))).reshape(nG, Mfull, Cin)

    # weights -> tap-major, bf16 for the MXU
    w1col = jnp.transpose(W1, (2, 3, 1, 0)).reshape(9 * Cin, Cout).astype(bf16)
    w2t = jnp.transpose(W2, (2, 3, 1, 0)).reshape(9, Cout, Cout).astype(bf16)
    if conv_shortcut:
        w0m = W0.reshape(Cout, Cin).T.astype(bf16)          # (Cin, Cout)
        b0r = b0.reshape(1, Cout).astype(f32)
    else:
        w0m = jnp.eye(Cin, dtype=bf16)                      # unused by the kernel
        b0r = jnp.zeros((1, Cout), f32)
    b1r = b1.reshape(1, Cout).astype(f32)
    b2r = b2.reshape(1, Cout).astype(f32)

    # validity mask over the segmented layout: 1 on interior rows at real-pixel
    # columns, 0 on border rows and on the left/right pad columns.
    mseg = np.zeros((Lseg,), np.float32)
    li = np.arange(L)
    mseg[nb + li] = (li % Wp < W).astype(np.float32)
    mask_seg = jnp.asarray(np.tile(mseg, BB).reshape(Mfull, 1))

    if downsample:
        Po, Qo = H // 2, W // 2
        Mout = BB * Po * Qo
    else:
        Po, Qo = H, W
        Mout = Mfull

    if lane_pack:
        out_shape = jax.ShapeDtypeStruct((nG, Cout, Mout), f32)
        out_spec = pl.BlockSpec((None, Cout, Mout), lambda g: (g, 0, 0))
    else:
        out_shape = jax.ShapeDtypeStruct((nG, Mout, Cout), f32)
        out_spec = pl.BlockSpec((None, Mout, Cout), lambda g: (g, 0, 0))

    # Rough scoped-VMEM footprint; only override the default when it is tight.
    est_bytes = (2 * Mfull * (9 * Cin) * 2                      # xcol (double buffered)
                 + 2 * Mfull * Cin * (2 if conv_shortcut else 4)
                 + 2 * (9 * Cin * Cout + 9 * Cout * Cout + Cin * Cout) * 2
                 + 2 * Mout * Cout * 4                          # output block
                 + 2 * Mfull * Cout * 4                         # scratches
                 + 2 * (3 * Cout + Mfull) * 4)                  # biases + mask
    vmem_limit = None if est_bytes < 12 * 2**20 else int(min(est_bytes * 1.5,
                                                             100 * 2**20))

    kernel = functools.partial(
        _disc_block_kernel, BB=BB, Wp=Wp, W=W, H=H, nb=nb, Lseg=Lseg,
        downsample=downsample, conv_shortcut=conv_shortcut, lane_pack=lane_pack)

    out_flat = pl.pallas_call(
        kernel,
        out_shape=out_shape,
        grid_spec=pltpu.PrefetchScalarGridSpec(
            num_scalar_prefetch=0,
            grid=(nG,),
            in_specs=[
                pl.BlockSpec((None, Mfull, 9 * Cin), lambda g: (g, 0, 0)),  # x_col
                pl.BlockSpec((None, Mfull, Cin), lambda g: (g, 0, 0)),      # x0
                pl.BlockSpec((9 * Cin, Cout), lambda g: (0, 0)),            # W1 (im2col)
                pl.BlockSpec((1, Cout), lambda g: (0, 0)),                  # b1
                pl.BlockSpec((9, Cout, Cout), lambda g: (0, 0, 0)),         # W2 taps
                pl.BlockSpec((1, Cout), lambda g: (0, 0)),                  # b2
                pl.BlockSpec((Cin, Cout), lambda g: (0, 0)),                # W0 (1x1)
                pl.BlockSpec((1, Cout), lambda g: (0, 0)),                  # b0
                pl.BlockSpec((Mfull, 1), lambda g: (0, 0)),                 # mask
            ],
            out_specs=out_spec,
            scratch_shapes=[pltpu.VMEM((Mfull, Cout), jnp.float32),   # h1 staging
                            pltpu.VMEM((Mfull, Cout), jnp.float32)],  # accumulator
        ),
        compiler_params=pltpu.CompilerParams(
            dimension_semantics=("parallel",),     # batch blocks are independent
            vmem_limit_bytes=vmem_limit),
    )(xcol_seg, x0_seg, w1col, b1r, w2t, b2r, w0m, b0r, mask_seg)

    # Undo the packed / segmented layouts (wrapper-side layout plumbing only).
    if downsample:
        if lane_pack:
            out = out_flat.reshape(nG, Cout, BB, Po, Qo)
            out = jnp.transpose(out, (0, 2, 1, 3, 4)).reshape(B, Cout, Po, Qo)
        else:
            out = out_flat.reshape(nG, BB, Po, Qo, Cout)
            out = jnp.transpose(out, (0, 1, 4, 2, 3)).reshape(B, Cout, Po, Qo)
    else:
        if lane_pack:
            out = out_flat.reshape(nG, Cout, BB, Lseg)[:, :, :, nb:nb + L]
            out = out.reshape(nG, Cout, BB, H, Wp)[:, :, :, :, :W]
            out = jnp.transpose(out, (0, 2, 1, 3, 4)).reshape(B, Cout, H, W)
        else:
            out = out_flat.reshape(nG, BB, Lseg, Cout)[:, :, nb:nb + L, :]
            out = out.reshape(nG, BB, H, Wp, Cout)[:, :, :, :W, :]
            out = jnp.transpose(out, (0, 1, 4, 2, 3)).reshape(B, Cout, H, W)
    return out


# ----------------------------------------------------------------------------
# Parameter setup (deterministic) + pure-JAX reference.
# ----------------------------------------------------------------------------
def spectral_normalize(w, n_iters=50):
    """Normalize conv weight by its largest singular value (power iteration),
    matching torch.nn.utils.spectral_norm semantics on the forward weight."""
    w2d = w.reshape(w.shape[0], -1)
    u = jnp.ones((w2d.shape[0],), jnp.float32)
    u = u / jnp.linalg.norm(u)
    v = None
    for _ in range(n_iters):
        v = w2d.T @ u
        v = v / (jnp.linalg.norm(v) + 1e-12)
        u = w2d @ v
        u = u / (jnp.linalg.norm(u) + 1e-12)
    sigma = u @ (w2d @ v)
    return w / sigma


def ref_disc_block(x, params, downsample=True):
    W1, b1, W2, b2, W0, b0 = (params["W1"], params["b1"], params["W2"],
                              params["b2"], params["W0"], params["b0"])
    ch_mismatch = (x.shape[1] != W1.shape[0])

    def conv(h, w, b, pad):
        y = lax.conv_general_dilated(
            h, w, window_strides=(1, 1), padding=[(pad, pad), (pad, pad)],
            dimension_numbers=("NCHW", "OIHW", "NCHW"),
            precision=lax.Precision.HIGHEST)
        return y + b.reshape(1, -1, 1, 1)

    def avgpool2(h):
        return lax.reduce_window(h, 0.0, lax.add,
                                 (1, 1, 2, 2), (1, 1, 2, 2), "VALID") / 4.0

    x0 = x
    h = jnp.maximum(x, 0.0)
    h = conv(h, W1, b1, 1)
    h = jnp.maximum(h, 0.0)
    h = conv(h, W2, b2, 1)
    if downsample:
        h = avgpool2(h)
    if downsample or ch_mismatch:
        x0 = conv(x0, W0, b0, 0)
        if downsample:
            x0 = avgpool2(x0)
    return h + x0


if __name__ == "__main__":
    B, Cin, Cout, H, W = 2, 4, 8, 16, 16

    key = jax.random.PRNGKey(0)
    ks = jax.random.split(key, 7)
    W1 = jax.random.normal(ks[0], (Cout, Cin, 3, 3), jnp.float32) * 0.2
    b1 = jax.random.normal(ks[1], (Cout,), jnp.float32) * 0.1
    W2 = jax.random.normal(ks[2], (Cout, Cout, 3, 3), jnp.float32) * 0.2
    b2 = jax.random.normal(ks[3], (Cout,), jnp.float32) * 0.1
    W0 = jax.random.normal(ks[4], (Cout, Cin, 1, 1), jnp.float32) * 0.2
    b0 = jax.random.normal(ks[5], (Cout,), jnp.float32) * 0.1
    x = jax.random.normal(ks[6], (B, Cin, H, W), jnp.float32)

    params = {
        "W1": spectral_normalize(W1), "b1": b1,
        "W2": spectral_normalize(W2), "b2": b2,
        "W0": spectral_normalize(W0), "b0": b0,
    }

    # downsample=True path
    out_ds = jax.block_until_ready(disc_block_forward(x, params, downsample=True))
    ref_ds = jax.block_until_ready(ref_disc_block(x, params, downsample=True))
    assert out_ds.shape == (B, Cout, H // 2, W // 2)
    np.testing.assert_allclose(np.asarray(out_ds), np.asarray(ref_ds),
                               rtol=2e-2, atol=2e-2)

    # downsample=False path (channel mismatch -> 1x1 conv shortcut, no pooling)
    out_nd = jax.block_until_ready(disc_block_forward(x, params, downsample=False))
    ref_nd = jax.block_until_ready(ref_disc_block(x, params, downsample=False))
    assert out_nd.shape == (B, Cout, H, W)
    np.testing.assert_allclose(np.asarray(out_nd), np.asarray(ref_nd),
                               rtol=2e-2, atol=2e-2)

    print("KERNEL_OK")
</pallas_src>

<mosaic_0001>
module attributes {stable_mosaic.version = 11 : i64} {
  func.func @_disc_block_kernel(%arg0: i32, %arg1: memref<1x672x36xbf16, #tpu.memory_space<vmem>>, %arg2: memref<1x672x4xbf16, #tpu.memory_space<vmem>>, %arg3: memref<36x8xbf16, #tpu.memory_space<vmem>>, %arg4: memref<1x8xf32, #tpu.memory_space<vmem>>, %arg5: memref<9x8x8xbf16, #tpu.memory_space<vmem>>, %arg6: memref<1x8xf32, #tpu.memory_space<vmem>>, %arg7: memref<4x8xbf16, #tpu.memory_space<vmem>>, %arg8: memref<1x8xf32, #tpu.memory_space<vmem>>, %arg9: memref<672x1xf32, #tpu.memory_space<vmem>>, %arg10: memref<1x8x128xf32, #tpu.memory_space<vmem>>, %arg11: memref<672x8xf32, #tpu.memory_space<vmem>>, %arg12: memref<672x8xf32, #tpu.memory_space<vmem>>) attributes {dimension_semantics = [#tpu.dimension_semantics<parallel>], iteration_bounds = array<i64: 1>, scalar_prefetch = 0 : i64, scratch_operands = 2 : i64, tpu.core_type = #tpu.core_type<tc>, window_params = [{transform_indices = @transform_0, window_bounds = array<i64: 1, 672, 36>}, {transform_indices = @transform_1, window_bounds = array<i64: 1, 672, 4>}, {pipeline_mode = #tpu.pipeline_mode<synchronous>, transform_indices = @transform_2, window_bounds = array<i64: 36, 8>}, {pipeline_mode = #tpu.pipeline_mode<synchronous>, transform_indices = @transform_3, window_bounds = array<i64: 1, 8>}, {pipeline_mode = #tpu.pipeline_mode<synchronous>, transform_indices = @transform_4, window_bounds = array<i64: 9, 8, 8>}, {pipeline_mode = #tpu.pipeline_mode<synchronous>, transform_indices = @transform_5, window_bounds = array<i64: 1, 8>}, {pipeline_mode = #tpu.pipeline_mode<synchronous>, transform_indices = @transform_6, window_bounds = array<i64: 4, 8>}, {pipeline_mode = #tpu.pipeline_mode<synchronous>, transform_indices = @transform_7, window_bounds = array<i64: 1, 8>}, {pipeline_mode = #tpu.pipeline_mode<synchronous>, transform_indices = @transform_8, window_bounds = array<i64: 672, 1>}, {transform_indices = @transform_9, window_bounds = array<i64: 1, 8, 128>}]} {
    %c0 = arith.constant 0 : index
    %c0_0 = arith.constant 0 : index
    %c0_1 = arith.constant 0 : index
    %0 = vector.load %arg1[%c0, %c0_0, %c0_1] : memref<1x672x36xbf16, #tpu.memory_space<vmem>>, vector<1x672x36xbf16>
    %1 = vector.shape_cast %0 : vector<1x672x36xbf16> to vector<672x36xbf16>
    %c0_2 = arith.constant 0 : index
    %c0_3 = arith.constant 0 : index
    %2 = vector.load %arg3[%c0_2, %c0_3] : memref<36x8xbf16, #tpu.memory_space<vmem>>, vector<36x8xbf16>
    %cst = arith.constant dense<0.000000e+00> : vector<672x8xf32>
    %3 = tpu.matmul %1, %2, %cst {dimension_numbers = #tpu.dot_dimension_numbers<[1], [0], [0], [1], [0, 0, 1, 1], [], []>} : vector<672x36xbf16>, vector<36x8xbf16>, vector<672x8xf32> -> vector<672x8xf32>
    %c0_4 = arith.constant 0 : index
    %c0_5 = arith.constant 0 : index
    %4 = vector.load %arg4[%c0_4, %c0_5] : memref<1x8xf32, #tpu.memory_space<vmem>>, vector<1x8xf32>
    %5 = vector.broadcast %4 : vector<1x8xf32> to vector<672x8xf32>
    %6 = arith.addf %3, %5 : vector<672x8xf32>
    %cst_6 = arith.constant 0.000000e+00 : f32
    %7 = vector.broadcast %cst_6 : f32 to vector<672x8xf32>
    %8 = arith.maximumf %6, %7 : vector<672x8xf32>
    %c0_7 = arith.constant 0 : index
    %c0_8 = arith.constant 0 : index
    %9 = vector.load %arg9[%c0_7, %c0_8] : memref<672x1xf32, #tpu.memory_space<vmem>>, vector<672x1xf32>
    %10 = vector.broadcast %9 : vector<672x1xf32> to vector<672x8xf32>
    %11 = arith.mulf %8, %10 : vector<672x8xf32>
    %c0_9 = arith.constant 0 : index
    %c0_10 = arith.constant 0 : index
    %12 = vector.load %arg11[%c0_9, %c0_10] : memref<672x8xf32, #tpu.memory_space<vmem>>, vector<672x8xf32>
    tpu.vector_store %arg11[%c0_9, %c0_10], %11 {strides = array<i32>} : memref<672x8xf32, #tpu.memory_space<vmem>>, vector<672x8xf32>,
    %cst_11 = arith.constant 0.000000e+00 : f32
    %13 = vector.broadcast %cst_11 : f32 to vector<672x8xf32>
    %c0_12 = arith.constant 0 : index
    %c0_13 = arith.constant 0 : index
    %14 = vector.load %arg12[%c0_12, %c0_13] : memref<672x8xf32, #tpu.memory_space<vmem>>, vector<672x8xf32>
    tpu.vector_store %arg12[%c0_12, %c0_13], %13 {strides = array<i32>} : memref<672x8xf32, #tpu.memory_space<vmem>>, vector<672x8xf32>,
    %c24 = arith.constant 24 : index
    %c0_14 = arith.constant 0 : index
    %15 = vector.load %arg12[%c24, %c0_14] : memref<672x8xf32, #tpu.memory_space<vmem>>, vector<624x8xf32>
    %c5 = arith.constant 5 : index
    %c0_15 = arith.constant 0 : index
    %16 = vector.load %arg11[%c5, %c0_15] : memref<672x8xf32, #tpu.memory_space<vmem>>, vector<624x8xf32>
    %17 = arith.truncf %16 : vector<624x8xf32> to vector<624x8xbf16>
    %c0_16 = arith.constant 0 : index
    %c0_17 = arith.constant 0 : index
    %c0_18 = arith.constant 0 : index
    %18 = vector.load %arg5[%c0_16, %c0_17, %c0_18] : memref<9x8x8xbf16, #tpu.memory_space<vmem>>, vector<1x8x8xbf16>
    %19 = vector.shape_cast %18 : vector<1x8x8xbf16> to vector<8x8xbf16>
    %cst_19 = arith.constant dense<0.000000e+00> : vector<624x8xf32>
    %20 = tpu.matmul %17, %19, %cst_19 {dimension_numbers = #tpu.dot_dimension_numbers<[1], [0], [0], [1], [0, 0, 1, 1], [], []>} : vector<624x8xbf16>, vector<8x8xbf16>, vector<624x8xf32> -> vector<624x8xf32>
    %21 = arith.addf %15, %20 : vector<624x8xf32>
    %c24_20 = arith.constant 24 : index
    %c0_21 = arith.constant 0 : index
    %22 = vector.load %arg12[%c24_20, %c0_21] : memref<672x8xf32, #tpu.memory_space<vmem>>, vector<624x8xf32>
    tpu.vector_store %arg12[%c24_20, %c0_21], %21 {strides = array<i32>} : memref<672x8xf32, #tpu.memory_space<vmem>>, vector<624x8xf32>,
    %c24_22 = arith.constant 24 : index
    %c0_23 = arith.constant 0 : index
    %23 = vector.load %arg12[%c24_22, %c0_23] : memref<672x8xf32, #tpu.memory_space<vmem>>, vector<624x8xf32>
    %c6 = arith.constant 6 : index
    %c0_24 = arith.constant 0 : index
    %24 = vector.load %arg11[%c6, %c0_24] : memref<672x8xf32, #tpu.memory_space<vmem>>, vector<624x8xf32>
    %25 = arith.truncf %24 : vector<624x8xf32> to vector<624x8xbf16>
    %c1 = arith.constant 1 : index
    %c0_25 = arith.constant 0 : index
    %c0_26 = arith.constant 0 : index
    %26 = vector.load %arg5[%c1, %c0_25, %c0_26] : memref<9x8x8xbf16, #tpu.memory_space<vmem>>, vector<1x8x8xbf16>
    %27 = vector.shape_cast %26 : vector<1x8x8xbf16> to vector<8x8xbf16>
    %cst_27 = arith.constant dense<0.000000e+00> : vector<624x8xf32>
    %28 = tpu.matmul %25, %27, %cst_27 {dimension_numbers = #tpu.dot_dimension_numbers<[1], [0], [0], [1], [0, 0, 1, 1], [], []>} : vector<624x8xbf16>, vector<8x8xbf16>, vector<624x8xf32> -> vector<624x8xf32>
    %29 = arith.addf %23, %28 : vector<624x8xf32>
    %c24_28 = arith.constant 24 : index
    %c0_29 = arith.constant 0 : index
    %30 = vector.load %arg12[%c24_28, %c0_29] : memref<672x8xf32, #tpu.memory_space<vmem>>, vector<624x8xf32>
    tpu.vector_store %arg12[%c24_28, %c0_29], %29 {strides = array<i32>} : memref<672x8xf32, #tpu.memory_space<vmem>>, vector<624x8xf32>,
    %c24_30 = arith.constant 24 : index
    %c0_31 = arith.constant 0 : index
    %31 = vector.load %arg12[%c24_30, %c0_31] : memref<672x8xf32, #tpu.memory_space<vmem>>, vector<624x8xf32>
    %c7 = arith.constant 7 : index
    %c0_32 = arith.constant 0 : index
    %32 = vector.load %arg11[%c7, %c0_32] : memref<672x8xf32, #tpu.memory_space<vmem>>, vector<624x8xf32>
    %33 = arith.truncf %32 : vector<624x8xf32> to vector<624x8xbf16>
    %c2 = arith.constant 2 : index
    %c0_33 = arith.constant 0 : index
    %c0_34 = arith.constant 0 : index
    %34 = vector.load %arg5[%c2, %c0_33, %c0_34] : memref<9x8x8xbf16, #tpu.memory_space<vmem>>, vector<1x8x8xbf16>
    %35 = vector.shape_cast %34 : vector<1x8x8xbf16> to vector<8x8xbf16>
    %cst_35 = arith.constant dense<0.000000e+00> : vector<624x8xf32>
    %36 = tpu.matmul %33, %35, %cst_35 {dimension_numbers = #tpu.dot_dimension_numbers<[1], [0], [0], [1], [0, 0, 1, 1], [], []>} : vector<624x8xbf16>, vector<8x8xbf16>, vector<624x8xf32> -> vector<624x8xf32>
    %37 = arith.addf %31, %36 : vector<624x8xf32>
    %c24_36 = arith.constant 24 : index
    %c0_37 = arith.constant 0 : index
    %38 = vector.load %arg12[%c24_36, %c0_37] : memref<672x8xf32, #tpu.memory_space<vmem>>, vector<624x8xf32>
    tpu.vector_store %arg12[%c24_36, %c0_37], %37 {strides = array<i32>} : memref<672x8xf32, #tpu.memory_space<vmem>>, vector<624x8xf32>,
    %c24_38 = arith.constant 24 : index
    %c0_39 = arith.constant 0 : index
    %39 = vector.load %arg12[%c24_38, %c0_39] : memref<672x8xf32, #tpu.memory_space<vmem>>, vector<624x8xf32>
    %c23 = arith.constant 23 : index
    %c0_40 = arith.constant 0 : index
    %40 = vector.load %arg11[%c23, %c0_40] : memref<672x8xf32, #tpu.memory_space<vmem>>, vector<624x8xf32>
    %41 = arith.truncf %40 : vector<624x8xf32> to vector<624x8xbf16>
    %c3 = arith.constant 3 : index
    %c0_41 = arith.constant 0 : index
    %c0_42 = arith.constant 0 : index
    %42 = vector.load %arg5[%c3, %c0_41, %c0_42] : memref<9x8x8xbf16, #tpu.memory_space<vmem>>, vector<1x8x8xbf16>
    %43 = vector.shape_cast %42 : vector<1x8x8xbf16> to vector<8x8xbf16>
    %cst_43 = arith.constant dense<0.000000e+00> : vector<624x8xf32>
    %44 = tpu.matmul %41, %43, %cst_43 {dimension_numbers = #tpu.dot_dimension_numbers<[1], [0], [0], [1], [0, 0, 1, 1], [], []>} : vector<624x8xbf16>, vector<8x8xbf16>, vector<624x8xf32> -> vector<624x8xf32>
    %45 = arith.addf %39, %44 : vector<624x8xf32>
    %c24_44 = arith.constant 24 : index
    %c0_45 = arith.constant 0 : index
    %46 = vector.load %arg12[%c24_44, %c0_45] : memref<672x8xf32, #tpu.memory_space<vmem>>, vector<624x8xf32>
    tpu.vector_store %arg12[%c24_44, %c0_45], %45 {strides = array<i32>} : memref<672x8xf32, #tpu.memory_space<vmem>>, vector<624x8xf32>,
    %c24_46 = arith.constant 24 : index
    %c0_47 = arith.constant 0 : index
    %47 = vector.load %arg12[%c24_46, %c0_47] : memref<672x8xf32, #tpu.memory_space<vmem>>, vector<624x8xf32>
    %c24_48 = arith.constant 24 : index
    %c0_49 = arith.constant 0 : index
    %48 = vector.load %arg11[%c24_48, %c0_49] : memref<672x8xf32, #tpu.memory_space<vmem>>, vector<624x8xf32>
    %49 = arith.truncf %48 : vector<624x8xf32> to vector<624x8xbf16>
    %c4 = arith.constant 4 : index
    %c0_50 = arith.constant 0 : index
    %c0_51 = arith.constant 0 : index
    %50 = vector.load %arg5[%c4, %c0_50, %c0_51] : memref<9x8x8xbf16, #tpu.memory_space<vmem>>, vector<1x8x8xbf16>
    %51 = vector.shape_cast %50 : vector<1x8x8xbf16> to vector<8x8xbf16>
    %cst_52 = arith.constant dense<0.000000e+00> : vector<624x8xf32>
    %52 = tpu.matmul %49, %51, %cst_52 {dimension_numbers = #tpu.dot_dimension_numbers<[1], [0], [0], [1], [0, 0, 1, 1], [], []>} : vector<624x8xbf16>, vector<8x8xbf16>, vector<624x8xf32> -> vector<624x8xf32>
    %53 = arith.addf %47, %52 : vector<624x8xf32>
    %c24_53 = arith.constant 24 : index
    %c0_54 = arith.constant 0 : index
    %54 = vector.load %arg12[%c24_53, %c0_54] : memref<672x8xf32, #tpu.memory_space<vmem>>, vector<624x8xf32>
    tpu.vector_store %arg12[%c24_53, %c0_54], %53 {strides = array<i32>} : memref<672x8xf32, #tpu.memory_space<vmem>>, vector<624x8xf32>,
    %c24_55 = arith.constant 24 : index
    %c0_56 = arith.constant 0 : index
    %55 = vector.load %arg12[%c24_55, %c0_56] : memref<672x8xf32, #tpu.memory_space<vmem>>, vector<624x8xf32>
    %c25 = arith.constant 25 : index
    %c0_57 = arith.constant 0 : index
    %56 = vector.load %arg11[%c25, %c0_57] : memref<672x8xf32, #tpu.memory_space<vmem>>, vector<624x8xf32>
    %57 = arith.truncf %56 : vector<624x8xf32> to vector<624x8xbf16>
    %c5_58 = arith.constant 5 : index
    %c0_59 = arith.constant 0 : index
    %c0_60 = arith.constant 0 : index
    %58 = vector.load %arg5[%c5_58, %c0_59, %c0_60] : memref<9x8x8xbf16, #tpu.memory_space<vmem>>, vector<1x8x8xbf16>
    %59 = vector.shape_cast %58 : vector<1x8x8xbf16> to vector<8x8xbf16>
    %cst_61 = arith.constant dense<0.000000e+00> : vector<624x8xf32>
    %60 = tpu.matmul %57, %59, %cst_61 {dimension_numbers = #tpu.dot_dimension_numbers<[1], [0], [0], [1], [0, 0, 1, 1], [], []>} : vector<624x8xbf16>, vector<8x8xbf16>, vector<624x8xf32> -> vector<624x8xf32>
    %61 = arith.addf %55, %60 : vector<624x8xf32>
    %c24_62 = arith.constant 24 : index
    %c0_63 = arith.constant 0 : index
    %62 = vector.load %arg12[%c24_62, %c0_63] : memref<672x8xf32, #tpu.memory_space<vmem>>, vector<624x8xf32>
    tpu.vector_store %arg12[%c24_62, %c0_63], %61 {strides = array<i32>} : memref<672x8xf32, #tpu.memory_space<vmem>>, vector<624x8xf32>,
    %c24_64 = arith.constant 24 : index
    %c0_65 = arith.constant 0 : index
    %63 = vector.load %arg12[%c24_64, %c0_65] : memref<672x8xf32, #tpu.memory_space<vmem>>, vector<624x8xf32>
    %c41 = arith.constant 41 : index
    %c0_66 = arith.constant 0 : index
    %64 = vector.load %arg11[%c41, %c0_66] : memref<672x8xf32, #tpu.memory_space<vmem>>, vector<624x8xf32>
    %65 = arith.truncf %64 : vector<624x8xf32> to vector<624x8xbf16>
    %c6_67 = arith.constant 6 : index
    %c0_68 = arith.constant 0 : index
    %c0_69 = arith.constant 0 : index
    %66 = vector.load %arg5[%c6_67, %c0_68, %c0_69] : memref<9x8x8xbf16, #tpu.memory_space<vmem>>, vector<1x8x8xbf16>
    %67 = vector.shape_cast %66 : vector<1x8x8xbf16> to vector<8x8xbf16>
    %cst_70 = arith.constant dense<0.000000e+00> : vector<624x8xf32>
    %68 = tpu.matmul %65, %67, %cst_70 {dimension_numbers = #tpu.dot_dimension_numbers<[1], [0], [0], [1], [0, 0, 1, 1], [], []>} : vector<624x8xbf16>, vector<8x8xbf16>, vector<624x8xf32> -> vector<624x8xf32>
    %69 = arith.addf %63, %68 : vector<624x8xf32>
    %c24_71 = arith.constant 24 : index
    %c0_72 = arith.constant 0 : index
    %70 = vector.load %arg12[%c24_71, %c0_72] : memref<672x8xf32, #tpu.memory_space<vmem>>, vector<624x8xf32>
    tpu.vector_store %arg12[%c24_71, %c0_72], %69 {strides = array<i32>} : memref<672x8xf32, #tpu.memory_space<vmem>>, vector<624x8xf32>,
    %c24_73 = arith.constant 24 : index
    %c0_74 = arith.constant 0 : index
    %71 = vector.load %arg12[%c24_73, %c0_74] : memref<672x8xf32, #tpu.memory_space<vmem>>, vector<624x8xf32>
    %c42 = arith.constant 42 : index
    %c0_75 = arith.constant 0 : index
    %72 = vector.load %arg11[%c42, %c0_75] : memref<672x8xf32, #tpu.memory_space<vmem>>, vector<624x8xf32>
    %73 = arith.truncf %72 : vector<624x8xf32> to vector<624x8xbf16>
    %c7_76 = arith.constant 7 : index
    %c0_77 = arith.constant 0 : index
    %c0_78 = arith.constant 0 : index
    %74 = vector.load %arg5[%c7_76, %c0_77, %c0_78] : memref<9x8x8xbf16, #tpu.memory_space<vmem>>, vector<1x8x8xbf16>
    %75 = vector.shape_cast %74 : vector<1x8x8xbf16> to vector<8x8xbf16>
    %cst_79 = arith.constant dense<0.000000e+00> : vector<624x8xf32>
    %76 = tpu.matmul %73, %75, %cst_79 {dimension_numbers = #tpu.dot_dimension_numbers<[1], [0], [0], [1], [0, 0, 1, 1], [], []>} : vector<624x8xbf16>, vector<8x8xbf16>, vector<624x8xf32> -> vector<624x8xf32>
    %77 = arith.addf %71, %76 : vector<624x8xf32>
    %c24_80 = arith.constant 24 : index
    %c0_81 = arith.constant 0 : index
    %78 = vector.load %arg12[%c24_80, %c0_81] : memref<672x8xf32, #tpu.memory_space<vmem>>, vector<624x8xf32>
    tpu.vector_store %arg12[%c24_80, %c0_81], %77 {strides = array<i32>} : memref<672x8xf32, #tpu.memory_space<vmem>>, vector<624x8xf32>,
    %c24_82 = arith.constant 24 : index
    %c0_83 = arith.constant 0 : index
    %79 = vector.load %arg12[%c24_82, %c0_83] : memref<672x8xf32, #tpu.memory_space<vmem>>, vector<624x8xf32>
    %c43 = arith.constant 43 : index
    %c0_84 = arith.constant 0 : index
    %80 = vector.load %arg11[%c43, %c0_84] : memref<672x8xf32, #tpu.memory_space<vmem>>, vector<624x8xf32>
    %81 = arith.truncf %80 : vector<624x8xf32> to vector<624x8xbf16>
    %c8 = arith.constant 8 : index
    %c0_85 = arith.constant 0 : index
    %c0_86 = arith.constant 0 : index
    %82 = vector.load %arg5[%c8, %c0_85, %c0_86] : memref<9x8x8xbf16, #tpu.memory_space<vmem>>, vector<1x8x8xbf16>
    %83 = vector.shape_cast %82 : vector<1x8x8xbf16> to vector<8x8xbf16>
    %cst_87 = arith.constant dense<0.000000e+00> : vector<624x8xf32>
    %84 = tpu.matmul %81, %83, %cst_87 {dimension_numbers = #tpu.dot_dimension_numbers<[1], [0], [0], [1], [0, 0, 1, 1], [], []>} : vector<624x8xbf16>, vector<8x8xbf16>, vector<624x8xf32> -> vector<624x8xf32>
    %85 = arith.addf %79, %84 : vector<624x8xf32>
    %c24_88 = arith.constant 24 : index
    %c0_89 = arith.constant 0 : index
    %86 = vector.load %arg12[%c24_88, %c0_89] : memref<672x8xf32, #tpu.memory_space<vmem>>, vector<624x8xf32>
    tpu.vector_store %arg12[%c24_88, %c0_89], %85 {strides = array<i32>} : memref<672x8xf32, #tpu.memory_space<vmem>>, vector<624x8xf32>,
    %c0_90 = arith.constant 0 : index
    %c0_91 = arith.constant 0 : index
    %c0_92 = arith.constant 0 : index
    %87 = vector.load %arg2[%c0_90, %c0_91, %c0_92] : memref<1x672x4xbf16, #tpu.memory_space<vmem>>, vector<1x672x4xbf16>
    %88 = vector.shape_cast %87 : vector<1x672x4xbf16> to vector<672x4xbf16>
    %c0_93 = arith.constant 0 : index
    %c0_94 = arith.constant 0 : index
    %89 = vector.load %arg7[%c0_93, %c0_94] : memref<4x8xbf16, #tpu.memory_space<vmem>>, vector<4x8xbf16>
    %cst_95 = arith.constant dense<0.000000e+00> : vector<672x8xf32>
    %90 = tpu.matmul %88, %89, %cst_95 {dimension_numbers = #tpu.dot_dimension_numbers<[1], [0], [0], [1], [0, 0, 1, 1], [], []>} : vector<672x4xbf16>, vector<4x8xbf16>, vector<672x8xf32> -> vector<672x8xf32>
    %c0_96 = arith.constant 0 : index
    %c0_97 = arith.constant 0 : index
    %91 = vector.load %arg8[%c0_96, %c0_97] : memref<1x8xf32, #tpu.memory_space<vmem>>, vector<1x8xf32>
    %92 = vector.broadcast %91 : vector<1x8xf32> to vector<672x8xf32>
    %93 = arith.addf %90, %92 : vector<672x8xf32>
    %c0_98 = arith.constant 0 : index
    %c0_99 = arith.constant 0 : index
    %94 = vector.load %arg12[%c0_98, %c0_99] : memref<672x8xf32, #tpu.memory_space<vmem>>, vector<672x8xf32>
    %c0_100 = arith.constant 0 : index
    %c0_101 = arith.constant 0 : index
    %95 = vector.load %arg6[%c0_100, %c0_101] : memref<1x8xf32, #tpu.memory_space<vmem>>, vector<1x8xf32>
    %96 = vector.broadcast %95 : vector<1x8xf32> to vector<672x8xf32>
    %97 = arith.addf %93, %96 : vector<672x8xf32>
    %98 = arith.addf %94, %97 : vector<672x8xf32>
    %c0_102 = arith.constant 0 : index
    %c0_103 = arith.constant 0 : index
    %99 = vector.load %arg12[%c0_102, %c0_103] : memref<672x8xf32, #tpu.memory_space<vmem>>, vector<672x8xf32>
    tpu.vector_store %arg12[%c0_102, %c0_103], %98 {strides = array<i32>} : memref<672x8xf32, #tpu.memory_space<vmem>>, vector<672x8xf32>,
    %c24_104 = arith.constant 24 : index
    %c0_105 = arith.constant 0 : index
    %100 = tpu.strided_load %arg12[%c24_104, %c0_105] {strides = array<i32: 2, 1>} : memref<672x8xf32, #tpu.memory_space<vmem>>, vector<8x8xf32>
    %c25_106 = arith.constant 25 : index
    %c0_107 = arith.constant 0 : index
    %101 = tpu.strided_load %arg12[%c25_106, %c0_107] {strides = array<i32: 2, 1>} : memref<672x8xf32, #tpu.memory_space<vmem>>, vector<8x8xf32>
    %c42_108 = arith.constant 42 : index
    %c0_109 = arith.constant 0 : index
    %102 = tpu.strided_load %arg12[%c42_108, %c0_109] {strides = array<i32: 2, 1>} : memref<672x8xf32, #tpu.memory_space<vmem>>, vector<8x8xf32>
    %c43_110 = arith.constant 43 : index
    %c0_111 = arith.constant 0 : index
    %103 = tpu.strided_load %arg12[%c43_110, %c0_111] {strides = array<i32: 2, 1>} : memref<672x8xf32, #tpu.memory_space<vmem>>, vector<8x8xf32>
    %104 = arith.addf %100, %101 : vector<8x8xf32>
    %105 = arith.addf %104, %102 : vector<8x8xf32>
    %106 = arith.addf %105, %103 : vector<8x8xf32>
    %cst_112 = arith.constant 2.500000e-01 : f32
    %107 = vector.broadcast %cst_112 : f32 to vector<8x8xf32>
    %108 = arith.mulf %106, %107 : vector<8x8xf32>
    %c60 = arith.constant 60 : index
    %c0_113 = arith.constant 0 : index
    %109 = tpu.strided_load %arg12[%c60, %c0_113] {strides = array<i32: 2, 1>} : memref<672x8xf32, #tpu.memory_space<vmem>>, vector<8x8xf32>
    %c61 = arith.constant 61 : index
    %c0_114 = arith.constant 0 : index
    %110 = tpu.strided_load %arg12[%c61, %c0_114] {strides = array<i32: 2, 1>} : memref<672x8xf32, #tpu.memory_space<vmem>>, vector<8x8xf32>
    %c78 = arith.constant 78 : index
    %c0_115 = arith.constant 0 : index
    %111 = tpu.strided_load %arg12[%c78, %c0_115] {strides = array<i32: 2, 1>} : memref<672x8xf32, #tpu.memory_space<vmem>>, vector<8x8xf32>
    %c79 = arith.constant 79 : index
    %c0_116 = arith.constant 0 : index
    %112 = tpu.strided_load %arg12[%c79, %c0_116] {strides = array<i32: 2, 1>} : memref<672x8xf32, #tpu.memory_space<vmem>>, vector<8x8xf32>
    %113 = arith.addf %109, %110 : vector<8x8xf32>
    %114 = arith.addf %113, %111 : vector<8x8xf32>
    %115 = arith.addf %114, %112 : vector<8x8xf32>
    %cst_117 = arith.constant 2.500000e-01 : f32
    %116 = vector.broadcast %cst_117 : f32 to vector<8x8xf32>
    %117 = arith.mulf %115, %116 : vector<8x8xf32>
    %c96 = arith.constant 96 : index
    %c0_118 = arith.constant 0 : index
    %118 = tpu.strided_load %arg12[%c96, %c0_118] {strides = array<i32: 2, 1>} : memref<672x8xf32, #tpu.memory_space<vmem>>, vector<8x8xf32>
    %c97 = arith.constant 97 : index
    %c0_119 = arith.constant 0 : index
    %119 = tpu.strided_load %arg12[%c97, %c0_119] {strides = array<i32: 2, 1>} : memref<672x8xf32, #tpu.memory_space<vmem>>, vector<8x8xf32>
    %c114 = arith.constant 114 : index
    %c0_120 = arith.constant 0 : index
    %120 = tpu.strided_load %arg12[%c114, %c0_120] {strides = array<i32: 2, 1>} : memref<672x8xf32, #tpu.memory_space<vmem>>, vector<8x8xf32>
    %c115 = arith.constant 115 : index
    %c0_121 = arith.constant 0 : index
    %121 = tpu.strided_load %arg12[%c115, %c0_121] {strides = array<i32: 2, 1>} : memref<672x8xf32, #tpu.memory_space<vmem>>, vector<8x8xf32>
    %122 = arith.addf %118, %119 : vector<8x8xf32>
    %123 = arith.addf %122, %120 : vector<8x8xf32>
    %124 = arith.addf %123, %121 : vector<8x8xf32>
    %cst_122 = arith.constant 2.500000e-01 : f32
    %125 = vector.broadcast %cst_122 : f32 to vector<8x8xf32>
    %126 = arith.mulf %124, %125 : vector<8x8xf32>
    %c132 = arith.constant 132 : index
    %c0_123 = arith.constant 0 : index
    %127 = tpu.strided_load %arg12[%c132, %c0_123] {strides = array<i32: 2, 1>} : memref<672x8xf32, #tpu.memory_space<vmem>>, vector<8x8xf32>
    %c133 = arith.constant 133 : index
    %c0_124 = arith.constant 0 : index
    %128 = tpu.strided_load %arg12[%c133, %c0_124] {strides = array<i32: 2, 1>} : memref<672x8xf32, #tpu.memory_space<vmem>>, vector<8x8xf32>
    %c150 = arith.constant 150 : index
    %c0_125 = arith.constant 0 : index
    %129 = tpu.strided_load %arg12[%c150, %c0_125] {strides = array<i32: 2, 1>} : memref<672x8xf32, #tpu.memory_space<vmem>>, vector<8x8xf32>
    %c151 = arith.constant 151 : index
    %c0_126 = arith.constant 0 : index
    %130 = tpu.strided_load %arg12[%c151, %c0_126] {strides = array<i32: 2, 1>} : memref<672x8xf32, #tpu.memory_space<vmem>>, vector<8x8xf32>
    %131 = arith.addf %127, %128 : vector<8x8xf32>
    %132 = arith.addf %131, %129 : vector<8x8xf32>
    %133 = arith.addf %132, %130 : vector<8x8xf32>
    %cst_127 = arith.constant 2.500000e-01 : f32
    %134 = vector.broadcast %cst_127 : f32 to vector<8x8xf32>
    %135 = arith.mulf %133, %134 : vector<8x8xf32>
    %c168 = arith.constant 168 : index
    %c0_128 = arith.constant 0 : index
    %136 = tpu.strided_load %arg12[%c168, %c0_128] {strides = array<i32: 2, 1>} : memref<672x8xf32, #tpu.memory_space<vmem>>, vector<8x8xf32>
    %c169 = arith.constant 169 : index
    %c0_129 = arith.constant 0 : index
    %137 = tpu.strided_load %arg12[%c169, %c0_129] {strides = array<i32: 2, 1>} : memref<672x8xf32, #tpu.memory_space<vmem>>, vector<8x8xf32>
    %c186 = arith.constant 186 : index
    %c0_130 = arith.constant 0 : index
    %138 = tpu.strided_load %arg12[%c186, %c0_130] {strides = array<i32: 2, 1>} : memref<672x8xf32, #tpu.memory_space<vmem>>, vector<8x8xf32>
    %c187 = arith.constant 187 : index
    %c0_131 = arith.constant 0 : index
    %139 = tpu.strided_load %arg12[%c187, %c0_131] {strides = array<i32: 2, 1>} : memref<672x8xf32, #tpu.memory_space<vmem>>, vector<8x8xf32>
    %140 = arith.addf %136, %137 : vector<8x8xf32>
    %141 = arith.addf %140, %138 : vector<8x8xf32>
    %142 = arith.addf %141, %139 : vector<8x8xf32>
    %cst_132 = arith.constant 2.500000e-01 : f32
    %143 = vector.broadcast %cst_132 : f32 to vector<8x8xf32>
    %144 = arith.mulf %142, %143 : vector<8x8xf32>
    %c204 = arith.constant 204 : index
    %c0_133 = arith.constant 0 : index
    %145 = tpu.strided_load %arg12[%c204, %c0_133] {strides = array<i32: 2, 1>} : memref<672x8xf32, #tpu.memory_space<vmem>>, vector<8x8xf32>
    %c205 = arith.constant 205 : index
    %c0_134 = arith.constant 0 : index
    %146 = tpu.strided_load %arg12[%c205, %c0_134] {strides = array<i32: 2, 1>} : memref<672x8xf32, #tpu.memory_space<vmem>>, vector<8x8xf32>
    %c222 = arith.constant 222 : index
    %c0_135 = arith.constant 0 : index
    %147 = tpu.strided_load %arg12[%c222, %c0_135] {strides = array<i32: 2, 1>} : memref<672x8xf32, #tpu.memory_space<vmem>>, vector<8x8xf32>
    %c223 = arith.constant 223 : index
    %c0_136 = arith.constant 0 : index
    %148 = tpu.strided_load %arg12[%c223, %c0_136] {strides = array<i32: 2, 1>} : memref<672x8xf32, #tpu.memory_space<vmem>>, vector<8x8xf32>
    %149 = arith.addf %145, %146 : vector<8x8xf32>
    %150 = arith.addf %149, %147 : vector<8x8xf32>
    %151 = arith.addf %150, %148 : vector<8x8xf32>
    %cst_137 = arith.constant 2.500000e-01 : f32
    %152 = vector.broadcast %cst_137 : f32 to vector<8x8xf32>
    %153 = arith.mulf %151, %152 : vector<8x8xf32>
    %c240 = arith.constant 240 : index
    %c0_138 = arith.constant 0 : index
    %154 = tpu.strided_load %arg12[%c240, %c0_138] {strides = array<i32: 2, 1>} : memref<672x8xf32, #tpu.memory_space<vmem>>, vector<8x8xf32>
    %c241 = arith.constant 241 : index
    %c0_139 = arith.constant 0 : index
    %155 = tpu.strided_load %arg12[%c241, %c0_139] {strides = array<i32: 2, 1>} : memref<672x8xf32, #tpu.memory_space<vmem>>, vector<8x8xf32>
    %c258 = arith.constant 258 : index
    %c0_140 = arith.constant 0 : index
    %156 = tpu.strided_load %arg12[%c258, %c0_140] {strides = array<i32: 2, 1>} : memref<672x8xf32, #tpu.memory_space<vmem>>, vector<8x8xf32>
    %c259 = arith.constant 259 : index
    %c0_141 = arith.constant 0 : index
    %157 = tpu.strided_load %arg12[%c259, %c0_141] {strides = array<i32: 2, 1>} : memref<672x8xf32, #tpu.memory_space<vmem>>, vector<8x8xf32>
    %158 = arith.addf %154, %155 : vector<8x8xf32>
    %159 = arith.addf %158, %156 : vector<8x8xf32>
    %160 = arith.addf %159, %157 : vector<8x8xf32>
    %cst_142 = arith.constant 2.500000e-01 : f32
    %161 = vector.broadcast %cst_142 : f32 to vector<8x8xf32>
    %162 = arith.mulf %160, %161 : vector<8x8xf32>
    %c276 = arith.constant 276 : index
    %c0_143 = arith.constant 0 : index
    %163 = tpu.strided_load %arg12[%c276, %c0_143] {strides = array<i32: 2, 1>} : memref<672x8xf32, #tpu.memory_space<vmem>>, vector<8x8xf32>
    %c277 = arith.constant 277 : index
    %c0_144 = arith.constant 0 : index
    %164 = tpu.strided_load %arg12[%c277, %c0_144] {strides = array<i32: 2, 1>} : memref<672x8xf32, #tpu.memory_space<vmem>>, vector<8x8xf32>
    %c294 = arith.constant 294 : index
    %c0_145 = arith.constant 0 : index
    %165 = tpu.strided_load %arg12[%c294, %c0_145] {strides = array<i32: 2, 1>} : memref<672x8xf32, #tpu.memory_space<vmem>>, vector<8x8xf32>
    %c295 = arith.constant 295 : index
    %c0_146 = arith.constant 0 : index
    %166 = tpu.strided_load %arg12[%c295, %c0_146] {strides = array<i32: 2, 1>} : memref<672x8xf32, #tpu.memory_space<vmem>>, vector<8x8xf32>
    %167 = arith.addf %163, %164 : vector<8x8xf32>
    %168 = arith.addf %167, %165 : vector<8x8xf32>
    %169 = arith.addf %168, %166 : vector<8x8xf32>
    %cst_147 = arith.constant 2.500000e-01 : f32
    %170 = vector.broadcast %cst_147 : f32 to vector<8x8xf32>
    %171 = arith.mulf %169, %170 : vector<8x8xf32>
    %c360 = arith.constant 360 : index
    %c0_148 = arith.constant 0 : index
    %172 = tpu.strided_load %arg12[%c360, %c0_148] {strides = array<i32: 2, 1>} : memref<672x8xf32, #tpu.memory_space<vmem>>, vector<8x8xf32>
    %c361 = arith.constant 361 : index
    %c0_149 = arith.constant 0 : index
    %173 = tpu.strided_load %arg12[%c361, %c0_149] {strides = array<i32: 2, 1>} : memref<672x8xf32, #tpu.memory_space<vmem>>, vector<8x8xf32>
    %c378 = arith.constant 378 : index
    %c0_150 = arith.constant 0 : index
    %174 = tpu.strided_load %arg12[%c378, %c0_150] {strides = array<i32: 2, 1>} : memref<672x8xf32, #tpu.memory_space<vmem>>, vector<8x8xf32>
    %c379 = arith.constant 379 : index
    %c0_151 = arith.constant 0 : index
    %175 = tpu.strided_load %arg12[%c379, %c0_151] {strides = array<i32: 2, 1>} : memref<672x8xf32, #tpu.memory_space<vmem>>, vector<8x8xf32>
    %176 = arith.addf %172, %173 : vector<8x8xf32>
    %177 = arith.addf %176, %174 : vector<8x8xf32>
    %178 = arith.addf %177, %175 : vector<8x8xf32>
    %cst_152 = arith.constant 2.500000e-01 : f32
    %179 = vector.broadcast %cst_152 : f32 to vector<8x8xf32>
    %180 = arith.mulf %178, %179 : vector<8x8xf32>
    %c396 = arith.constant 396 : index
    %c0_153 = arith.constant 0 : index
    %181 = tpu.strided_load %arg12[%c396, %c0_153] {strides = array<i32: 2, 1>} : memref<672x8xf32, #tpu.memory_space<vmem>>, vector<8x8xf32>
    %c397 = arith.constant 397 : index
    %c0_154 = arith.constant 0 : index
    %182 = tpu.strided_load %arg12[%c397, %c0_154] {strides = array<i32: 2, 1>} : memref<672x8xf32, #tpu.memory_space<vmem>>, vector<8x8xf32>
    %c414 = arith.constant 414 : index
    %c0_155 = arith.constant 0 : index
    %183 = tpu.strided_load %arg12[%c414, %c0_155] {strides = array<i32: 2, 1>} : memref<672x8xf32, #tpu.memory_space<vmem>>, vector<8x8xf32>
    %c415 = arith.constant 415 : index
    %c0_156 = arith.constant 0 : index
    %184 = tpu.strided_load %arg12[%c415, %c0_156] {strides = array<i32: 2, 1>} : memref<672x8xf32, #tpu.memory_space<vmem>>, vector<8x8xf32>
    %185 = arith.addf %181, %182 : vector<8x8xf32>
    %186 = arith.addf %185, %183 : vector<8x8xf32>
    %187 = arith.addf %186, %184 : vector<8x8xf32>
    %cst_157 = arith.constant 2.500000e-01 : f32
    %188 = vector.broadcast %cst_157 : f32 to vector<8x8xf32>
    %189 = arith.mulf %187, %188 : vector<8x8xf32>
    %c432 = arith.constant 432 : index
    %c0_158 = arith.constant 0 : index
    %190 = tpu.strided_load %arg12[%c432, %c0_158] {strides = array<i32: 2, 1>} : memref<672x8xf32, #tpu.memory_space<vmem>>, vector<8x8xf32>
    %c433 = arith.constant 433 : index
    %c0_159 = arith.constant 0 : index
    %191 = tpu.strided_load %arg12[%c433, %c0_159] {strides = array<i32: 2, 1>} : memref<672x8xf32, #tpu.memory_space<vmem>>, vector<8x8xf32>
    %c450 = arith.constant 450 : index
    %c0_160 = arith.constant 0 : index
    %192 = tpu.strided_load %arg12[%c450, %c0_160] {strides = array<i32: 2, 1>} : memref<672x8xf32, #tpu.memory_space<vmem>>, vector<8x8xf32>
    %c451 = arith.constant 451 : index
    %c0_161 = arith.constant 0 : index
    %193 = tpu.strided_load %arg12[%c451, %c0_161] {strides = array<i32: 2, 1>} : memref<672x8xf32, #tpu.memory_space<vmem>>, vector<8x8xf32>
    %194 = arith.addf %190, %191 : vector<8x8xf32>
    %195 = arith.addf %194, %192 : vector<8x8xf32>
    %196 = arith.addf %195, %193 : vector<8x8xf32>
    %cst_162 = arith.constant 2.500000e-01 : f32
    %197 = vector.broadcast %cst_162 : f32 to vector<8x8xf32>
    %198 = arith.mulf %196, %197 : vector<8x8xf32>
    %c468 = arith.constant 468 : index
    %c0_163 = arith.constant 0 : index
    %199 = tpu.strided_load %arg12[%c468, %c0_163] {strides = array<i32: 2, 1>} : memref<672x8xf32, #tpu.memory_space<vmem>>, vector<8x8xf32>
    %c469 = arith.constant 469 : index
    %c0_164 = arith.constant 0 : index
    %200 = tpu.strided_load %arg12[%c469, %c0_164] {strides = array<i32: 2, 1>} : memref<672x8xf32, #tpu.memory_space<vmem>>, vector<8x8xf32>
    %c486 = arith.constant 486 : index
    %c0_165 = arith.constant 0 : index
    %201 = tpu.strided_load %arg12[%c486, %c0_165] {strides = array<i32: 2, 1>} : memref<672x8xf32, #tpu.memory_space<vmem>>, vector<8x8xf32>
    %c487 = arith.constant 487 : index
    %c0_166 = arith.constant 0 : index
    %202 = tpu.strided_load %arg12[%c487, %c0_166] {strides = array<i32: 2, 1>} : memref<672x8xf32, #tpu.memory_space<vmem>>, vector<8x8xf32>
    %203 = arith.addf %199, %200 : vector<8x8xf32>
    %204 = arith.addf %203, %201 : vector<8x8xf32>
    %205 = arith.addf %204, %202 : vector<8x8xf32>
    %cst_167 = arith.constant 2.500000e-01 : f32
    %206 = vector.broadcast %cst_167 : f32 to vector<8x8xf32>
    %207 = arith.mulf %205, %206 : vector<8x8xf32>
    %c504 = arith.constant 504 : index
    %c0_168 = arith.constant 0 : index
    %208 = tpu.strided_load %arg12[%c504, %c0_168] {strides = array<i32: 2, 1>} : memref<672x8xf32, #tpu.memory_space<vmem>>, vector<8x8xf32>
    %c505 = arith.constant 505 : index
    %c0_169 = arith.constant 0 : index
    %209 = tpu.strided_load %arg12[%c505, %c0_169] {strides = array<i32: 2, 1>} : memref<672x8xf32, #tpu.memory_space<vmem>>, vector<8x8xf32>
    %c522 = arith.constant 522 : index
    %c0_170 = arith.constant 0 : index
    %210 = tpu.strided_load %arg12[%c522, %c0_170] {strides = array<i32: 2, 1>} : memref<672x8xf32, #tpu.memory_space<vmem>>, vector<8x8xf32>
    %c523 = arith.constant 523 : index
    %c0_171 = arith.constant 0 : index
    %211 = tpu.strided_load %arg12[%c523, %c0_171] {strides = array<i32: 2, 1>} : memref<672x8xf32, #tpu.memory_space<vmem>>, vector<8x8xf32>
    %212 = arith.addf %208, %209 : vector<8x8xf32>
    %213 = arith.addf %212, %210 : vector<8x8xf32>
    %214 = arith.addf %213, %211 : vector<8x8xf32>
    %cst_172 = arith.constant 2.500000e-01 : f32
    %215 = vector.broadcast %cst_172 : f32 to vector<8x8xf32>
    %216 = arith.mulf %214, %215 : vector<8x8xf32>
    %c540 = arith.constant 540 : index
    %c0_173 = arith.constant 0 : index
    %217 = tpu.strided_load %arg12[%c540, %c0_173] {strides = array<i32: 2, 1>} : memref<672x8xf32, #tpu.memory_space<vmem>>, vector<8x8xf32>
    %c541 = arith.constant 541 : index
    %c0_174 = arith.constant 0 : index
    %218 = tpu.strided_load %arg12[%c541, %c0_174] {strides = array<i32: 2, 1>} : memref<672x8xf32, #tpu.memory_space<vmem>>, vector<8x8xf32>
    %c558 = arith.constant 558 : index
    %c0_175 = arith.constant 0 : index
    %219 = tpu.strided_load %arg12[%c558, %c0_175] {strides = array<i32: 2, 1>} : memref<672x8xf32, #tpu.memory_space<vmem>>, vector<8x8xf32>
    %c559 = arith.constant 559 : index
    %c0_176 = arith.constant 0 : index
    %220 = tpu.strided_load %arg12[%c559, %c0_176] {strides = array<i32: 2, 1>} : memref<672x8xf32, #tpu.memory_space<vmem>>, vector<8x8xf32>
    %221 = arith.addf %217, %218 : vector<8x8xf32>
    %222 = arith.addf %221, %219 : vector<8x8xf32>
    %223 = arith.addf %222, %220 : vector<8x8xf32>
    %cst_177 = arith.constant 2.500000e-01 : f32
    %224 = vector.broadcast %cst_177 : f32 to vector<8x8xf32>
    %225 = arith.mulf %223, %224 : vector<8x8xf32>
    %c576 = arith.constant 576 : index
    %c0_178 = arith.constant 0 : index
    %226 = tpu.strided_load %arg12[%c576, %c0_178] {strides = array<i32: 2, 1>} : memref<672x8xf32, #tpu.memory_space<vmem>>, vector<8x8xf32>
    %c577 = arith.constant 577 : index
    %c0_179 = arith.constant 0 : index
    %227 = tpu.strided_load %arg12[%c577, %c0_179] {strides = array<i32: 2, 1>} : memref<672x8xf32, #tpu.memory_space<vmem>>, vector<8x8xf32>
    %c594 = arith.constant 594 : index
    %c0_180 = arith.constant 0 : index
    %228 = tpu.strided_load %arg12[%c594, %c0_180] {strides = array<i32: 2, 1>} : memref<672x8xf32, #tpu.memory_space<vmem>>, vector<8x8xf32>
    %c595 = arith.constant 595 : index
    %c0_181 = arith.constant 0 : index
    %229 = tpu.strided_load %arg12[%c595, %c0_181] {strides = array<i32: 2, 1>} : memref<672x8xf32, #tpu.memory_space<vmem>>, vector<8x8xf32>
    %230 = arith.addf %226, %227 : vector<8x8xf32>
    %231 = arith.addf %230, %228 : vector<8x8xf32>
    %232 = arith.addf %231, %229 : vector<8x8xf32>
    %cst_182 = arith.constant 2.500000e-01 : f32
    %233 = vector.broadcast %cst_182 : f32 to vector<8x8xf32>
    %234 = arith.mulf %232, %233 : vector<8x8xf32>
    %c612 = arith.constant 612 : index
    %c0_183 = arith.constant 0 : index
    %235 = tpu.strided_load %arg12[%c612, %c0_183] {strides = array<i32: 2, 1>} : memref<672x8xf32, #tpu.memory_space<vmem>>, vector<8x8xf32>
    %c613 = arith.constant 613 : index
    %c0_184 = arith.constant 0 : index
    %236 = tpu.strided_load %arg12[%c613, %c0_184] {strides = array<i32: 2, 1>} : memref<672x8xf32, #tpu.memory_space<vmem>>, vector<8x8xf32>
    %c630 = arith.constant 630 : index
    %c0_185 = arith.constant 0 : index
    %237 = tpu.strided_load %arg12[%c630, %c0_185] {strides = array<i32: 2, 1>} : memref<672x8xf32, #tpu.memory_space<vmem>>, vector<8x8xf32>
    %c631 = arith.constant 631 : index
    %c0_186 = arith.constant 0 : index
    %238 = tpu.strided_load %arg12[%c631, %c0_186] {strides = array<i32: 2, 1>} : memref<672x8xf32, #tpu.memory_space<vmem>>, vector<8x8xf32>
    %239 = arith.addf %235, %236 : vector<8x8xf32>
    %240 = arith.addf %239, %237 : vector<8x8xf32>
    %241 = arith.addf %240, %238 : vector<8x8xf32>
    %cst_187 = arith.constant 2.500000e-01 : f32
    %242 = vector.broadcast %cst_187 : f32 to vector<8x8xf32>
    %243 = arith.mulf %241, %242 : vector<8x8xf32>
    %244 = tpu.concatenate %108, %117, %126, %135, %144, %153, %162, %171, %180, %189, %198, %207, %216, %225, %234, %243 in 0 : vector<8x8xf32>, vector<8x8xf32>, vector<8x8xf32>, vector<8x8xf32>, vector<8x8xf32>, vector<8x8xf32>, vector<8x8xf32>, vector<8x8xf32>, vector<8x8xf32>, vector<8x8xf32>, vector<8x8xf32>, vector<8x8xf32>, vector<8x8xf32>, vector<8x8xf32>, vector<8x8xf32>, vector<8x8xf32> -> vector<128x8xf32>
    %245 = tpu.iota {dimensions = array<i32: 0>} : vector<8x8xi32>
    %246 = tpu.iota {dimensions = array<i32: 1>} : vector<8x8xi32>
    %247 = arith.cmpi eq, %245, %246 : vector<8x8xi32>
    %248 = arith.extui %247 : vector<8x8xi1> to vector<8x8xi32>
    %249 = arith.sitofp %248 : vector<8x8xi32> to vector<8x8xf32>
    %cst_188 = arith.constant dense<0.000000e+00> : vector<8x128xf32>
    %250 = tpu.matmul %249, %244, %cst_188 {dimension_numbers = #tpu.dot_dimension_numbers<[1], [1], [0], [0], [0, 0, 1, 0], [], []>} : vector<8x8xf32>, vector<128x8xf32>, vector<8x128xf32> -> vector<8x128xf32>
    %c0_189 = arith.constant 0 : index
    %c0_190 = arith.constant 0 : index
    %c0_191 = arith.constant 0 : index
    %251 = vector.load %arg10[%c0_189, %c0_190, %c0_191] : memref<1x8x128xf32, #tpu.memory_space<vmem>>, vector<1x8x128xf32>
    %252 = vector.shape_cast %251 : vector<1x8x128xf32> to vector<8x128xf32>
    %253 = vector.shape_cast %250 : vector<8x128xf32> to vector<1x8x128xf32>
    tpu.vector_store %arg10[%c0_189, %c0_190, %c0_191], %253 {strides = array<i32>} : memref<1x8x128xf32, #tpu.memory_space<vmem>>, vector<1x8x128xf32>,
    return
  }
  func.func @transform_0(%arg0: i32) -> (i32, i32, i32) {
    %c0_i32 = arith.constant 0 : i32
    %c0_i32_0 = arith.constant 0 : i32
    %c0_i32_1 = arith.constant 0 : i32
    return %arg0, %c0_i32, %c0_i32_0 : i32, i32, i32
  }
  func.func @transform_1(%arg0: i32) -> (i32, i32, i32) {
    %c0_i32 = arith.constant 0 : i32
    %c0_i32_0 = arith.constant 0 : i32
    %c0_i32_1 = arith.constant 0 : i32
    return %arg0, %c0_i32, %c0_i32_0 : i32, i32, i32
  }
  func.func @transform_2(%arg0: i32) -> (i32, i32) {
    %c0_i32 = arith.constant 0 : i32
    %c0_i32_0 = arith.constant 0 : i32
    %c0_i32_1 = arith.constant 0 : i32
    return %c0_i32, %c0_i32_0 : i32, i32
  }
  func.func @transform_3(%arg0: i32) -> (i32, i32) {
    %c0_i32 = arith.constant 0 : i32
    %c0_i32_0 = arith.constant 0 : i32
    %c0_i32_1 = arith.constant 0 : i32
    return %c0_i32, %c0_i32_0 : i32, i32
  }
  func.func @transform_4(%arg0: i32) -> (i32, i32, i32) {
    %c0_i32 = arith.constant 0 : i32
    %c0_i32_0 = arith.constant 0 : i32
    %c0_i32_1 = arith.constant 0 : i32
    %c0_i32_2 = arith.constant 0 : i32
    return %c0_i32, %c0_i32_0, %c0_i32_1 : i32, i32, i32
  }
  func.func @transform_5(%arg0: i32) -> (i32, i32) {
    %c0_i32 = arith.constant 0 : i32
    %c0_i32_0 = arith.constant 0 : i32
    %c0_i32_1 = arith.constant 0 : i32
    return %c0_i32, %c0_i32_0 : i32, i32
  }
  func.func @transform_6(%arg0: i32) -> (i32, i32) {
    %c0_i32 = arith.constant 0 : i32
    %c0_i32_0 = arith.constant 0 : i32
    %c0_i32_1 = arith.constant 0 : i32
    return %c0_i32, %c0_i32_0 : i32, i32
  }
  func.func @transform_7(%arg0: i32) -> (i32, i32) {
    %c0_i32 = arith.constant 0 : i32
    %c0_i32_0 = arith.constant 0 : i32
    %c0_i32_1 = arith.constant 0 : i32
    return %c0_i32, %c0_i32_0 : i32, i32
  }
  func.func @transform_8(%arg0: i32) -> (i32, i32) {
    %c0_i32 = arith.constant 0 : i32
    %c0_i32_0 = arith.constant 0 : i32
    %c0_i32_1 = arith.constant 0 : i32
    return %c0_i32, %c0_i32_0 : i32, i32
  }
  func.func @transform_9(%arg0: i32) -> (i32, i32, i32) {
    %c0_i32 = arith.constant 0 : i32
    %c0_i32_0 = arith.constant 0 : i32
    %c0_i32_1 = arith.constant 0 : i32
    return %arg0, %c0_i32, %c0_i32_0 : i32, i32, i32
  }
}

</mosaic_0001>

<llo_original>
// kernel: tpu_custom_call.1
$region0: #{tpu_custom_call.1}
  #allocation0 [shape = 'u32[]', space=smem, size = 0x4, offset = 0x4, fixed_abs, tag = 'smem constant byte address 0x4 - core index']
  #allocation1 [shape = 'u32[144,128]{1,0:T(1,128)}', space=vmem, size = 0x12000, scoped, tag = 'internal scratch']
  #allocation2 [shape = 'f32[672,8]{1,0:T(8,128)}', space=vmem, size = 0x54000, scoped, tag = 'scratch operand']
  #allocation3 [shape = 'f32[672,8]{1,0:T(8,128)}', space=vmem, size = 0x54000, scoped, tag = 'scratch operand']
  %s0 = inlined_call_operand.vmem [shape: bf16[1,672,36], index: 0, kind: input, shape index: {}]
  %s1 = inlined_call_operand.vmem [shape: bf16[1,672,4], index: 1, kind: input, shape index: {}]
  %s2 = inlined_call_operand.vmem [shape: bf16[36,8], index: 2, kind: input, shape index: {}]
  %s3 = inlined_call_operand.vmem [shape: f32[1,8], index: 3, kind: input, shape index: {}]
  %s4 = inlined_call_operand.vmem [shape: bf16[9,8,8], index: 4, kind: input, shape index: {}]
  %s5 = inlined_call_operand.vmem [shape: f32[1,8], index: 5, kind: input, shape index: {}]
  %s6 = inlined_call_operand.vmem [shape: bf16[4,8], index: 6, kind: input, shape index: {}]
  %s7 = inlined_call_operand.vmem [shape: f32[1,8], index: 7, kind: input, shape index: {}]
  %s8 = inlined_call_operand.vmem [shape: f32[672,1], index: 8, kind: input, shape index: {}]
  %s9 = inlined_call_operand.hbm [shape: f32[1,8,128], index: 9, kind: output, shape index: {}]
  %s10 = sld [smem:[#allocation0]]
  $region46: #{tpu_custom_call.1} parent=0
    _
  %s12 = ssub.s32 1, %s10
  %s13 = scalar_select 0, %s12, %s10
  $region1: #{tpu_custom_call.1} parent=0
    #allocation4 [shape = 'u8[4096]{0}', space=vmem, size = 0x1000, scoped, tag = 'output window, operand 0, single buffered']
    #allocation5 [shape = 's32[1]{0}', space=sflag, size = 0x4, scoped, tag = 'scoped memory for tpu_custom_call.1']
    %14 = vsyncpa [#allocation5], 0
    // Predicated region
    $region2: #{tpu_custom_call.1} parent=1 // pred_check
      _
    $region3: #{tpu_custom_call.1} parent=1 // pred_check_branch
      %16 = sbr.rel (0) target = $region5
    $region4: #{tpu_custom_call.1} parent=1 // pred_region
      _
    $region5: #{tpu_custom_call.1} parent=1 // pred_fallthru
      _
    // Predicated region
    $region6: #{tpu_custom_call.1} parent=1 // pred_check
      _
    $region7: #{tpu_custom_call.1} parent=1 // pred_check_branch
      %18 = sbr.rel (0) target = $region9
    $region8: #{tpu_custom_call.1} parent=1 // pred_region
      _
    $region9: #{tpu_custom_call.1} parent=1 // pred_fallthru
      _
    // Predicated region
    $region10: #{tpu_custom_call.1} parent=1 // pred_check
      _
    $region11: #{tpu_custom_call.1} parent=1 // pred_check_branch
      %20 = sbr.rel (0) target = $region13
    $region12: #{tpu_custom_call.1} parent=1 // pred_region
      _
    $region13: #{tpu_custom_call.1} parent=1 // pred_fallthru
      _
    // Predicated region
    $region14: #{tpu_custom_call.1} parent=1 // pred_check
      _
    $region15: #{tpu_custom_call.1} parent=1 // pred_check_branch
      %22 = sbr.rel (0) target = $region17
    $region16: #{tpu_custom_call.1} parent=1 // pred_region
      _
    $region17: #{tpu_custom_call.1} parent=1 // pred_fallthru
      _
    // Predicated region
    $region18: #{tpu_custom_call.1} parent=1 // pred_check
      _
    $region19: #{tpu_custom_call.1} parent=1 // pred_check_branch
      %24 = sbr.rel (0) target = $region21
    $region20: #{tpu_custom_call.1} parent=1 // pred_region
      _
    $region21: #{tpu_custom_call.1} parent=1 // pred_fallthru
      _
    // Predicated region
    $region22: #{tpu_custom_call.1} parent=1 // pred_check
      _
    $region23: #{tpu_custom_call.1} parent=1 // pred_check_branch
      %26 = sbr.rel (0) target = $region25
    $region24: #{tpu_custom_call.1} parent=1 // pred_region
      _
    $region25: #{tpu_custom_call.1} parent=1 // pred_fallthru
      _
    // Predicated region
    $region26: #{tpu_custom_call.1} parent=1 // pred_check
      _
    $region27: #{tpu_custom_call.1} parent=1 // pred_check_branch
      %28 = sbr.rel (0) target = $region29
    $region28: #{tpu_custom_call.1} parent=1 // pred_region
      _
    $region29: #{tpu_custom_call.1} parent=1 // pred_fallthru
      _
    // Predicated region
    $region30: #{tpu_custom_call.1} parent=1 // pred_check
      _
    $region31: #{tpu_custom_call.1} parent=1 // pred_check_branch
      %30 = sbr.rel (0) target = $region33
    $region32: #{tpu_custom_call.1} parent=1 // pred_region
      _
    $region33: #{tpu_custom_call.1} parent=1 // pred_fallthru
      _
    // Predicated region
    $region34: #{tpu_custom_call.1} parent=1 // pred_check
      _
    $region35: #{tpu_custom_call.1} parent=1 // pred_check_branch
      %32 = sbr.rel (0) target = $region37
    $region36: #{tpu_custom_call.1} parent=1 // pred_region
      _
    $region37: #{tpu_custom_call.1} parent=1 // pred_fallthru
      _
    %v34 = vld [vmem:[%s0] sm:$0xf]
    %v35 = vld [vmem:[%s0 + $0x4] sm:$0xf]
    %v36 = vld [vmem:[%s0 + $0x8] sm:$0xf]
    %v37 = vld [vmem:[%s0 + $0xc] sm:$0xf]
    %v38 = vld [vmem:[%s0 + $0x10] sm:$0xf]
    %v39 = vld [vmem:[%s0 + $0x14] sm:$0xf]
    %v40 = vld [vmem:[%s0 + $0x18] sm:$0xf]
    %v41 = vld [vmem:[%s0 + $0x1c] sm:$0xf]
    %v42 = vld [vmem:[%s0 + $0x20] sm:$0xf]
    %v43 = vld [vmem:[%s0 + $0x24] sm:$0xf]
    %v44 = vld [vmem:[%s0 + $0x28] sm:$0xf]
    %v45 = vld [vmem:[%s0 + $0x2c] sm:$0xf]
    %v46 = vld [vmem:[%s0 + $0x30] sm:$0xf]
    %v47 = vld [vmem:[%s0 + $0x34] sm:$0xf]
    %v48 = vld [vmem:[%s0 + $0x38] sm:$0xf]
    %v49 = vld [vmem:[%s0 + $0x3c] sm:$0xf]
    %v50 = vld [vmem:[%s0 + $0x40] sm:$0xf]
    %v51 = vld [vmem:[%s0 + $0x44] sm:$0xf]
    %v52 = vld [vmem:[%s0 + $0x48] sm:$0xf]
    %v53 = vld [vmem:[%s0 + $0x4c] sm:$0xf]
    %v54 = vld [vmem:[%s0 + $0x50] sm:$0xf]
    %v55 = vld [vmem:[%s0 + $0x54] sm:$0xf]
    %v56 = vld [vmem:[%s0 + $0x58] sm:$0xf]
    %v57 = vld [vmem:[%s0 + $0x5c] sm:$0xf]
    %v58 = vld [vmem:[%s0 + $0x60] sm:$0xf]
    %v59 = vld [vmem:[%s0 + $0x64] sm:$0xf]
    %v60 = vld [vmem:[%s0 + $0x68] sm:$0xf]
    %v61 = vld [vmem:[%s0 + $0x6c] sm:$0xf]
    %v62 = vld [vmem:[%s0 + $0x70] sm:$0xf]
    %v63 = vld [vmem:[%s0 + $0x74] sm:$0xf]
    %v64 = vld [vmem:[%s0 + $0x78] sm:$0xf]
    %v65 = vld [vmem:[%s0 + $0x7c] sm:$0xf]
    %v66 = vld [vmem:[%s0 + $0x80] sm:$0xf]
    %v67 = vld [vmem:[%s0 + $0x84] sm:$0xf]
    %v68 = vld [vmem:[%s0 + $0x88] sm:$0xf]
    %v69 = vld [vmem:[%s0 + $0x8c] sm:$0xf]
    %v70 = vld [vmem:[%s0 + $0x90] sm:$0xf]
    %v71 = vld [vmem:[%s0 + $0x94] sm:$0xf]
    %v72 = vld [vmem:[%s0 + $0x98] sm:$0xf]
    %v73 = vld [vmem:[%s0 + $0x9c] sm:$0xf]
    %v74 = vld [vmem:[%s0 + $0xa0] sm:$0xf]
    %v75 = vld [vmem:[%s0 + $0xa4] sm:$0xf]
    %v76 = vld [vmem:[%s0 + $0xa8] sm:$0xf]
    %v77 = vld [vmem:[%s0 + $0xac] sm:$0xf]
    %v78 = vld [vmem:[%s0 + $0xb0] sm:$0xf]
    %v79 = vld [vmem:[%s0 + $0xb4] sm:$0xf]
    %v80 = vld [vmem:[%s0 + $0xb8] sm:$0xf]
    %v81 = vld [vmem:[%s0 + $0xbc] sm:$0xf]
    %v82 = vld [vmem:[%s0 + $0xc0] sm:$0xf]
    %v83 = vld [vmem:[%s0 + $0xc4] sm:$0xf]
    %v84 = vld [vmem:[%s0 + $0xc8] sm:$0xf]
    %v85 = vld [vmem:[%s0 + $0xcc] sm:$0xf]
    %v86 = vld [vmem:[%s0 + $0xd0] sm:$0xf]
    %v87 = vld [vmem:[%s0 + $0xd4] sm:$0xf]
    %v88 = vld [vmem:[%s0 + $0xd8] sm:$0xf]
    %v89 = vld [vmem:[%s0 + $0xdc] sm:$0xf]
    %v90 = vld [vmem:[%s0 + $0xe0] sm:$0xf]
    %v91 = vld [vmem:[%s0 + $0xe4] sm:$0xf]
    %v92 = vld [vmem:[%s0 + $0xe8] sm:$0xf]
    %v93 = vld [vmem:[%s0 + $0xec] sm:$0xf]
    %v94 = vld [vmem:[%s0 + $0xf0] sm:$0xf]
    %v95 = vld [vmem:[%s0 + $0xf4] sm:$0xf]
    %v96 = vld [vmem:[%s0 + $0xf8] sm:$0xf]
    %v97 = vld [vmem:[%s0 + $0xfc] sm:$0xf]
    %v98 = vld [vmem:[%s0 + $0x100] sm:$0xf]
    %v99 = vld [vmem:[%s0 + $0x104] sm:$0xf]
    %v100 = vld [vmem:[%s0 + $0x108] sm:$0xf]
    %v101 = vld [vmem:[%s0 + $0x10c] sm:$0xf]
    %v102 = vld [vmem:[%s0 + $0x110] sm:$0xf]
    %v103 = vld [vmem:[%s0 + $0x114] sm:$0xf]
    %v104 = vld [vmem:[%s0 + $0x118] sm:$0xf]
    %v105 = vld [vmem:[%s0 + $0x11c] sm:$0xf]
    %v106 = vld [vmem:[%s0 + $0x120] sm:$0xf]
    %v107 = vld [vmem:[%s0 + $0x124] sm:$0xf]
    %v108 = vld [vmem:[%s0 + $0x128] sm:$0xf]
    %v109 = vld [vmem:[%s0 + $0x12c] sm:$0xf]
    %v110 = vld [vmem:[%s0 + $0x130] sm:$0xf]
    %v111 = vld [vmem:[%s0 + $0x134] sm:$0xf]
    %v112 = vld [vmem:[%s0 + $0x138] sm:$0xf]
    %v113 = vld [vmem:[%s0 + $0x13c] sm:$0xf]
    %v114 = vld [vmem:[%s0 + $0x140] sm:$0xf]
    %v115 = vld [vmem:[%s0 + $0x144] sm:$0xf]
    %v116 = vld [vmem:[%s0 + $0x148] sm:$0xf]
    %v117 = vld [vmem:[%s0 + $0x14c] sm:$0xf]
    %v118 = vld [vmem:[%s2] sm:$0xf]
    %v119 = vld [vmem:[%s2 + $0x4] sm:$0xf]
    %v120 = vld [vmem:[%s2 + $0x8] sm:$0xf]
    %v121 = vld [vmem:[%s2 + $0xc] sm:$0xf]
    %v122 = vld [vmem:[%s2 + $0x10] sm:$0x3]
    %v123 = vld [vmem:[%s3] sm:$0x1]
    %v125 = vlaneseq
    %v126 = vshrl.u32 %v125, 7
    %v127 = vsub.s32 0, %v126
    %v128 = vrot.slane %v123, %v127
    %v214 = vunpack.c.l.b16 %v34
    %v215 = vunpack.c.l.b16 %v35
    %v216 = vunpack.c.l.b16 %v36
    %v217 = vunpack.c.l.b16 %v37
    %v218 = vunpack.c.l.b16 %v38
    %v219 = vunpack.c.l.b16 %v39
    %v220 = vunpack.c.l.b16 %v40
    %v221 = vunpack.c.l.b16 %v41
    %v222 = vunpack.c.l.b16 %v42
    %v223 = vunpack.c.l.b16 %v43
    %v224 = vunpack.c.l.b16 %v44
    %v225 = vunpack.c.l.b16 %v45
    %v226 = vunpack.c.l.b16 %v46
    %v227 = vunpack.c.l.b16 %v47
    %v228 = vunpack.c.l.b16 %v48
    %v229 = vunpack.c.l.b16 %v49
    %v230 = vunpack.c.l.b16 %v50
    %v231 = vunpack.c.l.b16 %v51
    %v232 = vunpack.c.l.b16 %v52
    %v233 = vunpack.c.l.b16 %v53
    %v234 = vunpack.c.l.b16 %v54
    %v235 = vunpack.c.l.b16 %v55
    %v236 = vunpack.c.l.b16 %v56
    %v237 = vunpack.c.l.b16 %v57
    %v238 = vunpack.c.l.b16 %v58
    %v239 = vunpack.c.l.b16 %v59
    %v240 = vunpack.c.l.b16 %v60
    %v241 = vunpack.c.l.b16 %v61
    %v242 = vunpack.c.l.b16 %v62
    %v243 = vunpack.c.l.b16 %v63
    %v244 = vunpack.c.l.b16 %v64
    %v245 = vunpack.c.l.b16 %v65
    %v246 = vunpack.c.l.b16 %v66
    %v247 = vunpack.c.l.b16 %v67
    %v248 = vunpack.c.l.b16 %v68
    %v249 = vunpack.c.l.b16 %v69
    %v250 = vunpack.c.l.b16 %v70
    %v251 = vunpack.c.l.b16 %v71
    %v252 = vunpack.c.l.b16 %v72
    %v253 = vunpack.c.l.b16 %v73
    %v254 = vunpack.c.l.b16 %v74
    %v255 = vunpack.c.l.b16 %v75
    %v256 = vunpack.c.l.b16 %v76
    %v257 = vunpack.c.l.b16 %v77
    %v258 = vunpack.c.l.b16 %v78
    %v259 = vunpack.c.l.b16 %v79
    %v260 = vunpack.c.l.b16 %v80
    %v261 = vunpack.c.l.b16 %v81
    %v262 = vunpack.c.l.b16 %v82
    %v263 = vunpack.c.l.b16 %v83
    %v264 = vunpack.c.l.b16 %v84
    %v265 = vunpack.c.l.b16 %v85
    %v266 = vunpack.c.l.b16 %v86
    %v267 = vunpack.c.l.b16 %v87
    %v268 = vunpack.c.l.b16 %v88
    %v269 = vunpack.c.l.b16 %v89
    %v270 = vunpack.c.l.b16 %v90
    %v271 = vunpack.c.l.b16 %v91
    %v272 = vunpack.c.l.b16 %v92
    %v273 = vunpack.c.l.b16 %v93
    %v274 = vunpack.c.l.b16 %v94
    %v275 = vunpack.c.l.b16 %v95
    %v276 = vunpack.c.l.b16 %v96
    %v277 = vunpack.c.l.b16 %v97
    %v278 = vunpack.c.l.b16 %v98
    %v279 = vunpack.c.l.b16 %v99
    %v280 = vunpack.c.l.b16 %v100
    %v281 = vunpack.c.l.b16 %v101
    %v282 = vunpack.c.l.b16 %v102
    %v283 = vunpack.c.l.b16 %v103
    %v284 = vunpack.c.l.b16 %v104
    %v285 = vunpack.c.l.b16 %v105
    %v286 = vunpack.c.l.b16 %v106
    %v287 = vunpack.c.l.b16 %v107
    %v288 = vunpack.c.l.b16 %v108
    %v289 = vunpack.c.l.b16 %v109
    %v290 = vunpack.c.l.b16 %v110
    %v291 = vunpack.c.l.b16 %v111
    %v292 = vunpack.c.l.b16 %v112
    %v293 = vunpack.c.l.b16 %v113
    %v294 = vunpack.c.l.b16 %v114
    %v295 = vunpack.c.l.b16 %v115
    %v296 = vunpack.c.l.b16 %v116
    %v297 = vunpack.c.l.b16 %v117
    %v298 = vpack.c.b16 %v215, %v214
    %v299 = vpack.c.b16 %v217, %v216
    %v300 = vpack.c.b16 %v219, %v218
    %v301 = vpack.c.b16 %v221, %v220
    %v302 = vpack.c.b16 %v223, %v222
    %v303 = vpack.c.b16 %v225, %v224
    %v304 = vpack.c.b16 %v227, %v226
    %v305 = vpack.c.b16 %v229, %v228
    %v306 = vpack.c.b16 %v231, %v230
    %v307 = vpack.c.b16 %v233, %v232
    %v308 = vpack.c.b16 %v235, %v234
    %v309 = vpack.c.b16 %v237, %v236
    %v310 = vpack.c.b16 %v239, %v238
    %v311 = vpack.c.b16 %v241, %v240
    %v312 = vpack.c.b16 %v243, %v242
    %v313 = vpack.c.b16 %v245, %v244
    %v314 = vpack.c.b16 %v247, %v246
    %v315 = vpack.c.b16 %v249, %v248
    %v316 = vpack.c.b16 %v251, %v250
    %v317 = vpack.c.b16 %v253, %v252
    %v318 = vpack.c.b16 %v255, %v254
    %v319 = vpack.c.b16 %v257, %v256
    %v320 = vpack.c.b16 %v259, %v258
    %v321 = vpack.c.b16 %v261, %v260
    %v322 = vpack.c.b16 %v263, %v262
    %v323 = vpack.c.b16 %v265, %v264
    %v324 = vpack.c.b16 %v267, %v266
    %v325 = vpack.c.b16 %v269, %v268
    %v326 = vpack.c.b16 %v271, %v270
    %v327 = vpack.c.b16 %v273, %v272
    %v328 = vpack.c.b16 %v275, %v274
    %v329 = vpack.c.b16 %v277, %v276
    %v330 = vpack.c.b16 %v279, %v278
    %v331 = vpack.c.b16 %v281, %v280
    %v332 = vpack.c.b16 %v283, %v282
    %v333 = vpack.c.b16 %v285, %v284
    %v334 = vpack.c.b16 %v287, %v286
    %v335 = vpack.c.b16 %v289, %v288
    %v336 = vpack.c.b16 %v291, %v290
    %v337 = vpack.c.b16 %v293, %v292
    %v338 = vpack.c.b16 %v295, %v294
    %v339 = vpack.c.b16 %v297, %v296
    %v345 = vunpack.c.l.b16 %v118
    %v346 = vunpack.c.l.b16 %v119
    %v347 = vunpack.c.l.b16 %v120
    %v348 = vunpack.c.l.b16 %v121
    %v349 = vunpack.c.l.b16 %v122
    %v350 = vpack.c.b16 %v346, %v345
    %v351 = vpack.c.b16 %v348, %v347
    %v352 = vpack.c.b16 %v349, %v349
    %vm355 = vcmask 293888
    %v357 = vsel %vm355, %v298, 0
    %v360 = vsel %vm355, %v299, 0
    %v363 = vsel %vm355, %v300, 0
    %v366 = vsel %vm355, %v301, 0
    %v369 = vsel %vm355, %v302, 0
    %v372 = vsel %vm355, %v303, 0
    %v375 = vsel %vm355, %v304, 0
    %v378 = vsel %vm355, %v305, 0
    %v381 = vsel %vm355, %v306, 0
    %v384 = vsel %vm355, %v307, 0
    %v387 = vsel %vm355, %v308, 0
    %v390 = vsel %vm355, %v309, 0
    %v393 = vsel %vm355, %v310, 0
    %v396 = vsel %vm355, %v311, 0
    %v399 = vsel %vm355, %v312, 0
    %v402 = vsel %vm355, %v313, 0
    %v405 = vsel %vm355, %v314, 0
    %v408 = vsel %vm355, %v315, 0
    %v411 = vsel %vm355, %v316, 0
    %v414 = vsel %vm355, %v317, 0
    %v417 = vsel %vm355, %v318, 0
    %v420 = vsel %vm355, %v319, 0
    %v423 = vsel %vm355, %v320, 0
    %v426 = vsel %vm355, %v321, 0
    %v429 = vsel %vm355, %v322, 0
    %v432 = vsel %vm355, %v323, 0
    %v435 = vsel %vm355, %v324, 0
    %v438 = vsel %vm355, %v325, 0
    %v441 = vsel %vm355, %v326, 0
    %v444 = vsel %vm355, %v327, 0
    %v447 = vsel %vm355, %v328, 0
    %v450 = vsel %vm355, %v329, 0
    %v453 = vsel %vm355, %v330, 0
    %v456 = vsel %vm355, %v331, 0
    %v459 = vsel %vm355, %v332, 0
    %v462 = vsel %vm355, %v333, 0
    %v465 = vsel %vm355, %v334, 0
    %v468 = vsel %vm355, %v335, 0
    %v471 = vsel %vm355, %v336, 0
    %v474 = vsel %vm355, %v337, 0
    %v477 = vsel %vm355, %v338, 0
    %v480 = vsel %vm355, %v339, 0
    %vm482 = vcmask 1041408
    %v484 = vsel %vm482, %v352, 0
    %486 = vmatprep.subr.bf16.mxu0 0
    %487 = vmatpush1.bf16.msra.mxu0 %v350
    %488 = vmatprep.subr.bf16.mxu0 0
    %489 = vmatpush1.bf16.msra.mxu0 %v351
    %490 = vmatprep.subr.bf16.mxu0 0
    %491 = vmatpush1.bf16.msra.mxu0 %v484
    %492 = vmatprep.subr.bf16.mxu0 0
    %493 = vmatpush1.bf16.msra.mxu0 0
    %494 = vmatprep.subr.bf16.mxu0 0
    %495 = vmatpush1.bf16.msra.mxu0 0
    %496 = vmatprep.subr.bf16.mxu0 0
    %497 = vmatpush1.bf16.msra.mxu0 0
    %498 = vmatprep.subr.bf16.mxu0 0
    %499 = vmatpush1.bf16.msra.mxu0 0
    %500 = vmatprep.subr.bf16.mxu0 0
    %501 = vmatpush1.bf16.msra.mxu0 0
    %502 = vmatprep.subr.bf16.mxu0 0
    %503 = vmatpush1.bf16.msra.mxu0 0
    %504 = vmatprep.subr.bf16.mxu0 0
    %505 = vmatpush1.bf16.msra.mxu0 0
    %506 = vmatprep.subr.bf16.mxu0 0
    %507 = vmatpush1.bf16.msra.mxu0 0
    %508 = vmatprep.subr.bf16.mxu0 0
    %509 = vmatpush1.bf16.msra.mxu0 0
    %510 = vmatprep.subr.bf16.mxu0 0
    %511 = vmatpush1.bf16.msra.mxu0 0
    %512 = vmatprep.subr.bf16.mxu0 0
    %513 = vmatpush1.bf16.msra.mxu0 0
    %514 = vmatprep.subr.bf16.mxu0 0
    %515 = vmatpush1.bf16.msra.mxu0 0
    %516 = vmatprep.subr.bf16.mxu0 0
    %517 = vmatpush1.bf16.msra.mxu0 0
    %518 = vmatprep.mubr.bf16.mxu0 0
    %519 = vmatmul.mubr.bf16.gmra.mrb[0].mxu0 %v357
    %v520 = vpop.f32.mrb[0].mxu0
    %v521 = vadd.f32 %v128, %v520
    %v522 = vpop.f32.mrb[0].mxu0
    %v523 = vpop.f32.mrb[0].mxu0
    %v524 = vadd.f32 %v128, %v523
    %v525 = vpop.f32.mrb[0].mxu0
    %526 = vmatprep.mubr.bf16.mxu0 0
    %527 = vmatmul.mubr.bf16.gmra.mrb[0].mxu0 %v360
    %v528 = vpop.f32.mrb[0].mxu0
    %v529 = vadd.f32 %v128, %v528
    %v530 = vpop.f32.mrb[0].mxu0
    %v531 = vpop.f32.mrb[0].mxu0
    %v532 = vadd.f32 %v128, %v531
    %v533 = vpop.f32.mrb[0].mxu0
    %534 = vmatprep.mubr.bf16.mxu0 0
    %535 = vmatmul.mubr.bf16.gmra.mrb[0].mxu0 %v363
    %v536 = vpop.f32.mrb[0].mxu0
    %v537 = vadd.f32 %v128, %v536
    %v538 = vpop.f32.mrb[0].mxu0
    %v539 = vpop.f32.mrb[0].mxu0
    %v540 = vadd.f32 %v128, %v539
    %v541 = vpop.f32.mrb[0].mxu0
    %542 = vmatprep.mubr.bf16.mxu0 0
    %543 = vmatmul.mubr.bf16.gmra.mrb[0].mxu0 %v366
    %v544 = vpop.f32.mrb[0].mxu0
    %v545 = vadd.f32 %v128, %v544
    %v546 = vpop.f32.mrb[0].mxu0
    %v547 = vpop.f32.mrb[0].mxu0
    %v548 = vadd.f32 %v128, %v547
    %v549 = vpop.f32.mrb[0].mxu0
    %550 = vmatprep.mubr.bf16.mxu0 0
    %551 = vmatmul.mubr.bf16.gmra.mrb[0].mxu0 %v369
    %v552 = vpop.f32.mrb[0].mxu0
    %v553 = vadd.f32 %v128, %v552
    %v554 = vpop.f32.mrb[0].mxu0
    %v555 = vpop.f32.mrb[0].mxu0
    %v556 = vadd.f32 %v128, %v555
    %v557 = vpop.f32.mrb[0].mxu0
    %558 = vmatprep.mubr.bf16.mxu0 0
    %559 = vmatmul.mubr.bf16.gmra.mrb[0].mxu0 %v372
    %v560 = vpop.f32.mrb[0].mxu0
    %v561 = vadd.f32 %v128, %v560
    %v562 = vpop.f32.mrb[0].mxu0
    %v563 = vpop.f32.mrb[0].mxu0
    %v564 = vadd.f32 %v128, %v563
    %v565 = vpop.f32.mrb[0].mxu0
    %566 = vmatprep.mubr.bf16.mxu0 0
    %567 = vmatmul.mubr.bf16.gmra.mrb[0].mxu0 %v375
    %v568 = vpop.f32.mrb[0].mxu0
    %v569 = vadd.f32 %v128, %v568
    %v570 = vpop.f32.mrb[0].mxu0
    %v571 = vpop.f32.mrb[0].mxu0
    %v572 = vadd.f32 %v128, %v571
    %v573 = vpop.f32.mrb[0].mxu0
    %574 = vmatprep.mubr.bf16.mxu0 0
    %575 = vmatmul.mubr.bf16.gmra.mrb[0].mxu0 %v378
    %v576 = vpop.f32.mrb[0].mxu0
    %v577 = vadd.f32 %v128, %v576
    %v578 = vpop.f32.mrb[0].mxu0
    %v579 = vpop.f32.mrb[0].mxu0
    %v580 = vadd.f32 %v128, %v579
    %v581 = vpop.f32.mrb[0].mxu0
    %582 = vmatprep.mubr.bf16.mxu0 0
    %583 = vmatmul.mubr.bf16.gmra.mrb[0].mxu0 %v381
    %v584 = vpop.f32.mrb[0].mxu0
    %v585 = vadd.f32 %v128, %v584
    %v586 = vpop.f32.mrb[0].mxu0
    %v587 = vpop.f32.mrb[0].mxu0
    %v588 = vadd.f32 %v128, %v587
    %v589 = vpop.f32.mrb[0].mxu0
    %590 = vmatprep.mubr.bf16.mxu0 0
    %591 = vmatmul.mubr.bf16.gmra.mrb[0].mxu0 %v384
    %v592 = vpop.f32.mrb[0].mxu0
    %v593 = vadd.f32 %v128, %v592
    %v594 = vpop.f32.mrb[0].mxu0
    %v595 = vpop.f32.mrb[0].mxu0
    %v596 = vadd.f32 %v128, %v595
    %v597 = vpop.f32.mrb[0].mxu0
    %598 = vmatprep.mubr.bf16.mxu0 0
    %599 = vmatmul.mubr.bf16.gmra.mrb[0].mxu0 %v387
    %v600 = vpop.f32.mrb[0].mxu0
    %v601 = vadd.f32 %v128, %v600
    %v602 = vpop.f32.mrb[0].mxu0
    %v603 = vpop.f32.mrb[0].mxu0
    %v604 = vadd.f32 %v128, %v603
    %v605 = vpop.f32.mrb[0].mxu0
    %606 = vmatprep.mubr.bf16.mxu0 0
    %607 = vmatmul.mubr.bf16.gmra.mrb[0].mxu0 %v390
    %v608 = vpop.f32.mrb[0].mxu0
    %v609 = vadd.f32 %v128, %v608
    %v610 = vpop.f32.mrb[0].mxu0
    %v611 = vpop.f32.mrb[0].mxu0
    %v612 = vadd.f32 %v128, %v611
    %v613 = vpop.f32.mrb[0].mxu0
    %614 = vmatprep.mubr.bf16.mxu0 0
    %615 = vmatmul.mubr.bf16.gmra.mrb[0].mxu0 %v393
    %v616 = vpop.f32.mrb[0].mxu0
    %v617 = vadd.f32 %v128, %v616
    %v618 = vpop.f32.mrb[0].mxu0
    %v619 = vpop.f32.mrb[0].mxu0
    %v620 = vadd.f32 %v128, %v619
    %v621 = vpop.f32.mrb[0].mxu0
    %622 = vmatprep.mubr.bf16.mxu0 0
    %623 = vmatmul.mubr.bf16.gmra.mrb[0].mxu0 %v396
    %v624 = vpop.f32.mrb[0].mxu0
    %v625 = vadd.f32 %v128, %v624
    %v626 = vpop.f32.mrb[0].mxu0
    %v627 = vpop.f32.mrb[0].mxu0
    %v628 = vadd.f32 %v128, %v627
    %v629 = vpop.f32.mrb[0].mxu0
    %630 = vmatprep.mubr.bf16.mxu0 0
    %631 = vmatmul.mubr.bf16.gmra.mrb[0].mxu0 %v399
    %v632 = vpop.f32.mrb[0].mxu0
    %v633 = vadd.f32 %v128, %v632
    %v634 = vpop.f32.mrb[0].mxu0
    %v635 = vpop.f32.mrb[0].mxu0
    %v636 = vadd.f32 %v128, %v635
    %v637 = vpop.f32.mrb[0].mxu0
    %638 = vmatprep.mubr.bf16.mxu0 0
    %639 = vmatmul.mubr.bf16.gmra.mrb[0].mxu0 %v402
    %v640 = vpop.f32.mrb[0].mxu0
    %v641 = vadd.f32 %v128, %v640
    %v642 = vpop.f32.mrb[0].mxu0
    %v643 = vpop.f32.mrb[0].mxu0
    %v644 = vadd.f32 %v128, %v643
    %v645 = vpop.f32.mrb[0].mxu0
    %646 = vmatprep.mubr.bf16.mxu0 0
    %647 = vmatmul.mubr.bf16.gmra.mrb[0].mxu0 %v405
    %v648 = vpop.f32.mrb[0].mxu0
    %v649 = vadd.f32 %v128, %v648
    %v650 = vpop.f32.mrb[0].mxu0
    %v651 = vpop.f32.mrb[0].mxu0
    %v652 = vadd.f32 %v128, %v651
    %v653 = vpop.f32.mrb[0].mxu0
    %654 = vmatprep.mubr.bf16.mxu0 0
    %655 = vmatmul.mubr.bf16.gmra.mrb[0].mxu0 %v408
    %v656 = vpop.f32.mrb[0].mxu0
    %v657 = vadd.f32 %v128, %v656
    %v658 = vpop.f32.mrb[0].mxu0
    %v659 = vpop.f32.mrb[0].mxu0
    %v660 = vadd.f32 %v128, %v659
    %v661 = vpop.f32.mrb[0].mxu0
    %662 = vmatprep.mubr.bf16.mxu0 0
    %663 = vmatmul.mubr.bf16.gmra.mrb[0].mxu0 %v411
    %v664 = vpop.f32.mrb[0].mxu0
    %v665 = vadd.f32 %v128, %v664
    %v666 = vpop.f32.mrb[0].mxu0
    %v667 = vpop.f32.mrb[0].mxu0
    %v668 = vadd.f32 %v128, %v667
    %v669 = vpop.f32.mrb[0].mxu0
    %670 = vmatprep.mubr.bf16.mxu0 0
    %671 = vmatmul.mubr.bf16.gmra.mrb[0].mxu0 %v414
    %v672 = vpop.f32.mrb[0].mxu0
    %v673 = vadd.f32 %v128, %v672
    %v674 = vpop.f32.mrb[0].mxu0
    %v675 = vpop.f32.mrb[0].mxu0
    %v676 = vadd.f32 %v128, %v675
    %v677 = vpop.f32.mrb[0].mxu0
    %678 = vmatprep.mubr.bf16.mxu0 0
    %679 = vmatmul.mubr.bf16.gmra.mrb[0].mxu0 %v417
    %v680 = vpop.f32.mrb[0].mxu0
    %v681 = vadd.f32 %v128, %v680
    %v682 = vpop.f32.mrb[0].mxu0
    %v683 = vpop.f32.mrb[0].mxu0
    %v684 = vadd.f32 %v128, %v683
    %v685 = vpop.f32.mrb[0].mxu0
    %686 = vmatprep.mubr.bf16.mxu0 0
    %687 = vmatmul.mubr.bf16.gmra.mrb[0].mxu0 %v420
    %v688 = vpop.f32.mrb[0].mxu0
    %v689 = vadd.f32 %v128, %v688
    %v690 = vpop.f32.mrb[0].mxu0
    %v691 = vpop.f32.mrb[0].mxu0
    %v692 = vadd.f32 %v128, %v691
    %v693 = vpop.f32.mrb[0].mxu0
    %694 = vmatprep.mubr.bf16.mxu0 0
    %695 = vmatmul.mubr.bf16.gmra.mrb[0].mxu0 %v423
    %v696 = vpop.f32.mrb[0].mxu0
    %v697 = vadd.f32 %v128, %v696
    %v698 = vpop.f32.mrb[0].mxu0
    %v699 = vpop.f32.mrb[0].mxu0
    %v700 = vadd.f32 %v128, %v699
    %v701 = vpop.f32.mrb[0].mxu0
    %702 = vmatprep.mubr.bf16.mxu0 0
    %703 = vmatmul.mubr.bf16.gmra.mrb[0].mxu0 %v426
    %v704 = vpop.f32.mrb[0].mxu0
    %v705 = vadd.f32 %v128, %v704
    %v706 = vpop.f32.mrb[0].mxu0
    %v707 = vpop.f32.mrb[0].mxu0
    %v708 = vadd.f32 %v128, %v707
    %v709 = vpop.f32.mrb[0].mxu0
    %710 = vmatprep.mubr.bf16.mxu0 0
    %711 = vmatmul.mubr.bf16.gmra.mrb[0].mxu0 %v429
    %v712 = vpop.f32.mrb[0].mxu0
    %v713 = vadd.f32 %v128, %v712
    %v714 = vpop.f32.mrb[0].mxu0
    %v715 = vpop.f32.mrb[0].mxu0
    %v716 = vadd.f32 %v128, %v715
    %v717 = vpop.f32.mrb[0].mxu0
    %718 = vmatprep.mubr.bf16.mxu0 0
    %719 = vmatmul.mubr.bf16.gmra.mrb[0].mxu0 %v432
    %v720 = vpop.f32.mrb[0].mxu0
    %v721 = vadd.f32 %v128, %v720
    %v722 = vpop.f32.mrb[0].mxu0
    %v723 = vpop.f32.mrb[0].mxu0
    %v724 = vadd.f32 %v128, %v723
    %v725 = vpop.f32.mrb[0].mxu0
    %726 = vmatprep.mubr.bf16.mxu0 0
    %727 = vmatmul.mubr.bf16.gmra.mrb[0].mxu0 %v435
    %v728 = vpop.f32.mrb[0].mxu0
    %v729 = vadd.f32 %v128, %v728
    %v730 = vpop.f32.mrb[0].mxu0
    %v731 = vpop.f32.mrb[0].mxu0
    %v732 = vadd.f32 %v128, %v731
    %v733 = vpop.f32.mrb[0].mxu0
    %734 = vmatprep.mubr.bf16.mxu0 0
    %735 = vmatmul.mubr.bf16.gmra.mrb[0].mxu0 %v438
    %v736 = vpop.f32.mrb[0].mxu0
    %v737 = vadd.f32 %v128, %v736
    %v738 = vpop.f32.mrb[0].mxu0
    %v739 = vpop.f32.mrb[0].mxu0
    %v740 = vadd.f32 %v128, %v739
    %v741 = vpop.f32.mrb[0].mxu0
    %742 = vmatprep.mubr.bf16.mxu0 0
    %743 = vmatmul.mubr.bf16.gmra.mrb[0].mxu0 %v441
    %v744 = vpop.f32.mrb[0].mxu0
    %v745 = vadd.f32 %v128, %v744
    %v746 = vpop.f32.mrb[0].mxu0
    %v747 = vpop.f32.mrb[0].mxu0
    %v748 = vadd.f32 %v128, %v747
    %v749 = vpop.f32.mrb[0].mxu0
    %750 = vmatprep.mubr.bf16.mxu0 0
    %751 = vmatmul.mubr.bf16.gmra.mrb[0].mxu0 %v444
    %v752 = vpop.f32.mrb[0].mxu0
    %v753 = vadd.f32 %v128, %v752
    %v754 = vpop.f32.mrb[0].mxu0
    %v755 = vpop.f32.mrb[0].mxu0
    %v756 = vadd.f32 %v128, %v755
    %v757 = vpop.f32.mrb[0].mxu0
    %758 = vmatprep.mubr.bf16.mxu0 0
    %759 = vmatmul.mubr.bf16.gmra.mrb[0].mxu0 %v447
    %v760 = vpop.f32.mrb[0].mxu0
    %v761 = vadd.f32 %v128, %v760
    %v762 = vpop.f32.mrb[0].mxu0
    %v763 = vpop.f32.mrb[0].mxu0
    %v764 = vadd.f32 %v128, %v763
    %v765 = vpop.f32.mrb[0].mxu0
    %766 = vmatprep.mubr.bf16.mxu0 0
    %767 = vmatmul.mubr.bf16.gmra.mrb[0].mxu0 %v450
    %v768 = vpop.f32.mrb[0].mxu0
    %v769 = vadd.f32 %v128, %v768
    %v770 = vpop.f32.mrb[0].mxu0
    %v771 = vpop.f32.mrb[0].mxu0
    %v772 = vadd.f32 %v128, %v771
    %v773 = vpop.f32.mrb[0].mxu0
    %774 = vmatprep.mubr.bf16.mxu0 0
    %775 = vmatmul.mubr.bf16.gmra.mrb[0].mxu0 %v453
    %v776 = vpop.f32.mrb[0].mxu0
    %v777 = vadd.f32 %v128, %v776
    %v778 = vpop.f32.mrb[0].mxu0
    %v779 = vpop.f32.mrb[0].mxu0
    %v780 = vadd.f32 %v128, %v779
    %v781 = vpop.f32.mrb[0].mxu0
    %782 = vmatprep.mubr.bf16.mxu0 0
    %783 = vmatmul.mubr.bf16.gmra.mrb[0].mxu0 %v456
    %v784 = vpop.f32.mrb[0].mxu0
    %v785 = vadd.f32 %v128, %v784
    %v786 = vpop.f32.mrb[0].mxu0
    %v787 = vpop.f32.mrb[0].mxu0
    %v788 = vadd.f32 %v128, %v787
    %v789 = vpop.f32.mrb[0].mxu0
    %790 = vmatprep.mubr.bf16.mxu0 0
    %791 = vmatmul.mubr.bf16.gmra.mrb[0].mxu0 %v459
    %v792 = vpop.f32.mrb[0].mxu0
    %v793 = vadd.f32 %v128, %v792
    %v794 = vpop.f32.mrb[0].mxu0
    %v795 = vpop.f32.mrb[0].mxu0
    %v796 = vadd.f32 %v128, %v795
    %v797 = vpop.f32.mrb[0].mxu0
    %798 = vmatprep.mubr.bf16.mxu0 0
    %799 = vmatmul.mubr.bf16.gmra.mrb[0].mxu0 %v462
    %v800 = vpop.f32.mrb[0].mxu0
    %v801 = vadd.f32 %v128, %v800
    %v802 = vpop.f32.mrb[0].mxu0
    %v803 = vpop.f32.mrb[0].mxu0
    %v804 = vadd.f32 %v128, %v803
    %v805 = vpop.f32.mrb[0].mxu0
    %806 = vmatprep.mubr.bf16.mxu0 0
    %807 = vmatmul.mubr.bf16.gmra.mrb[0].mxu0 %v465
    %v808 = vpop.f32.mrb[0].mxu0
    %v809 = vadd.f32 %v128, %v808
    %v810 = vpop.f32.mrb[0].mxu0
    %v811 = vpop.f32.mrb[0].mxu0
    %v812 = vadd.f32 %v128, %v811
    %v813 = vpop.f32.mrb[0].mxu0
    %814 = vmatprep.mubr.bf16.mxu0 0
    %815 = vmatmul.mubr.bf16.gmra.mrb[0].mxu0 %v468
    %v816 = vpop.f32.mrb[0].mxu0
    %v817 = vadd.f32 %v128, %v816
    %v818 = vpop.f32.mrb[0].mxu0
    %v819 = vpop.f32.mrb[0].mxu0
    %v820 = vadd.f32 %v128, %v819
    %v821 = vpop.f32.mrb[0].mxu0
    %822 = vmatprep.mubr.bf16.mxu0 0
    %823 = vmatmul.mubr.bf16.gmra.mrb[0].mxu0 %v471
    %v824 = vpop.f32.mrb[0].mxu0
    %v825 = vadd.f32 %v128, %v824
    %v826 = vpop.f32.mrb[0].mxu0
    %v827 = vpop.f32.mrb[0].mxu0
    %v828 = vadd.f32 %v128, %v827
    %v829 = vpop.f32.mrb[0].mxu0
    %830 = vmatprep.mubr.bf16.mxu0 0
    %831 = vmatmul.mubr.bf16.gmra.mrb[0].mxu0 %v474
    %v832 = vpop.f32.mrb[0].mxu0
    %v833 = vadd.f32 %v128, %v832
    %v834 = vpop.f32.mrb[0].mxu0
    %v835 = vpop.f32.mrb[0].mxu0
    %v836 = vadd.f32 %v128, %v835
    %v837 = vpop.f32.mrb[0].mxu0
    %838 = vmatprep.mubr.bf16.mxu0 0
    %839 = vmatmul.mubr.bf16.gmra.mrb[0].mxu0 %v477
    %v840 = vpop.f32.mrb[0].mxu0
    %v841 = vadd.f32 %v128, %v840
    %v842 = vpop.f32.mrb[0].mxu0
    %v843 = vpop.f32.mrb[0].mxu0
    %v844 = vadd.f32 %v128, %v843
    %v845 = vpop.f32.mrb[0].mxu0
    %846 = vmatprep.mubr.bf16.mxu0 0
    %847 = vmatmul.mubr.bf16.gmra.mrb[0].mxu0 %v480
    %v848 = vpop.f32.mrb[0].mxu0
    %v849 = vadd.f32 %v128, %v848
    %v850 = vpop.f32.mrb[0].mxu0
    %v851 = vpop.f32.mrb[0].mxu0
    %v852 = vadd.f32 %v128, %v851
    %v853 = vpop.f32.mrb[0].mxu0
    %854 = vdwg.mxu0
    %v855 = vmax.f32 %v521, 0.0
    %v856 = vmax.f32 %v524, 0.0
    %v857 = vmax.f32 %v529, 0.0
    %v858 = vmax.f32 %v532, 0.0
    %v859 = vmax.f32 %v537, 0.0
    %v860 = vmax.f32 %v540, 0.0
    %v861 = vmax.f32 %v545, 0.0
    %v862 = vmax.f32 %v548, 0.0
    %v863 = vmax.f32 %v553, 0.0
    %v864 = vmax.f32 %v556, 0.0
    %v865 = vmax.f32 %v561, 0.0
    %v866 = vmax.f32 %v564, 0.0
    %v867 = vmax.f32 %v569, 0.0
    %v868 = vmax.f32 %v572, 0.0
    %v869 = vmax.f32 %v577, 0.0
    %v870 = vmax.f32 %v580, 0.0
    %v871 = vmax.f32 %v585, 0.0
    %v872 = vmax.f32 %v588, 0.0
    %v873 = vmax.f32 %v593, 0.0
    %v874 = vmax.f32 %v596, 0.0
    %v875 = vmax.f32 %v601, 0.0
    %v876 = vmax.f32 %v604, 0.0
    %v877 = vmax.f32 %v609, 0.0
    %v878 = vmax.f32 %v612, 0.0
    %v879 = vmax.f32 %v617, 0.0
    %v880 = vmax.f32 %v620, 0.0
    %v881 = vmax.f32 %v625, 0.0
    %v882 = vmax.f32 %v628, 0.0
    %v883 = vmax.f32 %v633, 0.0
    %v884 = vmax.f32 %v636, 0.0
    %v885 = vmax.f32 %v641, 0.0
    %v886 = vmax.f32 %v644, 0.0
    %v887 = vmax.f32 %v649, 0.0
    %v888 = vmax.f32 %v652, 0.0
    %v889 = vmax.f32 %v657, 0.0
    %v890 = vmax.f32 %v660, 0.0
    %v891 = vmax.f32 %v665, 0.0
    %v892 = vmax.f32 %v668, 0.0
    %v893 = vmax.f32 %v673, 0.0
    %v894 = vmax.f32 %v676, 0.0
    %v895 = vmax.f32 %v681, 0.0
    %v896 = vmax.f32 %v684, 0.0
    %v897 = vmax.f32 %v689, 0.0
    %v898 = vmax.f32 %v692, 0.0
    %v899 = vmax.f32 %v697, 0.0
    %v900 = vmax.f32 %v700, 0.0
    %v901 = vmax.f32 %v705, 0.0
    %v902 = vmax.f32 %v708, 0.0
    %v903 = vmax.f32 %v713, 0.0
    %v904 = vmax.f32 %v716, 0.0
    %v905 = vmax.f32 %v721, 0.0
    %v906 = vmax.f32 %v724, 0.0
    %v907 = vmax.f32 %v729, 0.0
    %v908 = vmax.f32 %v732, 0.0
    %v909 = vmax.f32 %v737, 0.0
    %v910 = vmax.f32 %v740, 0.0
    %v911 = vmax.f32 %v745, 0.0
    %v912 = vmax.f32 %v748, 0.0
    %v913 = vmax.f32 %v753, 0.0
    %v914 = vmax.f32 %v756, 0.0
    %v915 = vmax.f32 %v761, 0.0
    %v916 = vmax.f32 %v764, 0.0
    %v917 = vmax.f32 %v769, 0.0
    %v918 = vmax.f32 %v772, 0.0
    %v919 = vmax.f32 %v777, 0.0
    %v920 = vmax.f32 %v780, 0.0
    %v921 = vmax.f32 %v785, 0.0
    %v922 = vmax.f32 %v788, 0.0
    %v923 = vmax.f32 %v793, 0.0
    %v924 = vmax.f32 %v796, 0.0
    %v925 = vmax.f32 %v801, 0.0
    %v926 = vmax.f32 %v804, 0.0
    %v927 = vmax.f32 %v809, 0.0
    %v928 = vmax.f32 %v812, 0.0
    %v929 = vmax.f32 %v817, 0.0
    %v930 = vmax.f32 %v820, 0.0
    %v931 = vmax.f32 %v825, 0.0
    %v932 = vmax.f32 %v828, 0.0
    %v933 = vmax.f32 %v833, 0.0
    %v934 = vmax.f32 %v836, 0.0
    %v935 = vmax.f32 %v841, 0.0
    %v936 = vmax.f32 %v844, 0.0
    %v937 = vmax.f32 %v849, 0.0
    %v938 = vmax.f32 %v852, 0.0
    %v939 = vld [vmem:[%s8] sm:$0xff]
    %v940 = vld [vmem:[%s8 + $0x8] sm:$0xff]
    %v941 = vld [vmem:[%s8 + $0x10] sm:$0xff]
    %v942 = vld [vmem:[%s8 + $0x18] sm:$0xff]
    %v943 = vld [vmem:[%s8 + $0x20] sm:$0xff]
    %v944 = vld [vmem:[%s8 + $0x28] sm:$0xff]
    %v945 = vld [vmem:[%s8 + $0x30] sm:$0xff]
    %v946 = vld [vmem:[%s8 + $0x38] sm:$0xff]
    %v947 = vld [vmem:[%s8 + $0x40] sm:$0xff]
    %v948 = vld [vmem:[%s8 + $0x48] sm:$0xff]
    %v949 = vld [vmem:[%s8 + $0x50] sm:$0xff]
    %v950 = vld [vmem:[%s8 + $0x58] sm:$0xff]
    %v951 = vld [vmem:[%s8 + $0x60] sm:$0xff]
    %v952 = vld [vmem:[%s8 + $0x68] sm:$0xff]
    %v953 = vld [vmem:[%s8 + $0x70] sm:$0xff]
    %v954 = vld [vmem:[%s8 + $0x78] sm:$0xff]
    %v955 = vld [vmem:[%s8 + $0x80] sm:$0xff]
    %v956 = vld [vmem:[%s8 + $0x88] sm:$0xff]
    %v957 = vld [vmem:[%s8 + $0x90] sm:$0xff]
    %v958 = vld [vmem:[%s8 + $0x98] sm:$0xff]
    %v959 = vld [vmem:[%s8 + $0xa0] sm:$0xff]
    %v960 = vld [vmem:[%s8 + $0xa8] sm:$0xff]
    %v961 = vld [vmem:[%s8 + $0xb0] sm:$0xff]
    %v962 = vld [vmem:[%s8 + $0xb8] sm:$0xff]
    %v963 = vld [vmem:[%s8 + $0xc0] sm:$0xff]
    %v964 = vld [vmem:[%s8 + $0xc8] sm:$0xff]
    %v965 = vld [vmem:[%s8 + $0xd0] sm:$0xff]
    %v966 = vld [vmem:[%s8 + $0xd8] sm:$0xff]
    %v967 = vld [vmem:[%s8 + $0xe0] sm:$0xff]
    %v968 = vld [vmem:[%s8 + $0xe8] sm:$0xff]
    %v969 = vld [vmem:[%s8 + $0xf0] sm:$0xff]
    %v970 = vld [vmem:[%s8 + $0xf8] sm:$0xff]
    %v971 = vld [vmem:[%s8 + $0x100] sm:$0xff]
    %v972 = vld [vmem:[%s8 + $0x108] sm:$0xff]
    %v973 = vld [vmem:[%s8 + $0x110] sm:$0xff]
    %v974 = vld [vmem:[%s8 + $0x118] sm:$0xff]
    %v975 = vld [vmem:[%s8 + $0x120] sm:$0xff]
    %v976 = vld [vmem:[%s8 + $0x128] sm:$0xff]
    %v977 = vld [vmem:[%s8 + $0x130] sm:$0xff]
    %v978 = vld [vmem:[%s8 + $0x138] sm:$0xff]
    %v979 = vld [vmem:[%s8 + $0x140] sm:$0xff]
    %v980 = vld [vmem:[%s8 + $0x148] sm:$0xff]
    %v981 = vld [vmem:[%s8 + $0x150] sm:$0xff]
    %v982 = vld [vmem:[%s8 + $0x158] sm:$0xff]
    %v983 = vld [vmem:[%s8 + $0x160] sm:$0xff]
    %v984 = vld [vmem:[%s8 + $0x168] sm:$0xff]
    %v985 = vld [vmem:[%s8 + $0x170] sm:$0xff]
    %v986 = vld [vmem:[%s8 + $0x178] sm:$0xff]
    %v987 = vld [vmem:[%s8 + $0x180] sm:$0xff]
    %v988 = vld [vmem:[%s8 + $0x188] sm:$0xff]
    %v989 = vld [vmem:[%s8 + $0x190] sm:$0xff]
    %v990 = vld [vmem:[%s8 + $0x198] sm:$0xff]
    %v991 = vld [vmem:[%s8 + $0x1a0] sm:$0xff]
    %v992 = vld [vmem:[%s8 + $0x1a8] sm:$0xff]
    %v993 = vld [vmem:[%s8 + $0x1b0] sm:$0xff]
    %v994 = vld [vmem:[%s8 + $0x1b8] sm:$0xff]
    %v995 = vld [vmem:[%s8 + $0x1c0] sm:$0xff]
    %v996 = vld [vmem:[%s8 + $0x1c8] sm:$0xff]
    %v997 = vld [vmem:[%s8 + $0x1d0] sm:$0xff]
    %v998 = vld [vmem:[%s8 + $0x1d8] sm:$0xff]
    %v999 = vld [vmem:[%s8 + $0x1e0] sm:$0xff]
    %v1000 = vld [vmem:[%s8 + $0x1e8] sm:$0xff]
    %v1001 = vld [vmem:[%s8 + $0x1f0] sm:$0xff]
    %v1002 = vld [vmem:[%s8 + $0x1f8] sm:$0xff]
    %v1003 = vld [vmem:[%s8 + $0x200] sm:$0xff]
    %v1004 = vld [vmem:[%s8 + $0x208] sm:$0xff]
    %v1005 = vld [vmem:[%s8 + $0x210] sm:$0xff]
    %v1006 = vld [vmem:[%s8 + $0x218] sm:$0xff]
    %v1007 = vld [vmem:[%s8 + $0x220] sm:$0xff]
    %v1008 = vld [vmem:[%s8 + $0x228] sm:$0xff]
    %v1009 = vld [vmem:[%s8 + $0x230] sm:$0xff]
    %v1010 = vld [vmem:[%s8 + $0x238] sm:$0xff]
    %v1011 = vld [vmem:[%s8 + $0x240] sm:$0xff]
    %v1012 = vld [vmem:[%s8 + $0x248] sm:$0xff]
    %v1013 = vld [vmem:[%s8 + $0x250] sm:$0xff]
    %v1014 = vld [vmem:[%s8 + $0x258] sm:$0xff]
    %v1015 = vld [vmem:[%s8 + $0x260] sm:$0xff]
    %v1016 = vld [vmem:[%s8 + $0x268] sm:$0xff]
    %v1017 = vld [vmem:[%s8 + $0x270] sm:$0xff]
    %v1018 = vld [vmem:[%s8 + $0x278] sm:$0xff]
    %v1019 = vld [vmem:[%s8 + $0x280] sm:$0xff]
    %v1020 = vld [vmem:[%s8 + $0x288] sm:$0xff]
    %v1021 = vld [vmem:[%s8 + $0x290] sm:$0xff]
    %v1022 = vld [vmem:[%s8 + $0x298] sm:$0xff]
    %1024 = vset.pattern.permute.xlu0 0
    %1025 = vperm.xlu0 %1024, %v939
    %v1026 = vpop.permute.xlu0 %1025
    %1029 = vset.pattern.permute.xlu0 0
    %1030 = vperm.xlu0 %1029, %v940
    %v1031 = vpop.permute.xlu0 %1030
    %1034 = vset.pattern.permute.xlu0 0
    %1035 = vperm.xlu0 %1034, %v941
    %v1036 = vpop.permute.xlu0 %1035
    %1039 = vset.pattern.permute.xlu0 0
    %1040 = vperm.xlu0 %1039, %v942
    %v1041 = vpop.permute.xlu0 %1040
    %1044 = vset.pattern.permute.xlu0 0
    %1045 = vperm.xlu0 %1044, %v943
    %v1046 = vpop.permute.xlu0 %1045
    %1049 = vset.pattern.permute.xlu0 0
    %1050 = vperm.xlu0 %1049, %v944
    %v1051 = vpop.permute.xlu0 %1050
    %1054 = vset.pattern.permute.xlu0 0
    %1055 = vperm.xlu0 %1054, %v945
    %v1056 = vpop.permute.xlu0 %1055
    %1059 = vset.pattern.permute.xlu0 0
    %1060 = vperm.xlu0 %1059, %v946
    %v1061 = vpop.permute.xlu0 %1060
    %1064 = vset.pattern.permute.xlu0 0
    %1065 = vperm.xlu0 %1064, %v947
    %v1066 = vpop.permute.xlu0 %1065
    %1069 = vset.pattern.permute.xlu0 0
    %1070 = vperm.xlu0 %1069, %v948
    %v1071 = vpop.permute.xlu0 %1070
    %1074 = vset.pattern.permute.xlu0 0
    %1075 = vperm.xlu0 %1074, %v949
    %v1076 = vpop.permute.xlu0 %1075
    %1079 = vset.pattern.permute.xlu0 0
    %1080 = vperm.xlu0 %1079, %v950
    %v1081 = vpop.permute.xlu0 %1080
    %1084 = vset.pattern.permute.xlu0 0
    %1085 = vperm.xlu0 %1084, %v951
    %v1086 = vpop.permute.xlu0 %1085
    %1089 = vset.pattern.permute.xlu0 0
    %1090 = vperm.xlu0 %1089, %v952
    %v1091 = vpop.permute.xlu0 %1090
    %1094 = vset.pattern.permute.xlu0 0
    %1095 = vperm.xlu0 %1094, %v953
    %v1096 = vpop.permute.xlu0 %1095
    %1099 = vset.pattern.permute.xlu0 0
    %1100 = vperm.xlu0 %1099, %v954
    %v1101 = vpop.permute.xlu0 %1100
    %1104 = vset.pattern.permute.xlu0 0
    %1105 = vperm.xlu0 %1104, %v955
    %v1106 = vpop.permute.xlu0 %1105
    %1109 = vset.pattern.permute.xlu0 0
    %1110 = vperm.xlu0 %1109, %v956
    %v1111 = vpop.permute.xlu0 %1110
    %1114 = vset.pattern.permute.xlu0 0
    %1115 = vperm.xlu0 %1114, %v957
    %v1116 = vpop.permute.xlu0 %1115
    %1119 = vset.pattern.permute.xlu0 0
    %1120 = vperm.xlu0 %1119, %v958
    %v1121 = vpop.permute.xlu0 %1120
    %1124 = vset.pattern.permute.xlu0 0
    %1125 = vperm.xlu0 %1124, %v959
    %v1126 = vpop.permute.xlu0 %1125
    %1129 = vset.pattern.permute.xlu0 0
    %1130 = vperm.xlu0 %1129, %v960
    %v1131 = vpop.permute.xlu0 %1130
    %1134 = vset.pattern.permute.xlu0 0
    %1135 = vperm.xlu0 %1134, %v961
    %v1136 = vpop.permute.xlu0 %1135
    %1139 = vset.pattern.permute.xlu0 0
    %1140 = vperm.xlu0 %1139, %v962
    %v1141 = vpop.permute.xlu0 %1140
    %1144 = vset.pattern.permute.xlu0 0
    %1145 = vperm.xlu0 %1144, %v963
    %v1146 = vpop.permute.xlu0 %1145
    %1149 = vset.pattern.permute.xlu0 0
    %1150 = vperm.xlu0 %1149, %v964
    %v1151 = vpop.permute.xlu0 %1150
    %1154 = vset.pattern.permute.xlu0 0
    %1155 = vperm.xlu0 %1154, %v965
    %v1156 = vpop.permute.xlu0 %1155
    %1159 = vset.pattern.permute.xlu0 0
    %1160 = vperm.xlu0 %1159, %v966
    %v1161 = vpop.permute.xlu0 %1160
    %1164 = vset.pattern.permute.xlu0 0
    %1165 = vperm.xlu0 %1164, %v967
    %v1166 = vpop.permute.xlu0 %1165
    %1169 = vset.pattern.permute.xlu0 0
    %1170 = vperm.xlu0 %1169, %v968
    %v1171 = vpop.permute.xlu0 %1170
    %1174 = vset.pattern.permute.xlu0 0
    %1175 = vperm.xlu0 %1174, %v969
    %v1176 = vpop.permute.xlu0 %1175
    %1179 = vset.pattern.permute.xlu0 0
    %1180 = vperm.xlu0 %1179, %v970
    %v1181 = vpop.permute.xlu0 %1180
    %1184 = vset.pattern.permute.xlu0 0
    %1185 = vperm.xlu0 %1184, %v971
    %v1186 = vpop.permute.xlu0 %1185
    %1189 = vset.pattern.permute.xlu0 0
    %1190 = vperm.xlu0 %1189, %v972
    %v1191 = vpop.permute.xlu0 %1190
    %1194 = vset.pattern.permute.xlu0 0
    %1195 = vperm.xlu0 %1194, %v973
    %v1196 = vpop.permute.xlu0 %1195
    %1199 = vset.pattern.permute.xlu0 0
    %1200 = vperm.xlu0 %1199, %v974
    %v1201 = vpop.permute.xlu0 %1200
    %1204 = vset.pattern.permute.xlu0 0
    %1205 = vperm.xlu0 %1204, %v975
    %v1206 = vpop.permute.xlu0 %1205
    %1209 = vset.pattern.permute.xlu0 0
    %1210 = vperm.xlu0 %1209, %v976
    %v1211 = vpop.permute.xlu0 %1210
    %1214 = vset.pattern.permute.xlu0 0
    %1215 = vperm.xlu0 %1214, %v977
    %v1216 = vpop.permute.xlu0 %1215
    %1219 = vset.pattern.permute.xlu0 0
    %1220 = vperm.xlu0 %1219, %v978
    %v1221 = vpop.permute.xlu0 %1220
    %1224 = vset.pattern.permute.xlu0 0
    %1225 = vperm.xlu0 %1224, %v979
    %v1226 = vpop.permute.xlu0 %1225
    %1229 = vset.pattern.permute.xlu0 0
    %1230 = vperm.xlu0 %1229, %v980
    %v1231 = vpop.permute.xlu0 %1230
    %1234 = vset.pattern.permute.xlu0 0
    %1235 = vperm.xlu0 %1234, %v981
    %v1236 = vpop.permute.xlu0 %1235
    %1239 = vset.pattern.permute.xlu0 0
    %1240 = vperm.xlu0 %1239, %v982
    %v1241 = vpop.permute.xlu0 %1240
    %1244 = vset.pattern.permute.xlu0 0
    %1245 = vperm.xlu0 %1244, %v983
    %v1246 = vpop.permute.xlu0 %1245
    %1249 = vset.pattern.permute.xlu0 0
    %1250 = vperm.xlu0 %1249, %v984
    %v1251 = vpop.permute.xlu0 %1250
    %1254 = vset.pattern.permute.xlu0 0
    %1255 = vperm.xlu0 %1254, %v985
    %v1256 = vpop.permute.xlu0 %1255
    %1259 = vset.pattern.permute.xlu0 0
    %1260 = vperm.xlu0 %1259, %v986
    %v1261 = vpop.permute.xlu0 %1260
    %1264 = vset.pattern.permute.xlu0 0
    %1265 = vperm.xlu0 %1264, %v987
    %v1266 = vpop.permute.xlu0 %1265
    %1269 = vset.pattern.permute.xlu0 0
    %1270 = vperm.xlu0 %1269, %v988
    %v1271 = vpop.permute.xlu0 %1270
    %1274 = vset.pattern.permute.xlu0 0
    %1275 = vperm.xlu0 %1274, %v989
    %v1276 = vpop.permute.xlu0 %1275
    %1279 = vset.pattern.permute.xlu0 0
    %1280 = vperm.xlu0 %1279, %v990
    %v1281 = vpop.permute.xlu0 %1280
    %1284 = vset.pattern.permute.xlu0 0
    %1285 = vperm.xlu0 %1284, %v991
    %v1286 = vpop.permute.xlu0 %1285
    %1289 = vset.pattern.permute.xlu0 0
    %1290 = vperm.xlu0 %1289, %v992
    %v1291 = vpop.permute.xlu0 %1290
    %1294 = vset.pattern.permute.xlu0 0
    %1295 = vperm.xlu0 %1294, %v993
    %v1296 = vpop.permute.xlu0 %1295
    %1299 = vset.pattern.permute.xlu0 0
    %1300 = vperm.xlu0 %1299, %v994
    %v1301 = vpop.permute.xlu0 %1300
    %1304 = vset.pattern.permute.xlu0 0
    %1305 = vperm.xlu0 %1304, %v995
    %v1306 = vpop.permute.xlu0 %1305
    %1309 = vset.pattern.permute.xlu0 0
    %1310 = vperm.xlu0 %1309, %v996
    %v1311 = vpop.permute.xlu0 %1310
    %1314 = vset.pattern.permute.xlu0 0
    %1315 = vperm.xlu0 %1314, %v997
    %v1316 = vpop.permute.xlu0 %1315
    %1319 = vset.pattern.permute.xlu0 0
    %1320 = vperm.xlu0 %1319, %v998
    %v1321 = vpop.permute.xlu0 %1320
    %1324 = vset.pattern.permute.xlu0 0
    %1325 = vperm.xlu0 %1324, %v999
    %v1326 = vpop.permute.xlu0 %1325
    %1329 = vset.pattern.permute.xlu0 0
    %1330 = vperm.xlu0 %1329, %v1000
    %v1331 = vpop.permute.xlu0 %1330
    %1334 = vset.pattern.permute.xlu0 0
    %1335 = vperm.xlu0 %1334, %v1001
    %v1336 = vpop.permute.xlu0 %1335
    %1339 = vset.pattern.permute.xlu0 0
    %1340 = vperm.xlu0 %1339, %v1002
    %v1341 = vpop.permute.xlu0 %1340
    %1344 = vset.pattern.permute.xlu0 0
    %1345 = vperm.xlu0 %1344, %v1003
    %v1346 = vpop.permute.xlu0 %1345
    %1349 = vset.pattern.permute.xlu0 0
    %1350 = vperm.xlu0 %1349, %v1004
    %v1351 = vpop.permute.xlu0 %1350
    %1354 = vset.pattern.permute.xlu0 0
    %1355 = vperm.xlu0 %1354, %v1005
    %v1356 = vpop.permute.xlu0 %1355
    %1359 = vset.pattern.permute.xlu0 0
    %1360 = vperm.xlu0 %1359, %v1006
    %v1361 = vpop.permute.xlu0 %1360
    %1364 = vset.pattern.permute.xlu0 0
    %1365 = vperm.xlu0 %1364, %v1007
    %v1366 = vpop.permute.xlu0 %1365
    %1369 = vset.pattern.permute.xlu0 0
    %1370 = vperm.xlu0 %1369, %v1008
    %v1371 = vpop.permute.xlu0 %1370
    %1374 = vset.pattern.permute.xlu0 0
    %1375 = vperm.xlu0 %1374, %v1009
    %v1376 = vpop.permute.xlu0 %1375
    %1379 = vset.pattern.permute.xlu0 0
    %1380 = vperm.xlu0 %1379, %v1010
    %v1381 = vpop.permute.xlu0 %1380
    %1384 = vset.pattern.permute.xlu0 0
    %1385 = vperm.xlu0 %1384, %v1011
    %v1386 = vpop.permute.xlu0 %1385
    %1389 = vset.pattern.permute.xlu0 0
    %1390 = vperm.xlu0 %1389, %v1012
    %v1391 = vpop.permute.xlu0 %1390
    %1394 = vset.pattern.permute.xlu0 0
    %1395 = vperm.xlu0 %1394, %v1013
    %v1396 = vpop.permute.xlu0 %1395
    %1399 = vset.pattern.permute.xlu0 0
    %1400 = vperm.xlu0 %1399, %v1014
    %v1401 = vpop.permute.xlu0 %1400
    %1404 = vset.pattern.permute.xlu0 0
    %1405 = vperm.xlu0 %1404, %v1015
    %v1406 = vpop.permute.xlu0 %1405
    %1409 = vset.pattern.permute.xlu0 0
    %1410 = vperm.xlu0 %1409, %v1016
    %v1411 = vpop.permute.xlu0 %1410
    %1414 = vset.pattern.permute.xlu0 0
    %1415 = vperm.xlu0 %1414, %v1017
    %v1416 = vpop.permute.xlu0 %1415
    %1419 = vset.pattern.permute.xlu0 0
    %1420 = vperm.xlu0 %1419, %v1018
    %v1421 = vpop.permute.xlu0 %1420
    %1424 = vset.pattern.permute.xlu0 0
    %1425 = vperm.xlu0 %1424, %v1019
    %v1426 = vpop.permute.xlu0 %1425
    %1429 = vset.pattern.permute.xlu0 0
    %1430 = vperm.xlu0 %1429, %v1020
    %v1431 = vpop.permute.xlu0 %1430
    %1434 = vset.pattern.permute.xlu0 0
    %1435 = vperm.xlu0 %1434, %v1021
    %v1436 = vpop.permute.xlu0 %1435
    %1439 = vset.pattern.permute.xlu0 0
    %1440 = vperm.xlu0 %1439, %v1022
    %v1441 = vpop.permute.xlu0 %1440
    %v1443 = vmul.f32 %v855, %v1026
    %v1444 = vmul.f32 %v856, %v1031
    %v1445 = vmul.f32 %v857, %v1036
    %v1446 = vmul.f32 %v858, %v1041
    %v1447 = vmul.f32 %v859, %v1046
    %v1448 = vmul.f32 %v860, %v1051
    %v1449 = vmul.f32 %v861, %v1056
    %v1450 = vmul.f32 %v862, %v1061
    %v1451 = vmul.f32 %v863, %v1066
    %v1452 = vmul.f32 %v864, %v1071
    %v1453 = vmul.f32 %v865, %v1076
    %v1454 = vmul.f32 %v866, %v1081
    %v1455 = vmul.f32 %v867, %v1086
    %v1456 = vmul.f32 %v868, %v1091
    %v1457 = vmul.f32 %v869, %v1096
    %v1458 = vmul.f32 %v870, %v1101
    %v1459 = vmul.f32 %v871, %v1106
    %v1460 = vmul.f32 %v872, %v1111
    %v1461 = vmul.f32 %v873, %v1116
    %v1462 = vmul.f32 %v874, %v1121
    %v1463 = vmul.f32 %v875, %v1126
    %v1464 = vmul.f32 %v876, %v1131
    %v1465 = vmul.f32 %v877, %v1136
    %v1466 = vmul.f32 %v878, %v1141
    %v1467 = vmul.f32 %v879, %v1146
    %v1468 = vmul.f32 %v880, %v1151
    %v1469 = vmul.f32 %v881, %v1156
    %v1470 = vmul.f32 %v882, %v1161
    %v1471 = vmul.f32 %v883, %v1166
    %v1472 = vmul.f32 %v884, %v1171
    %v1473 = vmul.f32 %v885, %v1176
    %v1474 = vmul.f32 %v886, %v1181
    %v1475 = vmul.f32 %v887, %v1186
    %v1476 = vmul.f32 %v888, %v1191
    %v1477 = vmul.f32 %v889, %v1196
    %v1478 = vmul.f32 %v890, %v1201
    %v1479 = vmul.f32 %v891, %v1206
    %v1480 = vmul.f32 %v892, %v1211
    %v1481 = vmul.f32 %v893, %v1216
    %v1482 = vmul.f32 %v894, %v1221
    %v1483 = vmul.f32 %v895, %v1226
    %v1484 = vmul.f32 %v896, %v1231
    %v1485 = vmul.f32 %v897, %v1236
    %v1486 = vmul.f32 %v898, %v1241
    %v1487 = vmul.f32 %v899, %v1246
    %v1488 = vmul.f32 %v900, %v1251
    %v1489 = vmul.f32 %v901, %v1256
    %v1490 = vmul.f32 %v902, %v1261
    %v1491 = vmul.f32 %v903, %v1266
    %v1492 = vmul.f32 %v904, %v1271
    %v1493 = vmul.f32 %v905, %v1276
    %v1494 = vmul.f32 %v906, %v1281
    %v1495 = vmul.f32 %v907, %v1286
    %v1496 = vmul.f32 %v908, %v1291
    %v1497 = vmul.f32 %v909, %v1296
    %v1498 = vmul.f32 %v910, %v1301
    %v1499 = vmul.f32 %v911, %v1306
    %v1500 = vmul.f32 %v912, %v1311
    %v1501 = vmul.f32 %v913, %v1316
    %v1502 = vmul.f32 %v914, %v1321
    %v1503 = vmul.f32 %v915, %v1326
    %v1504 = vmul.f32 %v916, %v1331
    %v1505 = vmul.f32 %v917, %v1336
    %v1506 = vmul.f32 %v918, %v1341
    %v1507 = vmul.f32 %v919, %v1346
    %v1508 = vmul.f32 %v920, %v1351
    %v1509 = vmul.f32 %v921, %v1356
    %v1510 = vmul.f32 %v922, %v1361
    %v1511 = vmul.f32 %v923, %v1366
    %v1512 = vmul.f32 %v924, %v1371
    %v1513 = vmul.f32 %v925, %v1376
    %v1514 = vmul.f32 %v926, %v1381
    %v1515 = vmul.f32 %v927, %v1386
    %v1516 = vmul.f32 %v928, %v1391
    %v1517 = vmul.f32 %v929, %v1396
    %v1518 = vmul.f32 %v930, %v1401
    %v1519 = vmul.f32 %v931, %v1406
    %v1520 = vmul.f32 %v932, %v1411
    %v1521 = vmul.f32 %v933, %v1416
    %v1522 = vmul.f32 %v934, %v1421
    %v1523 = vmul.f32 %v935, %v1426
    %v1524 = vmul.f32 %v936, %v1431
    %v1525 = vmul.f32 %v937, %v1436
    %v1526 = vmul.f32 %v938, %v1441
    %vm1527 = vcmask 64512
    %1528 = vst.msk [vmem:[#allocation2] sm:$0xff] %vm1527, %v1443
    %1529 = vst.msk [vmem:[#allocation2 + $0x8] sm:$0xff] %vm1527, %v1444
    %1530 = vst.msk [vmem:[#allocation2 + $0x10] sm:$0xff] %vm1527, %v1445
    %1531 = vst.msk [vmem:[#allocation2 + $0x18] sm:$0xff] %vm1527, %v1446
    %1532 = vst.msk [vmem:[#allocation2 + $0x20] sm:$0xff] %vm1527, %v1447
    %1533 = vst.msk [vmem:[#allocation2 + $0x28] sm:$0xff] %vm1527, %v1448
    %1534 = vst.msk [vmem:[#allocation2 + $0x30] sm:$0xff] %vm1527, %v1449
    %1535 = vst.msk [vmem:[#allocation2 + $0x38] sm:$0xff] %vm1527, %v1450
    %1536 = vst.msk [vmem:[#allocation2 + $0x40] sm:$0xff] %vm1527, %v1451
    %1537 = vst.msk [vmem:[#allocation2 + $0x48] sm:$0xff] %vm1527, %v1452
    %1538 = vst.msk [vmem:[#allocation2 + $0x50] sm:$0xff] %vm1527, %v1453
    %1539 = vst.msk [vmem:[#allocation2 + $0x58] sm:$0xff] %vm1527, %v1454
    %1540 = vst.msk [vmem:[#allocation2 + $0x60] sm:$0xff] %vm1527, %v1455
    %1541 = vst.msk [vmem:[#allocation2 + $0x68] sm:$0xff] %vm1527, %v1456
    %1542 = vst.msk [vmem:[#allocation2 + $0x70] sm:$0xff] %vm1527, %v1457
    %1543 = vst.msk [vmem:[#allocation2 + $0x78] sm:$0xff] %vm1527, %v1458
    %1544 = vst.msk [vmem:[#allocation2 + $0x80] sm:$0xff] %vm1527, %v1459
    %1545 = vst.msk [vmem:[#allocation2 + $0x88] sm:$0xff] %vm1527, %v1460
    %1546 = vst.msk [vmem:[#allocation2 + $0x90] sm:$0xff] %vm1527, %v1461
    %1547 = vst.msk [vmem:[#allocation2 + $0x98] sm:$0xff] %vm1527, %v1462
    %1548 = vst.msk [vmem:[#allocation2 + $0xa0] sm:$0xff] %vm1527, %v1463
    %1549 = vst.msk [vmem:[#allocation2 + $0xa8] sm:$0xff] %vm1527, %v1464
    %1550 = vst.msk [vmem:[#allocation2 + $0xb0] sm:$0xff] %vm1527, %v1465
    %1551 = vst.msk [vmem:[#allocation2 + $0xb8] sm:$0xff] %vm1527, %v1466
    %1552 = vst.msk [vmem:[#allocation2 + $0xc0] sm:$0xff] %vm1527, %v1467
    %1553 = vst.msk [vmem:[#allocation2 + $0xc8] sm:$0xff] %vm1527, %v1468
    %1554 = vst.msk [vmem:[#allocation2 + $0xd0] sm:$0xff] %vm1527, %v1469
    %1555 = vst.msk [vmem:[#allocation2 + $0xd8] sm:$0xff] %vm1527, %v1470
    %1556 = vst.msk [vmem:[#allocation2 + $0xe0] sm:$0xff] %vm1527, %v1471
    %1557 = vst.msk [vmem:[#allocation2 + $0xe8] sm:$0xff] %vm1527, %v1472
    %1558 = vst.msk [vmem:[#allocation2 + $0xf0] sm:$0xff] %vm1527, %v1473
    %1559 = vst.msk [vmem:[#allocation2 + $0xf8] sm:$0xff] %vm1527, %v1474
    %1560 = vst.msk [vmem:[#allocation2 + $0x100] sm:$0xff] %vm1527, %v1475
    %1561 = vst.msk [vmem:[#allocation2 + $0x108] sm:$0xff] %vm1527, %v1476
    %1562 = vst.msk [vmem:[#allocation2 + $0x110] sm:$0xff] %vm1527, %v1477
    %1563 = vst.msk [vmem:[#allocation2 + $0x118] sm:$0xff] %vm1527, %v1478
    %1564 = vst.msk [vmem:[#allocation2 + $0x120] sm:$0xff] %vm1527, %v1479
    %1565 = vst.msk [vmem:[#allocation2 + $0x128] sm:$0xff] %vm1527, %v1480
    %1566 = vst.msk [vmem:[#allocation2 + $0x130] sm:$0xff] %vm1527, %v1481
    %1567 = vst.msk [vmem:[#allocation2 + $0x138] sm:$0xff] %vm1527, %v1482
    %1568 = vst.msk [vmem:[#allocation2 + $0x140] sm:$0xff] %vm1527, %v1483
    %1569 = vst.msk [vmem:[#allocation2 + $0x148] sm:$0xff] %vm1527, %v1484
    %1570 = vst.msk [vmem:[#allocation2 + $0x150] sm:$0xff] %vm1527, %v1485
    %1571 = vst.msk [vmem:[#allocation2 + $0x158] sm:$0xff] %vm1527, %v1486
    %1572 = vst.msk [vmem:[#allocation2 + $0x160] sm:$0xff] %vm1527, %v1487
    %1573 = vst.msk [vmem:[#allocation2 + $0x168] sm:$0xff] %vm1527, %v1488
    %1574 = vst.msk [vmem:[#allocation2 + $0x170] sm:$0xff] %vm1527, %v1489
    %1575 = vst.msk [vmem:[#allocation2 + $0x178] sm:$0xff] %vm1527, %v1490
    %1576 = vst.msk [vmem:[#allocation2 + $0x180] sm:$0xff] %vm1527, %v1491
    %1577 = vst.msk [vmem:[#allocation2 + $0x188] sm:$0xff] %vm1527, %v1492
    %1578 = vst.msk [vmem:[#allocation2 + $0x190] sm:$0xff] %vm1527, %v1493
    %1579 = vst.msk [vmem:[#allocation2 + $0x198] sm:$0xff] %vm1527, %v1494
    %1580 = vst.msk [vmem:[#allocation2 + $0x1a0] sm:$0xff] %vm1527, %v1495
    %1581 = vst.msk [vmem:[#allocation2 + $0x1a8] sm:$0xff] %vm1527, %v1496
    %1582 = vst.msk [vmem:[#allocation2 + $0x1b0] sm:$0xff] %vm1527, %v1497
    %1583 = vst.msk [vmem:[#allocation2 + $0x1b8] sm:$0xff] %vm1527, %v1498
    %1584 = vst.msk [vmem:[#allocation2 + $0x1c0] sm:$0xff] %vm1527, %v1499
    %1585 = vst.msk [vmem:[#allocation2 + $0x1c8] sm:$0xff] %vm1527, %v1500
    %1586 = vst.msk [vmem:[#allocation2 + $0x1d0] sm:$0xff] %vm1527, %v1501
    %1587 = vst.msk [vmem:[#allocation2 + $0x1d8] sm:$0xff] %vm1527, %v1502
    %1588 = vst.msk [vmem:[#allocation2 + $0x1e0] sm:$0xff] %vm1527, %v1503
    %1589 = vst.msk [vmem:[#allocation2 + $0x1e8] sm:$0xff] %vm1527, %v1504
    %1590 = vst.msk [vmem:[#allocation2 + $0x1f0] sm:$0xff] %vm1527, %v1505
    %1591 = vst.msk [vmem:[#allocation2 + $0x1f8] sm:$0xff] %vm1527, %v1506
    %1592 = vst.msk [vmem:[#allocation2 + $0x200] sm:$0xff] %vm1527, %v1507
    %1593 = vst.msk [vmem:[#allocation2 + $0x208] sm:$0xff] %vm1527, %v1508
    %1594 = vst.msk [vmem:[#allocation2 + $0x210] sm:$0xff] %vm1527, %v1509
    %1595 = vst.msk [vmem:[#allocation2 + $0x218] sm:$0xff] %vm1527, %v1510
    %1596 = vst.msk [vmem:[#allocation2 + $0x220] sm:$0xff] %vm1527, %v1511
    %1597 = vst.msk [vmem:[#allocation2 + $0x228] sm:$0xff] %vm1527, %v1512
    %1598 = vst.msk [vmem:[#allocation2 + $0x230] sm:$0xff] %vm1527, %v1513
    %1599 = vst.msk [vmem:[#allocation2 + $0x238] sm:$0xff] %vm1527, %v1514
    %1600 = vst.msk [vmem:[#allocation2 + $0x240] sm:$0xff] %vm1527, %v1515
    %1601 = vst.msk [vmem:[#allocation2 + $0x248] sm:$0xff] %vm1527, %v1516
    %1602 = vst.msk [vmem:[#allocation2 + $0x250] sm:$0xff] %vm1527, %v1517
    %1603 = vst.msk [vmem:[#allocation2 + $0x258] sm:$0xff] %vm1527, %v1518
    %1604 = vst.msk [vmem:[#allocation2 + $0x260] sm:$0xff] %vm1527, %v1519
    %1605 = vst.msk [vmem:[#allocation2 + $0x268] sm:$0xff] %vm1527, %v1520
    %1606 = vst.msk [vmem:[#allocation2 + $0x270] sm:$0xff] %vm1527, %v1521
    %1607 = vst.msk [vmem:[#allocation2 + $0x278] sm:$0xff] %vm1527, %v1522
    %1608 = vst.msk [vmem:[#allocation2 + $0x280] sm:$0xff] %vm1527, %v1523
    %1609 = vst.msk [vmem:[#allocation2 + $0x288] sm:$0xff] %vm1527, %v1524
    %1610 = vst.msk [vmem:[#allocation2 + $0x290] sm:$0xff] %vm1527, %v1525
    %1611 = vst.msk [vmem:[#allocation2 + $0x298] sm:$0xff] %vm1527, %v1526
    %1612 = vst.msk [vmem:[#allocation3] sm:$0xff] %vm1527, 0.0
    %1613 = vst.msk [vmem:[#allocation3 + $0x8] sm:$0xff] %vm1527, 0.0
    %1614 = vst.msk [vmem:[#allocation3 + $0x10] sm:$0xff] %vm1527, 0.0
    %1615 = vst.msk [vmem:[#allocation3 + $0x18] sm:$0xff] %vm1527, 0.0
    %1616 = vst.msk [vmem:[#allocation3 + $0x20] sm:$0xff] %vm1527, 0.0
    %1617 = vst.msk [vmem:[#allocation3 + $0x28] sm:$0xff] %vm1527, 0.0
    %1618 = vst.msk [vmem:[#allocation3 + $0x30] sm:$0xff] %vm1527, 0.0
    %1619 = vst.msk [vmem:[#allocation3 + $0x38] sm:$0xff] %vm1527, 0.0
    %1620 = vst.msk [vmem:[#allocation3 + $0x40] sm:$0xff] %vm1527, 0.0
    %1621 = vst.msk [vmem:[#allocation3 + $0x48] sm:$0xff] %vm1527, 0.0
    %1622 = vst.msk [vmem:[#allocation3 + $0x50] sm:$0xff] %vm1527, 0.0
    %1623 = vst.msk [vmem:[#allocation3 + $0x58] sm:$0xff] %vm1527, 0.0
    %1624 = vst.msk [vmem:[#allocation3 + $0x60] sm:$0xff] %vm1527, 0.0
    %1625 = vst.msk [vmem:[#allocation3 + $0x68] sm:$0xff] %vm1527, 0.0
    %1626 = vst.msk [vmem:[#allocation3 + $0x70] sm:$0xff] %vm1527, 0.0
    %1627 = vst.msk [vmem:[#allocation3 + $0x78] sm:$0xff] %vm1527, 0.0
    %1628 = vst.msk [vmem:[#allocation3 + $0x80] sm:$0xff] %vm1527, 0.0
    %1629 = vst.msk [vmem:[#allocation3 + $0x88] sm:$0xff] %vm1527, 0.0
    %1630 = vst.msk [vmem:[#allocation3 + $0x90] sm:$0xff] %vm1527, 0.0
    %1631 = vst.msk [vmem:[#allocation3 + $0x98] sm:$0xff] %vm1527, 0.0
    %1632 = vst.msk [vmem:[#allocation3 + $0xa0] sm:$0xff] %vm1527, 0.0
    %1633 = vst.msk [vmem:[#allocation3 + $0xa8] sm:$0xff] %vm1527, 0.0
    %1634 = vst.msk [vmem:[#allocation3 + $0xb0] sm:$0xff] %vm1527, 0.0
    %1635 = vst.msk [vmem:[#allocation3 + $0xb8] sm:$0xff] %vm1527, 0.0
    %1636 = vst.msk [vmem:[#allocation3 + $0xc0] sm:$0xff] %vm1527, 0.0
    %1637 = vst.msk [vmem:[#allocation3 + $0xc8] sm:$0xff] %vm1527, 0.0
    %1638 = vst.msk [vmem:[#allocation3 + $0xd0] sm:$0xff] %vm1527, 0.0
    %1639 = vst.msk [vmem:[#allocation3 + $0xd8] sm:$0xff] %vm1527, 0.0
    %1640 = vst.msk [vmem:[#allocation3 + $0xe0] sm:$0xff] %vm1527, 0.0
    %1641 = vst.msk [vmem:[#allocation3 + $0xe8] sm:$0xff] %vm1527, 0.0
    %1642 = vst.msk [vmem:[#allocation3 + $0xf0] sm:$0xff] %vm1527, 0.0
    %1643 = vst.msk [vmem:[#allocation3 + $0xf8] sm:$0xff] %vm1527, 0.0
    %1644 = vst.msk [vmem:[#allocation3 + $0x100] sm:$0xff] %vm1527, 0.0
    %1645 = vst.msk [vmem:[#allocation3 + $0x108] sm:$0xff] %vm1527, 0.0
    %1646 = vst.msk [vmem:[#allocation3 + $0x110] sm:$0xff] %vm1527, 0.0
    %1647 = vst.msk [vmem:[#allocation3 + $0x118] sm:$0xff] %vm1527, 0.0
    %1648 = vst.msk [vmem:[#allocation3 + $0x120] sm:$0xff] %vm1527, 0.0
    %1649 = vst.msk [vmem:[#allocation3 + $0x128] sm:$0xff] %vm1527, 0.0
    %1650 = vst.msk [vmem:[#allocation3 + $0x130] sm:$0xff] %vm1527, 0.0
    %1651 = vst.msk [vmem:[#allocation3 + $0x138] sm:$0xff] %vm1527, 0.0
    %1652 = vst.msk [vmem:[#allocation3 + $0x140] sm:$0xff] %vm1527, 0.0
    %1653 = vst.msk [vmem:[#allocation3 + $0x148] sm:$0xff] %vm1527, 0.0
    %1654 = vst.msk [vmem:[#allocation3 + $0x150] sm:$0xff] %vm1527, 0.0
    %1655 = vst.msk [vmem:[#allocation3 + $0x158] sm:$0xff] %vm1527, 0.0
    %1656 = vst.msk [vmem:[#allocation3 + $0x160] sm:$0xff] %vm1527, 0.0
    %1657 = vst.msk [vmem:[#allocation3 + $0x168] sm:$0xff] %vm1527, 0.0
    %1658 = vst.msk [vmem:[#allocation3 + $0x170] sm:$0xff] %vm1527, 0.0
    %1659 = vst.msk [vmem:[#allocation3 + $0x178] sm:$0xff] %vm1527, 0.0
    %1660 = vst.msk [vmem:[#allocation3 + $0x180] sm:$0xff] %vm1527, 0.0
    %1661 = vst.msk [vmem:[#allocation3 + $0x188] sm:$0xff] %vm1527, 0.0
    %1662 = vst.msk [vmem:[#allocation3 + $0x190] sm:$0xff] %vm1527, 0.0
    %1663 = vst.msk [vmem:[#allocation3 + $0x198] sm:$0xff] %vm1527, 0.0
    %1664 = vst.msk [vmem:[#allocation3 + $0x1a0] sm:$0xff] %vm1527, 0.0
    %1665 = vst.msk [vmem:[#allocation3 + $0x1a8] sm:$0xff] %vm1527, 0.0
    %1666 = vst.msk [vmem:[#allocation3 + $0x1b0] sm:$0xff] %vm1527, 0.0
    %1667 = vst.msk [vmem:[#allocation3 + $0x1b8] sm:$0xff] %vm1527, 0.0
    %1668 = vst.msk [vmem:[#allocation3 + $0x1c0] sm:$0xff] %vm1527, 0.0
    %1669 = vst.msk [vmem:[#allocation3 + $0x1c8] sm:$0xff] %vm1527, 0.0
    %1670 = vst.msk [vmem:[#allocation3 + $0x1d0] sm:$0xff] %vm1527, 0.0
    %1671 = vst.msk [vmem:[#allocation3 + $0x1d8] sm:$0xff] %vm1527, 0.0
    %1672 = vst.msk [vmem:[#allocation3 + $0x1e0] sm:$0xff] %vm1527, 0.0
    %1673 = vst.msk [vmem:[#allocation3 + $0x1e8] sm:$0xff] %vm1527, 0.0
    %1674 = vst.msk [vmem:[#allocation3 + $0x1f0] sm:$0xff] %vm1527, 0.0
    %1675 = vst.msk [vmem:[#allocation3 + $0x1f8] sm:$0xff] %vm1527, 0.0
    %1676 = vst.msk [vmem:[#allocation3 + $0x200] sm:$0xff] %vm1527, 0.0
    %1677 = vst.msk [vmem:[#allocation3 + $0x208] sm:$0xff] %vm1527, 0.0
    %1678 = vst.msk [vmem:[#allocation3 + $0x210] sm:$0xff] %vm1527, 0.0
    %1679 = vst.msk [vmem:[#allocation3 + $0x218] sm:$0xff] %vm1527, 0.0
    %1680 = vst.msk [vmem:[#allocation3 + $0x220] sm:$0xff] %vm1527, 0.0
    %1681 = vst.msk [vmem:[#allocation3 + $0x228] sm:$0xff] %vm1527, 0.0
    %1682 = vst.msk [vmem:[#allocation3 + $0x230] sm:$0xff] %vm1527, 0.0
    %1683 = vst.msk [vmem:[#allocation3 + $0x238] sm:$0xff] %vm1527, 0.0
    %1684 = vst.msk [vmem:[#allocation3 + $0x240] sm:$0xff] %vm1527, 0.0
    %1685 = vst.msk [vmem:[#allocation3 + $0x248] sm:$0xff] %vm1527, 0.0
    %1686 = vst.msk [vmem:[#allocation3 + $0x250] sm:$0xff] %vm1527, 0.0
    %1687 = vst.msk [vmem:[#allocation3 + $0x258] sm:$0xff] %vm1527, 0.0
    %1688 = vst.msk [vmem:[#allocation3 + $0x260] sm:$0xff] %vm1527, 0.0
    %1689 = vst.msk [vmem:[#allocation3 + $0x268] sm:$0xff] %vm1527, 0.0
    %1690 = vst.msk [vmem:[#allocation3 + $0x270] sm:$0xff] %vm1527, 0.0
    %1691 = vst.msk [vmem:[#allocation3 + $0x278] sm:$0xff] %vm1527, 0.0
    %1692 = vst.msk [vmem:[#allocation3 + $0x280] sm:$0xff] %vm1527, 0.0
    %1693 = vst.msk [vmem:[#allocation3 + $0x288] sm:$0xff] %vm1527, 0.0
    %1694 = vst.msk [vmem:[#allocation3 + $0x290] sm:$0xff] %vm1527, 0.0
    %1695 = vst.msk [vmem:[#allocation3 + $0x298] sm:$0xff] %vm1527, 0.0
    %v1696 = vld [vmem:[#allocation3 + $0x18] sm:$0xff]
    %v1697 = vld [vmem:[#allocation3 + $0x20] sm:$0xff]
    %v1698 = vld [vmem:[#allocation3 + $0x28] sm:$0xff]
    %v1699 = vld [vmem:[#allocation3 + $0x30] sm:$0xff]
    %v1700 = vld [vmem:[#allocation3 + $0x38] sm:$0xff]
    %v1701 = vld [vmem:[#allocation3 + $0x40] sm:$0xff]
    %v1702 = vld [vmem:[#allocation3 + $0x48] sm:$0xff]
    %v1703 = vld [vmem:[#allocation3 + $0x50] sm:$0xff]
    %v1704 = vld [vmem:[#allocation3 + $0x58] sm:$0xff]
    %v1705 = vld [vmem:[#allocation3 + $0x60] sm:$0xff]
    %v1706 = vld [vmem:[#allocation3 + $0x68] sm:$0xff]
    %v1707 = vld [vmem:[#allocation3 + $0x70] sm:$0xff]
    %v1708 = vld [vmem:[#allocation3 + $0x78] sm:$0xff]
    %v1709 = vld [vmem:[#allocation3 + $0x80] sm:$0xff]
    %v1710 = vld [vmem:[#allocation3 + $0x88] sm:$0xff]
    %v1711 = vld [vmem:[#allocation3 + $0x90] sm:$0xff]
    %v1712 = vld [vmem:[#allocation3 + $0x98] sm:$0xff]
    %v1713 = vld [vmem:[#allocation3 + $0xa0] sm:$0xff]
    %v1714 = vld [vmem:[#allocation3 + $0xa8] sm:$0xff]
    %v1715 = vld [vmem:[#allocation3 + $0xb0] sm:$0xff]
    %v1716 = vld [vmem:[#allocation3 + $0xb8] sm:$0xff]
    %v1717 = vld [vmem:[#allocation3 + $0xc0] sm:$0xff]
    %v1718 = vld [vmem:[#allocation3 + $0xc8] sm:$0xff]
    %v1719 = vld [vmem:[#allocation3 + $0xd0] sm:$0xff]
    %v1720 = vld [vmem:[#allocation3 + $0xd8] sm:$0xff]
    %v1721 = vld [vmem:[#allocation3 + $0xe0] sm:$0xff]
    %v1722 = vld [vmem:[#allocation3 + $0xe8] sm:$0xff]
    %v1723 = vld [vmem:[#allocation3 + $0xf0] sm:$0xff]
    %v1724 = vld [vmem:[#allocation3 + $0xf8] sm:$0xff]
    %v1725 = vld [vmem:[#allocation3 + $0x100] sm:$0xff]
    %v1726 = vld [vmem:[#allocation3 + $0x108] sm:$0xff]
    %v1727 = vld [vmem:[#allocation3 + $0x110] sm:$0xff]
    %v1728 = vld [vmem:[#allocation3 + $0x118] sm:$0xff]
    %v1729 = vld [vmem:[#allocation3 + $0x120] sm:$0xff]
    %v1730 = vld [vmem:[#allocation3 + $0x128] sm:$0xff]
    %v1731 = vld [vmem:[#allocation3 + $0x130] sm:$0xff]
    %v1732 = vld [vmem:[#allocation3 + $0x138] sm:$0xff]
    %v1733 = vld [vmem:[#allocation3 + $0x140] sm:$0xff]
    %v1734 = vld [vmem:[#allocation3 + $0x148] sm:$0xff]
    %v1735 = vld [vmem:[#allocation3 + $0x150] sm:$0xff]
    %v1736 = vld [vmem:[#allocation3 + $0x158] sm:$0xff]
    %v1737 = vld [vmem:[#allocation3 + $0x160] sm:$0xff]
    %v1738 = vld [vmem:[#allocation3 + $0x168] sm:$0xff]
    %v1739 = vld [vmem:[#allocation3 + $0x170] sm:$0xff]
    %v1740 = vld [vmem:[#allocation3 + $0x178] sm:$0xff]
    %v1741 = vld [vmem:[#allocation3 + $0x180] sm:$0xff]
    %v1742 = vld [vmem:[#allocation3 + $0x188] sm:$0xff]
    %v1743 = vld [vmem:[#allocation3 + $0x190] sm:$0xff]
    %v1744 = vld [vmem:[#allocation3 + $0x198] sm:$0xff]
    %v1745 = vld [vmem:[#allocation3 + $0x1a0] sm:$0xff]
    %v1746 = vld [vmem:[#allocation3 + $0x1a8] sm:$0xff]
    %v1747 = vld [vmem:[#allocation3 + $0x1b0] sm:$0xff]
    %v1748 = vld [vmem:[#allocation3 + $0x1b8] sm:$0xff]
    %v1749 = vld [vmem:[#allocation3 + $0x1c0] sm:$0xff]
    %v1750 = vld [vmem:[#allocation3 + $0x1c8] sm:$0xff]
    %v1751 = vld [vmem:[#allocation3 + $0x1d0] sm:$0xff]
    %v1752 = vld [vmem:[#allocation3 + $0x1d8] sm:$0xff]
    %v1753 = vld [vmem:[#allocation3 + $0x1e0] sm:$0xff]
    %v1754 = vld [vmem:[#allocation3 + $0x1e8] sm:$0xff]
    %v1755 = vld [vmem:[#allocation3 + $0x1f0] sm:$0xff]
    %v1756 = vld [vmem:[#allocation3 + $0x1f8] sm:$0xff]
    %v1757 = vld [vmem:[#allocation3 + $0x200] sm:$0xff]
    %v1758 = vld [vmem:[#allocation3 + $0x208] sm:$0xff]
    %v1759 = vld [vmem:[#allocation3 + $0x210] sm:$0xff]
    %v1760 = vld [vmem:[#allocation3 + $0x218] sm:$0xff]
    %v1761 = vld [vmem:[#allocation3 + $0x220] sm:$0xff]
    %v1762 = vld [vmem:[#allocation3 + $0x228] sm:$0xff]
    %v1763 = vld [vmem:[#allocation3 + $0x230] sm:$0xff]
    %v1764 = vld [vmem:[#allocation3 + $0x238] sm:$0xff]
    %v1765 = vld [vmem:[#allocation3 + $0x240] sm:$0xff]
    %v1766 = vld [vmem:[#allocation3 + $0x248] sm:$0xff]
    %v1767 = vld [vmem:[#allocation3 + $0x250] sm:$0xff]
    %v1768 = vld [vmem:[#allocation3 + $0x258] sm:$0xff]
    %v1769 = vld [vmem:[#allocation3 + $0x260] sm:$0xff]
    %v1770 = vld [vmem:[#allocation3 + $0x268] sm:$0xff]
    %v1771 = vld [vmem:[#allocation3 + $0x270] sm:$0xff]
    %v1772 = vld [vmem:[#allocation3 + $0x278] sm:$0xff]
    %v1773 = vld [vmem:[#allocation3 + $0x280] sm:$0xff]
    %v1774 = vld [vmem:[#allocation2 + $0x5] sm:$0xff]
    %v1775 = vld [vmem:[#allocation2 + $0xd] sm:$0xff]
    %v1776 = vld [vmem:[#allocation2 + $0x15] sm:$0xff]
    %v1777 = vld [vmem:[#allocation2 + $0x1d] sm:$0xff]
    %v1778 = vld [vmem:[#allocation2 + $0x25] sm:$0xff]
    %v1779 = vld [vmem:[#allocation2 + $0x2d] sm:$0xff]
    %v1780 = vld [vmem:[#allocation2 + $0x35] sm:$0xff]
    %v1781 = vld [vmem:[#allocation2 + $0x3d] sm:$0xff]
    %v1782 = vld [vmem:[#allocation2 + $0x45] sm:$0xff]
    %v1783 = vld [vmem:[#allocation2 + $0x4d] sm:$0xff]
    %v1784 = vld [vmem:[#allocation2 + $0x55] sm:$0xff]
    %v1785 = vld [vmem:[#allocation2 + $0x5d] sm:$0xff]
    %v1786 = vld [vmem:[#allocation2 + $0x65] sm:$0xff]
    %v1787 = vld [vmem:[#allocation2 + $0x6d] sm:$0xff]
    %v1788 = vld [vmem:[#allocation2 + $0x75] sm:$0xff]
    %v1789 = vld [vmem:[#allocation2 + $0x7d] sm:$0xff]
    %v1790 = vld [vmem:[#allocation2 + $0x85] sm:$0xff]
    %v1791 = vld [vmem:[#allocation2 + $0x8d] sm:$0xff]
    %v1792 = vld [vmem:[#allocation2 + $0x95] sm:$0xff]
    %v1793 = vld [vmem:[#allocation2 + $0x9d] sm:$0xff]
    %v1794 = vld [vmem:[#allocation2 + $0xa5] sm:$0xff]
    %v1795 = vld [vmem:[#allocation2 + $0xad] sm:$0xff]
    %v1796 = vld [vmem:[#allocation2 + $0xb5] sm:$0xff]
    %v1797 = vld [vmem:[#allocation2 + $0xbd] sm:$0xff]
    %v1798 = vld [vmem:[#allocation2 + $0xc5] sm:$0xff]
    %v1799 = vld [vmem:[#allocation2 + $0xcd] sm:$0xff]
    %v1800 = vld [vmem:[#allocation2 + $0xd5] sm:$0xff]
    %v1801 = vld [vmem:[#allocation2 + $0xdd] sm:$0xff]
    %v1802 = vld [vmem:[#allocation2 + $0xe5] sm:$0xff]
    %v1803 = vld [vmem:[#allocation2 + $0xed] sm:$0xff]
    %v1804 = vld [vmem:[#allocation2 + $0xf5] sm:$0xff]
    %v1805 = vld [vmem:[#allocation2 + $0xfd] sm:$0xff]
    %v1806 = vld [vmem:[#allocation2 + $0x105] sm:$0xff]
    %v1807 = vld [vmem:[#allocation2 + $0x10d] sm:$0xff]
    %v1808 = vld [vmem:[#allocation2 + $0x115] sm:$0xff]
    %v1809 = vld [vmem:[#allocation2 + $0x11d] sm:$0xff]
    %v1810 = vld [vmem:[#allocation2 + $0x125] sm:$0xff]
    %v1811 = vld [vmem:[#allocation2 + $0x12d] sm:$0xff]
    %v1812 = vld [vmem:[#allocation2 + $0x135] sm:$0xff]
    %v1813 = vld [vmem:[#allocation2 + $0x13d] sm:$0xff]
    %v1814 = vld [vmem:[#allocation2 + $0x145] sm:$0xff]
    %v1815 = vld [vmem:[#allocation2 + $0x14d] sm:$0xff]
    %v1816 = vld [vmem:[#allocation2 + $0x155] sm:$0xff]
    %v1817 = vld [vmem:[#allocation2 + $0x15d] sm:$0xff]
    %v1818 = vld [vmem:[#allocation2 + $0x165] sm:$0xff]
    %v1819 = vld [vmem:[#allocation2 + $0x16d] sm:$0xff]
    %v1820 = vld [vmem:[#allocation2 + $0x175] sm:$0xff]
    %v1821 = vld [vmem:[#allocation2 + $0x17d] sm:$0xff]
    %v1822 = vld [vmem:[#allocation2 + $0x185] sm:$0xff]
    %v1823 = vld [vmem:[#allocation2 + $0x18d] sm:$0xff]
    %v1824 = vld [vmem:[#allocation2 + $0x195] sm:$0xff]
    %v1825 = vld [vmem:[#allocation2 + $0x19d] sm:$0xff]
    %v1826 = vld [vmem:[#allocation2 + $0x1a5] sm:$0xff]
    %v1827 = vld [vmem:[#allocation2 + $0x1ad] sm:$0xff]
    %v1828 = vld [vmem:[#allocation2 + $0x1b5] sm:$0xff]
    %v1829 = vld [vmem:[#allocation2 + $0x1bd] sm:$0xff]
    %v1830 = vld [vmem:[#allocation2 + $0x1c5] sm:$0xff]
    %v1831 = vld [vmem:[#allocation2 + $0x1cd] sm:$0xff]
    %v1832 = vld [vmem:[#allocation2 + $0x1d5] sm:$0xff]
    %v1833 = vld [vmem:[#allocation2 + $0x1dd] sm:$0xff]
    %v1834 = vld [vmem:[#allocation2 + $0x1e5] sm:$0xff]
    %v1835 = vld [vmem:[#allocation2 + $0x1ed] sm:$0xff]
    %v1836 = vld [vmem:[#allocation2 + $0x1f5] sm:$0xff]
    %v1837 = vld [vmem:[#allocation2 + $0x1fd] sm:$0xff]
    %v1838 = vld [vmem:[#allocation2 + $0x205] sm:$0xff]
    %v1839 = vld [vmem:[#allocation2 + $0x20d] sm:$0xff]
    %v1840 = vld [vmem:[#allocation2 + $0x215] sm:$0xff]
    %v1841 = vld [vmem:[#allocation2 + $0x21d] sm:$0xff]
    %v1842 = vld [vmem:[#allocation2 + $0x225] sm:$0xff]
    %v1843 = vld [vmem:[#allocation2 + $0x22d] sm:$0xff]
    %v1844 = vld [vmem:[#allocation2 + $0x235] sm:$0xff]
    %v1845 = vld [vmem:[#allocation2 + $0x23d] sm:$0xff]
    %v1846 = vld [vmem:[#allocation2 + $0x245] sm:$0xff]
    %v1847 = vld [vmem:[#allocation2 + $0x24d] sm:$0xff]
    %v1848 = vld [vmem:[#allocation2 + $0x255] sm:$0xff]
    %v1849 = vld [vmem:[#allocation2 + $0x25d] sm:$0xff]
    %v1850 = vld [vmem:[#allocation2 + $0x265] sm:$0xff]
    %v1851 = vld [vmem:[#allocation2 + $0x26d] sm:$0xff]
    %v1852 = vpack.c.bf16 %v1775, %v1774
    %v1853 = vpack.c.bf16 %v1777, %v1776
    %v1854 = vpack.c.bf16 %v1779, %v1778
    %v1855 = vpack.c.bf16 %v1781, %v1780
    %v1856 = vpack.c.bf16 %v1783, %v1782
    %v1857 = vpack.c.bf16 %v1785, %v1784
    %v1858 = vpack.c.bf16 %v1787, %v1786
    %v1859 = vpack.c.bf16 %v1789, %v1788
    %v1860 = vpack.c.bf16 %v1791, %v1790
    %v1861 = vpack.c.bf16 %v1793, %v1792
    %v1862 = vpack.c.bf16 %v1795, %v1794
    %v1863 = vpack.c.bf16 %v1797, %v1796
    %v1864 = vpack.c.bf16 %v1799, %v1798
    %v1865 = vpack.c.bf16 %v1801, %v1800
    %v1866 = vpack.c.bf16 %v1803, %v1802
    %v1867 = vpack.c.bf16 %v1805, %v1804
    %v1868 = vpack.c.bf16 %v1807, %v1806
    %v1869 = vpack.c.bf16 %v1809, %v1808
    %v1870 = vpack.c.bf16 %v1811, %v1810
    %v1871 = vpack.c.bf16 %v1813, %v1812
    %v1872 = vpack.c.bf16 %v1815, %v1814
    %v1873 = vpack.c.bf16 %v1817, %v1816
    %v1874 = vpack.c.bf16 %v1819, %v1818
    %v1875 = vpack.c.bf16 %v1821, %v1820
    %v1876 = vpack.c.bf16 %v1823, %v1822
    %v1877 = vpack.c.bf16 %v1825, %v1824
    %v1878 = vpack.c.bf16 %v1827, %v1826
    %v1879 = vpack.c.bf16 %v1829, %v1828
    %v1880 = vpack.c.bf16 %v1831, %v1830
    %v1881 = vpack.c.bf16 %v1833, %v1832
    %v1882 = vpack.c.bf16 %v1835, %v1834
    %v1883 = vpack.c.bf16 %v1837, %v1836
    %v1884 = vpack.c.bf16 %v1839, %v1838
    %v1885 = vpack.c.bf16 %v1841, %v1840
    %v1886 = vpack.c.bf16 %v1843, %v1842
    %v1887 = vpack.c.bf16 %v1845, %v1844
    %v1888 = vpack.c.bf16 %v1847, %v1846
    %v1889 = vpack.c.bf16 %v1849, %v1848
    %v1890 = vpack.c.bf16 %v1851, %v1850
    %v1891 = vld [vmem:[%s4] sm:$0xf]
    %v1893 = vsel %vm1527, %v1852, 0
    %v1896 = vsel %vm1527, %v1853, 0
    %v1899 = vsel %vm1527, %v1854, 0
    %v1902 = vsel %vm1527, %v1855, 0
    %v1905 = vsel %vm1527, %v1856, 0
    %v1908 = vsel %vm1527, %v1857, 0
    %v1911 = vsel %vm1527, %v1858, 0
    %v1914 = vsel %vm1527, %v1859, 0
    %v1917 = vsel %vm1527, %v1860, 0
    %v1920 = vsel %vm1527, %v1861, 0
    %v1923 = vsel %vm1527, %v1862, 0
    %v1926 = vsel %vm1527, %v1863, 0
    %v1929 = vsel %vm1527, %v1864, 0
    %v1932 = vsel %vm1527, %v1865, 0
    %v1935 = vsel %vm1527, %v1866, 0
    %v1938 = vsel %vm1527, %v1867, 0
    %v1941 = vsel %vm1527, %v1868, 0
    %v1944 = vsel %vm1527, %v1869, 0
    %v1947 = vsel %vm1527, %v1870, 0
    %v1950 = vsel %vm1527, %v1871, 0
    %v1953 = vsel %vm1527, %v1872, 0
    %v1956 = vsel %vm1527, %v1873, 0
    %v1959 = vsel %vm1527, %v1874, 0
    %v1962 = vsel %vm1527, %v1875, 0
    %v1965 = vsel %vm1527, %v1876, 0
    %v1968 = vsel %vm1527, %v1877, 0
    %v1971 = vsel %vm1527, %v1878, 0
    %v1974 = vsel %vm1527, %v1879, 0
    %v1977 = vsel %vm1527, %v1880, 0
    %v1980 = vsel %vm1527, %v1881, 0
    %v1983 = vsel %vm1527, %v1882, 0
    %v1986 = vsel %vm1527, %v1883, 0
    %v1989 = vsel %vm1527, %v1884, 0
    %v1992 = vsel %vm1527, %v1885, 0
    %v1995 = vsel %vm1527, %v1886, 0
    %v1998 = vsel %vm1527, %v1887, 0
    %v2001 = vsel %vm1527, %v1888, 0
    %v2004 = vsel %vm1527, %v1889, 0
    %v2007 = vsel %vm1527, %v1890, 0
    %vm2009 = vcmask 1043456
    %v2011 = vsel %vm2009, %v1891, 0
    %2013 = vmatprep.subr.bf16.mxu0 0
    %2014 = vmatpush1.bf16.msra.mxu0 %v2011
    %2015 = vmatprep.subr.bf16.mxu0 0
    %2016 = vmatpush1.bf16.msra.mxu0 0
    %2017 = vmatprep.subr.bf16.mxu0 0
    %2018 = vmatpush1.bf16.msra.mxu0 0
    %2019 = vmatprep.subr.bf16.mxu0 0
    %2020 = vmatpush1.bf16.msra.mxu0 0
    %2021 = vmatprep.subr.bf16.mxu0 0
    %2022 = vmatpush1.bf16.msra.mxu0 0
    %2023 = vmatprep.subr.bf16.mxu0 0
    %2024 = vmatpush1.bf16.msra.mxu0 0
    %2025 = vmatprep.subr.bf16.mxu0 0
    %2026 = vmatpush1.bf16.msra.mxu0 0
    %2027 = vmatprep.subr.bf16.mxu0 0
    %2028 = vmatpush1.bf16.msra.mxu0 0
    %2029 = vmatprep.subr.bf16.mxu0 0
    %2030 = vmatpush1.bf16.msra.mxu0 0
    %2031 = vmatprep.subr.bf16.mxu0 0
    %2032 = vmatpush1.bf16.msra.mxu0 0
    %2033 = vmatprep.subr.bf16.mxu0 0
    %2034 = vmatpush1.bf16.msra.mxu0 0
    %2035 = vmatprep.subr.bf16.mxu0 0
    %2036 = vmatpush1.bf16.msra.mxu0 0
    %2037 = vmatprep.subr.bf16.mxu0 0
    %2038 = vmatpush1.bf16.msra.mxu0 0
    %2039 = vmatprep.subr.bf16.mxu0 0
    %2040 = vmatpush1.bf16.msra.mxu0 0
    %2041 = vmatprep.subr.bf16.mxu0 0
    %2042 = vmatpush1.bf16.msra.mxu0 0
    %2043 = vmatprep.subr.bf16.mxu0 0
    %2044 = vmatpush1.bf16.msra.mxu0 0
    %2045 = vmatprep.mubr.bf16.mxu0 0
    %2046 = vmatmul.mubr.bf16.gmra.mrb[0].mxu0 %v1893
    %v2047 = vpop.f32.mrb[0].mxu0
    %v2048 = vadd.f32 0.0, %v2047
    %v2049 = vpop.f32.mrb[0].mxu0
    %v2050 = vpop.f32.mrb[0].mxu0
    %v2051 = vadd.f32 0.0, %v2050
    %v2052 = vpop.f32.mrb[0].mxu0
    %2053 = vmatprep.mubr.bf16.mxu0 0
    %2054 = vmatmul.mubr.bf16.gmra.mrb[0].mxu0 %v1896
    %v2055 = vpop.f32.mrb[0].mxu0
    %v2056 = vadd.f32 0.0, %v2055
    %v2057 = vpop.f32.mrb[0].mxu0
    %v2058 = vpop.f32.mrb[0].mxu0
    %v2059 = vadd.f32 0.0, %v2058
    %v2060 = vpop.f32.mrb[0].mxu0
    %2061 = vmatprep.mubr.bf16.mxu0 0
    %2062 = vmatmul.mubr.bf16.gmra.mrb[0].mxu0 %v1899
    %v2063 = vpop.f32.mrb[0].mxu0
    %v2064 = vadd.f32 0.0, %v2063
    %v2065 = vpop.f32.mrb[0].mxu0
    %v2066 = vpop.f32.mrb[0].mxu0
    %v2067 = vadd.f32 0.0, %v2066
    %v2068 = vpop.f32.mrb[0].mxu0
    %2069 = vmatprep.mubr.bf16.mxu0 0
    %2070 = vmatmul.mubr.bf16.gmra.mrb[0].mxu0 %v1902
    %v2071 = vpop.f32.mrb[0].mxu0
    %v2072 = vadd.f32 0.0, %v2071
    %v2073 = vpop.f32.mrb[0].mxu0
    %v2074 = vpop.f32.mrb[0].mxu0
    %v2075 = vadd.f32 0.0, %v2074
    %v2076 = vpop.f32.mrb[0].mxu0
    %2077 = vmatprep.mubr.bf16.mxu0 0
    %2078 = vmatmul.mubr.bf16.gmra.mrb[0].mxu0 %v1905
    %v2079 = vpop.f32.mrb[0].mxu0
    %v2080 = vadd.f32 0.0, %v2079
    %v2081 = vpop.f32.mrb[0].mxu0
    %v2082 = vpop.f32.mrb[0].mxu0
    %v2083 = vadd.f32 0.0, %v2082
    %v2084 = vpop.f32.mrb[0].mxu0
    %2085 = vmatprep.mubr.bf16.mxu0 0
    %2086 = vmatmul.mubr.bf16.gmra.mrb[0].mxu0 %v1908
    %v2087 = vpop.f32.mrb[0].mxu0
    %v2088 = vadd.f32 0.0, %v2087
    %v2089 = vpop.f32.mrb[0].mxu0
    %v2090 = vpop.f32.mrb[0].mxu0
    %v2091 = vadd.f32 0.0, %v2090
    %v2092 = vpop.f32.mrb[0].mxu0
    %2093 = vmatprep.mubr.bf16.mxu0 0
    %2094 = vmatmul.mubr.bf16.gmra.mrb[0].mxu0 %v1911
    %v2095 = vpop.f32.mrb[0].mxu0
    %v2096 = vadd.f32 0.0, %v2095
    %v2097 = vpop.f32.mrb[0].mxu0
    %v2098 = vpop.f32.mrb[0].mxu0
    %v2099 = vadd.f32 0.0, %v2098
    %v2100 = vpop.f32.mrb[0].mxu0
    %2101 = vmatprep.mubr.bf16.mxu0 0
    %2102 = vmatmul.mubr.bf16.gmra.mrb[0].mxu0 %v1914
    %v2103 = vpop.f32.mrb[0].mxu0
    %v2104 = vadd.f32 0.0, %v2103
    %v2105 = vpop.f32.mrb[0].mxu0
    %v2106 = vpop.f32.mrb[0].mxu0
    %v2107 = vadd.f32 0.0, %v2106
    %v2108 = vpop.f32.mrb[0].mxu0
    %2109 = vmatprep.mubr.bf16.mxu0 0
    %2110 = vmatmul.mubr.bf16.gmra.mrb[0].mxu0 %v1917
    %v2111 = vpop.f32.mrb[0].mxu0
    %v2112 = vadd.f32 0.0, %v2111
    %v2113 = vpop.f32.mrb[0].mxu0
    %v2114 = vpop.f32.mrb[0].mxu0
    %v2115 = vadd.f32 0.0, %v2114
    %v2116 = vpop.f32.mrb[0].mxu0
    %2117 = vmatprep.mubr.bf16.mxu0 0
    %2118 = vmatmul.mubr.bf16.gmra.mrb[0].mxu0 %v1920
    %v2119 = vpop.f32.mrb[0].mxu0
    %v2120 = vadd.f32 0.0, %v2119
    %v2121 = vpop.f32.mrb[0].mxu0
    %v2122 = vpop.f32.mrb[0].mxu0
    %v2123 = vadd.f32 0.0, %v2122
    %v2124 = vpop.f32.mrb[0].mxu0
    %2125 = vmatprep.mubr.bf16.mxu0 0
    %2126 = vmatmul.mubr.bf16.gmra.mrb[0].mxu0 %v1923
    %v2127 = vpop.f32.mrb[0].mxu0
    %v2128 = vadd.f32 0.0, %v2127
    %v2129 = vpop.f32.mrb[0].mxu0
    %v2130 = vpop.f32.mrb[0].mxu0
    %v2131 = vadd.f32 0.0, %v2130
    %v2132 = vpop.f32.mrb[0].mxu0
    %2133 = vmatprep.mubr.bf16.mxu0 0
    %2134 = vmatmul.mubr.bf16.gmra.mrb[0].mxu0 %v1926
    %v2135 = vpop.f32.mrb[0].mxu0
    %v2136 = vadd.f32 0.0, %v2135
    %v2137 = vpop.f32.mrb[0].mxu0
    %v2138 = vpop.f32.mrb[0].mxu0
    %v2139 = vadd.f32 0.0, %v2138
    %v2140 = vpop.f32.mrb[0].mxu0
    %2141 = vmatprep.mubr.bf16.mxu0 0
    %2142 = vmatmul.mubr.bf16.gmra.mrb[0].mxu0 %v1929
    %v2143 = vpop.f32.mrb[0].mxu0
    %v2144 = vadd.f32 0.0, %v2143
    %v2145 = vpop.f32.mrb[0].mxu0
    %v2146 = vpop.f32.mrb[0].mxu0
    %v2147 = vadd.f32 0.0, %v2146
    %v2148 = vpop.f32.mrb[0].mxu0
    %2149 = vmatprep.mubr.bf16.mxu0 0
    %2150 = vmatmul.mubr.bf16.gmra.mrb[0].mxu0 %v1932
    %v2151 = vpop.f32.mrb[0].mxu0
    %v2152 = vadd.f32 0.0, %v2151
    %v2153 = vpop.f32.mrb[0].mxu0
    %v2154 = vpop.f32.mrb[0].mxu0
    %v2155 = vadd.f32 0.0, %v2154
    %v2156 = vpop.f32.mrb[0].mxu0
    %2157 = vmatprep.mubr.bf16.mxu0 0
    %2158 = vmatmul.mubr.bf16.gmra.mrb[0].mxu0 %v1935
    %v2159 = vpop.f32.mrb[0].mxu0
    %v2160 = vadd.f32 0.0, %v2159
    %v2161 = vpop.f32.mrb[0].mxu0
    %v2162 = vpop.f32.mrb[0].mxu0
    %v2163 = vadd.f32 0.0, %v2162
    %v2164 = vpop.f32.mrb[0].mxu0
    %2165 = vmatprep.mubr.bf16.mxu0 0
    %2166 = vmatmul.mubr.bf16.gmra.mrb[0].mxu0 %v1938
    %v2167 = vpop.f32.mrb[0].mxu0
    %v2168 = vadd.f32 0.0, %v2167
    %v2169 = vpop.f32.mrb[0].mxu0
    %v2170 = vpop.f32.mrb[0].mxu0
    %v2171 = vadd.f32 0.0, %v2170
    %v2172 = vpop.f32.mrb[0].mxu0
    %2173 = vmatprep.mubr.bf16.mxu0 0
    %2174 = vmatmul.mubr.bf16.gmra.mrb[0].mxu0 %v1941
    %v2175 = vpop.f32.mrb[0].mxu0
    %v2176 = vadd.f32 0.0, %v2175
    %v2177 = vpop.f32.mrb[0].mxu0
    %v2178 = vpop.f32.mrb[0].mxu0
    %v2179 = vadd.f32 0.0, %v2178
    %v2180 = vpop.f32.mrb[0].mxu0
    %2181 = vmatprep.mubr.bf16.mxu0 0
    %2182 = vmatmul.mubr.bf16.gmra.mrb[0].mxu0 %v1944
    %v2183 = vpop.f32.mrb[0].mxu0
    %v2184 = vadd.f32 0.0, %v2183
    %v2185 = vpop.f32.mrb[0].mxu0
    %v2186 = vpop.f32.mrb[0].mxu0
    %v2187 = vadd.f32 0.0, %v2186
    %v2188 = vpop.f32.mrb[0].mxu0
    %2189 = vmatprep.mubr.bf16.mxu0 0
    %2190 = vmatmul.mubr.bf16.gmra.mrb[0].mxu0 %v1947
    %v2191 = vpop.f32.mrb[0].mxu0
    %v2192 = vadd.f32 0.0, %v2191
    %v2193 = vpop.f32.mrb[0].mxu0
    %v2194 = vpop.f32.mrb[0].mxu0
    %v2195 = vadd.f32 0.0, %v2194
    %v2196 = vpop.f32.mrb[0].mxu0
    %2197 = vmatprep.mubr.bf16.mxu0 0
    %2198 = vmatmul.mubr.bf16.gmra.mrb[0].mxu0 %v1950
    %v2199 = vpop.f32.mrb[0].mxu0
    %v2200 = vadd.f32 0.0, %v2199
    %v2201 = vpop.f32.mrb[0].mxu0
    %v2202 = vpop.f32.mrb[0].mxu0
    %v2203 = vadd.f32 0.0, %v2202
    %v2204 = vpop.f32.mrb[0].mxu0
    %2205 = vmatprep.mubr.bf16.mxu0 0
    %2206 = vmatmul.mubr.bf16.gmra.mrb[0].mxu0 %v1953
    %v2207 = vpop.f32.mrb[0].mxu0
    %v2208 = vadd.f32 0.0, %v2207
    %v2209 = vpop.f32.mrb[0].mxu0
    %v2210 = vpop.f32.mrb[0].mxu0
    %v2211 = vadd.f32 0.0, %v2210
    %v2212 = vpop.f32.mrb[0].mxu0
    %2213 = vmatprep.mubr.bf16.mxu0 0
    %2214 = vmatmul.mubr.bf16.gmra.mrb[0].mxu0 %v1956
    %v2215 = vpop.f32.mrb[0].mxu0
    %v2216 = vadd.f32 0.0, %v2215
    %v2217 = vpop.f32.mrb[0].mxu0
    %v2218 = vpop.f32.mrb[0].mxu0
    %v2219 = vadd.f32 0.0, %v2218
    %v2220 = vpop.f32.mrb[0].mxu0
    %2221 = vmatprep.mubr.bf16.mxu0 0
    %2222 = vmatmul.mubr.bf16.gmra.mrb[0].mxu0 %v1959
    %v2223 = vpop.f32.mrb[0].mxu0
    %v2224 = vadd.f32 0.0, %v2223
    %v2225 = vpop.f32.mrb[0].mxu0
    %v2226 = vpop.f32.mrb[0].mxu0
    %v2227 = vadd.f32 0.0, %v2226
    %v2228 = vpop.f32.mrb[0].mxu0
    %2229 = vmatprep.mubr.bf16.mxu0 0
    %2230 = vmatmul.mubr.bf16.gmra.mrb[0].mxu0 %v1962
    %v2231 = vpop.f32.mrb[0].mxu0
    %v2232 = vadd.f32 0.0, %v2231
    %v2233 = vpop.f32.mrb[0].mxu0
    %v2234 = vpop.f32.mrb[0].mxu0
    %v2235 = vadd.f32 0.0, %v2234
    %v2236 = vpop.f32.mrb[0].mxu0
    %2237 = vmatprep.mubr.bf16.mxu0 0
    %2238 = vmatmul.mubr.bf16.gmra.mrb[0].mxu0 %v1965
    %v2239 = vpop.f32.mrb[0].mxu0
    %v2240 = vadd.f32 0.0, %v2239
    %v2241 = vpop.f32.mrb[0].mxu0
    %v2242 = vpop.f32.mrb[0].mxu0
    %v2243 = vadd.f32 0.0, %v2242
    %v2244 = vpop.f32.mrb[0].mxu0
    %2245 = vmatprep.mubr.bf16.mxu0 0
    %2246 = vmatmul.mubr.bf16.gmra.mrb[0].mxu0 %v1968
    %v2247 = vpop.f32.mrb[0].mxu0
    %v2248 = vadd.f32 0.0, %v2247
    %v2249 = vpop.f32.mrb[0].mxu0
    %v2250 = vpop.f32.mrb[0].mxu0
    %v2251 = vadd.f32 0.0, %v2250
    %v2252 = vpop.f32.mrb[0].mxu0
    %2253 = vmatprep.mubr.bf16.mxu0 0
    %2254 = vmatmul.mubr.bf16.gmra.mrb[0].mxu0 %v1971
    %v2255 = vpop.f32.mrb[0].mxu0
    %v2256 = vadd.f32 0.0, %v2255
    %v2257 = vpop.f32.mrb[0].mxu0
    %v2258 = vpop.f32.mrb[0].mxu0
    %v2259 = vadd.f32 0.0, %v2258
    %v2260 = vpop.f32.mrb[0].mxu0
    %2261 = vmatprep.mubr.bf16.mxu0 0
    %2262 = vmatmul.mubr.bf16.gmra.mrb[0].mxu0 %v1974
    %v2263 = vpop.f32.mrb[0].mxu0
    %v2264 = vadd.f32 0.0, %v2263
    %v2265 = vpop.f32.mrb[0].mxu0
    %v2266 = vpop.f32.mrb[0].mxu0
    %v2267 = vadd.f32 0.0, %v2266
    %v2268 = vpop.f32.mrb[0].mxu0
    %2269 = vmatprep.mubr.bf16.mxu0 0
    %2270 = vmatmul.mubr.bf16.gmra.mrb[0].mxu0 %v1977
    %v2271 = vpop.f32.mrb[0].mxu0
    %v2272 = vadd.f32 0.0, %v2271
    %v2273 = vpop.f32.mrb[0].mxu0
    %v2274 = vpop.f32.mrb[0].mxu0
    %v2275 = vadd.f32 0.0, %v2274
    %v2276 = vpop.f32.mrb[0].mxu0
    %2277 = vmatprep.mubr.bf16.mxu0 0
    %2278 = vmatmul.mubr.bf16.gmra.mrb[0].mxu0 %v1980
    %v2279 = vpop.f32.mrb[0].mxu0
    %v2280 = vadd.f32 0.0, %v2279
    %v2281 = vpop.f32.mrb[0].mxu0
    %v2282 = vpop.f32.mrb[0].mxu0
    %v2283 = vadd.f32 0.0, %v2282
    %v2284 = vpop.f32.mrb[0].mxu0
    %2285 = vmatprep.mubr.bf16.mxu0 0
    %2286 = vmatmul.mubr.bf16.gmra.mrb[0].mxu0 %v1983
    %v2287 = vpop.f32.mrb[0].mxu0
    %v2288 = vadd.f32 0.0, %v2287
    %v2289 = vpop.f32.mrb[0].mxu0
    %v2290 = vpop.f32.mrb[0].mxu0
    %v2291 = vadd.f32 0.0, %v2290
    %v2292 = vpop.f32.mrb[0].mxu0
    %2293 = vmatprep.mubr.bf16.mxu0 0
    %2294 = vmatmul.mubr.bf16.gmra.mrb[0].mxu0 %v1986
    %v2295 = vpop.f32.mrb[0].mxu0
    %v2296 = vadd.f32 0.0, %v2295
    %v2297 = vpop.f32.mrb[0].mxu0
    %v2298 = vpop.f32.mrb[0].mxu0
    %v2299 = vadd.f32 0.0, %v2298
    %v2300 = vpop.f32.mrb[0].mxu0
    %2301 = vmatprep.mubr.bf16.mxu0 0
    %2302 = vmatmul.mubr.bf16.gmra.mrb[0].mxu0 %v1989
    %v2303 = vpop.f32.mrb[0].mxu0
    %v2304 = vadd.f32 0.0, %v2303
    %v2305 = vpop.f32.mrb[0].mxu0
    %v2306 = vpop.f32.mrb[0].mxu0
    %v2307 = vadd.f32 0.0, %v2306
    %v2308 = vpop.f32.mrb[0].mxu0
    %2309 = vmatprep.mubr.bf16.mxu0 0
    %2310 = vmatmul.mubr.bf16.gmra.mrb[0].mxu0 %v1992
    %v2311 = vpop.f32.mrb[0].mxu0
    %v2312 = vadd.f32 0.0, %v2311
    %v2313 = vpop.f32.mrb[0].mxu0
    %v2314 = vpop.f32.mrb[0].mxu0
    %v2315 = vadd.f32 0.0, %v2314
    %v2316 = vpop.f32.mrb[0].mxu0
    %2317 = vmatprep.mubr.bf16.mxu0 0
    %2318 = vmatmul.mubr.bf16.gmra.mrb[0].mxu0 %v1995
    %v2319 = vpop.f32.mrb[0].mxu0
    %v2320 = vadd.f32 0.0, %v2319
    %v2321 = vpop.f32.mrb[0].mxu0
    %v2322 = vpop.f32.mrb[0].mxu0
    %v2323 = vadd.f32 0.0, %v2322
    %v2324 = vpop.f32.mrb[0].mxu0
    %2325 = vmatprep.mubr.bf16.mxu0 0
    %2326 = vmatmul.mubr.bf16.gmra.mrb[0].mxu0 %v1998
    %v2327 = vpop.f32.mrb[0].mxu0
    %v2328 = vadd.f32 0.0, %v2327
    %v2329 = vpop.f32.mrb[0].mxu0
    %v2330 = vpop.f32.mrb[0].mxu0
    %v2331 = vadd.f32 0.0, %v2330
    %v2332 = vpop.f32.mrb[0].mxu0
    %2333 = vmatprep.mubr.bf16.mxu0 0
    %2334 = vmatmul.mubr.bf16.gmra.mrb[0].mxu0 %v2001
    %v2335 = vpop.f32.mrb[0].mxu0
    %v2336 = vadd.f32 0.0, %v2335
    %v2337 = vpop.f32.mrb[0].mxu0
    %v2338 = vpop.f32.mrb[0].mxu0
    %v2339 = vadd.f32 0.0, %v2338
    %v2340 = vpop.f32.mrb[0].mxu0
    %2341 = vmatprep.mubr.bf16.mxu0 0
    %2342 = vmatmul.mubr.bf16.gmra.mrb[0].mxu0 %v2004
    %v2343 = vpop.f32.mrb[0].mxu0
    %v2344 = vadd.f32 0.0, %v2343
    %v2345 = vpop.f32.mrb[0].mxu0
    %v2346 = vpop.f32.mrb[0].mxu0
    %v2347 = vadd.f32 0.0, %v2346
    %v2348 = vpop.f32.mrb[0].mxu0
    %2349 = vmatprep.mubr.bf16.mxu0 0
    %2350 = vmatmul.mubr.bf16.gmra.mrb[0].mxu0 %v2007
    %v2351 = vpop.f32.mrb[0].mxu0
    %v2352 = vadd.f32 0.0, %v2351
    %v2353 = vpop.f32.mrb[0].mxu0
    %v2354 = vpop.f32.mrb[0].mxu0
    %v2355 = vadd.f32 0.0, %v2354
    %v2356 = vpop.f32.mrb[0].mxu0
    %2357 = vdwg.mxu0
    %v2358 = vadd.f32 %v1696, %v2048
    %v2359 = vadd.f32 %v1697, %v2051
    %v2360 = vadd.f32 %v1698, %v2056
    %v2361 = vadd.f32 %v1699, %v2059
    %v2362 = vadd.f32 %v1700, %v2064
    %v2363 = vadd.f32 %v1701, %v2067
    %v2364 = vadd.f32 %v1702, %v2072
    %v2365 = vadd.f32 %v1703, %v2075
    %v2366 = vadd.f32 %v1704, %v2080
    %v2367 = vadd.f32 %v1705, %v2083
    %v2368 = vadd.f32 %v1706, %v2088
    %v2369 = vadd.f32 %v1707, %v2091
    %v2370 = vadd.f32 %v1708, %v2096
    %v2371 = vadd.f32 %v1709, %v2099
    %v2372 = vadd.f32 %v1710, %v2104
    %v2373 = vadd.f32 %v1711, %v2107
    %v2374 = vadd.f32 %v1712, %v2112
    %v2375 = vadd.f32 %v1713, %v2115
    %v2376 = vadd.f32 %v1714, %v2120
    %v2377 = vadd.f32 %v1715, %v2123
    %v2378 = vadd.f32 %v1716, %v2128
    %v2379 = vadd.f32 %v1717, %v2131
    %v2380 = vadd.f32 %v1718, %v2136
    %v2381 = vadd.f32 %v1719, %v2139
    %v2382 = vadd.f32 %v1720, %v2144
    %v2383 = vadd.f32 %v1721, %v2147
    %v2384 = vadd.f32 %v1722, %v2152
    %v2385 = vadd.f32 %v1723, %v2155
    %v2386 = vadd.f32 %v1724, %v2160
    %v2387 = vadd.f32 %v1725, %v2163
    %v2388 = vadd.f32 %v1726, %v2168
    %v2389 = vadd.f32 %v1727, %v2171
    %v2390 = vadd.f32 %v1728, %v2176
    %v2391 = vadd.f32 %v1729, %v2179
    %v2392 = vadd.f32 %v1730, %v2184
    %v2393 = vadd.f32 %v1731, %v2187
    %v2394 = vadd.f32 %v1732, %v2192
    %v2395 = vadd.f32 %v1733, %v2195
    %v2396 = vadd.f32 %v1734, %v2200
    %v2397 = vadd.f32 %v1735, %v2203
    %v2398 = vadd.f32 %v1736, %v2208
    %v2399 = vadd.f32 %v1737, %v2211
    %v2400 = vadd.f32 %v1738, %v2216
    %v2401 = vadd.f32 %v1739, %v2219
    %v2402 = vadd.f32 %v1740, %v2224
    %v2403 = vadd.f32 %v1741, %v2227
    %v2404 = vadd.f32 %v1742, %v2232
    %v2405 = vadd.f32 %v1743, %v2235
    %v2406 = vadd.f32 %v1744, %v2240
    %v2407 = vadd.f32 %v1745, %v2243
    %v2408 = vadd.f32 %v1746, %v2248
    %v2409 = vadd.f32 %v1747, %v2251
    %v2410 = vadd.f32 %v1748, %v2256
    %v2411 = vadd.f32 %v1749, %v2259
    %v2412 = vadd.f32 %v1750, %v2264
    %v2413 = vadd.f32 %v1751, %v2267
    %v2414 = vadd.f32 %v1752, %v2272
    %v2415 = vadd.f32 %v1753, %v2275
    %v2416 = vadd.f32 %v1754, %v2280
    %v2417 = vadd.f32 %v1755, %v2283
    %v2418 = vadd.f32 %v1756, %v2288
    %v2419 = vadd.f32 %v1757, %v2291
    %v2420 = vadd.f32 %v1758, %v2296
    %v2421 = vadd.f32 %v1759, %v2299
    %v2422 = vadd.f32 %v1760, %v2304
    %v2423 = vadd.f32 %v1761, %v2307
    %v2424 = vadd.f32 %v1762, %v2312
    %v2425 = vadd.f32 %v1763, %v2315
    %v2426 = vadd.f32 %v1764, %v2320
    %v2427 = vadd.f32 %v1765, %v2323
    %v2428 = vadd.f32 %v1766, %v2328
    %v2429 = vadd.f32 %v1767, %v2331
    %v2430 = vadd.f32 %v1768, %v2336
    %v2431 = vadd.f32 %v1769, %v2339
    %v2432 = vadd.f32 %v1770, %v2344
    %v2433 = vadd.f32 %v1771, %v2347
    %v2434 = vadd.f32 %v1772, %v2352
    %v2435 = vadd.f32 %v1773, %v2355
    %2436 = vst.msk [vmem:[#allocation3 + $0x18] sm:$0xff] %vm1527, %v2358
    %2437 = vst.msk [vmem:[#allocation3 + $0x20] sm:$0xff] %vm1527, %v2359
    %2438 = vst.msk [vmem:[#allocation3 + $0x28] sm:$0xff] %vm1527, %v2360
    %2439 = vst.msk [vmem:[#allocation3 + $0x30] sm:$0xff] %vm1527, %v2361
    %2440 = vst.msk [vmem:[#allocation3 + $0x38] sm:$0xff] %vm1527, %v2362
    %2441 = vst.msk [vmem:[#allocation3 + $0x40] sm:$0xff] %vm1527, %v2363
    %2442 = vst.msk [vmem:[#allocation3 + $0x48] sm:$0xff] %vm1527, %v2364
    %2443 = vst.msk [vmem:[#allocation3 + $0x50] sm:$0xff] %vm1527, %v2365
    %2444 = vst.msk [vmem:[#allocation3 + $0x58] sm:$0xff] %vm1527, %v2366
    %2445 = vst.msk [vmem:[#allocation3 + $0x60] sm:$0xff] %vm1527, %v2367
    %2446 = vst.msk [vmem:[#allocation3 + $0x68] sm:$0xff] %vm1527, %v2368
    %2447 = vst.msk [vmem:[#allocation3 + $0x70] sm:$0xff] %vm1527, %v2369
    %2448 = vst.msk [vmem:[#allocation3 + $0x78] sm:$0xff] %vm1527, %v2370
    %2449 = vst.msk [vmem:[#allocation3 + $0x80] sm:$0xff] %vm1527, %v2371
    %2450 = vst.msk [vmem:[#allocation3 + $0x88] sm:$0xff] %vm1527, %v2372
    %2451 = vst.msk [vmem:[#allocation3 + $0x90] sm:$0xff] %vm1527, %v2373
    %2452 = vst.msk [vmem:[#allocation3 + $0x98] sm:$0xff] %vm1527, %v2374
    %2453 = vst.msk [vmem:[#allocation3 + $0xa0] sm:$0xff] %vm1527, %v2375
    %2454 = vst.msk [vmem:[#allocation3 + $0xa8] sm:$0xff] %vm1527, %v2376
    %2455 = vst.msk [vmem:[#allocation3 + $0xb0] sm:$0xff] %vm1527, %v2377
    %2456 = vst.msk [vmem:[#allocation3 + $0xb8] sm:$0xff] %vm1527, %v2378
    %2457 = vst.msk [vmem:[#allocation3 + $0xc0] sm:$0xff] %vm1527, %v2379
    %2458 = vst.msk [vmem:[#allocation3 + $0xc8] sm:$0xff] %vm1527, %v2380
    %2459 = vst.msk [vmem:[#allocation3 + $0xd0] sm:$0xff] %vm1527, %v2381
    %2460 = vst.msk [vmem:[#allocation3 + $0xd8] sm:$0xff] %vm1527, %v2382
    %2461 = vst.msk [vmem:[#allocation3 + $0xe0] sm:$0xff] %vm1527, %v2383
    %2462 = vst.msk [vmem:[#allocation3 + $0xe8] sm:$0xff] %vm1527, %v2384
    %2463 = vst.msk [vmem:[#allocation3 + $0xf0] sm:$0xff] %vm1527, %v2385
    %2464 = vst.msk [vmem:[#allocation3 + $0xf8] sm:$0xff] %vm1527, %v2386
    %2465 = vst.msk [vmem:[#allocation3 + $0x100] sm:$0xff] %vm1527, %v2387
    %2466 = vst.msk [vmem:[#allocation3 + $0x108] sm:$0xff] %vm1527, %v2388
    %2467 = vst.msk [vmem:[#allocation3 + $0x110] sm:$0xff] %vm1527, %v2389
    %2468 = vst.msk [vmem:[#allocation3 + $0x118] sm:$0xff] %vm1527, %v2390
    %2469 = vst.msk [vmem:[#allocation3 + $0x120] sm:$0xff] %vm1527, %v2391
    %2470 = vst.msk [vmem:[#allocation3 + $0x128] sm:$0xff] %vm1527, %v2392
    %2471 = vst.msk [vmem:[#allocation3 + $0x130] sm:$0xff] %vm1527, %v2393
    %2472 = vst.msk [vmem:[#allocation3 + $0x138] sm:$0xff] %vm1527, %v2394
    %2473 = vst.msk [vmem:[#allocation3 + $0x140] sm:$0xff] %vm1527, %v2395
    %2474 = vst.msk [vmem:[#allocation3 + $0x148] sm:$0xff] %vm1527, %v2396
    %2475 = vst.msk [vmem:[#allocation3 + $0x150] sm:$0xff] %vm1527, %v2397
    %2476 = vst.msk [vmem:[#allocation3 + $0x158] sm:$0xff] %vm1527, %v2398
    %2477 = vst.msk [vmem:[#allocation3 + $0x160] sm:$0xff] %vm1527, %v2399
    %2478 = vst.msk [vmem:[#allocation3 + $0x168] sm:$0xff] %vm1527, %v2400
    %2479 = vst.msk [vmem:[#allocation3 + $0x170] sm:$0xff] %vm1527, %v2401
    %2480 = vst.msk [vmem:[#allocation3 + $0x178] sm:$0xff] %vm1527, %v2402
    %2481 = vst.msk [vmem:[#allocation3 + $0x180] sm:$0xff] %vm1527, %v2403
    %2482 = vst.msk [vmem:[#allocation3 + $0x188] sm:$0xff] %vm1527, %v2404
    %2483 = vst.msk [vmem:[#allocation3 + $0x190] sm:$0xff] %vm1527, %v2405
    %2484 = vst.msk [vmem:[#allocation3 + $0x198] sm:$0xff] %vm1527, %v2406
    %2485 = vst.msk [vmem:[#allocation3 + $0x1a0] sm:$0xff] %vm1527, %v2407
    %2486 = vst.msk [vmem:[#allocation3 + $0x1a8] sm:$0xff] %vm1527, %v2408
    %2487 = vst.msk [vmem:[#allocation3 + $0x1b0] sm:$0xff] %vm1527, %v2409
    %2488 = vst.msk [vmem:[#allocation3 + $0x1b8] sm:$0xff] %vm1527, %v2410
    %2489 = vst.msk [vmem:[#allocation3 + $0x1c0] sm:$0xff] %vm1527, %v2411
    %2490 = vst.msk [vmem:[#allocation3 + $0x1c8] sm:$0xff] %vm1527, %v2412
    %2491 = vst.msk [vmem:[#allocation3 + $0x1d0] sm:$0xff] %vm1527, %v2413
    %2492 = vst.msk [vmem:[#allocation3 + $0x1d8] sm:$0xff] %vm1527, %v2414
    %2493 = vst.msk [vmem:[#allocation3 + $0x1e0] sm:$0xff] %vm1527, %v2415
    %2494 = vst.msk [vmem:[#allocation3 + $0x1e8] sm:$0xff] %vm1527, %v2416
    %2495 = vst.msk [vmem:[#allocation3 + $0x1f0] sm:$0xff] %vm1527, %v2417
    %2496 = vst.msk [vmem:[#allocation3 + $0x1f8] sm:$0xff] %vm1527, %v2418
    %2497 = vst.msk [vmem:[#allocation3 + $0x200] sm:$0xff] %vm1527, %v2419
    %2498 = vst.msk [vmem:[#allocation3 + $0x208] sm:$0xff] %vm1527, %v2420
    %2499 = vst.msk [vmem:[#allocation3 + $0x210] sm:$0xff] %vm1527, %v2421
    %2500 = vst.msk [vmem:[#allocation3 + $0x218] sm:$0xff] %vm1527, %v2422
    %2501 = vst.msk [vmem:[#allocation3 + $0x220] sm:$0xff] %vm1527, %v2423
    %2502 = vst.msk [vmem:[#allocation3 + $0x228] sm:$0xff] %vm1527, %v2424
    %2503 = vst.msk [vmem:[#allocation3 + $0x230] sm:$0xff] %vm1527, %v2425
    %2504 = vst.msk [vmem:[#allocation3 + $0x238] sm:$0xff] %vm1527, %v2426
    %2505 = vst.msk [vmem:[#allocation3 + $0x240] sm:$0xff] %vm1527, %v2427
    %2506 = vst.msk [vmem:[#allocation3 + $0x248] sm:$0xff] %vm1527, %v2428
    %2507 = vst.msk [vmem:[#allocation3 + $0x250] sm:$0xff] %vm1527, %v2429
    %2508 = vst.msk [vmem:[#allocation3 + $0x258] sm:$0xff] %vm1527, %v2430
    %2509 = vst.msk [vmem:[#allocation3 + $0x260] sm:$0xff] %vm1527, %v2431
    %2510 = vst.msk [vmem:[#allocation3 + $0x268] sm:$0xff] %vm1527, %v2432
    %2511 = vst.msk [vmem:[#allocation3 + $0x270] sm:$0xff] %vm1527, %v2433
    %2512 = vst.msk [vmem:[#allocation3 + $0x278] sm:$0xff] %vm1527, %v2434
    %2513 = vst.msk [vmem:[#allocation3 + $0x280] sm:$0xff] %vm1527, %v2435
    %v2514 = vld [vmem:[#allocation3 + $0x18] sm:$0xff]
    %v2515 = vld [vmem:[#allocation3 + $0x20] sm:$0xff]
    %v2516 = vld [vmem:[#allocation3 + $0x28] sm:$0xff]
    %v2517 = vld [vmem:[#allocation3 + $0x30] sm:$0xff]
    %v2518 = vld [vmem:[#allocation3 + $0x38] sm:$0xff]
    %v2519 = vld [vmem:[#allocation3 + $0x40] sm:$0xff]
    %v2520 = vld [vmem:[#allocation3 + $0x48] sm:$0xff]
    %v2521 = vld [vmem:[#allocation3 + $0x50] sm:$0xff]
    %v2522 = vld [vmem:[#allocation3 + $0x58] sm:$0xff]
    %v2523 = vld [vmem:[#allocation3 + $0x60] sm:$0xff]
    %v2524 = vld [vmem:[#allocation3 + $0x68] sm:$0xff]
    %v2525 = vld [vmem:[#allocation3 + $0x70] sm:$0xff]
    %v2526 = vld [vmem:[#allocation3 + $0x78] sm:$0xff]
    %v2527 = vld [vmem:[#allocation3 + $0x80] sm:$0xff]
    %v2528 = vld [vmem:[#allocation3 + $0x88] sm:$0xff]
    %v2529 = vld [vmem:[#allocation3 + $0x90] sm:$0xff]
    %v2530 = vld [vmem:[#allocation3 + $0x98] sm:$0xff]
    %v2531 = vld [vmem:[#allocation3 + $0xa0] sm:$0xff]
    %v2532 = vld [vmem:[#allocation3 + $0xa8] sm:$0xff]
    %v2533 = vld [vmem:[#allocation3 + $0xb0] sm:$0xff]
    %v2534 = vld [vmem:[#allocation3 + $0xb8] sm:$0xff]
    %v2535 = vld [vmem:[#allocation3 + $0xc0] sm:$0xff]
    %v2536 = vld [vmem:[#allocation3 + $0xc8] sm:$0xff]
    %v2537 = vld [vmem:[#allocation3 + $0xd0] sm:$0xff]
    %v2538 = vld [vmem:[#allocation3 + $0xd8] sm:$0xff]
    %v2539 = vld [vmem:[#allocation3 + $0xe0] sm:$0xff]
    %v2540 = vld [vmem:[#allocation3 + $0xe8] sm:$0xff]
    %v2541 = vld [vmem:[#allocation3 + $0xf0] sm:$0xff]
    %v2542 = vld [vmem:[#allocation3 + $0xf8] sm:$0xff]
    %v2543 = vld [vmem:[#allocation3 + $0x100] sm:$0xff]
    %v2544 = vld [vmem:[#allocation3 + $0x108] sm:$0xff]
    %v2545 = vld [vmem:[#allocation3 + $0x110] sm:$0xff]
    %v2546 = vld [vmem:[#allocation3 + $0x118] sm:$0xff]
    %v2547 = vld [vmem:[#allocation3 + $0x120] sm:$0xff]
    %v2548 = vld [vmem:[#allocation3 + $0x128] sm:$0xff]
    %v2549 = vld [vmem:[#allocation3 + $0x130] sm:$0xff]
    %v2550 = vld [vmem:[#allocation3 + $0x138] sm:$0xff]
    %v2551 = vld [vmem:[#allocation3 + $0x140] sm:$0xff]
    %v2552 = vld [vmem:[#allocation3 + $0x148] sm:$0xff]
    %v2553 = vld [vmem:[#allocation3 + $0x150] sm:$0xff]
    %v2554 = vld [vmem:[#allocation3 + $0x158] sm:$0xff]
    %v2555 = vld [vmem:[#allocation3 + $0x160] sm:$0xff]
    %v2556 = vld [vmem:[#allocation3 + $0x168] sm:$0xff]
    %v2557 = vld [vmem:[#allocation3 + $0x170] sm:$0xff]
    %v2558 = vld [vmem:[#allocation3 + $0x178] sm:$0xff]
    %v2559 = vld [vmem:[#allocation3 + $0x180] sm:$0xff]
    %v2560 = vld [vmem:[#allocation3 + $0x188] sm:$0xff]
    %v2561 = vld [vmem:[#allocation3 + $0x190] sm:$0xff]
    %v2562 = vld [vmem:[#allocation3 + $0x198] sm:$0xff]
    %v2563 = vld [vmem:[#allocation3 + $0x1a0] sm:$0xff]
    %v2564 = vld [vmem:[#allocation3 + $0x1a8] sm:$0xff]
    %v2565 = vld [vmem:[#allocation3 + $0x1b0] sm:$0xff]
    %v2566 = vld [vmem:[#allocation3 + $0x1b8] sm:$0xff]
    %v2567 = vld [vmem:[#allocation3 + $0x1c0] sm:$0xff]
    %v2568 = vld [vmem:[#allocation3 + $0x1c8] sm:$0xff]
    %v2569 = vld [vmem:[#allocation3 + $0x1d0] sm:$0xff]
    %v2570 = vld [vmem:[#allocation3 + $0x1d8] sm:$0xff]
    %v2571 = vld [vmem:[#allocation3 + $0x1e0] sm:$0xff]
    %v2572 = vld [vmem:[#allocation3 + $0x1e8] sm:$0xff]
    %v2573 = vld [vmem:[#allocation3 + $0x1f0] sm:$0xff]
    %v2574 = vld [vmem:[#allocation3 + $0x1f8] sm:$0xff]
    %v2575 = vld [vmem:[#allocation3 + $0x200] sm:$0xff]
    %v2576 = vld [vmem:[#allocation3 + $0x208] sm:$0xff]
    %v2577 = vld [vmem:[#allocation3 + $0x210] sm:$0xff]
    %v2578 = vld [vmem:[#allocation3 + $0x218] sm:$0xff]
    %v2579 = vld [vmem:[#allocation3 + $0x220] sm:$0xff]
    %v2580 = vld [vmem:[#allocation3 + $0x228] sm:$0xff]
    %v2581 = vld [vmem:[#allocation3 + $0x230] sm:$0xff]
    %v2582 = vld [vmem:[#allocation3 + $0x238] sm:$0xff]
    %v2583 = vld [vmem:[#allocation3 + $0x240] sm:$0xff]
    %v2584 = vld [vmem:[#allocation3 + $0x248] sm:$0xff]
    %v2585 = vld [vmem:[#allocation3 + $0x250] sm:$0xff]
    %v2586 = vld [vmem:[#allocation3 + $0x258] sm:$0xff]
    %v2587 = vld [vmem:[#allocation3 + $0x260] sm:$0xff]
    %v2588 = vld [vmem:[#allocation3 + $0x268] sm:$0xff]
    %v2589 = vld [vmem:[#allocation3 + $0x270] sm:$0xff]
    %v2590 = vld [vmem:[#allocation3 + $0x278] sm:$0xff]
    %v2591 = vld [vmem:[#allocation3 + $0x280] sm:$0xff]
    %v2592 = vld [vmem:[#allocation2 + $0x6] sm:$0xff]
    %v2593 = vld [vmem:[#allocation2 + $0xe] sm:$0xff]
    %v2594 = vld [vmem:[#allocation2 + $0x16] sm:$0xff]
    %v2595 = vld [vmem:[#allocation2 + $0x1e] sm:$0xff]
    %v2596 = vld [vmem:[#allocation2 + $0x26] sm:$0xff]
    %v2597 = vld [vmem:[#allocation2 + $0x2e] sm:$0xff]
    %v2598 = vld [vmem:[#allocation2 + $0x36] sm:$0xff]
    %v2599 = vld [vmem:[#allocation2 + $0x3e] sm:$0xff]
    %v2600 = vld [vmem:[#allocation2 + $0x46] sm:$0xff]
    %v2601 = vld [vmem:[#allocation2 + $0x4e] sm:$0xff]
    %v2602 = vld [vmem:[#allocation2 + $0x56] sm:$0xff]
    %v2603 = vld [vmem:[#allocation2 + $0x5e] sm:$0xff]
    %v2604 = vld [vmem:[#allocation2 + $0x66] sm:$0xff]
    %v2605 = vld [vmem:[#allocation2 + $0x6e] sm:$0xff]
    %v2606 = vld [vmem:[#allocation2 + $0x76] sm:$0xff]
    %v2607 = vld [vmem:[#allocation2 + $0x7e] sm:$0xff]
    %v2608 = vld [vmem:[#allocation2 + $0x86] sm:$0xff]
    %v2609 = vld [vmem:[#allocation2 + $0x8e] sm:$0xff]
    %v2610 = vld [vmem:[#allocation2 + $0x96] sm:$0xff]
    %v2611 = vld [vmem:[#allocation2 + $0x9e] sm:$0xff]
    %v2612 = vld [vmem:[#allocation2 + $0xa6] sm:$0xff]
    %v2613 = vld [vmem:[#allocation2 + $0xae] sm:$0xff]
    %v2614 = vld [vmem:[#allocation2 + $0xb6] sm:$0xff]
    %v2615 = vld [vmem:[#allocation2 + $0xbe] sm:$0xff]
    %v2616 = vld [vmem:[#allocation2 + $0xc6] sm:$0xff]
    %v2617 = vld [vmem:[#allocation2 + $0xce] sm:$0xff]
    %v2618 = vld [vmem:[#allocation2 + $0xd6] sm:$0xff]
    %v2619 = vld [vmem:[#allocation2 + $0xde] sm:$0xff]
    %v2620 = vld [vmem:[#allocation2 + $0xe6] sm:$0xff]
    %v2621 = vld [vmem:[#allocation2 + $0xee] sm:$0xff]
    %v2622 = vld [vmem:[#allocation2 + $0xf6] sm:$0xff]
    %v2623 = vld [vmem:[#allocation2 + $0xfe] sm:$0xff]
    %v2624 = vld [vmem:[#allocation2 + $0x106] sm:$0xff]
    %v2625 = vld [vmem:[#allocation2 + $0x10e] sm:$0xff]
    %v2626 = vld [vmem:[#allocation2 + $0x116] sm:$0xff]
    %v2627 = vld [vmem:[#allocation2 + $0x11e] sm:$0xff]
    %v2628 = vld [vmem:[#allocation2 + $0x126] sm:$0xff]
    %v2629 = vld [vmem:[#allocation2 + $0x12e] sm:$0xff]
    %v2630 = vld [vmem:[#allocation2 + $0x136] sm:$0xff]
    %v2631 = vld [vmem:[#allocation2 + $0x13e] sm:$0xff]
    %v2632 = vld [vmem:[#allocation2 + $0x146] sm:$0xff]
    %v2633 = vld [vmem:[#allocation2 + $0x14e] sm:$0xff]
    %v2634 = vld [vmem:[#allocation2 + $0x156] sm:$0xff]
    %v2635 = vld [vmem:[#allocation2 + $0x15e] sm:$0xff]
    %v2636 = vld [vmem:[#allocation2 + $0x166] sm:$0xff]
    %v2637 = vld [vmem:[#allocation2 + $0x16e] sm:$0xff]
    %v2638 = vld [vmem:[#allocation2 + $0x176] sm:$0xff]
    %v2639 = vld [vmem:[#allocation2 + $0x17e] sm:$0xff]
    %v2640 = vld [vmem:[#allocation2 + $0x186] sm:$0xff]
    %v2641 = vld [vmem:[#allocation2 + $0x18e] sm:$0xff]
    %v2642 = vld [vmem:[#allocation2 + $0x196] sm:$0xff]
    %v2643 = vld [vmem:[#allocation2 + $0x19e] sm:$0xff]
    %v2644 = vld [vmem:[#allocation2 + $0x1a6] sm:$0xff]
    %v2645 = vld [vmem:[#allocation2 + $0x1ae] sm:$0xff]
    %v2646 = vld [vmem:[#allocation2 + $0x1b6] sm:$0xff]
    %v2647 = vld [vmem:[#allocation2 + $0x1be] sm:$0xff]
    %v2648 = vld [vmem:[#allocation2 + $0x1c6] sm:$0xff]
    %v2649 = vld [vmem:[#allocation2 + $0x1ce] sm:$0xff]
    %v2650 = vld [vmem:[#allocation2 + $0x1d6] sm:$0xff]
    %v2651 = vld [vmem:[#allocation2 + $0x1de] sm:$0xff]
    %v2652 = vld [vmem:[#allocation2 + $0x1e6] sm:$0xff]
    %v2653 = vld [vmem:[#allocation2 + $0x1ee] sm:$0xff]
    %v2654 = vld [vmem:[#allocation2 + $0x1f6] sm:$0xff]
    %v2655 = vld [vmem:[#allocation2 + $0x1fe] sm:$0xff]
    %v2656 = vld [vmem:[#allocation2 + $0x206] sm:$0xff]
    %v2657 = vld [vmem:[#allocation2 + $0x20e] sm:$0xff]
    %v2658 = vld [vmem:[#allocation2 + $0x216] sm:$0xff]
    %v2659 = vld [vmem:[#allocation2 + $0x21e] sm:$0xff]
    %v2660 = vld [vmem:[#allocation2 + $0x226] sm:$0xff]
    %v2661 = vld [vmem:[#allocation2 + $0x22e] sm:$0xff]
    %v2662 = vld [vmem:[#allocation2 + $0x236] sm:$0xff]
    %v2663 = vld [vmem:[#allocation2 + $0x23e] sm:$0xff]
    %v2664 = vld [vmem:[#allocation2 + $0x246] sm:$0xff]
    %v2665 = vld [vmem:[#allocation2 + $0x24e] sm:$0xff]
    %v2666 = vld [vmem:[#allocation2 + $0x256] sm:$0xff]
    %v2667 = vld [vmem:[#allocation2 + $0x25e] sm:$0xff]
    %v2668 = vld [vmem:[#allocation2 + $0x266] sm:$0xff]
    %v2669 = vld [vmem:[#allocation2 + $0x26e] sm:$0xff]
    %v2670 = vpack.c.bf16 %v2593, %v2592
    %v2671 = vpack.c.bf16 %v2595, %v2594
    %v2672 = vpack.c.bf16 %v2597, %v2596
    %v2673 = vpack.c.bf16 %v2599, %v2598
    %v2674 = vpack.c.bf16 %v2601, %v2600
    %v2675 = vpack.c.bf16 %v2603, %v2602
    %v2676 = vpack.c.bf16 %v2605, %v2604
    %v2677 = vpack.c.bf16 %v2607, %v2606
    %v2678 = vpack.c.bf16 %v2609, %v2608
    %v2679 = vpack.c.bf16 %v2611, %v2610
    %v2680 = vpack.c.bf16 %v2613, %v2612
    %v2681 = vpack.c.bf16 %v2615, %v2614
    %v2682 = vpack.c.bf16 %v2617, %v2616
    %v2683 = vpack.c.bf16 %v2619, %v2618
    %v2684 = vpack.c.bf16 %v2621, %v2620
    %v2685 = vpack.c.bf16 %v2623, %v2622
    %v2686 = vpack.c.bf16 %v2625, %v2624
    %v2687 = vpack.c.bf16 %v2627, %v2626
    %v2688 = vpack.c.bf16 %v2629, %v2628
    %v2689 = vpack.c.bf16 %v2631, %v2630
    %v2690 = vpack.c.bf16 %v2633, %v2632
    %v2691 = vpack.c.bf16 %v2635, %v2634
    %v2692 = vpack.c.bf16 %v2637, %v2636
    %v2693 = vpack.c.bf16 %v2639, %v2638
    %v2694 = vpack.c.bf16 %v2641, %v2640
    %v2695 = vpack.c.bf16 %v2643, %v2642
    %v2696 = vpack.c.bf16 %v2645, %v2644
    %v2697 = vpack.c.bf16 %v2647, %v2646
    %v2698 = vpack.c.bf16 %v2649, %v2648
    %v2699 = vpack.c.bf16 %v2651, %v2650
    %v2700 = vpack.c.bf16 %v2653, %v2652
    %v2701 = vpack.c.bf16 %v2655, %v2654
    %v2702 = vpack.c.bf16 %v2657, %v2656
    %v2703 = vpack.c.bf16 %v2659, %v2658
    %v2704 = vpack.c.bf16 %v2661, %v2660
    %v2705 = vpack.c.bf16 %v2663, %v2662
    %v2706 = vpack.c.bf16 %v2665, %v2664
    %v2707 = vpack.c.bf16 %v2667, %v2666
    %v2708 = vpack.c.bf16 %v2669, %v2668
    %s2709 = scalar_lea.vmem %s4, 4
    %v2710 = vld [vmem:[%s2709] sm:$0xf]
    %v2712 = vsel %vm1527, %v2670, 0
    %v2715 = vsel %vm1527, %v2671, 0
    %v2718 = vsel %vm1527, %v2672, 0
    %v2721 = vsel %vm1527, %v2673, 0
    %v2724 = vsel %vm1527, %v2674, 0
    %v2727 = vsel %vm1527, %v2675, 0
    %v2730 = vsel %vm1527, %v2676, 0
    %v2733 = vsel %vm1527, %v2677, 0
    %v2736 = vsel %vm1527, %v2678, 0
    %v2739 = vsel %vm1527, %v2679, 0
    %v2742 = vsel %vm1527, %v2680, 0
    %v2745 = vsel %vm1527, %v2681, 0
    %v2748 = vsel %vm1527, %v2682, 0
    %v2751 = vsel %vm1527, %v2683, 0
    %v2754 = vsel %vm1527, %v2684, 0
    %v2757 = vsel %vm1527, %v2685, 0
    %v2760 = vsel %vm1527, %v2686, 0
    %v2763 = vsel %vm1527, %v2687, 0
    %v2766 = vsel %vm1527, %v2688, 0
    %v2769 = vsel %vm1527, %v2689, 0
    %v2772 = vsel %vm1527, %v2690, 0
    %v2775 = vsel %vm1527, %v2691, 0
    %v2778 = vsel %vm1527, %v2692, 0
    %v2781 = vsel %vm1527, %v2693, 0
    %v2784 = vsel %vm1527, %v2694, 0
    %v2787 = vsel %vm1527, %v2695, 0
    %v2790 = vsel %vm1527, %v2696, 0
    %v2793 = vsel %vm1527, %v2697, 0
    %v2796 = vsel %vm1527, %v2698, 0
    %v2799 = vsel %vm1527, %v2699, 0
    %v2802 = vsel %vm1527, %v2700, 0
    %v2805 = vsel %vm1527, %v2701, 0
    %v2808 = vsel %vm1527, %v2702, 0
    %v2811 = vsel %vm1527, %v2703, 0
    %v2814 = vsel %vm1527, %v2704, 0
    %v2817 = vsel %vm1527, %v2705, 0
    %v2820 = vsel %vm1527, %v2706, 0
    %v2823 = vsel %vm1527, %v2707, 0
    %v2826 = vsel %vm1527, %v2708, 0
    %v2829 = vsel %vm2009, %v2710, 0
    %2831 = vmatprep.subr.bf16.mxu0 0
    %2832 = vmatpush1.bf16.msra.mxu0 %v2829
    %2833 = vmatprep.subr.bf16.mxu0 0
    %2834 = vmatpush1.bf16.msra.mxu0 0
    %2835 = vmatprep.subr.bf16.mxu0 0
    %2836 = vmatpush1.bf16.msra.mxu0 0
    %2837 = vmatprep.subr.bf16.mxu0 0
    %2838 = vmatpush1.bf16.msra.mxu0 0
    %2839 = vmatprep.subr.bf16.mxu0 0
    %2840 = vmatpush1.bf16.msra.mxu0 0
    %2841 = vmatprep.subr.bf16.mxu0 0
    %2842 = vmatpush1.bf16.msra.mxu0 0
    %2843 = vmatprep.subr.bf16.mxu0 0
    %2844 = vmatpush1.bf16.msra.mxu0 0
    %2845 = vmatprep.subr.bf16.mxu0 0
    %2846 = vmatpush1.bf16.msra.mxu0 0
    %2847 = vmatprep.subr.bf16.mxu0 0
    %2848 = vmatpush1.bf16.msra.mxu0 0
    %2849 = vmatprep.subr.bf16.mxu0 0
    %2850 = vmatpush1.bf16.msra.mxu0 0
    %2851 = vmatprep.subr.bf16.mxu0 0
    %2852 = vmatpush1.bf16.msra.mxu0 0
    %2853 = vmatprep.subr.bf16.mxu0 0
    %2854 = vmatpush1.bf16.msra.mxu0 0
    %2855 = vmatprep.subr.bf16.mxu0 0
    %2856 = vmatpush1.bf16.msra.mxu0 0
    %2857 = vmatprep.subr.bf16.mxu0 0
    %2858 = vmatpush1.bf16.msra.mxu0 0
    %2859 = vmatprep.subr.bf16.mxu0 0
    %2860 = vmatpush1.bf16.msra.mxu0 0
    %2861 = vmatprep.subr.bf16.mxu0 0
    %2862 = vmatpush1.bf16.msra.mxu0 0
    %2863 = vmatprep.mubr.bf16.mxu0 0
    %2864 = vmatmul.mubr.bf16.gmra.mrb[0].mxu0 %v2712
    %v2865 = vpop.f32.mrb[0].mxu0
    %v2866 = vadd.f32 0.0, %v2865
    %v2867 = vpop.f32.mrb[0].mxu0
    %v2868 = vpop.f32.mrb[0].mxu0
    %v2869 = vadd.f32 0.0, %v2868
    %v2870 = vpop.f32.mrb[0].mxu0
    %2871 = vmatprep.mubr.bf16.mxu0 0
    %2872 = vmatmul.mubr.bf16.gmra.mrb[0].mxu0 %v2715
    %v2873 = vpop.f32.mrb[0].mxu0
    %v2874 = vadd.f32 0.0, %v2873
    %v2875 = vpop.f32.mrb[0].mxu0
    %v2876 = vpop.f32.mrb[0].mxu0
    %v2877 = vadd.f32 0.0, %v2876
    %v2878 = vpop.f32.mrb[0].mxu0
    %2879 = vmatprep.mubr.bf16.mxu0 0
    %2880 = vmatmul.mubr.bf16.gmra.mrb[0].mxu0 %v2718
    %v2881 = vpop.f32.mrb[0].mxu0
    %v2882 = vadd.f32 0.0, %v2881
    %v2883 = vpop.f32.mrb[0].mxu0
    %v2884 = vpop.f32.mrb[0].mxu0
    %v2885 = vadd.f32 0.0, %v2884
    %v2886 = vpop.f32.mrb[0].mxu0
    %2887 = vmatprep.mubr.bf16.mxu0 0
    %2888 = vmatmul.mubr.bf16.gmra.mrb[0].mxu0 %v2721
    %v2889 = vpop.f32.mrb[0].mxu0
    %v2890 = vadd.f32 0.0, %v2889
    %v2891 = vpop.f32.mrb[0].mxu0
    %v2892 = vpop.f32.mrb[0].mxu0
    %v2893 = vadd.f32 0.0, %v2892
    %v2894 = vpop.f32.mrb[0].mxu0
    %2895 = vmatprep.mubr.bf16.mxu0 0
    %2896 = vmatmul.mubr.bf16.gmra.mrb[0].mxu0 %v2724
    %v2897 = vpop.f32.mrb[0].mxu0
    %v2898 = vadd.f32 0.0, %v2897
    %v2899 = vpop.f32.mrb[0].mxu0
    %v2900 = vpop.f32.mrb[0].mxu0
    %v2901 = vadd.f32 0.0, %v2900
    %v2902 = vpop.f32.mrb[0].mxu0
    %2903 = vmatprep.mubr.bf16.mxu0 0
    %2904 = vmatmul.mubr.bf16.gmra.mrb[0].mxu0 %v2727
    %v2905 = vpop.f32.mrb[0].mxu0
    %v2906 = vadd.f32 0.0, %v2905
    %v2907 = vpop.f32.mrb[0].mxu0
    %v2908 = vpop.f32.mrb[0].mxu0
    %v2909 = vadd.f32 0.0, %v2908
    %v2910 = vpop.f32.mrb[0].mxu0
    %2911 = vmatprep.mubr.bf16.mxu0 0
    %2912 = vmatmul.mubr.bf16.gmra.mrb[0].mxu0 %v2730
    %v2913 = vpop.f32.mrb[0].mxu0
    %v2914 = vadd.f32 0.0, %v2913
    %v2915 = vpop.f32.mrb[0].mxu0
    %v2916 = vpop.f32.mrb[0].mxu0
    %v2917 = vadd.f32 0.0, %v2916
    %v2918 = vpop.f32.mrb[0].mxu0
    %2919 = vmatprep.mubr.bf16.mxu0 0
    %2920 = vmatmul.mubr.bf16.gmra.mrb[0].mxu0 %v2733
    %v2921 = vpop.f32.mrb[0].mxu0
    %v2922 = vadd.f32 0.0, %v2921
    %v2923 = vpop.f32.mrb[0].mxu0
    %v2924 = vpop.f32.mrb[0].mxu0
    %v2925 = vadd.f32 0.0, %v2924
    %v2926 = vpop.f32.mrb[0].mxu0
    %2927 = vmatprep.mubr.bf16.mxu0 0
    %2928 = vmatmul.mubr.bf16.gmra.mrb[0].mxu0 %v2736
    %v2929 = vpop.f32.mrb[0].mxu0
    %v2930 = vadd.f32 0.0, %v2929
    %v2931 = vpop.f32.mrb[0].mxu0
    %v2932 = vpop.f32.mrb[0].mxu0
    %v2933 = vadd.f32 0.0, %v2932
    %v2934 = vpop.f32.mrb[0].mxu0
    %2935 = vmatprep.mubr.bf16.mxu0 0
    %2936 = vmatmul.mubr.bf16.gmra.mrb[0].mxu0 %v2739
    %v2937 = vpop.f32.mrb[0].mxu0
    %v2938 = vadd.f32 0.0, %v2937
    %v2939 = vpop.f32.mrb[0].mxu0
    %v2940 = vpop.f32.mrb[0].mxu0
    %v2941 = vadd.f32 0.0, %v2940
    %v2942 = vpop.f32.mrb[0].mxu0
    %2943 = vmatprep.mubr.bf16.mxu0 0
    %2944 = vmatmul.mubr.bf16.gmra.mrb[0].mxu0 %v2742
    %v2945 = vpop.f32.mrb[0].mxu0
    %v2946 = vadd.f32 0.0, %v2945
    %v2947 = vpop.f32.mrb[0].mxu0
    %v2948 = vpop.f32.mrb[0].mxu0
    %v2949 = vadd.f32 0.0, %v2948
    %v2950 = vpop.f32.mrb[0].mxu0
    %2951 = vmatprep.mubr.bf16.mxu0 0
    %2952 = vmatmul.mubr.bf16.gmra.mrb[0].mxu0 %v2745
    %v2953 = vpop.f32.mrb[0].mxu0
    %v2954 = vadd.f32 0.0, %v2953
    %v2955 = vpop.f32.mrb[0].mxu0
    %v2956 = vpop.f32.mrb[0].mxu0
    %v2957 = vadd.f32 0.0, %v2956
    %v2958 = vpop.f32.mrb[0].mxu0
    %2959 = vmatprep.mubr.bf16.mxu0 0
    %2960 = vmatmul.mubr.bf16.gmra.mrb[0].mxu0 %v2748
    %v2961 = vpop.f32.mrb[0].mxu0
    %v2962 = vadd.f32 0.0, %v2961
    %v2963 = vpop.f32.mrb[0].mxu0
    %v2964 = vpop.f32.mrb[0].mxu0
    %v2965 = vadd.f32 0.0, %v2964
    %v2966 = vpop.f32.mrb[0].mxu0
    %2967 = vmatprep.mubr.bf16.mxu0 0
    %2968 = vmatmul.mubr.bf16.gmra.mrb[0].mxu0 %v2751
    %v2969 = vpop.f32.mrb[0].mxu0
    %v2970 = vadd.f32 0.0, %v2969
    %v2971 = vpop.f32.mrb[0].mxu0
    %v2972 = vpop.f32.mrb[0].mxu0
    %v2973 = vadd.f32 0.0, %v2972
    %v2974 = vpop.f32.mrb[0].mxu0
    %2975 = vmatprep.mubr.bf16.mxu0 0
    %2976 = vmatmul.mubr.bf16.gmra.mrb[0].mxu0 %v2754
    %v2977 = vpop.f32.mrb[0].mxu0
    %v2978 = vadd.f32 0.0, %v2977
    %v2979 = vpop.f32.mrb[0].mxu0
    %v2980 = vpop.f32.mrb[0].mxu0
    %v2981 = vadd.f32 0.0, %v2980
    %v2982 = vpop.f32.mrb[0].mxu0
    %2983 = vmatprep.mubr.bf16.mxu0 0
    %2984 = vmatmul.mubr.bf16.gmra.mrb[0].mxu0 %v2757
    %v2985 = vpop.f32.mrb[0].mxu0
    %v2986 = vadd.f32 0.0, %v2985
    %v2987 = vpop.f32.mrb[0].mxu0
    %v2988 = vpop.f32.mrb[0].mxu0
    %v2989 = vadd.f32 0.0, %v2988
    %v2990 = vpop.f32.mrb[0].mxu0
    %2991 = vmatprep.mubr.bf16.mxu0 0
    %2992 = vmatmul.mubr.bf16.gmra.mrb[0].mxu0 %v2760
    %v2993 = vpop.f32.mrb[0].mxu0
    %v2994 = vadd.f32 0.0, %v2993
    %v2995 = vpop.f32.mrb[0].mxu0
    %v2996 = vpop.f32.mrb[0].mxu0
    %v2997 = vadd.f32 0.0, %v2996
    %v2998 = vpop.f32.mrb[0].mxu0
    %2999 = vmatprep.mubr.bf16.mxu0 0
    %3000 = vmatmul.mubr.bf16.gmra.mrb[0].mxu0 %v2763
    %v3001 = vpop.f32.mrb[0].mxu0
    %v3002 = vadd.f32 0.0, %v3001
    %v3003 = vpop.f32.mrb[0].mxu0
    %v3004 = vpop.f32.mrb[0].mxu0
    %v3005 = vadd.f32 0.0, %v3004
    %v3006 = vpop.f32.mrb[0].mxu0
    %3007 = vmatprep.mubr.bf16.mxu0 0
    %3008 = vmatmul.mubr.bf16.gmra.mrb[0].mxu0 %v2766
    %v3009 = vpop.f32.mrb[0].mxu0
    %v3010 = vadd.f32 0.0, %v3009
    %v3011 = vpop.f32.mrb[0].mxu0
    %v3012 = vpop.f32.mrb[0].mxu0
    %v3013 = vadd.f32 0.0, %v3012
    %v3014 = vpop.f32.mrb[0].mxu0
    %3015 = vmatprep.mubr.bf16.mxu0 0
    %3016 = vmatmul.mubr.bf16.gmra.mrb[0].mxu0 %v2769
    %v3017 = vpop.f32.mrb[0].mxu0
    %v3018 = vadd.f32 0.0, %v3017
    %v3019 = vpop.f32.mrb[0].mxu0
    %v3020 = vpop.f32.mrb[0].mxu0
    %v3021 = vadd.f32 0.0, %v3020
    %v3022 = vpop.f32.mrb[0].mxu0
    %3023 = vmatprep.mubr.bf16.mxu0 0
    %3024 = vmatmul.mubr.bf16.gmra.mrb[0].mxu0 %v2772
    %v3025 = vpop.f32.mrb[0].mxu0
    %v3026 = vadd.f32 0.0, %v3025
    %v3027 = vpop.f32.mrb[0].mxu0
    %v3028 = vpop.f32.mrb[0].mxu0
    %v3029 = vadd.f32 0.0, %v3028
    %v3030 = vpop.f32.mrb[0].mxu0
    %3031 = vmatprep.mubr.bf16.mxu0 0
    %3032 = vmatmul.mubr.bf16.gmra.mrb[0].mxu0 %v2775
    %v3033 = vpop.f32.mrb[0].mxu0
    %v3034 = vadd.f32 0.0, %v3033
    %v3035 = vpop.f32.mrb[0].mxu0
    %v3036 = vpop.f32.mrb[0].mxu0
    %v3037 = vadd.f32 0.0, %v3036
    %v3038 = vpop.f32.mrb[0].mxu0
    %3039 = vmatprep.mubr.bf16.mxu0 0
    %3040 = vmatmul.mubr.bf16.gmra.mrb[0].mxu0 %v2778
    %v3041 = vpop.f32.mrb[0].mxu0
    %v3042 = vadd.f32 0.0, %v3041
    %v3043 = vpop.f32.mrb[0].mxu0
    %v3044 = vpop.f32.mrb[0].mxu0
    %v3045 = vadd.f32 0.0, %v3044
    %v3046 = vpop.f32.mrb[0].mxu0
    %3047 = vmatprep.mubr.bf16.mxu0 0
    %3048 = vmatmul.mubr.bf16.gmra.mrb[0].mxu0 %v2781
    %v3049 = vpop.f32.mrb[0].mxu0
    %v3050 = vadd.f32 0.0, %v3049
    %v3051 = vpop.f32.mrb[0].mxu0
    %v3052 = vpop.f32.mrb[0].mxu0
    %v3053 = vadd.f32 0.0, %v3052
    %v3054 = vpop.f32.mrb[0].mxu0
    %3055 = vmatprep.mubr.bf16.mxu0 0
    %3056 = vmatmul.mubr.bf16.gmra.mrb[0].mxu0 %v2784
    %v3057 = vpop.f32.mrb[0].mxu0
    %v3058 = vadd.f32 0.0, %v3057
    %v3059 = vpop.f32.mrb[0].mxu0
    %v3060 = vpop.f32.mrb[0].mxu0
    %v3061 = vadd.f32 0.0, %v3060
    %v3062 = vpop.f32.mrb[0].mxu0
    %3063 = vmatprep.mubr.bf16.mxu0 0
    %3064 = vmatmul.mubr.bf16.gmra.mrb[0].mxu0 %v2787
    %v3065 = vpop.f32.mrb[0].mxu0
    %v3066 = vadd.f32 0.0, %v3065
    %v3067 = vpop.f32.mrb[0].mxu0
    %v3068 = vpop.f32.mrb[0].mxu0
    %v3069 = vadd.f32 0.0, %v3068
    %v3070 = vpop.f32.mrb[0].mxu0
    %3071 = vmatprep.mubr.bf16.mxu0 0
    %3072 = vmatmul.mubr.bf16.gmra.mrb[0].mxu0 %v2790
    %v3073 = vpop.f32.mrb[0].mxu0
    %v3074 = vadd.f32 0.0, %v3073
    %v3075 = vpop.f32.mrb[0].mxu0
    %v3076 = vpop.f32.mrb[0].mxu0
    %v3077 = vadd.f32 0.0, %v3076
    %v3078 = vpop.f32.mrb[0].mxu0
    %3079 = vmatprep.mubr.bf16.mxu0 0
    %3080 = vmatmul.mubr.bf16.gmra.mrb[0].mxu0 %v2793
    %v3081 = vpop.f32.mrb[0].mxu0
    %v3082 = vadd.f32 0.0, %v3081
    %v3083 = vpop.f32.mrb[0].mxu0
    %v3084 = vpop.f32.mrb[0].mxu0
    %v3085 = vadd.f32 0.0, %v3084
    %v3086 = vpop.f32.mrb[0].mxu0
    %3087 = vmatprep.mubr.bf16.mxu0 0
    %3088 = vmatmul.mubr.bf16.gmra.mrb[0].mxu0 %v2796
    %v3089 = vpop.f32.mrb[0].mxu0
    %v3090 = vadd.f32 0.0, %v3089
    %v3091 = vpop.f32.mrb[0].mxu0
    %v3092 = vpop.f32.mrb[0].mxu0
    %v3093 = vadd.f32 0.0, %v3092
    %v3094 = vpop.f32.mrb[0].mxu0
    %3095 = vmatprep.mubr.bf16.mxu0 0
    %3096 = vmatmul.mubr.bf16.gmra.mrb[0].mxu0 %v2799
    %v3097 = vpop.f32.mrb[0].mxu0
    %v3098 = vadd.f32 0.0, %v3097
    %v3099 = vpop.f32.mrb[0].mxu0
    %v3100 = vpop.f32.mrb[0].mxu0
    %v3101 = vadd.f32 0.0, %v3100
    %v3102 = vpop.f32.mrb[0].mxu0
    %3103 = vmatprep.mubr.bf16.mxu0 0
    %3104 = vmatmul.mubr.bf16.gmra.mrb[0].mxu0 %v2802
    %v3105 = vpop.f32.mrb[0].mxu0
    %v3106 = vadd.f32 0.0, %v3105
    %v3107 = vpop.f32.mrb[0].mxu0
    %v3108 = vpop.f32.mrb[0].mxu0
    %v3109 = vadd.f32 0.0, %v3108
    %v3110 = vpop.f32.mrb[0].mxu0
    %3111 = vmatprep.mubr.bf16.mxu0 0
    %3112 = vmatmul.mubr.bf16.gmra.mrb[0].mxu0 %v2805
    %v3113 = vpop.f32.mrb[0].mxu0
    %v3114 = vadd.f32 0.0, %v3113
    %v3115 = vpop.f32.mrb[0].mxu0
    %v3116 = vpop.f32.mrb[0].mxu0
    %v3117 = vadd.f32 0.0, %v3116
    %v3118 = vpop.f32.mrb[0].mxu0
    %3119 = vmatprep.mubr.bf16.mxu0 0
    %3120 = vmatmul.mubr.bf16.gmra.mrb[0].mxu0 %v2808
    %v3121 = vpop.f32.mrb[0].mxu0
    %v3122 = vadd.f32 0.0, %v3121
    %v3123 = vpop.f32.mrb[0].mxu0
    %v3124 = vpop.f32.mrb[0].mxu0
    %v3125 = vadd.f32 0.0, %v3124
    %v3126 = vpop.f32.mrb[0].mxu0
    %3127 = vmatprep.mubr.bf16.mxu0 0
    %3128 = vmatmul.mubr.bf16.gmra.mrb[0].mxu0 %v2811
    %v3129 = vpop.f32.mrb[0].mxu0
    %v3130 = vadd.f32 0.0, %v3129
    %v3131 = vpop.f32.mrb[0].mxu0
    %v3132 = vpop.f32.mrb[0].mxu0
    %v3133 = vadd.f32 0.0, %v3132
    %v3134 = vpop.f32.mrb[0].mxu0
    %3135 = vmatprep.mubr.bf16.mxu0 0
    %3136 = vmatmul.mubr.bf16.gmra.mrb[0].mxu0 %v2814
    %v3137 = vpop.f32.mrb[0].mxu0
    %v3138 = vadd.f32 0.0, %v3137
    %v3139 = vpop.f32.mrb[0].mxu0
    %v3140 = vpop.f32.mrb[0].mxu0
    %v3141 = vadd.f32 0.0, %v3140
    %v3142 = vpop.f32.mrb[0].mxu0
    %3143 = vmatprep.mubr.bf16.mxu0 0
    %3144 = vmatmul.mubr.bf16.gmra.mrb[0].mxu0 %v2817
    %v3145 = vpop.f32.mrb[0].mxu0
    %v3146 = vadd.f32 0.0, %v3145
    %v3147 = vpop.f32.mrb[0].mxu0
    %v3148 = vpop.f32.mrb[0].mxu0
    %v3149 = vadd.f32 0.0, %v3148
    %v3150 = vpop.f32.mrb[0].mxu0
    %3151 = vmatprep.mubr.bf16.mxu0 0
    %3152 = vmatmul.mubr.bf16.gmra.mrb[0].mxu0 %v2820
    %v3153 = vpop.f32.mrb[0].mxu0
    %v3154 = vadd.f32 0.0, %v3153
    %v3155 = vpop.f32.mrb[0].mxu0
    %v3156 = vpop.f32.mrb[0].mxu0
    %v3157 = vadd.f32 0.0, %v3156
    %v3158 = vpop.f32.mrb[0].mxu0
    %3159 = vmatprep.mubr.bf16.mxu0 0
    %3160 = vmatmul.mubr.bf16.gmra.mrb[0].mxu0 %v2823
    %v3161 = vpop.f32.mrb[0].mxu0
    %v3162 = vadd.f32 0.0, %v3161
    %v3163 = vpop.f32.mrb[0].mxu0
    %v3164 = vpop.f32.mrb[0].mxu0
    %v3165 = vadd.f32 0.0, %v3164
    %v3166 = vpop.f32.mrb[0].mxu0
    %3167 = vmatprep.mubr.bf16.mxu0 0
    %3168 = vmatmul.mubr.bf16.gmra.mrb[0].mxu0 %v2826
    %v3169 = vpop.f32.mrb[0].mxu0
    %v3170 = vadd.f32 0.0, %v3169
    %v3171 = vpop.f32.mrb[0].mxu0
    %v3172 = vpop.f32.mrb[0].mxu0
    %v3173 = vadd.f32 0.0, %v3172
    %v3174 = vpop.f32.mrb[0].mxu0
    %3175 = vdwg.mxu0
    %v3176 = vadd.f32 %v2514, %v2866
    %v3177 = vadd.f32 %v2515, %v2869
    %v3178 = vadd.f32 %v2516, %v2874
    %v3179 = vadd.f32 %v2517, %v2877
    %v3180 = vadd.f32 %v2518, %v2882
    %v3181 = vadd.f32 %v2519, %v2885
    %v3182 = vadd.f32 %v2520, %v2890
    %v3183 = vadd.f32 %v2521, %v2893
    %v3184 = vadd.f32 %v2522, %v2898
    %v3185 = vadd.f32 %v2523, %v2901
    %v3186 = vadd.f32 %v2524, %v2906
    %v3187 = vadd.f32 %v2525, %v2909
    %v3188 = vadd.f32 %v2526, %v2914
    %v3189 = vadd.f32 %v2527, %v2917
    %v3190 = vadd.f32 %v2528, %v2922
    %v3191 = vadd.f32 %v2529, %v2925
    %v3192 = vadd.f32 %v2530, %v2930
    %v3193 = vadd.f32 %v2531, %v2933
    %v3194 = vadd.f32 %v2532, %v2938
    %v3195 = vadd.f32 %v2533, %v2941
    %v3196 = vadd.f32 %v2534, %v2946
    %v3197 = vadd.f32 %v2535, %v2949
    %v3198 = vadd.f32 %v2536, %v2954
    %v3199 = vadd.f32 %v2537, %v2957
    %v3200 = vadd.f32 %v2538, %v2962
    %v3201 = vadd.f32 %v2539, %v2965
    %v3202 = vadd.f32 %v2540, %v2970
    %v3203 = vadd.f32 %v2541, %v2973
    %v3204 = vadd.f32 %v2542, %v2978
    %v3205 = vadd.f32 %v2543, %v2981
    %v3206 = vadd.f32 %v2544, %v2986
    %v3207 = vadd.f32 %v2545, %v2989
    %v3208 = vadd.f32 %v2546, %v2994
    %v3209 = vadd.f32 %v2547, %v2997
    %v3210 = vadd.f32 %v2548, %v3002
    %v3211 = vadd.f32 %v2549, %v3005
    %v3212 = vadd.f32 %v2550, %v3010
    %v3213 = vadd.f32 %v2551, %v3013
    %v3214 = vadd.f32 %v2552, %v3018
    %v3215 = vadd.f32 %v2553, %v3021
    %v3216 = vadd.f32 %v2554, %v3026
    %v3217 = vadd.f32 %v2555, %v3029
    %v3218 = vadd.f32 %v2556, %v3034
    %v3219 = vadd.f32 %v2557, %v3037
    %v3220 = vadd.f32 %v2558, %v3042
    %v3221 = vadd.f32 %v2559, %v3045
    %v3222 = vadd.f32 %v2560, %v3050
    %v3223 = vadd.f32 %v2561, %v3053
    %v3224 = vadd.f32 %v2562, %v3058
    %v3225 = vadd.f32 %v2563, %v3061
    %v3226 = vadd.f32 %v2564, %v3066
    %v3227 = vadd.f32 %v2565, %v3069
    %v3228 = vadd.f32 %v2566, %v3074
    %v3229 = vadd.f32 %v2567, %v3077
    %v3230 = vadd.f32 %v2568, %v3082
    %v3231 = vadd.f32 %v2569, %v3085
    %v3232 = vadd.f32 %v2570, %v3090
    %v3233 = vadd.f32 %v2571, %v3093
    %v3234 = vadd.f32 %v2572, %v3098
    %v3235 = vadd.f32 %v2573, %v3101
    %v3236 = vadd.f32 %v2574, %v3106
    %v3237 = vadd.f32 %v2575, %v3109
    %v3238 = vadd.f32 %v2576, %v3114
    %v3239 = vadd.f32 %v2577, %v3117
    %v3240 = vadd.f32 %v2578, %v3122
    %v3241 = vadd.f32 %v2579, %v3125
    %v3242 = vadd.f32 %v2580, %v3130
    %v3243 = vadd.f32 %v2581, %v3133
    %v3244 = vadd.f32 %v2582, %v3138
    %v3245 = vadd.f32 %v2583, %v3141
    %v3246 = vadd.f32 %v2584, %v3146
    %v3247 = vadd.f32 %v2585, %v3149
    %v3248 = vadd.f32 %v2586, %v3154
    %v3249 = vadd.f32 %v2587, %v3157
    %v3250 = vadd.f32 %v2588, %v3162
    %v3251 = vadd.f32 %v2589, %v3165
    %v3252 = vadd.f32 %v2590, %v3170
    %v3253 = vadd.f32 %v2591, %v3173
    %3254 = vst.msk [vmem:[#allocation3 + $0x18] sm:$0xff] %vm1527, %v3176
    %3255 = vst.msk [vmem:[#allocation3 + $0x20] sm:$0xff] %vm1527, %v3177
    %3256 = vst.msk [vmem:[#allocation3 + $0x28] sm:$0xff] %vm1527, %v3178
    %3257 = vst.msk [vmem:[#allocation3 + $0x30] sm:$0xff] %vm1527, %v3179
    %3258 = vst.msk [vmem:[#allocation3 + $0x38] sm:$0xff] %vm1527, %v3180
    %3259 = vst.msk [vmem:[#allocation3 + $0x40] sm:$0xff] %vm1527, %v3181
    %3260 = vst.msk [vmem:[#allocation3 + $0x48] sm:$0xff] %vm1527, %v3182
    %3261 = vst.msk [vmem:[#allocation3 + $0x50] sm:$0xff] %vm1527, %v3183
    %3262 = vst.msk [vmem:[#allocation3 + $0x58] sm:$0xff] %vm1527, %v3184
    %3263 = vst.msk [vmem:[#allocation3 + $0x60] sm:$0xff] %vm1527, %v3185
    %3264 = vst.msk [vmem:[#allocation3 + $0x68] sm:$0xff] %vm1527, %v3186
    %3265 = vst.msk [vmem:[#allocation3 + $0x70] sm:$0xff] %vm1527, %v3187
    %3266 = vst.msk [vmem:[#allocation3 + $0x78] sm:$0xff] %vm1527, %v3188
    %3267 = vst.msk [vmem:[#allocation3 + $0x80] sm:$0xff] %vm1527, %v3189
    %3268 = vst.msk [vmem:[#allocation3 + $0x88] sm:$0xff] %vm1527, %v3190
    %3269 = vst.msk [vmem:[#allocation3 + $0x90] sm:$0xff] %vm1527, %v3191
    %3270 = vst.msk [vmem:[#allocation3 + $0x98] sm:$0xff] %vm1527, %v3192
    %3271 = vst.msk [vmem:[#allocation3 + $0xa0] sm:$0xff] %vm1527, %v3193
    %3272 = vst.msk [vmem:[#allocation3 + $0xa8] sm:$0xff] %vm1527, %v3194
    %3273 = vst.msk [vmem:[#allocation3 + $0xb0] sm:$0xff] %vm1527, %v3195
    %3274 = vst.msk [vmem:[#allocation3 + $0xb8] sm:$0xff] %vm1527, %v3196
    %3275 = vst.msk [vmem:[#allocation3 + $0xc0] sm:$0xff] %vm1527, %v3197
    %3276 = vst.msk [vmem:[#allocation3 + $0xc8] sm:$0xff] %vm1527, %v3198
    %3277 = vst.msk [vmem:[#allocation3 + $0xd0] sm:$0xff] %vm1527, %v3199
    %3278 = vst.msk [vmem:[#allocation3 + $0xd8] sm:$0xff] %vm1527, %v3200
    %3279 = vst.msk [vmem:[#allocation3 + $0xe0] sm:$0xff] %vm1527, %v3201
    %3280 = vst.msk [vmem:[#allocation3 + $0xe8] sm:$0xff] %vm1527, %v3202
    %3281 = vst.msk [vmem:[#allocation3 + $0xf0] sm:$0xff] %vm1527, %v3203
    %3282 = vst.msk [vmem:[#allocation3 + $0xf8] sm:$0xff] %vm1527, %v3204
    %3283 = vst.msk [vmem:[#allocation3 + $0x100] sm:$0xff] %vm1527, %v3205
    %3284 = vst.msk [vmem:[#allocation3 + $0x108] sm:$0xff] %vm1527, %v3206
    %3285 = vst.msk [vmem:[#allocation3 + $0x110] sm:$0xff] %vm1527, %v3207
    %3286 = vst.msk [vmem:[#allocation3 + $0x118] sm:$0xff] %vm1527, %v3208
    %3287 = vst.msk [vmem:[#allocation3 + $0x120] sm:$0xff] %vm1527, %v3209
    %3288 = vst.msk [vmem:[#allocation3 + $0x128] sm:$0xff] %vm1527, %v3210
    %3289 = vst.msk [vmem:[#allocation3 + $0x130] sm:$0xff] %vm1527, %v3211
    %3290 = vst.msk [vmem:[#allocation3 + $0x138] sm:$0xff] %vm1527, %v3212
    %3291 = vst.msk [vmem:[#allocation3 + $0x140] sm:$0xff] %vm1527, %v3213
    %3292 = vst.msk [vmem:[#allocation3 + $0x148] sm:$0xff] %vm1527, %v3214
    %3293 = vst.msk [vmem:[#allocation3 + $0x150] sm:$0xff] %vm1527, %v3215
    %3294 = vst.msk [vmem:[#allocation3 + $0x158] sm:$0xff] %vm1527, %v3216
    %3295 = vst.msk [vmem:[#allocation3 + $0x160] sm:$0xff] %vm1527, %v3217
    %3296 = vst.msk [vmem:[#allocation3 + $0x168] sm:$0xff] %vm1527, %v3218
    %3297 = vst.msk [vmem:[#allocation3 + $0x170] sm:$0xff] %vm1527, %v3219
    %3298 = vst.msk [vmem:[#allocation3 + $0x178] sm:$0xff] %vm1527, %v3220
    %3299 = vst.msk [vmem:[#allocation3 + $0x180] sm:$0xff] %vm1527, %v3221
    %3300 = vst.msk [vmem:[#allocation3 + $0x188] sm:$0xff] %vm1527, %v3222
    %3301 = vst.msk [vmem:[#allocation3 + $0x190] sm:$0xff] %vm1527, %v3223
    %3302 = vst.msk [vmem:[#allocation3 + $0x198] sm:$0xff] %vm1527, %v3224
    %3303 = vst.msk [vmem:[#allocation3 + $0x1a0] sm:$0xff] %vm1527, %v3225
    %3304 = vst.msk [vmem:[#allocation3 + $0x1a8] sm:$0xff] %vm1527, %v3226
    %3305 = vst.msk [vmem:[#allocation3 + $0x1b0] sm:$0xff] %vm1527, %v3227
    %3306 = vst.msk [vmem:[#allocation3 + $0x1b8] sm:$0xff] %vm1527, %v3228
    %3307 = vst.msk [vmem:[#allocation3 + $0x1c0] sm:$0xff] %vm1527, %v3229
    %3308 = vst.msk [vmem:[#allocation3 + $0x1c8] sm:$0xff] %vm1527, %v3230
    %3309 = vst.msk [vmem:[#allocation3 + $0x1d0] sm:$0xff] %vm1527, %v3231
    %3310 = vst.msk [vmem:[#allocation3 + $0x1d8] sm:$0xff] %vm1527, %v3232
    %3311 = vst.msk [vmem:[#allocation3 + $0x1e0] sm:$0xff] %vm1527, %v3233
    %3312 = vst.msk [vmem:[#allocation3 + $0x1e8] sm:$0xff] %vm1527, %v3234
    %3313 = vst.msk [vmem:[#allocation3 + $0x1f0] sm:$0xff] %vm1527, %v3235
    %3314 = vst.msk [vmem:[#allocation3 + $0x1f8] sm:$0xff] %vm1527, %v3236
    %3315 = vst.msk [vmem:[#allocation3 + $0x200] sm:$0xff] %vm1527, %v3237
    %3316 = vst.msk [vmem:[#allocation3 + $0x208] sm:$0xff] %vm1527, %v3238
    %3317 = vst.msk [vmem:[#allocation3 + $0x210] sm:$0xff] %vm1527, %v3239
    %3318 = vst.msk [vmem:[#allocation3 + $0x218] sm:$0xff] %vm1527, %v3240
    %3319 = vst.msk [vmem:[#allocation3 + $0x220] sm:$0xff] %vm1527, %v3241
    %3320 = vst.msk [vmem:[#allocation3 + $0x228] sm:$0xff] %vm1527, %v3242
    %3321 = vst.msk [vmem:[#allocation3 + $0x230] sm:$0xff] %vm1527, %v3243
    %3322 = vst.msk [vmem:[#allocation3 + $0x238] sm:$0xff] %vm1527, %v3244
    %3323 = vst.msk [vmem:[#allocation3 + $0x240] sm:$0xff] %vm1527, %v3245
    %3324 = vst.msk [vmem:[#allocation3 + $0x248] sm:$0xff] %vm1527, %v3246
    %3325 = vst.msk [vmem:[#allocation3 + $0x250] sm:$0xff] %vm1527, %v3247
    %3326 = vst.msk [vmem:[#allocation3 + $0x258] sm:$0xff] %vm1527, %v3248
    %3327 = vst.msk [vmem:[#allocation3 + $0x260] sm:$0xff] %vm1527, %v3249
    %3328 = vst.msk [vmem:[#allocation3 + $0x268] sm:$0xff] %vm1527, %v3250
    %3329 = vst.msk [vmem:[#allocation3 + $0x270] sm:$0xff] %vm1527, %v3251
    %3330 = vst.msk [vmem:[#allocation3 + $0x278] sm:$0xff] %vm1527, %v3252
    %3331 = vst.msk [vmem:[#allocation3 + $0x280] sm:$0xff] %vm1527, %v3253
    %v3332 = vld [vmem:[#allocation3 + $0x18] sm:$0xff]
    %v3333 = vld [vmem:[#allocation3 + $0x20] sm:$0xff]
    %v3334 = vld [vmem:[#allocation3 + $0x28] sm:$0xff]
    %v3335 = vld [vmem:[#allocation3 + $0x30] sm:$0xff]
    %v3336 = vld [vmem:[#allocation3 + $0x38] sm:$0xff]
    %v3337 = vld [vmem:[#allocation3 + $0x40] sm:$0xff]
    %v3338 = vld [vmem:[#allocation3 + $0x48] sm:$0xff]
    %v3339 = vld [vmem:[#allocation3 + $0x50] sm:$0xff]
    %v3340 = vld [vmem:[#allocation3 + $0x58] sm:$0xff]
    %v3341 = vld [vmem:[#allocation3 + $0x60] sm:$0xff]
    %v3342 = vld [vmem:[#allocation3 + $0x68] sm:$0xff]
    %v3343 = vld [vmem:[#allocation3 + $0x70] sm:$0xff]
    %v3344 = vld [vmem:[#allocation3 + $0x78] sm:$0xff]
    %v3345 = vld [vmem:[#allocation3 + $0x80] sm:$0xff]
    %v3346 = vld [vmem:[#allocation3 + $0x88] sm:$0xff]
    %v3347 = vld [vmem:[#allocation3 + $0x90] sm:$0xff]
    %v3348 = vld [vmem:[#allocation3 + $0x98] sm:$0xff]
    %v3349 = vld [vmem:[#allocation3 + $0xa0] sm:$0xff]
    %v3350 = vld [vmem:[#allocation3 + $0xa8] sm:$0xff]
    %v3351 = vld [vmem:[#allocation3 + $0xb0] sm:$0xff]
    %v3352 = vld [vmem:[#allocation3 + $0xb8] sm:$0xff]
    %v3353 = vld [vmem:[#allocation3 + $0xc0] sm:$0xff]
    %v3354 = vld [vmem:[#allocation3 + $0xc8] sm:$0xff]
    %v3355 = vld [vmem:[#allocation3 + $0xd0] sm:$0xff]
    %v3356 = vld [vmem:[#allocation3 + $0xd8] sm:$0xff]
    %v3357 = vld [vmem:[#allocation3 + $0xe0] sm:$0xff]
    %v3358 = vld [vmem:[#allocation3 + $0xe8] sm:$0xff]
    %v3359 = vld [vmem:[#allocation3 + $0xf0] sm:$0xff]
    %v3360 = vld [vmem:[#allocation3 + $0xf8] sm:$0xff]
    %v3361 = vld [vmem:[#allocation3 + $0x100] sm:$0xff]
    %v3362 = vld [vmem:[#allocation3 + $0x108] sm:$0xff]
    %v3363 = vld [vmem:[#allocation3 + $0x110] sm:$0xff]
    %v3364 = vld [vmem:[#allocation3 + $0x118] sm:$0xff]
    %v3365 = vld [vmem:[#allocation3 + $0x120] sm:$0xff]
    %v3366 = vld [vmem:[#allocation3 + $0x128] sm:$0xff]
    %v3367 = vld [vmem:[#allocation3 + $0x130] sm:$0xff]
    %v3368 = vld [vmem:[#allocation3 + $0x138] sm:$0xff]
    %v3369 = vld [vmem:[#allocation3 + $0x140] sm:$0xff]
    %v3370 = vld [vmem:[#allocation3 + $0x148] sm:$0xff]
    %v3371 = vld [vmem:[#allocation3 + $0x150] sm:$0xff]
    %v3372 = vld [vmem:[#allocation3 + $0x158] sm:$0xff]
    %v3373 = vld [vmem:[#allocation3 + $0x160] sm:$0xff]
    %v3374 = vld [vmem:[#allocation3 + $0x168] sm:$0xff]
    %v3375 = vld [vmem:[#allocation3 + $0x170] sm:$0xff]
    %v3376 = vld [vmem:[#allocation3 + $0x178] sm:$0xff]
    %v3377 = vld [vmem:[#allocation3 + $0x180] sm:$0xff]
    %v3378 = vld [vmem:[#allocation3 + $0x188] sm:$0xff]
    %v3379 = vld [vmem:[#allocation3 + $0x190] sm:$0xff]
    %v3380 = vld [vmem:[#allocation3 + $0x198] sm:$0xff]
    %v3381 = vld [vmem:[#allocation3 + $0x1a0] sm:$0xff]
    %v3382 = vld [vmem:[#allocation3 + $0x1a8] sm:$0xff]
    %v3383 = vld [vmem:[#allocation3 + $0x1b0] sm:$0xff]
    %v3384 = vld [vmem:[#allocation3 + $0x1b8] sm:$0xff]
    %v3385 = vld [vmem:[#allocation3 + $0x1c0] sm:$0xff]
    %v3386 = vld [vmem:[#allocation3 + $0x1c8] sm:$0xff]
    %v3387 = vld [vmem:[#allocation3 + $0x1d0] sm:$0xff]
    %v3388 = vld [vmem:[#allocation3 + $0x1d8] sm:$0xff]
    %v3389 = vld [vmem:[#allocation3 + $0x1e0] sm:$0xff]
    %v3390 = vld [vmem:[#allocation3 + $0x1e8] sm:$0xff]
    %v3391 = vld [vmem:[#allocation3 + $0x1f0] sm:$0xff]
    %v3392 = vld [vmem:[#allocation3 + $0x1f8] sm:$0xff]
    %v3393 = vld [vmem:[#allocation3 + $0x200] sm:$0xff]
    %v3394 = vld [vmem:[#allocation3 + $0x208] sm:$0xff]
    %v3395 = vld [vmem:[#allocation3 + $0x210] sm:$0xff]
    %v3396 = vld [vmem:[#allocation3 + $0x218] sm:$0xff]
    %v3397 = vld [vmem:[#allocation3 + $0x220] sm:$0xff]
    %v3398 = vld [vmem:[#allocation3 + $0x228] sm:$0xff]
    %v3399 = vld [vmem:[#allocation3 + $0x230] sm:$0xff]
    %v3400 = vld [vmem:[#allocation3 + $0x238] sm:$0xff]
    %v3401 = vld [vmem:[#allocation3 + $0x240] sm:$0xff]
    %v3402 = vld [vmem:[#allocation3 + $0x248] sm:$0xff]
    %v3403 = vld [vmem:[#allocation3 + $0x250] sm:$0xff]
    %v3404 = vld [vmem:[#allocation3 + $0x258] sm:$0xff]
    %v3405 = vld [vmem:[#allocation3 + $0x260] sm:$0xff]
    %v3406 = vld [vmem:[#allocation3 + $0x268] sm:$0xff]
    %v3407 = vld [vmem:[#allocation3 + $0x270] sm:$0xff]
    %v3408 = vld [vmem:[#allocation3 + $0x278] sm:$0xff]
    %v3409 = vld [vmem:[#allocation3 + $0x280] sm:$0xff]
    %v3410 = vld [vmem:[#allocation2 + $0x7] sm:$0xff]
    %v3411 = vld [vmem:[#allocation2 + $0xf] sm:$0xff]
    %v3412 = vld [vmem:[#allocation2 + $0x17] sm:$0xff]
    %v3413 = vld [vmem:[#allocation2 + $0x1f] sm:$0xff]
    %v3414 = vld [vmem:[#allocation2 + $0x27] sm:$0xff]
    %v3415 = vld [vmem:[#allocation2 + $0x2f] sm:$0xff]
    %v3416 = vld [vmem:[#allocation2 + $0x37] sm:$0xff]
    %v3417 = vld [vmem:[#allocation2 + $0x3f] sm:$0xff]
    %v3418 = vld [vmem:[#allocation2 + $0x47] sm:$0xff]
    %v3419 = vld [vmem:[#allocation2 + $0x4f] sm:$0xff]
    %v3420 = vld [vmem:[#allocation2 + $0x57] sm:$0xff]
    %v3421 = vld [vmem:[#allocation2 + $0x5f] sm:$0xff]
    %v3422 = vld [vmem:[#allocation2 + $0x67] sm:$0xff]
    %v3423 = vld [vmem:[#allocation2 + $0x6f] sm:$0xff]
    %v3424 = vld [vmem:[#allocation2 + $0x77] sm:$0xff]
    %v3425 = vld [vmem:[#allocation2 + $0x7f] sm:$0xff]
    %v3426 = vld [vmem:[#allocation2 + $0x87] sm:$0xff]
    %v3427 = vld [vmem:[#allocation2 + $0x8f] sm:$0xff]
    %v3428 = vld [vmem:[#allocation2 + $0x97] sm:$0xff]
    %v3429 = vld [vmem:[#allocation2 + $0x9f] sm:$0xff]
    %v3430 = vld [vmem:[#allocation2 + $0xa7] sm:$0xff]
    %v3431 = vld [vmem:[#allocation2 + $0xaf] sm:$0xff]
    %v3432 = vld [vmem:[#allocation2 + $0xb7] sm:$0xff]
    %v3433 = vld [vmem:[#allocation2 + $0xbf] sm:$0xff]
    %v3434 = vld [vmem:[#allocation2 + $0xc7] sm:$0xff]
    %v3435 = vld [vmem:[#allocation2 + $0xcf] sm:$0xff]
    %v3436 = vld [vmem:[#allocation2 + $0xd7] sm:$0xff]
    %v3437 = vld [vmem:[#allocation2 + $0xdf] sm:$0xff]
    %v3438 = vld [vmem:[#allocation2 + $0xe7] sm:$0xff]
    %v3439 = vld [vmem:[#allocation2 + $0xef] sm:$0xff]
    %v3440 = vld [vmem:[#allocation2 + $0xf7] sm:$0xff]
    %v3441 = vld [vmem:[#allocation2 + $0xff] sm:$0xff]
    %v3442 = vld [vmem:[#allocation2 + $0x107] sm:$0xff]
    %v3443 = vld [vmem:[#allocation2 + $0x10f] sm:$0xff]
    %v3444 = vld [vmem:[#allocation2 + $0x117] sm:$0xff]
    %v3445 = vld [vmem:[#allocation2 + $0x11f] sm:$0xff]
    %v3446 = vld [vmem:[#allocation2 + $0x127] sm:$0xff]
    %v3447 = vld [vmem:[#allocation2 + $0x12f] sm:$0xff]
    %v3448 = vld [vmem:[#allocation2 + $0x137] sm:$0xff]
    %v3449 = vld [vmem:[#allocation2 + $0x13f] sm:$0xff]
    %v3450 = vld [vmem:[#allocation2 + $0x147] sm:$0xff]
    %v3451 = vld [vmem:[#allocation2 + $0x14f] sm:$0xff]
    %v3452 = vld [vmem:[#allocation2 + $0x157] sm:$0xff]
    %v3453 = vld [vmem:[#allocation2 + $0x15f] sm:$0xff]
    %v3454 = vld [vmem:[#allocation2 + $0x167] sm:$0xff]
    %v3455 = vld [vmem:[#allocation2 + $0x16f] sm:$0xff]
    %v3456 = vld [vmem:[#allocation2 + $0x177] sm:$0xff]
    %v3457 = vld [vmem:[#allocation2 + $0x17f] sm:$0xff]
    %v3458 = vld [vmem:[#allocation2 + $0x187] sm:$0xff]
    %v3459 = vld [vmem:[#allocation2 + $0x18f] sm:$0xff]
    %v3460 = vld [vmem:[#allocation2 + $0x197] sm:$0xff]
    %v3461 = vld [vmem:[#allocation2 + $0x19f] sm:$0xff]
    %v3462 = vld [vmem:[#allocation2 + $0x1a7] sm:$0xff]
    %v3463 = vld [vmem:[#allocation2 + $0x1af] sm:$0xff]
    %v3464 = vld [vmem:[#allocation2 + $0x1b7] sm:$0xff]
    %v3465 = vld [vmem:[#allocation2 + $0x1bf] sm:$0xff]
    %v3466 = vld [vmem:[#allocation2 + $0x1c7] sm:$0xff]
    %v3467 = vld [vmem:[#allocation2 + $0x1cf] sm:$0xff]
    %v3468 = vld [vmem:[#allocation2 + $0x1d7] sm:$0xff]
    %v3469 = vld [vmem:[#allocation2 + $0x1df] sm:$0xff]
    %v3470 = vld [vmem:[#allocation2 + $0x1e7] sm:$0xff]
    %v3471 = vld [vmem:[#allocation2 + $0x1ef] sm:$0xff]
    %v3472 = vld [vmem:[#allocation2 + $0x1f7] sm:$0xff]
    %v3473 = vld [vmem:[#allocation2 + $0x1ff] sm:$0xff]
    %v3474 = vld [vmem:[#allocation2 + $0x207] sm:$0xff]
    %v3475 = vld [vmem:[#allocation2 + $0x20f] sm:$0xff]
    %v3476 = vld [vmem:[#allocation2 + $0x217] sm:$0xff]
    %v3477 = vld [vmem:[#allocation2 + $0x21f] sm:$0xff]
    %v3478 = vld [vmem:[#allocation2 + $0x227] sm:$0xff]
    %v3479 = vld [vmem:[#allocation2 + $0x22f] sm:$0xff]
    %v3480 = vld [vmem:[#allocation2 + $0x237] sm:$0xff]
    %v3481 = vld [vmem:[#allocation2 + $0x23f] sm:$0xff]
    %v3482 = vld [vmem:[#allocation2 + $0x247] sm:$0xff]
    %v3483 = vld [vmem:[#allocation2 + $0x24f] sm:$0xff]
    %v3484 = vld [vmem:[#allocation2 + $0x257] sm:$0xff]
    %v3485 = vld [vmem:[#allocation2 + $0x25f] sm:$0xff]
    %v3486 = vld [vmem:[#allocation2 + $0x267] sm:$0xff]
    %v3487 = vld [vmem:[#allocation2 + $0x26f] sm:$0xff]
    %v3488 = vpack.c.bf16 %v3411, %v3410
    %v3489 = vpack.c.bf16 %v3413, %v3412
    %v3490 = vpack.c.bf16 %v3415, %v3414
    %v3491 = vpack.c.bf16 %v3417, %v3416
    %v3492 = vpack.c.bf16 %v3419, %v3418
    %v3493 = vpack.c.bf16 %v3421, %v3420
    %v3494 = vpack.c.bf16 %v3423, %v3422
    %v3495 = vpack.c.bf16 %v3425, %v3424
    %v3496 = vpack.c.bf16 %v3427, %v3426
    %v3497 = vpack.c.bf16 %v3429, %v3428
    %v3498 = vpack.c.bf16 %v3431, %v3430
    %v3499 = vpack.c.bf16 %v3433, %v3432
    %v3500 = vpack.c.bf16 %v3435, %v3434
    %v3501 = vpack.c.bf16 %v3437, %v3436
    %v3502 = vpack.c.bf16 %v3439, %v3438
    %v3503 = vpack.c.bf16 %v3441, %v3440
    %v3504 = vpack.c.bf16 %v3443, %v3442
    %v3505 = vpack.c.bf16 %v3445, %v3444
    %v3506 = vpack.c.bf16 %v3447, %v3446
    %v3507 = vpack.c.bf16 %v3449, %v3448
    %v3508 = vpack.c.bf16 %v3451, %v3450
    %v3509 = vpack.c.bf16 %v3453, %v3452
    %v3510 = vpack.c.bf16 %v3455, %v3454
    %v3511 = vpack.c.bf16 %v3457, %v3456
    %v3512 = vpack.c.bf16 %v3459, %v3458
    %v3513 = vpack.c.bf16 %v3461, %v3460
    %v3514 = vpack.c.bf16 %v3463, %v3462
    %v3515 = vpack.c.bf16 %v3465, %v3464
    %v3516 = vpack.c.bf16 %v3467, %v3466
    %v3517 = vpack.c.bf16 %v3469, %v3468
    %v3518 = vpack.c.bf16 %v3471, %v3470
    %v3519 = vpack.c.bf16 %v3473, %v3472
    %v3520 = vpack.c.bf16 %v3475, %v3474
    %v3521 = vpack.c.bf16 %v3477, %v3476
    %v3522 = vpack.c.bf16 %v3479, %v3478
    %v3523 = vpack.c.bf16 %v3481, %v3480
    %v3524 = vpack.c.bf16 %v3483, %v3482
    %v3525 = vpack.c.bf16 %v3485, %v3484
    %v3526 = vpack.c.bf16 %v3487, %v3486
    %s3527 = scalar_lea.vmem %s4, 8
    %v3528 = vld [vmem:[%s3527] sm:$0xf]
    %v3530 = vsel %vm1527, %v3488, 0
    %v3533 = vsel %vm1527, %v3489, 0
    %v3536 = vsel %vm1527, %v3490, 0
    %v3539 = vsel %vm1527, %v3491, 0
    %v3542 = vsel %vm1527, %v3492, 0
    %v3545 = vsel %vm1527, %v3493, 0
    %v3548 = vsel %vm1527, %v3494, 0
    %v3551 = vsel %vm1527, %v3495, 0
    %v3554 = vsel %vm1527, %v3496, 0
    %v3557 = vsel %vm1527, %v3497, 0
    %v3560 = vsel %vm1527, %v3498, 0
    %v3563 = vsel %vm1527, %v3499, 0
    %v3566 = vsel %vm1527, %v3500, 0
    %v3569 = vsel %vm1527, %v3501, 0
    %v3572 = vsel %vm1527, %v3502, 0
    %v3575 = vsel %vm1527, %v3503, 0
    %v3578 = vsel %vm1527, %v3504, 0
    %v3581 = vsel %vm1527, %v3505, 0
    %v3584 = vsel %vm1527, %v3506, 0
    %v3587 = vsel %vm1527, %v3507, 0
    %v3590 = vsel %vm1527, %v3508, 0
    %v3593 = vsel %vm1527, %v3509, 0
    %v3596 = vsel %vm1527, %v3510, 0
    %v3599 = vsel %vm1527, %v3511, 0
    %v3602 = vsel %vm1527, %v3512, 0
    %v3605 = vsel %vm1527, %v3513, 0
    %v3608 = vsel %vm1527, %v3514, 0
    %v3611 = vsel %vm1527, %v3515, 0
    %v3614 = vsel %vm1527, %v3516, 0
    %v3617 = vsel %vm1527, %v3517, 0
    %v3620 = vsel %vm1527, %v3518, 0
    %v3623 = vsel %vm1527, %v3519, 0
    %v3626 = vsel %vm1527, %v3520, 0
    %v3629 = vsel %vm1527, %v3521, 0
    %v3632 = vsel %vm1527, %v3522, 0
    %v3635 = vsel %vm1527, %v3523, 0
    %v3638 = vsel %vm1527, %v3524, 0
    %v3641 = vsel %vm1527, %v3525, 0
    %v3644 = vsel %vm1527, %v3526, 0
    %v3647 = vsel %vm2009, %v3528, 0
    %3649 = vmatprep.subr.bf16.mxu0 0
    %3650 = vmatpush1.bf16.msra.mxu0 %v3647
    %3651 = vmatprep.subr.bf16.mxu0 0
    %3652 = vmatpush1.bf16.msra.mxu0 0
    %3653 = vmatprep.subr.bf16.mxu0 0
    %3654 = vmatpush1.bf16.msra.mxu0 0
    %3655 = vmatprep.subr.bf16.mxu0 0
    %3656 = vmatpush1.bf16.msra.mxu0 0
    %3657 = vmatprep.subr.bf16.mxu0 0
    %3658 = vmatpush1.bf16.msra.mxu0 0
    %3659 = vmatprep.subr.bf16.mxu0 0
    %3660 = vmatpush1.bf16.msra.mxu0 0
    %3661 = vmatprep.subr.bf16.mxu0 0
    %3662 = vmatpush1.bf16.msra.mxu0 0
    %3663 = vmatprep.subr.bf16.mxu0 0
    %3664 = vmatpush1.bf16.msra.mxu0 0
    %3665 = vmatprep.subr.bf16.mxu0 0
    %3666 = vmatpush1.bf16.msra.mxu0 0
    %3667 = vmatprep.subr.bf16.mxu0 0
    %3668 = vmatpush1.bf16.msra.mxu0 0
    %3669 = vmatprep.subr.bf16.mxu0 0
    %3670 = vmatpush1.bf16.msra.mxu0 0
    %3671 = vmatprep.subr.bf16.mxu0 0
    %3672 = vmatpush1.bf16.msra.mxu0 0
    %3673 = vmatprep.subr.bf16.mxu0 0
    %3674 = vmatpush1.bf16.msra.mxu0 0
    %3675 = vmatprep.subr.bf16.mxu0 0
    %3676 = vmatpush1.bf16.msra.mxu0 0
    %3677 = vmatprep.subr.bf16.mxu0 0
    %3678 = vmatpush1.bf16.msra.mxu0 0
    %3679 = vmatprep.subr.bf16.mxu0 0
    %3680 = vmatpush1.bf16.msra.mxu0 0
    %3681 = vmatprep.mubr.bf16.mxu0 0
    %3682 = vmatmul.mubr.bf16.gmra.mrb[0].mxu0 %v3530
    %v3683 = vpop.f32.mrb[0].mxu0
    %v3684 = vadd.f32 0.0, %v3683
    %v3685 = vpop.f32.mrb[0].mxu0
    %v3686 = vpop.f32.mrb[0].mxu0
    %v3687 = vadd.f32 0.0, %v3686
    %v3688 = vpop.f32.mrb[0].mxu0
    %3689 = vmatprep.mubr.bf16.mxu0 0
    %3690 = vmatmul.mubr.bf16.gmra.mrb[0].mxu0 %v3533
    %v3691 = vpop.f32.mrb[0].mxu0
    %v3692 = vadd.f32 0.0, %v3691
    %v3693 = vpop.f32.mrb[0].mxu0
    %v3694 = vpop.f32.mrb[0].mxu0
    %v3695 = vadd.f32 0.0, %v3694
    %v3696 = vpop.f32.mrb[0].mxu0
    %3697 = vmatprep.mubr.bf16.mxu0 0
    %3698 = vmatmul.mubr.bf16.gmra.mrb[0].mxu0 %v3536
    %v3699 = vpop.f32.mrb[0].mxu0
    %v3700 = vadd.f32 0.0, %v3699
    %v3701 = vpop.f32.mrb[0].mxu0
    %v3702 = vpop.f32.mrb[0].mxu0
    %v3703 = vadd.f32 0.0, %v3702
    %v3704 = vpop.f32.mrb[0].mxu0
    %3705 = vmatprep.mubr.bf16.mxu0 0
    %3706 = vmatmul.mubr.bf16.gmra.mrb[0].mxu0 %v3539
    %v3707 = vpop.f32.mrb[0].mxu0
    %v3708 = vadd.f32 0.0, %v3707
    %v3709 = vpop.f32.mrb[0].mxu0
    %v3710 = vpop.f32.mrb[0].mxu0
    %v3711 = vadd.f32 0.0, %v3710
    %v3712 = vpop.f32.mrb[0].mxu0
    %3713 = vmatprep.mubr.bf16.mxu0 0
    %3714 = vmatmul.mubr.bf16.gmra.mrb[0].mxu0 %v3542
    %v3715 = vpop.f32.mrb[0].mxu0
    %v3716 = vadd.f32 0.0, %v3715
    %v3717 = vpop.f32.mrb[0].mxu0
    %v3718 = vpop.f32.mrb[0].mxu0
    %v3719 = vadd.f32 0.0, %v3718
    %v3720 = vpop.f32.mrb[0].mxu0
    %3721 = vmatprep.mubr.bf16.mxu0 0
    %3722 = vmatmul.mubr.bf16.gmra.mrb[0].mxu0 %v3545
    %v3723 = vpop.f32.mrb[0].mxu0
    %v3724 = vadd.f32 0.0, %v3723
    %v3725 = vpop.f32.mrb[0].mxu0
    %v3726 = vpop.f32.mrb[0].mxu0
    %v3727 = vadd.f32 0.0, %v3726
    %v3728 = vpop.f32.mrb[0].mxu0
    %3729 = vmatprep.mubr.bf16.mxu0 0
    %3730 = vmatmul.mubr.bf16.gmra.mrb[0].mxu0 %v3548
    %v3731 = vpop.f32.mrb[0].mxu0
    %v3732 = vadd.f32 0.0, %v3731
    %v3733 = vpop.f32.mrb[0].mxu0
    %v3734 = vpop.f32.mrb[0].mxu0
    %v3735 = vadd.f32 0.0, %v3734
    %v3736 = vpop.f32.mrb[0].mxu0
    %3737 = vmatprep.mubr.bf16.mxu0 0
    %3738 = vmatmul.mubr.bf16.gmra.mrb[0].mxu0 %v3551
    %v3739 = vpop.f32.mrb[0].mxu0
    %v3740 = vadd.f32 0.0, %v3739
    %v3741 = vpop.f32.mrb[0].mxu0
    %v3742 = vpop.f32.mrb[0].mxu0
    %v3743 = vadd.f32 0.0, %v3742
    %v3744 = vpop.f32.mrb[0].mxu0
    %3745 = vmatprep.mubr.bf16.mxu0 0
    %3746 = vmatmul.mubr.bf16.gmra.mrb[0].mxu0 %v3554
    %v3747 = vpop.f32.mrb[0].mxu0
    %v3748 = vadd.f32 0.0, %v3747
    %v3749 = vpop.f32.mrb[0].mxu0
    %v3750 = vpop.f32.mrb[0].mxu0
    %v3751 = vadd.f32 0.0, %v3750
    %v3752 = vpop.f32.mrb[0].mxu0
    %3753 = vmatprep.mubr.bf16.mxu0 0
    %3754 = vmatmul.mubr.bf16.gmra.mrb[0].mxu0 %v3557
    %v3755 = vpop.f32.mrb[0].mxu0
    %v3756 = vadd.f32 0.0, %v3755
    %v3757 = vpop.f32.mrb[0].mxu0
    %v3758 = vpop.f32.mrb[0].mxu0
    %v3759 = vadd.f32 0.0, %v3758
    %v3760 = vpop.f32.mrb[0].mxu0
    %3761 = vmatprep.mubr.bf16.mxu0 0
    %3762 = vmatmul.mubr.bf16.gmra.mrb[0].mxu0 %v3560
    %v3763 = vpop.f32.mrb[0].mxu0
    %v3764 = vadd.f32 0.0, %v3763
    %v3765 = vpop.f32.mrb[0].mxu0
    %v3766 = vpop.f32.mrb[0].mxu0
    %v3767 = vadd.f32 0.0, %v3766
    %v3768 = vpop.f32.mrb[0].mxu0
    %3769 = vmatprep.mubr.bf16.mxu0 0
    %3770 = vmatmul.mubr.bf16.gmra.mrb[0].mxu0 %v3563
    %v3771 = vpop.f32.mrb[0].mxu0
    %v3772 = vadd.f32 0.0, %v3771
    %v3773 = vpop.f32.mrb[0].mxu0
    %v3774 = vpop.f32.mrb[0].mxu0
    %v3775 = vadd.f32 0.0, %v3774
    %v3776 = vpop.f32.mrb[0].mxu0
    %3777 = vmatprep.mubr.bf16.mxu0 0
    %3778 = vmatmul.mubr.bf16.gmra.mrb[0].mxu0 %v3566
    %v3779 = vpop.f32.mrb[0].mxu0
    %v3780 = vadd.f32 0.0, %v3779
    %v3781 = vpop.f32.mrb[0].mxu0
    %v3782 = vpop.f32.mrb[0].mxu0
    %v3783 = vadd.f32 0.0, %v3782
    %v3784 = vpop.f32.mrb[0].mxu0
    %3785 = vmatprep.mubr.bf16.mxu0 0
    %3786 = vmatmul.mubr.bf16.gmra.mrb[0].mxu0 %v3569
    %v3787 = vpop.f32.mrb[0].mxu0
    %v3788 = vadd.f32 0.0, %v3787
    %v3789 = vpop.f32.mrb[0].mxu0
    %v3790 = vpop.f32.mrb[0].mxu0
    %v3791 = vadd.f32 0.0, %v3790
    %v3792 = vpop.f32.mrb[0].mxu0
    %3793 = vmatprep.mubr.bf16.mxu0 0
    %3794 = vmatmul.mubr.bf16.gmra.mrb[0].mxu0 %v3572
    %v3795 = vpop.f32.mrb[0].mxu0
    %v3796 = vadd.f32 0.0, %v3795
    %v3797 = vpop.f32.mrb[0].mxu0
    %v3798 = vpop.f32.mrb[0].mxu0
    %v3799 = vadd.f32 0.0, %v3798
    %v3800 = vpop.f32.mrb[0].mxu0
    %3801 = vmatprep.mubr.bf16.mxu0 0
    %3802 = vmatmul.mubr.bf16.gmra.mrb[0].mxu0 %v3575
    %v3803 = vpop.f32.mrb[0].mxu0
    %v3804 = vadd.f32 0.0, %v3803
    %v3805 = vpop.f32.mrb[0].mxu0
    %v3806 = vpop.f32.mrb[0].mxu0
    %v3807 = vadd.f32 0.0, %v3806
    %v3808 = vpop.f32.mrb[0].mxu0
    %3809 = vmatprep.mubr.bf16.mxu0 0
    %3810 = vmatmul.mubr.bf16.gmra.mrb[0].mxu0 %v3578
    %v3811 = vpop.f32.mrb[0].mxu0
    %v3812 = vadd.f32 0.0, %v3811
    %v3813 = vpop.f32.mrb[0].mxu0
    %v3814 = vpop.f32.mrb[0].mxu0
    %v3815 = vadd.f32 0.0, %v3814
    %v3816 = vpop.f32.mrb[0].mxu0
    %3817 = vmatprep.mubr.bf16.mxu0 0
    %3818 = vmatmul.mubr.bf16.gmra.mrb[0].mxu0 %v3581
    %v3819 = vpop.f32.mrb[0].mxu0
    %v3820 = vadd.f32 0.0, %v3819
    %v3821 = vpop.f32.mrb[0].mxu0
    %v3822 = vpop.f32.mrb[0].mxu0
    %v3823 = vadd.f32 0.0, %v3822
    %v3824 = vpop.f32.mrb[0].mxu0
    %3825 = vmatprep.mubr.bf16.mxu0 0
    %3826 = vmatmul.mubr.bf16.gmra.mrb[0].mxu0 %v3584
    %v3827 = vpop.f32.mrb[0].mxu0
    %v3828 = vadd.f32 0.0, %v3827
    %v3829 = vpop.f32.mrb[0].mxu0
    %v3830 = vpop.f32.mrb[0].mxu0
    %v3831 = vadd.f32 0.0, %v3830
    %v3832 = vpop.f32.mrb[0].mxu0
    %3833 = vmatprep.mubr.bf16.mxu0 0
    %3834 = vmatmul.mubr.bf16.gmra.mrb[0].mxu0 %v3587
    %v3835 = vpop.f32.mrb[0].mxu0
    %v3836 = vadd.f32 0.0, %v3835
    %v3837 = vpop.f32.mrb[0].mxu0
    %v3838 = vpop.f32.mrb[0].mxu0
    %v3839 = vadd.f32 0.0, %v3838
    %v3840 = vpop.f32.mrb[0].mxu0
    %3841 = vmatprep.mubr.bf16.mxu0 0
    %3842 = vmatmul.mubr.bf16.gmra.mrb[0].mxu0 %v3590
    %v3843 = vpop.f32.mrb[0].mxu0
    %v3844 = vadd.f32 0.0, %v3843
    %v3845 = vpop.f32.mrb[0].mxu0
    %v3846 = vpop.f32.mrb[0].mxu0
    %v3847 = vadd.f32 0.0, %v3846
    %v3848 = vpop.f32.mrb[0].mxu0
    %3849 = vmatprep.mubr.bf16.mxu0 0
    %3850 = vmatmul.mubr.bf16.gmra.mrb[0].mxu0 %v3593
    %v3851 = vpop.f32.mrb[0].mxu0
    %v3852 = vadd.f32 0.0, %v3851
    %v3853 = vpop.f32.mrb[0].mxu0
    %v3854 = vpop.f32.mrb[0].mxu0
    %v3855 = vadd.f32 0.0, %v3854
    %v3856 = vpop.f32.mrb[0].mxu0
    %3857 = vmatprep.mubr.bf16.mxu0 0
    %3858 = vmatmul.mubr.bf16.gmra.mrb[0].mxu0 %v3596
    %v3859 = vpop.f32.mrb[0].mxu0
    %v3860 = vadd.f32 0.0, %v3859
    %v3861 = vpop.f32.mrb[0].mxu0
    %v3862 = vpop.f32.mrb[0].mxu0
    %v3863 = vadd.f32 0.0, %v3862
    %v3864 = vpop.f32.mrb[0].mxu0
    %3865 = vmatprep.mubr.bf16.mxu0 0
    %3866 = vmatmul.mubr.bf16.gmra.mrb[0].mxu0 %v3599
    %v3867 = vpop.f32.mrb[0].mxu0
    %v3868 = vadd.f32 0.0, %v3867
    %v3869 = vpop.f32.mrb[0].mxu0
    %v3870 = vpop.f32.mrb[0].mxu0
    %v3871 = vadd.f32 0.0, %v3870
    %v3872 = vpop.f32.mrb[0].mxu0
    %3873 = vmatprep.mubr.bf16.mxu0 0
    %3874 = vmatmul.mubr.bf16.gmra.mrb[0].mxu0 %v3602
    %v3875 = vpop.f32.mrb[0].mxu0
    %v3876 = vadd.f32 0.0, %v3875
    %v3877 = vpop.f32.mrb[0].mxu0
    %v3878 = vpop.f32.mrb[0].mxu0
    %v3879 = vadd.f32 0.0, %v3878
    %v3880 = vpop.f32.mrb[0].mxu0
    %3881 = vmatprep.mubr.bf16.mxu0 0
    %3882 = vmatmul.mubr.bf16.gmra.mrb[0].mxu0 %v3605
    %v3883 = vpop.f32.mrb[0].mxu0
    %v3884 = vadd.f32 0.0, %v3883
    %v3885 = vpop.f32.mrb[0].mxu0
    %v3886 = vpop.f32.mrb[0].mxu0
    %v3887 = vadd.f32 0.0, %v3886
    %v3888 = vpop.f32.mrb[0].mxu0
    %3889 = vmatprep.mubr.bf16.mxu0 0
    %3890 = vmatmul.mubr.bf16.gmra.mrb[0].mxu0 %v3608
    %v3891 = vpop.f32.mrb[0].mxu0
    %v3892 = vadd.f32 0.0, %v3891
    %v3893 = vpop.f32.mrb[0].mxu0
    %v3894 = vpop.f32.mrb[0].mxu0
    %v3895 = vadd.f32 0.0, %v3894
    %v3896 = vpop.f32.mrb[0].mxu0
    %3897 = vmatprep.mubr.bf16.mxu0 0
    %3898 = vmatmul.mubr.bf16.gmra.mrb[0].mxu0 %v3611
    %v3899 = vpop.f32.mrb[0].mxu0
    %v3900 = vadd.f32 0.0, %v3899
    %v3901 = vpop.f32.mrb[0].mxu0
    %v3902 = vpop.f32.mrb[0].mxu0
    %v3903 = vadd.f32 0.0, %v3902
    %v3904 = vpop.f32.mrb[0].mxu0
    %3905 = vmatprep.mubr.bf16.mxu0 0
    %3906 = vmatmul.mubr.bf16.gmra.mrb[0].mxu0 %v3614
    %v3907 = vpop.f32.mrb[0].mxu0
    %v3908 = vadd.f32 0.0, %v3907
    %v3909 = vpop.f32.mrb[0].mxu0
    %v3910 = vpop.f32.mrb[0].mxu0
    %v3911 = vadd.f32 0.0, %v3910
    %v3912 = vpop.f32.mrb[0].mxu0
    %3913 = vmatprep.mubr.bf16.mxu0 0
    %3914 = vmatmul.mubr.bf16.gmra.mrb[0].mxu0 %v3617
    %v3915 = vpop.f32.mrb[0].mxu0
    %v3916 = vadd.f32 0.0, %v3915
    %v3917 = vpop.f32.mrb[0].mxu0
    %v3918 = vpop.f32.mrb[0].mxu0
    %v3919 = vadd.f32 0.0, %v3918
    %v3920 = vpop.f32.mrb[0].mxu0
    %3921 = vmatprep.mubr.bf16.mxu0 0
    %3922 = vmatmul.mubr.bf16.gmra.mrb[0].mxu0 %v3620
    %v3923 = vpop.f32.mrb[0].mxu0
    %v3924 = vadd.f32 0.0, %v3923
    %v3925 = vpop.f32.mrb[0].mxu0
    %v3926 = vpop.f32.mrb[0].mxu0
    %v3927 = vadd.f32 0.0, %v3926
    %v3928 = vpop.f32.mrb[0].mxu0
    %3929 = vmatprep.mubr.bf16.mxu0 0
    %3930 = vmatmul.mubr.bf16.gmra.mrb[0].mxu0 %v3623
    %v3931 = vpop.f32.mrb[0].mxu0
    %v3932 = vadd.f32 0.0, %v3931
    %v3933 = vpop.f32.mrb[0].mxu0
    %v3934 = vpop.f32.mrb[0].mxu0
    %v3935 = vadd.f32 0.0, %v3934
    %v3936 = vpop.f32.mrb[0].mxu0
    %3937 = vmatprep.mubr.bf16.mxu0 0
    %3938 = vmatmul.mubr.bf16.gmra.mrb[0].mxu0 %v3626
    %v3939 = vpop.f32.mrb[0].mxu0
    %v3940 = vadd.f32 0.0, %v3939
    %v3941 = vpop.f32.mrb[0].mxu0
    %v3942 = vpop.f32.mrb[0].mxu0
    %v3943 = vadd.f32 0.0, %v3942
    %v3944 = vpop.f32.mrb[0].mxu0
    %3945 = vmatprep.mubr.bf16.mxu0 0
    %3946 = vmatmul.mubr.bf16.gmra.mrb[0].mxu0 %v3629
    %v3947 = vpop.f32.mrb[0].mxu0
    %v3948 = vadd.f32 0.0, %v3947
    %v3949 = vpop.f32.mrb[0].mxu0
    %v3950 = vpop.f32.mrb[0].mxu0
    %v3951 = vadd.f32 0.0, %v3950
    %v3952 = vpop.f32.mrb[0].mxu0
    %3953 = vmatprep.mubr.bf16.mxu0 0
    %3954 = vmatmul.mubr.bf16.gmra.mrb[0].mxu0 %v3632
    %v3955 = vpop.f32.mrb[0].mxu0
    %v3956 = vadd.f32 0.0, %v3955
    %v3957 = vpop.f32.mrb[0].mxu0
    %v3958 = vpop.f32.mrb[0].mxu0
    %v3959 = vadd.f32 0.0, %v3958
    %v3960 = vpop.f32.mrb[0].mxu0
    %3961 = vmatprep.mubr.bf16.mxu0 0
    %3962 = vmatmul.mubr.bf16.gmra.mrb[0].mxu0 %v3635
    %v3963 = vpop.f32.mrb[0].mxu0
    %v3964 = vadd.f32 0.0, %v3963
    %v3965 = vpop.f32.mrb[0].mxu0
    %v3966 = vpop.f32.mrb[0].mxu0
    %v3967 = vadd.f32 0.0, %v3966
    %v3968 = vpop.f32.mrb[0].mxu0
    %3969 = vmatprep.mubr.bf16.mxu0 0
    %3970 = vmatmul.mubr.bf16.gmra.mrb[0].mxu0 %v3638
    %v3971 = vpop.f32.mrb[0].mxu0
    %v3972 = vadd.f32 0.0, %v3971
    %v3973 = vpop.f32.mrb[0].mxu0
    %v3974 = vpop.f32.mrb[0].mxu0
    %v3975 = vadd.f32 0.0, %v3974
    %v3976 = vpop.f32.mrb[0].mxu0
    %3977 = vmatprep.mubr.bf16.mxu0 0
    %3978 = vmatmul.mubr.bf16.gmra.mrb[0].mxu0 %v3641
    %v3979 = vpop.f32.mrb[0].mxu0
    %v3980 = vadd.f32 0.0, %v3979
    %v3981 = vpop.f32.mrb[0].mxu0
    %v3982 = vpop.f32.mrb[0].mxu0
    %v3983 = vadd.f32 0.0, %v3982
    %v3984 = vpop.f32.mrb[0].mxu0
    %3985 = vmatprep.mubr.bf16.mxu0 0
    %3986 = vmatmul.mubr.bf16.gmra.mrb[0].mxu0 %v3644
    %v3987 = vpop.f32.mrb[0].mxu0
    %v3988 = vadd.f32 0.0, %v3987
    %v3989 = vpop.f32.mrb[0].mxu0
    %v3990 = vpop.f32.mrb[0].mxu0
    %v3991 = vadd.f32 0.0, %v3990
    %v3992 = vpop.f32.mrb[0].mxu0
    %3993 = vdwg.mxu0
    %v3994 = vadd.f32 %v3332, %v3684
    %v3995 = vadd.f32 %v3333, %v3687
    %v3996 = vadd.f32 %v3334, %v3692
    %v3997 = vadd.f32 %v3335, %v3695
    %v3998 = vadd.f32 %v3336, %v3700
    %v3999 = vadd.f32 %v3337, %v3703
    %v4000 = vadd.f32 %v3338, %v3708
    %v4001 = vadd.f32 %v3339, %v3711
    %v4002 = vadd.f32 %v3340, %v3716
    %v4003 = vadd.f32 %v3341, %v3719
    %v4004 = vadd.f32 %v3342, %v3724
    %v4005 = vadd.f32 %v3343, %v3727
    %v4006 = vadd.f32 %v3344, %v3732
    %v4007 = vadd.f32 %v3345, %v3735
    %v4008 = vadd.f32 %v3346, %v3740
    %v4009 = vadd.f32 %v3347, %v3743
    %v4010 = vadd.f32 %v3348, %v3748
    %v4011 = vadd.f32 %v3349, %v3751
    %v4012 = vadd.f32 %v3350, %v3756
    %v4013 = vadd.f32 %v3351, %v3759
    %v4014 = vadd.f32 %v3352, %v3764
    %v4015 = vadd.f32 %v3353, %v3767
    %v4016 = vadd.f32 %v3354, %v3772
    %v4017 = vadd.f32 %v3355, %v3775
    %v4018 = vadd.f32 %v3356, %v3780
    %v4019 = vadd.f32 %v3357, %v3783
    %v4020 = vadd.f32 %v3358, %v3788
    %v4021 = vadd.f32 %v3359, %v3791
    %v4022 = vadd.f32 %v3360, %v3796
    %v4023 = vadd.f32 %v3361, %v3799
    %v4024 = vadd.f32 %v3362, %v3804
    %v4025 = vadd.f32 %v3363, %v3807
    %v4026 = vadd.f32 %v3364, %v3812
    %v4027 = vadd.f32 %v3365, %v3815
    %v4028 = vadd.f32 %v3366, %v3820
    %v4029 = vadd.f32 %v3367, %v3823
    %v4030 = vadd.f32 %v3368, %v3828
    %v4031 = vadd.f32 %v3369, %v3831
    %v4032 = vadd.f32 %v3370, %v3836
    %v4033 = vadd.f32 %v3371, %v3839
    %v4034 = vadd.f32 %v3372, %v3844
    %v4035 = vadd.f32 %v3373, %v3847
    %v4036 = vadd.f32 %v3374, %v3852
    %v4037 = vadd.f32 %v3375, %v3855
    %v4038 = vadd.f32 %v3376, %v3860
    %v4039 = vadd.f32 %v3377, %v3863
    %v4040 = vadd.f32 %v3378, %v3868
    %v4041 = vadd.f32 %v3379, %v3871
    %v4042 = vadd.f32 %v3380, %v3876
    %v4043 = vadd.f32 %v3381, %v3879
    %v4044 = vadd.f32 %v3382, %v3884
    %v4045 = vadd.f32 %v3383, %v3887
    %v4046 = vadd.f32 %v3384, %v3892
    %v4047 = vadd.f32 %v3385, %v3895
    %v4048 = vadd.f32 %v3386, %v3900
    %v4049 = vadd.f32 %v3387, %v3903
    %v4050 = vadd.f32 %v3388, %v3908
    %v4051 = vadd.f32 %v3389, %v3911
    %v4052 = vadd.f32 %v3390, %v3916
    %v4053 = vadd.f32 %v3391, %v3919
    %v4054 = vadd.f32 %v3392, %v3924
    %v4055 = vadd.f32 %v3393, %v3927
    %v4056 = vadd.f32 %v3394, %v3932
    %v4057 = vadd.f32 %v3395, %v3935
    %v4058 = vadd.f32 %v3396, %v3940
    %v4059 = vadd.f32 %v3397, %v3943
    %v4060 = vadd.f32 %v3398, %v3948
    %v4061 = vadd.f32 %v3399, %v3951
    %v4062 = vadd.f32 %v3400, %v3956
    %v4063 = vadd.f32 %v3401, %v3959
    %v4064 = vadd.f32 %v3402, %v3964
    %v4065 = vadd.f32 %v3403, %v3967
    %v4066 = vadd.f32 %v3404, %v3972
    %v4067 = vadd.f32 %v3405, %v3975
    %v4068 = vadd.f32 %v3406, %v3980
    %v4069 = vadd.f32 %v3407, %v3983
    %v4070 = vadd.f32 %v3408, %v3988
    %v4071 = vadd.f32 %v3409, %v3991
    %4072 = vst.msk [vmem:[#allocation3 + $0x18] sm:$0xff] %vm1527, %v3994
    %4073 = vst.msk [vmem:[#allocation3 + $0x20] sm:$0xff] %vm1527, %v3995
    %4074 = vst.msk [vmem:[#allocation3 + $0x28] sm:$0xff] %vm1527, %v3996
    %4075 = vst.msk [vmem:[#allocation3 + $0x30] sm:$0xff] %vm1527, %v3997
    %4076 = vst.msk [vmem:[#allocation3 + $0x38] sm:$0xff] %vm1527, %v3998
    %4077 = vst.msk [vmem:[#allocation3 + $0x40] sm:$0xff] %vm1527, %v3999
    %4078 = vst.msk [vmem:[#allocation3 + $0x48] sm:$0xff] %vm1527, %v4000
    %4079 = vst.msk [vmem:[#allocation3 + $0x50] sm:$0xff] %vm1527, %v4001
    %4080 = vst.msk [vmem:[#allocation3 + $0x58] sm:$0xff] %vm1527, %v4002
    %4081 = vst.msk [vmem:[#allocation3 + $0x60] sm:$0xff] %vm1527, %v4003
    %4082 = vst.msk [vmem:[#allocation3 + $0x68] sm:$0xff] %vm1527, %v4004
    %4083 = vst.msk [vmem:[#allocation3 + $0x70] sm:$0xff] %vm1527, %v4005
    %4084 = vst.msk [vmem:[#allocation3 + $0x78] sm:$0xff] %vm1527, %v4006
    %4085 = vst.msk [vmem:[#allocation3 + $0x80] sm:$0xff] %vm1527, %v4007
    %4086 = vst.msk [vmem:[#allocation3 + $0x88] sm:$0xff] %vm1527, %v4008
    %4087 = vst.msk [vmem:[#allocation3 + $0x90] sm:$0xff] %vm1527, %v4009
    %4088 = vst.msk [vmem:[#allocation3 + $0x98] sm:$0xff] %vm1527, %v4010
    %4089 = vst.msk [vmem:[#allocation3 + $0xa0] sm:$0xff] %vm1527, %v4011
    %4090 = vst.msk [vmem:[#allocation3 + $0xa8] sm:$0xff] %vm1527, %v4012
    %4091 = vst.msk [vmem:[#allocation3 + $0xb0] sm:$0xff] %vm1527, %v4013
    %4092 = vst.msk [vmem:[#allocation3 + $0xb8] sm:$0xff] %vm1527, %v4014
    %4093 = vst.msk [vmem:[#allocation3 + $0xc0] sm:$0xff] %vm1527, %v4015
    %4094 = vst.msk [vmem:[#allocation3 + $0xc8] sm:$0xff] %vm1527, %v4016
    %4095 = vst.msk [vmem:[#allocation3 + $0xd0] sm:$0xff] %vm1527, %v4017
    %4096 = vst.msk [vmem:[#allocation3 + $0xd8] sm:$0xff] %vm1527, %v4018
    %4097 = vst.msk [vmem:[#allocation3 + $0xe0] sm:$0xff] %vm1527, %v4019
    %4098 = vst.msk [vmem:[#allocation3 + $0xe8] sm:$0xff] %vm1527, %v4020
    %4099 = vst.msk [vmem:[#allocation3 + $0xf0] sm:$0xff] %vm1527, %v4021
    %4100 = vst.msk [vmem:[#allocation3 + $0xf8] sm:$0xff] %vm1527, %v4022
    %4101 = vst.msk [vmem:[#allocation3 + $0x100] sm:$0xff] %vm1527, %v4023
    %4102 = vst.msk [vmem:[#allocation3 + $0x108] sm:$0xff] %vm1527, %v4024
    %4103 = vst.msk [vmem:[#allocation3 + $0x110] sm:$0xff] %vm1527, %v4025
    %4104 = vst.msk [vmem:[#allocation3 + $0x118] sm:$0xff] %vm1527, %v4026
    %4105 = vst.msk [vmem:[#allocation3 + $0x120] sm:$0xff] %vm1527, %v4027
    %4106 = vst.msk [vmem:[#allocation3 + $0x128] sm:$0xff] %vm1527, %v4028
    %4107 = vst.msk [vmem:[#allocation3 + $0x130] sm:$0xff] %vm1527, %v4029
    %4108 = vst.msk [vmem:[#allocation3 + $0x138] sm:$0xff] %vm1527, %v4030
    %4109 = vst.msk [vmem:[#allocation3 + $0x140] sm:$0xff] %vm1527, %v4031
    %4110 = vst.msk [vmem:[#allocation3 + $0x148] sm:$0xff] %vm1527, %v4032
    %4111 = vst.msk [vmem:[#allocation3 + $0x150] sm:$0xff] %vm1527, %v4033
    %4112 = vst.msk [vmem:[#allocation3 + $0x158] sm:$0xff] %vm1527, %v4034
    %4113 = vst.msk [vmem:[#allocation3 + $0x160] sm:$0xff] %vm1527, %v4035
    %4114 = vst.msk [vmem:[#allocation3 + $0x168] sm:$0xff] %vm1527, %v4036
    %4115 = vst.msk [vmem:[#allocation3 + $0x170] sm:$0xff] %vm1527, %v4037
    %4116 = vst.msk [vmem:[#allocation3 + $0x178] sm:$0xff] %vm1527, %v4038
    %4117 = vst.msk [vmem:[#allocation3 + $0x180] sm:$0xff] %vm1527, %v4039
    %4118 = vst.msk [vmem:[#allocation3 + $0x188] sm:$0xff] %vm1527, %v4040
    %4119 = vst.msk [vmem:[#allocation3 + $0x190] sm:$0xff] %vm1527, %v4041
    %4120 = vst.msk [vmem:[#allocation3 + $0x198] sm:$0xff] %vm1527, %v4042
    %4121 = vst.msk [vmem:[#allocation3 + $0x1a0] sm:$0xff] %vm1527, %v4043
    %4122 = vst.msk [vmem:[#allocation3 + $0x1a8] sm:$0xff] %vm1527, %v4044
    %4123 = vst.msk [vmem:[#allocation3 + $0x1b0] sm:$0xff] %vm1527, %v4045
    %4124 = vst.msk [vmem:[#allocation3 + $0x1b8] sm:$0xff] %vm1527, %v4046
    %4125 = vst.msk [vmem:[#allocation3 + $0x1c0] sm:$0xff] %vm1527, %v4047
    %4126 = vst.msk [vmem:[#allocation3 + $0x1c8] sm:$0xff] %vm1527, %v4048
    %4127 = vst.msk [vmem:[#allocation3 + $0x1d0] sm:$0xff] %vm1527, %v4049
    %4128 = vst.msk [vmem:[#allocation3 + $0x1d8] sm:$0xff] %vm1527, %v4050
    %4129 = vst.msk [vmem:[#allocation3 + $0x1e0] sm:$0xff] %vm1527, %v4051
    %4130 = vst.msk [vmem:[#allocation3 + $0x1e8] sm:$0xff] %vm1527, %v4052
    %4131 = vst.msk [vmem:[#allocation3 + $0x1f0] sm:$0xff] %vm1527, %v4053
    %4132 = vst.msk [vmem:[#allocation3 + $0x1f8] sm:$0xff] %vm1527, %v4054
    %4133 = vst.msk [vmem:[#allocation3 + $0x200] sm:$0xff] %vm1527, %v4055
    %4134 = vst.msk [vmem:[#allocation3 + $0x208] sm:$0xff] %vm1527, %v4056
    %4135 = vst.msk [vmem:[#allocation3 + $0x210] sm:$0xff] %vm1527, %v4057
    %4136 = vst.msk [vmem:[#allocation3 + $0x218] sm:$0xff] %vm1527, %v4058
    %4137 = vst.msk [vmem:[#allocation3 + $0x220] sm:$0xff] %vm1527, %v4059
    %4138 = vst.msk [vmem:[#allocation3 + $0x228] sm:$0xff] %vm1527, %v4060
    %4139 = vst.msk [vmem:[#allocation3 + $0x230] sm:$0xff] %vm1527, %v4061
    %4140 = vst.msk [vmem:[#allocation3 + $0x238] sm:$0xff] %vm1527, %v4062
    %4141 = vst.msk [vmem:[#allocation3 + $0x240] sm:$0xff] %vm1527, %v4063
    %4142 = vst.msk [vmem:[#allocation3 + $0x248] sm:$0xff] %vm1527, %v4064
    %4143 = vst.msk [vmem:[#allocation3 + $0x250] sm:$0xff] %vm1527, %v4065
    %4144 = vst.msk [vmem:[#allocation3 + $0x258] sm:$0xff] %vm1527, %v4066
    %4145 = vst.msk [vmem:[#allocation3 + $0x260] sm:$0xff] %vm1527, %v4067
    %4146 = vst.msk [vmem:[#allocation3 + $0x268] sm:$0xff] %vm1527, %v4068
    %4147 = vst.msk [vmem:[#allocation3 + $0x270] sm:$0xff] %vm1527, %v4069
    %4148 = vst.msk [vmem:[#allocation3 + $0x278] sm:$0xff] %vm1527, %v4070
    %4149 = vst.msk [vmem:[#allocation3 + $0x280] sm:$0xff] %vm1527, %v4071
    %v4150 = vld [vmem:[#allocation3 + $0x18] sm:$0xff]
    %v4151 = vld [vmem:[#allocation3 + $0x20] sm:$0xff]
    %v4152 = vld [vmem:[#allocation3 + $0x28] sm:$0xff]
    %v4153 = vld [vmem:[#allocation3 + $0x30] sm:$0xff]
    %v4154 = vld [vmem:[#allocation3 + $0x38] sm:$0xff]
    %v4155 = vld [vmem:[#allocation3 + $0x40] sm:$0xff]
    %v4156 = vld [vmem:[#allocation3 + $0x48] sm:$0xff]
    %v4157 = vld [vmem:[#allocation3 + $0x50] sm:$0xff]
    %v4158 = vld [vmem:[#allocation3 + $0x58] sm:$0xff]
    %v4159 = vld [vmem:[#allocation3 + $0x60] sm:$0xff]
    %v4160 = vld [vmem:[#allocation3 + $0x68] sm:$0xff]
    %v4161 = vld [vmem:[#allocation3 + $0x70] sm:$0xff]
    %v4162 = vld [vmem:[#allocation3 + $0x78] sm:$0xff]
    %v4163 = vld [vmem:[#allocation3 + $0x80] sm:$0xff]
    %v4164 = vld [vmem:[#allocation3 + $0x88] sm:$0xff]
    %v4165 = vld [vmem:[#allocation3 + $0x90] sm:$0xff]
    %v4166 = vld [vmem:[#allocation3 + $0x98] sm:$0xff]
    %v4167 = vld [vmem:[#allocation3 + $0xa0] sm:$0xff]
    %v4168 = vld [vmem:[#allocation3 + $0xa8] sm:$0xff]
    %v4169 = vld [vmem:[#allocation3 + $0xb0] sm:$0xff]
    %v4170 = vld [vmem:[#allocation3 + $0xb8] sm:$0xff]
    %v4171 = vld [vmem:[#allocation3 + $0xc0] sm:$0xff]
    %v4172 = vld [vmem:[#allocation3 + $0xc8] sm:$0xff]
    %v4173 = vld [vmem:[#allocation3 + $0xd0] sm:$0xff]
    %v4174 = vld [vmem:[#allocation3 + $0xd8] sm:$0xff]
    %v4175 = vld [vmem:[#allocation3 + $0xe0] sm:$0xff]
    %v4176 = vld [vmem:[#allocation3 + $0xe8] sm:$0xff]
    %v4177 = vld [vmem:[#allocation3 + $0xf0] sm:$0xff]
    %v4178 = vld [vmem:[#allocation3 + $0xf8] sm:$0xff]
    %v4179 = vld [vmem:[#allocation3 + $0x100] sm:$0xff]
    %v4180 = vld [vmem:[#allocation3 + $0x108] sm:$0xff]
    %v4181 = vld [vmem:[#allocation3 + $0x110] sm:$0xff]
    %v4182 = vld [vmem:[#allocation3 + $0x118] sm:$0xff]
    %v4183 = vld [vmem:[#allocation3 + $0x120] sm:$0xff]
    %v4184 = vld [vmem:[#allocation3 + $0x128] sm:$0xff]
    %v4185 = vld [vmem:[#allocation3 + $0x130] sm:$0xff]
    %v4186 = vld [vmem:[#allocation3 + $0x138] sm:$0xff]
    %v4187 = vld [vmem:[#allocation3 + $0x140] sm:$0xff]
    %v4188 = vld [vmem:[#allocation3 + $0x148] sm:$0xff]
    %v4189 = vld [vmem:[#allocation3 + $0x150] sm:$0xff]
    %v4190 = vld [vmem:[#allocation3 + $0x158] sm:$0xff]
    %v4191 = vld [vmem:[#allocation3 + $0x160] sm:$0xff]
    %v4192 = vld [vmem:[#allocation3 + $0x168] sm:$0xff]
    %v4193 = vld [vmem:[#allocation3 + $0x170] sm:$0xff]
    %v4194 = vld [vmem:[#allocation3 + $0x178] sm:$0xff]
    %v4195 = vld [vmem:[#allocation3 + $0x180] sm:$0xff]
    %v4196 = vld [vmem:[#allocation3 + $0x188] sm:$0xff]
    %v4197 = vld [vmem:[#allocation3 + $0x190] sm:$0xff]
    %v4198 = vld [vmem:[#allocation3 + $0x198] sm:$0xff]
    %v4199 = vld [vmem:[#allocation3 + $0x1a0] sm:$0xff]
    %v4200 = vld [vmem:[#allocation3 + $0x1a8] sm:$0xff]
    %v4201 = vld [vmem:[#allocation3 + $0x1b0] sm:$0xff]
    %v4202 = vld [vmem:[#allocation3 + $0x1b8] sm:$0xff]
    %v4203 = vld [vmem:[#allocation3 + $0x1c0] sm:$0xff]
    %v4204 = vld [vmem:[#allocation3 + $0x1c8] sm:$0xff]
    %v4205 = vld [vmem:[#allocation3 + $0x1d0] sm:$0xff]
    %v4206 = vld [vmem:[#allocation3 + $0x1d8] sm:$0xff]
    %v4207 = vld [vmem:[#allocation3 + $0x1e0] sm:$0xff]
    %v4208 = vld [vmem:[#allocation3 + $0x1e8] sm:$0xff]
    %v4209 = vld [vmem:[#allocation3 + $0x1f0] sm:$0xff]
    %v4210 = vld [vmem:[#allocation3 + $0x1f8] sm:$0xff]
    %v4211 = vld [vmem:[#allocation3 + $0x200] sm:$0xff]
    %v4212 = vld [vmem:[#allocation3 + $0x208] sm:$0xff]
    %v4213 = vld [vmem:[#allocation3 + $0x210] sm:$0xff]
    %v4214 = vld [vmem:[#allocation3 + $0x218] sm:$0xff]
    %v4215 = vld [vmem:[#allocation3 + $0x220] sm:$0xff]
    %v4216 = vld [vmem:[#allocation3 + $0x228] sm:$0xff]
    %v4217 = vld [vmem:[#allocation3 + $0x230] sm:$0xff]
    %v4218 = vld [vmem:[#allocation3 + $0x238] sm:$0xff]
    %v4219 = vld [vmem:[#allocation3 + $0x240] sm:$0xff]
    %v4220 = vld [vmem:[#allocation3 + $0x248] sm:$0xff]
    %v4221 = vld [vmem:[#allocation3 + $0x250] sm:$0xff]
    %v4222 = vld [vmem:[#allocation3 + $0x258] sm:$0xff]
    %v4223 = vld [vmem:[#allocation3 + $0x260] sm:$0xff]
    %v4224 = vld [vmem:[#allocation3 + $0x268] sm:$0xff]
    %v4225 = vld [vmem:[#allocation3 + $0x270] sm:$0xff]
    %v4226 = vld [vmem:[#allocation3 + $0x278] sm:$0xff]
    %v4227 = vld [vmem:[#allocation3 + $0x280] sm:$0xff]
    %v4228 = vld [vmem:[#allocation2 + $0x17] sm:$0xff]
    %v4229 = vld [vmem:[#allocation2 + $0x1f] sm:$0xff]
    %v4230 = vld [vmem:[#allocation2 + $0x27] sm:$0xff]
    %v4231 = vld [vmem:[#allocation2 + $0x2f] sm:$0xff]
    %v4232 = vld [vmem:[#allocation2 + $0x37] sm:$0xff]
    %v4233 = vld [vmem:[#allocation2 + $0x3f] sm:$0xff]
    %v4234 = vld [vmem:[#allocation2 + $0x47] sm:$0xff]
    %v4235 = vld [vmem:[#allocation2 + $0x4f] sm:$0xff]
    %v4236 = vld [vmem:[#allocation2 + $0x57] sm:$0xff]
    %v4237 = vld [vmem:[#allocation2 + $0x5f] sm:$0xff]
    %v4238 = vld [vmem:[#allocation2 + $0x67] sm:$0xff]
    %v4239 = vld [vmem:[#allocation2 + $0x6f] sm:$0xff]
    %v4240 = vld [vmem:[#allocation2 + $0x77] sm:$0xff]
    %v4241 = vld [vmem:[#allocation2 + $0x7f] sm:$0xff]
    %v4242 = vld [vmem:[#allocation2 + $0x87] sm:$0xff]
    %v4243 = vld [vmem:[#allocation2 + $0x8f] sm:$0xff]
    %v4244 = vld [vmem:[#allocation2 + $0x97] sm:$0xff]
    %v4245 = vld [vmem:[#allocation2 + $0x9f] sm:$0xff]
    %v4246 = vld [vmem:[#allocation2 + $0xa7] sm:$0xff]
    %v4247 = vld [vmem:[#allocation2 + $0xaf] sm:$0xff]
    %v4248 = vld [vmem:[#allocation2 + $0xb7] sm:$0xff]
    %v4249 = vld [vmem:[#allocation2 + $0xbf] sm:$0xff]
    %v4250 = vld [vmem:[#allocation2 + $0xc7] sm:$0xff]
    %v4251 = vld [vmem:[#allocation2 + $0xcf] sm:$0xff]
    %v4252 = vld [vmem:[#allocation2 + $0xd7] sm:$0xff]
    %v4253 = vld [vmem:[#allocation2 + $0xdf] sm:$0xff]
    %v4254 = vld [vmem:[#allocation2 + $0xe7] sm:$0xff]
    %v4255 = vld [vmem:[#allocation2 + $0xef] sm:$0xff]
    %v4256 = vld [vmem:[#allocation2 + $0xf7] sm:$0xff]
    %v4257 = vld [vmem:[#allocation2 + $0xff] sm:$0xff]
    %v4258 = vld [vmem:[#allocation2 + $0x107] sm:$0xff]
    %v4259 = vld [vmem:[#allocation2 + $0x10f] sm:$0xff]
    %v4260 = vld [vmem:[#allocation2 + $0x117] sm:$0xff]
    %v4261 = vld [vmem:[#allocation2 + $0x11f] sm:$0xff]
    %v4262 = vld [vmem:[#allocation2 + $0x127] sm:$0xff]
    %v4263 = vld [vmem:[#allocation2 + $0x12f] sm:$0xff]
    %v4264 = vld [vmem:[#allocation2 + $0x137] sm:$0xff]
    %v4265 = vld [vmem:[#allocation2 + $0x13f] sm:$0xff]
    %v4266 = vld [vmem:[#allocation2 + $0x147] sm:$0xff]
    %v4267 = vld [vmem:[#allocation2 + $0x14f] sm:$0xff]
    %v4268 = vld [vmem:[#allocation2 + $0x157] sm:$0xff]
    %v4269 = vld [vmem:[#allocation2 + $0x15f] sm:$0xff]
    %v4270 = vld [vmem:[#allocation2 + $0x167] sm:$0xff]
    %v4271 = vld [vmem:[#allocation2 + $0x16f] sm:$0xff]
    %v4272 = vld [vmem:[#allocation2 + $0x177] sm:$0xff]
    %v4273 = vld [vmem:[#allocation2 + $0x17f] sm:$0xff]
    %v4274 = vld [vmem:[#allocation2 + $0x187] sm:$0xff]
    %v4275 = vld [vmem:[#allocation2 + $0x18f] sm:$0xff]
    %v4276 = vld [vmem:[#allocation2 + $0x197] sm:$0xff]
    %v4277 = vld [vmem:[#allocation2 + $0x19f] sm:$0xff]
    %v4278 = vld [vmem:[#allocation2 + $0x1a7] sm:$0xff]
    %v4279 = vld [vmem:[#allocation2 + $0x1af] sm:$0xff]
    %v4280 = vld [vmem:[#allocation2 + $0x1b7] sm:$0xff]
    %v4281 = vld [vmem:[#allocation2 + $0x1bf] sm:$0xff]
    %v4282 = vld [vmem:[#allocation2 + $0x1c7] sm:$0xff]
    %v4283 = vld [vmem:[#allocation2 + $0x1cf] sm:$0xff]
    %v4284 = vld [vmem:[#allocation2 + $0x1d7] sm:$0xff]
    %v4285 = vld [vmem:[#allocation2 + $0x1df] sm:$0xff]
    %v4286 = vld [vmem:[#allocation2 + $0x1e7] sm:$0xff]
    %v4287 = vld [vmem:[#allocation2 + $0x1ef] sm:$0xff]
    %v4288 = vld [vmem:[#allocation2 + $0x1f7] sm:$0xff]
    %v4289 = vld [vmem:[#allocation2 + $0x1ff] sm:$0xff]
    %v4290 = vld [vmem:[#allocation2 + $0x207] sm:$0xff]
    %v4291 = vld [vmem:[#allocation2 + $0x20f] sm:$0xff]
    %v4292 = vld [vmem:[#allocation2 + $0x217] sm:$0xff]
    %v4293 = vld [vmem:[#allocation2 + $0x21f] sm:$0xff]
    %v4294 = vld [vmem:[#allocation2 + $0x227] sm:$0xff]
    %v4295 = vld [vmem:[#allocation2 + $0x22f] sm:$0xff]
    %v4296 = vld [vmem:[#allocation2 + $0x237] sm:$0xff]
    %v4297 = vld [vmem:[#allocation2 + $0x23f] sm:$0xff]
    %v4298 = vld [vmem:[#allocation2 + $0x247] sm:$0xff]
    %v4299 = vld [vmem:[#allocation2 + $0x24f] sm:$0xff]
    %v4300 = vld [vmem:[#allocation2 + $0x257] sm:$0xff]
    %v4301 = vld [vmem:[#allocation2 + $0x25f] sm:$0xff]
    %v4302 = vld [vmem:[#allocation2 + $0x267] sm:$0xff]
    %v4303 = vld [vmem:[#allocation2 + $0x26f] sm:$0xff]
    %v4304 = vld [vmem:[#allocation2 + $0x277] sm:$0xff]
    %v4305 = vld [vmem:[#allocation2 + $0x27f] sm:$0xff]
    %v4306 = vpack.c.bf16 %v4229, %v4228
    %v4307 = vpack.c.bf16 %v4231, %v4230
    %v4308 = vpack.c.bf16 %v4233, %v4232
    %v4309 = vpack.c.bf16 %v4235, %v4234
    %v4310 = vpack.c.bf16 %v4237, %v4236
    %v4311 = vpack.c.bf16 %v4239, %v4238
    %v4312 = vpack.c.bf16 %v4241, %v4240
    %v4313 = vpack.c.bf16 %v4243, %v4242
    %v4314 = vpack.c.bf16 %v4245, %v4244
    %v4315 = vpack.c.bf16 %v4247, %v4246
    %v4316 = vpack.c.bf16 %v4249, %v4248
    %v4317 = vpack.c.bf16 %v4251, %v4250
    %v4318 = vpack.c.bf16 %v4253, %v4252
    %v4319 = vpack.c.bf16 %v4255, %v4254
    %v4320 = vpack.c.bf16 %v4257, %v4256
    %v4321 = vpack.c.bf16 %v4259, %v4258
    %v4322 = vpack.c.bf16 %v4261, %v4260
    %v4323 = vpack.c.bf16 %v4263, %v4262
    %v4324 = vpack.c.bf16 %v4265, %v4264
    %v4325 = vpack.c.bf16 %v4267, %v4266
    %v4326 = vpack.c.bf16 %v4269, %v4268
    %v4327 = vpack.c.bf16 %v4271, %v4270
    %v4328 = vpack.c.bf16 %v4273, %v4272
    %v4329 = vpack.c.bf16 %v4275, %v4274
    %v4330 = vpack.c.bf16 %v4277, %v4276
    %v4331 = vpack.c.bf16 %v4279, %v4278
    %v4332 = vpack.c.bf16 %v4281, %v4280
    %v4333 = vpack.c.bf16 %v4283, %v4282
    %v4334 = vpack.c.bf16 %v4285, %v4284
    %v4335 = vpack.c.bf16 %v4287, %v4286
    %v4336 = vpack.c.bf16 %v4289, %v4288
    %v4337 = vpack.c.bf16 %v4291, %v4290
    %v4338 = vpack.c.bf16 %v4293, %v4292
    %v4339 = vpack.c.bf16 %v4295, %v4294
    %v4340 = vpack.c.bf16 %v4297, %v4296
    %v4341 = vpack.c.bf16 %v4299, %v4298
    %v4342 = vpack.c.bf16 %v4301, %v4300
    %v4343 = vpack.c.bf16 %v4303, %v4302
    %v4344 = vpack.c.bf16 %v4305, %v4304
    %s4345 = scalar_lea.vmem %s4, 12
    %v4346 = vld [vmem:[%s4345] sm:$0xf]
    %v4348 = vsel %vm1527, %v4306, 0
    %v4351 = vsel %vm1527, %v4307, 0
    %v4354 = vsel %vm1527, %v4308, 0
    %v4357 = vsel %vm1527, %v4309, 0
    %v4360 = vsel %vm1527, %v4310, 0
    %v4363 = vsel %vm1527, %v4311, 0
    %v4366 = vsel %vm1527, %v4312, 0
    %v4369 = vsel %vm1527, %v4313, 0
    %v4372 = vsel %vm1527, %v4314, 0
    %v4375 = vsel %vm1527, %v4315, 0
    %v4378 = vsel %vm1527, %v4316, 0
    %v4381 = vsel %vm1527, %v4317, 0
    %v4384 = vsel %vm1527, %v4318, 0
    %v4387 = vsel %vm1527, %v4319, 0
    %v4390 = vsel %vm1527, %v4320, 0
    %v4393 = vsel %vm1527, %v4321, 0
    %v4396 = vsel %vm1527, %v4322, 0
    %v4399 = vsel %vm1527, %v4323, 0
    %v4402 = vsel %vm1527, %v4324, 0
    %v4405 = vsel %vm1527, %v4325, 0
    %v4408 = vsel %vm1527, %v4326, 0
    %v4411 = vsel %vm1527, %v4327, 0
    %v4414 = vsel %vm1527, %v4328, 0
    %v4417 = vsel %vm1527, %v4329, 0
    %v4420 = vsel %vm1527, %v4330, 0
    %v4423 = vsel %vm1527, %v4331, 0
    %v4426 = vsel %vm1527, %v4332, 0
    %v4429 = vsel %vm1527, %v4333, 0
    %v4432 = vsel %vm1527, %v4334, 0
    %v4435 = vsel %vm1527, %v4335, 0
    %v4438 = vsel %vm1527, %v4336, 0
    %v4441 = vsel %vm1527, %v4337, 0
    %v4444 = vsel %vm1527, %v4338, 0
    %v4447 = vsel %vm1527, %v4339, 0
    %v4450 = vsel %vm1527, %v4340, 0
    %v4453 = vsel %vm1527, %v4341, 0
    %v4456 = vsel %vm1527, %v4342, 0
    %v4459 = vsel %vm1527, %v4343, 0
    %v4462 = vsel %vm1527, %v4344, 0
    %v4465 = vsel %vm2009, %v4346, 0
    %4467 = vmatprep.subr.bf16.mxu0 0
    %4468 = vmatpush1.bf16.msra.mxu0 %v4465
    %4469 = vmatprep.subr.bf16.mxu0 0
    %4470 = vmatpush1.bf16.msra.mxu0 0
    %4471 = vmatprep.subr.bf16.mxu0 0
    %4472 = vmatpush1.bf16.msra.mxu0 0
    %4473 = vmatprep.subr.bf16.mxu0 0
    %4474 = vmatpush1.bf16.msra.mxu0 0
    %4475 = vmatprep.subr.bf16.mxu0 0
    %4476 = vmatpush1.bf16.msra.mxu0 0
    %4477 = vmatprep.subr.bf16.mxu0 0
    %4478 = vmatpush1.bf16.msra.mxu0 0
    %4479 = vmatprep.subr.bf16.mxu0 0
    %4480 = vmatpush1.bf16.msra.mxu0 0
    %4481 = vmatprep.subr.bf16.mxu0 0
    %4482 = vmatpush1.bf16.msra.mxu0 0
    %4483 = vmatprep.subr.bf16.mxu0 0
    %4484 = vmatpush1.bf16.msra.mxu0 0
    %4485 = vmatprep.subr.bf16.mxu0 0
    %4486 = vmatpush1.bf16.msra.mxu0 0
    %4487 = vmatprep.subr.bf16.mxu0 0
    %4488 = vmatpush1.bf16.msra.mxu0 0
    %4489 = vmatprep.subr.bf16.mxu0 0
    %4490 = vmatpush1.bf16.msra.mxu0 0
    %4491 = vmatprep.subr.bf16.mxu0 0
    %4492 = vmatpush1.bf16.msra.mxu0 0
    %4493 = vmatprep.subr.bf16.mxu0 0
    %4494 = vmatpush1.bf16.msra.mxu0 0
    %4495 = vmatprep.subr.bf16.mxu0 0
    %4496 = vmatpush1.bf16.msra.mxu0 0
    %4497 = vmatprep.subr.bf16.mxu0 0
    %4498 = vmatpush1.bf16.msra.mxu0 0
    %4499 = vmatprep.mubr.bf16.mxu0 0
    %4500 = vmatmul.mubr.bf16.gmra.mrb[0].mxu0 %v4348
    %v4501 = vpop.f32.mrb[0].mxu0
    %v4502 = vadd.f32 0.0, %v4501
    %v4503 = vpop.f32.mrb[0].mxu0
    %v4504 = vpop.f32.mrb[0].mxu0
    %v4505 = vadd.f32 0.0, %v4504
    %v4506 = vpop.f32.mrb[0].mxu0
    %4507 = vmatprep.mubr.bf16.mxu0 0
    %4508 = vmatmul.mubr.bf16.gmra.mrb[0].mxu0 %v4351
    %v4509 = vpop.f32.mrb[0].mxu0
    %v4510 = vadd.f32 0.0, %v4509
    %v4511 = vpop.f32.mrb[0].mxu0
    %v4512 = vpop.f32.mrb[0].mxu0
    %v4513 = vadd.f32 0.0, %v4512
    %v4514 = vpop.f32.mrb[0].mxu0
    %4515 = vmatprep.mubr.bf16.mxu0 0
    %4516 = vmatmul.mubr.bf16.gmra.mrb[0].mxu0 %v4354
    %v4517 = vpop.f32.mrb[0].mxu0
    %v4518 = vadd.f32 0.0, %v4517
    %v4519 = vpop.f32.mrb[0].mxu0
    %v4520 = vpop.f32.mrb[0].mxu0
    %v4521 = vadd.f32 0.0, %v4520
    %v4522 = vpop.f32.mrb[0].mxu0
    %4523 = vmatprep.mubr.bf16.mxu0 0
    %4524 = vmatmul.mubr.bf16.gmra.mrb[0].mxu0 %v4357
    %v4525 = vpop.f32.mrb[0].mxu0
    %v4526 = vadd.f32 0.0, %v4525
    %v4527 = vpop.f32.mrb[0].mxu0
    %v4528 = vpop.f32.mrb[0].mxu0
    %v4529 = vadd.f32 0.0, %v4528
    %v4530 = vpop.f32.mrb[0].mxu0
    %4531 = vmatprep.mubr.bf16.mxu0 0
    %4532 = vmatmul.mubr.bf16.gmra.mrb[0].mxu0 %v4360
    %v4533 = vpop.f32.mrb[0].mxu0
    %v4534 = vadd.f32 0.0, %v4533
    %v4535 = vpop.f32.mrb[0].mxu0
    %v4536 = vpop.f32.mrb[0].mxu0
    %v4537 = vadd.f32 0.0, %v4536
    %v4538 = vpop.f32.mrb[0].mxu0
    %4539 = vmatprep.mubr.bf16.mxu0 0
    %4540 = vmatmul.mubr.bf16.gmra.mrb[0].mxu0 %v4363
    %v4541 = vpop.f32.mrb[0].mxu0
    %v4542 = vadd.f32 0.0, %v4541
    %v4543 = vpop.f32.mrb[0].mxu0
    %v4544 = vpop.f32.mrb[0].mxu0
    %v4545 = vadd.f32 0.0, %v4544
    %v4546 = vpop.f32.mrb[0].mxu0
    %4547 = vmatprep.mubr.bf16.mxu0 0
    %4548 = vmatmul.mubr.bf16.gmra.mrb[0].mxu0 %v4366
    %v4549 = vpop.f32.mrb[0].mxu0
    %v4550 = vadd.f32 0.0, %v4549
    %v4551 = vpop.f32.mrb[0].mxu0
    %v4552 = vpop.f32.mrb[0].mxu0
    %v4553 = vadd.f32 0.0, %v4552
    %v4554 = vpop.f32.mrb[0].mxu0
    %4555 = vmatprep.mubr.bf16.mxu0 0
    %4556 = vmatmul.mubr.bf16.gmra.mrb[0].mxu0 %v4369
    %v4557 = vpop.f32.mrb[0].mxu0
    %v4558 = vadd.f32 0.0, %v4557
    %v4559 = vpop.f32.mrb[0].mxu0
    %v4560 = vpop.f32.mrb[0].mxu0
    %v4561 = vadd.f32 0.0, %v4560
    %v4562 = vpop.f32.mrb[0].mxu0
    %4563 = vmatprep.mubr.bf16.mxu0 0
    %4564 = vmatmul.mubr.bf16.gmra.mrb[0].mxu0 %v4372
    %v4565 = vpop.f32.mrb[0].mxu0
    %v4566 = vadd.f32 0.0, %v4565
    %v4567 = vpop.f32.mrb[0].mxu0
    %v4568 = vpop.f32.mrb[0].mxu0
    %v4569 = vadd.f32 0.0, %v4568
    %v4570 = vpop.f32.mrb[0].mxu0
    %4571 = vmatprep.mubr.bf16.mxu0 0
    %4572 = vmatmul.mubr.bf16.gmra.mrb[0].mxu0 %v4375
    %v4573 = vpop.f32.mrb[0].mxu0
    %v4574 = vadd.f32 0.0, %v4573
    %v4575 = vpop.f32.mrb[0].mxu0
    %v4576 = vpop.f32.mrb[0].mxu0
    %v4577 = vadd.f32 0.0, %v4576
    %v4578 = vpop.f32.mrb[0].mxu0
    %4579 = vmatprep.mubr.bf16.mxu0 0
    %4580 = vmatmul.mubr.bf16.gmra.mrb[0].mxu0 %v4378
    %v4581 = vpop.f32.mrb[0].mxu0
    %v4582 = vadd.f32 0.0, %v4581
    %v4583 = vpop.f32.mrb[0].mxu0
    %v4584 = vpop.f32.mrb[0].mxu0
    %v4585 = vadd.f32 0.0, %v4584
    %v4586 = vpop.f32.mrb[0].mxu0
    %4587 = vmatprep.mubr.bf16.mxu0 0
    %4588 = vmatmul.mubr.bf16.gmra.mrb[0].mxu0 %v4381
    %v4589 = vpop.f32.mrb[0].mxu0
    %v4590 = vadd.f32 0.0, %v4589
    %v4591 = vpop.f32.mrb[0].mxu0
    %v4592 = vpop.f32.mrb[0].mxu0
    %v4593 = vadd.f32 0.0, %v4592
    %v4594 = vpop.f32.mrb[0].mxu0
    %4595 = vmatprep.mubr.bf16.mxu0 0
    %4596 = vmatmul.mubr.bf16.gmra.mrb[0].mxu0 %v4384
    %v4597 = vpop.f32.mrb[0].mxu0
    %v4598 = vadd.f32 0.0, %v4597
    %v4599 = vpop.f32.mrb[0].mxu0
    %v4600 = vpop.f32.mrb[0].mxu0
    %v4601 = vadd.f32 0.0, %v4600
    %v4602 = vpop.f32.mrb[0].mxu0
    %4603 = vmatprep.mubr.bf16.mxu0 0
    %4604 = vmatmul.mubr.bf16.gmra.mrb[0].mxu0 %v4387
    %v4605 = vpop.f32.mrb[0].mxu0
    %v4606 = vadd.f32 0.0, %v4605
    %v4607 = vpop.f32.mrb[0].mxu0
    %v4608 = vpop.f32.mrb[0].mxu0
    %v4609 = vadd.f32 0.0, %v4608
    %v4610 = vpop.f32.mrb[0].mxu0
    %4611 = vmatprep.mubr.bf16.mxu0 0
    %4612 = vmatmul.mubr.bf16.gmra.mrb[0].mxu0 %v4390
    %v4613 = vpop.f32.mrb[0].mxu0
    %v4614 = vadd.f32 0.0, %v4613
    %v4615 = vpop.f32.mrb[0].mxu0
    %v4616 = vpop.f32.mrb[0].mxu0
    %v4617 = vadd.f32 0.0, %v4616
    %v4618 = vpop.f32.mrb[0].mxu0
    %4619 = vmatprep.mubr.bf16.mxu0 0
    %4620 = vmatmul.mubr.bf16.gmra.mrb[0].mxu0 %v4393
    %v4621 = vpop.f32.mrb[0].mxu0
    %v4622 = vadd.f32 0.0, %v4621
    %v4623 = vpop.f32.mrb[0].mxu0
    %v4624 = vpop.f32.mrb[0].mxu0
    %v4625 = vadd.f32 0.0, %v4624
    %v4626 = vpop.f32.mrb[0].mxu0
    %4627 = vmatprep.mubr.bf16.mxu0 0
    %4628 = vmatmul.mubr.bf16.gmra.mrb[0].mxu0 %v4396
    %v4629 = vpop.f32.mrb[0].mxu0
    %v4630 = vadd.f32 0.0, %v4629
    %v4631 = vpop.f32.mrb[0].mxu0
    %v4632 = vpop.f32.mrb[0].mxu0
    %v4633 = vadd.f32 0.0, %v4632
    %v4634 = vpop.f32.mrb[0].mxu0
    %4635 = vmatprep.mubr.bf16.mxu0 0
    %4636 = vmatmul.mubr.bf16.gmra.mrb[0].mxu0 %v4399
    %v4637 = vpop.f32.mrb[0].mxu0
    %v4638 = vadd.f32 0.0, %v4637
    %v4639 = vpop.f32.mrb[0].mxu0
    %v4640 = vpop.f32.mrb[0].mxu0
    %v4641 = vadd.f32 0.0, %v4640
    %v4642 = vpop.f32.mrb[0].mxu0
    %4643 = vmatprep.mubr.bf16.mxu0 0
    %4644 = vmatmul.mubr.bf16.gmra.mrb[0].mxu0 %v4402
    %v4645 = vpop.f32.mrb[0].mxu0
    %v4646 = vadd.f32 0.0, %v4645
    %v4647 = vpop.f32.mrb[0].mxu0
    %v4648 = vpop.f32.mrb[0].mxu0
    %v4649 = vadd.f32 0.0, %v4648
    %v4650 = vpop.f32.mrb[0].mxu0
    %4651 = vmatprep.mubr.bf16.mxu0 0
    %4652 = vmatmul.mubr.bf16.gmra.mrb[0].mxu0 %v4405
    %v4653 = vpop.f32.mrb[0].mxu0
    %v4654 = vadd.f32 0.0, %v4653
    %v4655 = vpop.f32.mrb[0].mxu0
    %v4656 = vpop.f32.mrb[0].mxu0
    %v4657 = vadd.f32 0.0, %v4656
    %v4658 = vpop.f32.mrb[0].mxu0
    %4659 = vmatprep.mubr.bf16.mxu0 0
    %4660 = vmatmul.mubr.bf16.gmra.mrb[0].mxu0 %v4408
    %v4661 = vpop.f32.mrb[0].mxu0
    %v4662 = vadd.f32 0.0, %v4661
    %v4663 = vpop.f32.mrb[0].mxu0
    %v4664 = vpop.f32.mrb[0].mxu0
    %v4665 = vadd.f32 0.0, %v4664
    %v4666 = vpop.f32.mrb[0].mxu0
    %4667 = vmatprep.mubr.bf16.mxu0 0
    %4668 = vmatmul.mubr.bf16.gmra.mrb[0].mxu0 %v4411
    %v4669 = vpop.f32.mrb[0].mxu0
    %v4670 = vadd.f32 0.0, %v4669
    %v4671 = vpop.f32.mrb[0].mxu0
    %v4672 = vpop.f32.mrb[0].mxu0
    %v4673 = vadd.f32 0.0, %v4672
    %v4674 = vpop.f32.mrb[0].mxu0
    %4675 = vmatprep.mubr.bf16.mxu0 0
    %4676 = vmatmul.mubr.bf16.gmra.mrb[0].mxu0 %v4414
    %v4677 = vpop.f32.mrb[0].mxu0
    %v4678 = vadd.f32 0.0, %v4677
    %v4679 = vpop.f32.mrb[0].mxu0
    %v4680 = vpop.f32.mrb[0].mxu0
    %v4681 = vadd.f32 0.0, %v4680
    %v4682 = vpop.f32.mrb[0].mxu0
    %4683 = vmatprep.mubr.bf16.mxu0 0
    %4684 = vmatmul.mubr.bf16.gmra.mrb[0].mxu0 %v4417
    %v4685 = vpop.f32.mrb[0].mxu0
    %v4686 = vadd.f32 0.0, %v4685
    %v4687 = vpop.f32.mrb[0].mxu0
    %v4688 = vpop.f32.mrb[0].mxu0
    %v4689 = vadd.f32 0.0, %v4688
    %v4690 = vpop.f32.mrb[0].mxu0
    %4691 = vmatprep.mubr.bf16.mxu0 0
    %4692 = vmatmul.mubr.bf16.gmra.mrb[0].mxu0 %v4420
    %v4693 = vpop.f32.mrb[0].mxu0
    %v4694 = vadd.f32 0.0, %v4693
    %v4695 = vpop.f32.mrb[0].mxu0
    %v4696 = vpop.f32.mrb[0].mxu0
    %v4697 = vadd.f32 0.0, %v4696
    %v4698 = vpop.f32.mrb[0].mxu0
    %4699 = vmatprep.mubr.bf16.mxu0 0
    %4700 = vmatmul.mubr.bf16.gmra.mrb[0].mxu0 %v4423
    %v4701 = vpop.f32.mrb[0].mxu0
    %v4702 = vadd.f32 0.0, %v4701
    %v4703 = vpop.f32.mrb[0].mxu0
    %v4704 = vpop.f32.mrb[0].mxu0
    %v4705 = vadd.f32 0.0, %v4704
    %v4706 = vpop.f32.mrb[0].mxu0
    %4707 = vmatprep.mubr.bf16.mxu0 0
    %4708 = vmatmul.mubr.bf16.gmra.mrb[0].mxu0 %v4426
    %v4709 = vpop.f32.mrb[0].mxu0
    %v4710 = vadd.f32 0.0, %v4709
    %v4711 = vpop.f32.mrb[0].mxu0
    %v4712 = vpop.f32.mrb[0].mxu0
    %v4713 = vadd.f32 0.0, %v4712
    %v4714 = vpop.f32.mrb[0].mxu0
    %4715 = vmatprep.mubr.bf16.mxu0 0
    %4716 = vmatmul.mubr.bf16.gmra.mrb[0].mxu0 %v4429
    %v4717 = vpop.f32.mrb[0].mxu0
    %v4718 = vadd.f32 0.0, %v4717
    %v4719 = vpop.f32.mrb[0].mxu0
    %v4720 = vpop.f32.mrb[0].mxu0
    %v4721 = vadd.f32 0.0, %v4720
    %v4722 = vpop.f32.mrb[0].mxu0
    %4723 = vmatprep.mubr.bf16.mxu0 0
    %4724 = vmatmul.mubr.bf16.gmra.mrb[0].mxu0 %v4432
    %v4725 = vpop.f32.mrb[0].mxu0
    %v4726 = vadd.f32 0.0, %v4725
    %v4727 = vpop.f32.mrb[0].mxu0
    %v4728 = vpop.f32.mrb[0].mxu0
    %v4729 = vadd.f32 0.0, %v4728
    %v4730 = vpop.f32.mrb[0].mxu0
    %4731 = vmatprep.mubr.bf16.mxu0 0
    %4732 = vmatmul.mubr.bf16.gmra.mrb[0].mxu0 %v4435
    %v4733 = vpop.f32.mrb[0].mxu0
    %v4734 = vadd.f32 0.0, %v4733
    %v4735 = vpop.f32.mrb[0].mxu0
    %v4736 = vpop.f32.mrb[0].mxu0
    %v4737 = vadd.f32 0.0, %v4736
    %v4738 = vpop.f32.mrb[0].mxu0
    %4739 = vmatprep.mubr.bf16.mxu0 0
    %4740 = vmatmul.mubr.bf16.gmra.mrb[0].mxu0 %v4438
    %v4741 = vpop.f32.mrb[0].mxu0
    %v4742 = vadd.f32 0.0, %v4741
    %v4743 = vpop.f32.mrb[0].mxu0
    %v4744 = vpop.f32.mrb[0].mxu0
    %v4745 = vadd.f32 0.0, %v4744
    %v4746 = vpop.f32.mrb[0].mxu0
    %4747 = vmatprep.mubr.bf16.mxu0 0
    %4748 = vmatmul.mubr.bf16.gmra.mrb[0].mxu0 %v4441
    %v4749 = vpop.f32.mrb[0].mxu0
    %v4750 = vadd.f32 0.0, %v4749
    %v4751 = vpop.f32.mrb[0].mxu0
    %v4752 = vpop.f32.mrb[0].mxu0
    %v4753 = vadd.f32 0.0, %v4752
    %v4754 = vpop.f32.mrb[0].mxu0
    %4755 = vmatprep.mubr.bf16.mxu0 0
    %4756 = vmatmul.mubr.bf16.gmra.mrb[0].mxu0 %v4444
    %v4757 = vpop.f32.mrb[0].mxu0
    %v4758 = vadd.f32 0.0, %v4757
    %v4759 = vpop.f32.mrb[0].mxu0
    %v4760 = vpop.f32.mrb[0].mxu0
    %v4761 = vadd.f32 0.0, %v4760
    %v4762 = vpop.f32.mrb[0].mxu0
    %4763 = vmatprep.mubr.bf16.mxu0 0
    %4764 = vmatmul.mubr.bf16.gmra.mrb[0].mxu0 %v4447
    %v4765 = vpop.f32.mrb[0].mxu0
    %v4766 = vadd.f32 0.0, %v4765
    %v4767 = vpop.f32.mrb[0].mxu0
    %v4768 = vpop.f32.mrb[0].mxu0
    %v4769 = vadd.f32 0.0, %v4768
    %v4770 = vpop.f32.mrb[0].mxu0
    %4771 = vmatprep.mubr.bf16.mxu0 0
    %4772 = vmatmul.mubr.bf16.gmra.mrb[0].mxu0 %v4450
    %v4773 = vpop.f32.mrb[0].mxu0
    %v4774 = vadd.f32 0.0, %v4773
    %v4775 = vpop.f32.mrb[0].mxu0
    %v4776 = vpop.f32.mrb[0].mxu0
    %v4777 = vadd.f32 0.0, %v4776
    %v4778 = vpop.f32.mrb[0].mxu0
    %4779 = vmatprep.mubr.bf16.mxu0 0
    %4780 = vmatmul.mubr.bf16.gmra.mrb[0].mxu0 %v4453
    %v4781 = vpop.f32.mrb[0].mxu0
    %v4782 = vadd.f32 0.0, %v4781
    %v4783 = vpop.f32.mrb[0].mxu0
    %v4784 = vpop.f32.mrb[0].mxu0
    %v4785 = vadd.f32 0.0, %v4784
    %v4786 = vpop.f32.mrb[0].mxu0
    %4787 = vmatprep.mubr.bf16.mxu0 0
    %4788 = vmatmul.mubr.bf16.gmra.mrb[0].mxu0 %v4456
    %v4789 = vpop.f32.mrb[0].mxu0
    %v4790 = vadd.f32 0.0, %v4789
    %v4791 = vpop.f32.mrb[0].mxu0
    %v4792 = vpop.f32.mrb[0].mxu0
    %v4793 = vadd.f32 0.0, %v4792
    %v4794 = vpop.f32.mrb[0].mxu0
    %4795 = vmatprep.mubr.bf16.mxu0 0
    %4796 = vmatmul.mubr.bf16.gmra.mrb[0].mxu0 %v4459
    %v4797 = vpop.f32.mrb[0].mxu0
    %v4798 = vadd.f32 0.0, %v4797
    %v4799 = vpop.f32.mrb[0].mxu0
    %v4800 = vpop.f32.mrb[0].mxu0
    %v4801 = vadd.f32 0.0, %v4800
    %v4802 = vpop.f32.mrb[0].mxu0
    %4803 = vmatprep.mubr.bf16.mxu0 0
    %4804 = vmatmul.mubr.bf16.gmra.mrb[0].mxu0 %v4462
    %v4805 = vpop.f32.mrb[0].mxu0
    %v4806 = vadd.f32 0.0, %v4805
    %v4807 = vpop.f32.mrb[0].mxu0
    %v4808 = vpop.f32.mrb[0].mxu0
    %v4809 = vadd.f32 0.0, %v4808
    %v4810 = vpop.f32.mrb[0].mxu0
    %4811 = vdwg.mxu0
    %v4812 = vadd.f32 %v4150, %v4502
    %v4813 = vadd.f32 %v4151, %v4505
    %v4814 = vadd.f32 %v4152, %v4510
    %v4815 = vadd.f32 %v4153, %v4513
    %v4816 = vadd.f32 %v4154, %v4518
    %v4817 = vadd.f32 %v4155, %v4521
    %v4818 = vadd.f32 %v4156, %v4526
    %v4819 = vadd.f32 %v4157, %v4529
    %v4820 = vadd.f32 %v4158, %v4534
    %v4821 = vadd.f32 %v4159, %v4537
    %v4822 = vadd.f32 %v4160, %v4542
    %v4823 = vadd.f32 %v4161, %v4545
    %v4824 = vadd.f32 %v4162, %v4550
    %v4825 = vadd.f32 %v4163, %v4553
    %v4826 = vadd.f32 %v4164, %v4558
    %v4827 = vadd.f32 %v4165, %v4561
    %v4828 = vadd.f32 %v4166, %v4566
    %v4829 = vadd.f32 %v4167, %v4569
    %v4830 = vadd.f32 %v4168, %v4574
    %v4831 = vadd.f32 %v4169, %v4577
    %v4832 = vadd.f32 %v4170, %v4582
    %v4833 = vadd.f32 %v4171, %v4585
    %v4834 = vadd.f32 %v4172, %v4590
    %v4835 = vadd.f32 %v4173, %v4593
    %v4836 = vadd.f32 %v4174, %v4598
    %v4837 = vadd.f32 %v4175, %v4601
    %v4838 = vadd.f32 %v4176, %v4606
    %v4839 = vadd.f32 %v4177, %v4609
    %v4840 = vadd.f32 %v4178, %v4614
    %v4841 = vadd.f32 %v4179, %v4617
    %v4842 = vadd.f32 %v4180, %v4622
    %v4843 = vadd.f32 %v4181, %v4625
    %v4844 = vadd.f32 %v4182, %v4630
    %v4845 = vadd.f32 %v4183, %v4633
    %v4846 = vadd.f32 %v4184, %v4638
    %v4847 = vadd.f32 %v4185, %v4641
    %v4848 = vadd.f32 %v4186, %v4646
    %v4849 = vadd.f32 %v4187, %v4649
    %v4850 = vadd.f32 %v4188, %v4654
    %v4851 = vadd.f32 %v4189, %v4657
    %v4852 = vadd.f32 %v4190, %v4662
    %v4853 = vadd.f32 %v4191, %v4665
    %v4854 = vadd.f32 %v4192, %v4670
    %v4855 = vadd.f32 %v4193, %v4673
    %v4856 = vadd.f32 %v4194, %v4678
    %v4857 = vadd.f32 %v4195, %v4681
    %v4858 = vadd.f32 %v4196, %v4686
    %v4859 = vadd.f32 %v4197, %v4689
    %v4860 = vadd.f32 %v4198, %v4694
    %v4861 = vadd.f32 %v4199, %v4697
    %v4862 = vadd.f32 %v4200, %v4702
    %v4863 = vadd.f32 %v4201, %v4705
    %v4864 = vadd.f32 %v4202, %v4710
    %v4865 = vadd.f32 %v4203, %v4713
    %v4866 = vadd.f32 %v4204, %v4718
    %v4867 = vadd.f32 %v4205, %v4721
    %v4868 = vadd.f32 %v4206, %v4726
    %v4869 = vadd.f32 %v4207, %v4729
    %v4870 = vadd.f32 %v4208, %v4734
    %v4871 = vadd.f32 %v4209, %v4737
    %v4872 = vadd.f32 %v4210, %v4742
    %v4873 = vadd.f32 %v4211, %v4745
    %v4874 = vadd.f32 %v4212, %v4750
    %v4875 = vadd.f32 %v4213, %v4753
    %v4876 = vadd.f32 %v4214, %v4758
    %v4877 = vadd.f32 %v4215, %v4761
    %v4878 = vadd.f32 %v4216, %v4766
    %v4879 = vadd.f32 %v4217, %v4769
    %v4880 = vadd.f32 %v4218, %v4774
    %v4881 = vadd.f32 %v4219, %v4777
    %v4882 = vadd.f32 %v4220, %v4782
    %v4883 = vadd.f32 %v4221, %v4785
    %v4884 = vadd.f32 %v4222, %v4790
    %v4885 = vadd.f32 %v4223, %v4793
    %v4886 = vadd.f32 %v4224, %v4798
    %v4887 = vadd.f32 %v4225, %v4801
    %v4888 = vadd.f32 %v4226, %v4806
    %v4889 = vadd.f32 %v4227, %v4809
    %4890 = vst.msk [vmem:[#allocation3 + $0x18] sm:$0xff] %vm1527, %v4812
    %4891 = vst.msk [vmem:[#allocation3 + $0x20] sm:$0xff] %vm1527, %v4813
    %4892 = vst.msk [vmem:[#allocation3 + $0x28] sm:$0xff] %vm1527, %v4814
    %4893 = vst.msk [vmem:[#allocation3 + $0x30] sm:$0xff] %vm1527, %v4815
    %4894 = vst.msk [vmem:[#allocation3 + $0x38] sm:$0xff] %vm1527, %v4816
    %4895 = vst.msk [vmem:[#allocation3 + $0x40] sm:$0xff] %vm1527, %v4817
    %4896 = vst.msk [vmem:[#allocation3 + $0x48] sm:$0xff] %vm1527, %v4818
    %4897 = vst.msk [vmem:[#allocation3 + $0x50] sm:$0xff] %vm1527, %v4819
    %4898 = vst.msk [vmem:[#allocation3 + $0x58] sm:$0xff] %vm1527, %v4820
    %4899 = vst.msk [vmem:[#allocation3 + $0x60] sm:$0xff] %vm1527, %v4821
    %4900 = vst.msk [vmem:[#allocation3 + $0x68] sm:$0xff] %vm1527, %v4822
    %4901 = vst.msk [vmem:[#allocation3 + $0x70] sm:$0xff] %vm1527, %v4823
    %4902 = vst.msk [vmem:[#allocation3 + $0x78] sm:$0xff] %vm1527, %v4824
    %4903 = vst.msk [vmem:[#allocation3 + $0x80] sm:$0xff] %vm1527, %v4825
    %4904 = vst.msk [vmem:[#allocation3 + $0x88] sm:$0xff] %vm1527, %v4826
    %4905 = vst.msk [vmem:[#allocation3 + $0x90] sm:$0xff] %vm1527, %v4827
    %4906 = vst.msk [vmem:[#allocation3 + $0x98] sm:$0xff] %vm1527, %v4828
    %4907 = vst.msk [vmem:[#allocation3 + $0xa0] sm:$0xff] %vm1527, %v4829
    %4908 = vst.msk [vmem:[#allocation3 + $0xa8] sm:$0xff] %vm1527, %v4830
    %4909 = vst.msk [vmem:[#allocation3 + $0xb0] sm:$0xff] %vm1527, %v4831
    %4910 = vst.msk [vmem:[#allocation3 + $0xb8] sm:$0xff] %vm1527, %v4832
    %4911 = vst.msk [vmem:[#allocation3 + $0xc0] sm:$0xff] %vm1527, %v4833
    %4912 = vst.msk [vmem:[#allocation3 + $0xc8] sm:$0xff] %vm1527, %v4834
    %4913 = vst.msk [vmem:[#allocation3 + $0xd0] sm:$0xff] %vm1527, %v4835
    %4914 = vst.msk [vmem:[#allocation3 + $0xd8] sm:$0xff] %vm1527, %v4836
    %4915 = vst.msk [vmem:[#allocation3 + $0xe0] sm:$0xff] %vm1527, %v4837
    %4916 = vst.msk [vmem:[#allocation3 + $0xe8] sm:$0xff] %vm1527, %v4838
    %4917 = vst.msk [vmem:[#allocation3 + $0xf0] sm:$0xff] %vm1527, %v4839
    %4918 = vst.msk [vmem:[#allocation3 + $0xf8] sm:$0xff] %vm1527, %v4840
    %4919 = vst.msk [vmem:[#allocation3 + $0x100] sm:$0xff] %vm1527, %v4841
    %4920 = vst.msk [vmem:[#allocation3 + $0x108] sm:$0xff] %vm1527, %v4842
    %4921 = vst.msk [vmem:[#allocation3 + $0x110] sm:$0xff] %vm1527, %v4843
    %4922 = vst.msk [vmem:[#allocation3 + $0x118] sm:$0xff] %vm1527, %v4844
    %4923 = vst.msk [vmem:[#allocation3 + $0x120] sm:$0xff] %vm1527, %v4845
    %4924 = vst.msk [vmem:[#allocation3 + $0x128] sm:$0xff] %vm1527, %v4846
    %4925 = vst.msk [vmem:[#allocation3 + $0x130] sm:$0xff] %vm1527, %v4847
    %4926 = vst.msk [vmem:[#allocation3 + $0x138] sm:$0xff] %vm1527, %v4848
    %4927 = vst.msk [vmem:[#allocation3 + $0x140] sm:$0xff] %vm1527, %v4849
    %4928 = vst.msk [vmem:[#allocation3 + $0x148] sm:$0xff] %vm1527, %v4850
    %4929 = vst.msk [vmem:[#allocation3 + $0x150] sm:$0xff] %vm1527, %v4851
    %4930 = vst.msk [vmem:[#allocation3 + $0x158] sm:$0xff] %vm1527, %v4852
    %4931 = vst.msk [vmem:[#allocation3 + $0x160] sm:$0xff] %vm1527, %v4853
    %4932 = vst.msk [vmem:[#allocation3 + $0x168] sm:$0xff] %vm1527, %v4854
    %4933 = vst.msk [vmem:[#allocation3 + $0x170] sm:$0xff] %vm1527, %v4855
    %4934 = vst.msk [vmem:[#allocation3 + $0x178] sm:$0xff] %vm1527, %v4856
    %4935 = vst.msk [vmem:[#allocation3 + $0x180] sm:$0xff] %vm1527, %v4857
    %4936 = vst.msk [vmem:[#allocation3 + $0x188] sm:$0xff] %vm1527, %v4858
    %4937 = vst.msk [vmem:[#allocation3 + $0x190] sm:$0xff] %vm1527, %v4859
    %4938 = vst.msk [vmem:[#allocation3 + $0x198] sm:$0xff] %vm1527, %v4860
    %4939 = vst.msk [vmem:[#allocation3 + $0x1a0] sm:$0xff] %vm1527, %v4861
    %4940 = vst.msk [vmem:[#allocation3 + $0x1a8] sm:$0xff] %vm1527, %v4862
    %4941 = vst.msk [vmem:[#allocation3 + $0x1b0] sm:$0xff] %vm1527, %v4863
    %4942 = vst.msk [vmem:[#allocation3 + $0x1b8] sm:$0xff] %vm1527, %v4864
    %4943 = vst.msk [vmem:[#allocation3 + $0x1c0] sm:$0xff] %vm1527, %v4865
    %4944 = vst.msk [vmem:[#allocation3 + $0x1c8] sm:$0xff] %vm1527, %v4866
    %4945 = vst.msk [vmem:[#allocation3 + $0x1d0] sm:$0xff] %vm1527, %v4867
    %4946 = vst.msk [vmem:[#allocation3 + $0x1d8] sm:$0xff] %vm1527, %v4868
    %4947 = vst.msk [vmem:[#allocation3 + $0x1e0] sm:$0xff] %vm1527, %v4869
    %4948 = vst.msk [vmem:[#allocation3 + $0x1e8] sm:$0xff] %vm1527, %v4870
    %4949 = vst.msk [vmem:[#allocation3 + $0x1f0] sm:$0xff] %vm1527, %v4871
    %4950 = vst.msk [vmem:[#allocation3 + $0x1f8] sm:$0xff] %vm1527, %v4872
    %4951 = vst.msk [vmem:[#allocation3 + $0x200] sm:$0xff] %vm1527, %v4873
    %4952 = vst.msk [vmem:[#allocation3 + $0x208] sm:$0xff] %vm1527, %v4874
    %4953 = vst.msk [vmem:[#allocation3 + $0x210] sm:$0xff] %vm1527, %v4875
    %4954 = vst.msk [vmem:[#allocation3 + $0x218] sm:$0xff] %vm1527, %v4876
    %4955 = vst.msk [vmem:[#allocation3 + $0x220] sm:$0xff] %vm1527, %v4877
    %4956 = vst.msk [vmem:[#allocation3 + $0x228] sm:$0xff] %vm1527, %v4878
    %4957 = vst.msk [vmem:[#allocation3 + $0x230] sm:$0xff] %vm1527, %v4879
    %4958 = vst.msk [vmem:[#allocation3 + $0x238] sm:$0xff] %vm1527, %v4880
    %4959 = vst.msk [vmem:[#allocation3 + $0x240] sm:$0xff] %vm1527, %v4881
    %4960 = vst.msk [vmem:[#allocation3 + $0x248] sm:$0xff] %vm1527, %v4882
    %4961 = vst.msk [vmem:[#allocation3 + $0x250] sm:$0xff] %vm1527, %v4883
    %4962 = vst.msk [vmem:[#allocation3 + $0x258] sm:$0xff] %vm1527, %v4884
    %4963 = vst.msk [vmem:[#allocation3 + $0x260] sm:$0xff] %vm1527, %v4885
    %4964 = vst.msk [vmem:[#allocation3 + $0x268] sm:$0xff] %vm1527, %v4886
    %4965 = vst.msk [vmem:[#allocation3 + $0x270] sm:$0xff] %vm1527, %v4887
    %4966 = vst.msk [vmem:[#allocation3 + $0x278] sm:$0xff] %vm1527, %v4888
    %4967 = vst.msk [vmem:[#allocation3 + $0x280] sm:$0xff] %vm1527, %v4889
    %v4968 = vld [vmem:[#allocation3 + $0x18] sm:$0xff]
    %v4969 = vld [vmem:[#allocation3 + $0x20] sm:$0xff]
    %v4970 = vld [vmem:[#allocation3 + $0x28] sm:$0xff]
    %v4971 = vld [vmem:[#allocation3 + $0x30] sm:$0xff]
    %v4972 = vld [vmem:[#allocation3 + $0x38] sm:$0xff]
    %v4973 = vld [vmem:[#allocation3 + $0x40] sm:$0xff]
    %v4974 = vld [vmem:[#allocation3 + $0x48] sm:$0xff]
    %v4975 = vld [vmem:[#allocation3 + $0x50] sm:$0xff]
    %v4976 = vld [vmem:[#allocation3 + $0x58] sm:$0xff]
    %v4977 = vld [vmem:[#allocation3 + $0x60] sm:$0xff]
    %v4978 = vld [vmem:[#allocation3 + $0x68] sm:$0xff]
    %v4979 = vld [vmem:[#allocation3 + $0x70] sm:$0xff]
    %v4980 = vld [vmem:[#allocation3 + $0x78] sm:$0xff]
    %v4981 = vld [vmem:[#allocation3 + $0x80] sm:$0xff]
    %v4982 = vld [vmem:[#allocation3 + $0x88] sm:$0xff]
    %v4983 = vld [vmem:[#allocation3 + $0x90] sm:$0xff]
    %v4984 = vld [vmem:[#allocation3 + $0x98] sm:$0xff]
    %v4985 = vld [vmem:[#allocation3 + $0xa0] sm:$0xff]
    %v4986 = vld [vmem:[#allocation3 + $0xa8] sm:$0xff]
    %v4987 = vld [vmem:[#allocation3 + $0xb0] sm:$0xff]
    %v4988 = vld [vmem:[#allocation3 + $0xb8] sm:$0xff]
    %v4989 = vld [vmem:[#allocation3 + $0xc0] sm:$0xff]
    %v4990 = vld [vmem:[#allocation3 + $0xc8] sm:$0xff]
    %v4991 = vld [vmem:[#allocation3 + $0xd0] sm:$0xff]
    %v4992 = vld [vmem:[#allocation3 + $0xd8] sm:$0xff]
    %v4993 = vld [vmem:[#allocation3 + $0xe0] sm:$0xff]
    %v4994 = vld [vmem:[#allocation3 + $0xe8] sm:$0xff]
    %v4995 = vld [vmem:[#allocation3 + $0xf0] sm:$0xff]
    %v4996 = vld [vmem:[#allocation3 + $0xf8] sm:$0xff]
    %v4997 = vld [vmem:[#allocation3 + $0x100] sm:$0xff]
    %v4998 = vld [vmem:[#allocation3 + $0x108] sm:$0xff]
    %v4999 = vld [vmem:[#allocation3 + $0x110] sm:$0xff]
    %v5000 = vld [vmem:[#allocation3 + $0x118] sm:$0xff]
    %v5001 = vld [vmem:[#allocation3 + $0x120] sm:$0xff]
    %v5002 = vld [vmem:[#allocation3 + $0x128] sm:$0xff]
    %v5003 = vld [vmem:[#allocation3 + $0x130] sm:$0xff]
    %v5004 = vld [vmem:[#allocation3 + $0x138] sm:$0xff]
    %v5005 = vld [vmem:[#allocation3 + $0x140] sm:$0xff]
    %v5006 = vld [vmem:[#allocation3 + $0x148] sm:$0xff]
    %v5007 = vld [vmem:[#allocation3 + $0x150] sm:$0xff]
    %v5008 = vld [vmem:[#allocation3 + $0x158] sm:$0xff]
    %v5009 = vld [vmem:[#allocation3 + $0x160] sm:$0xff]
    %v5010 = vld [vmem:[#allocation3 + $0x168] sm:$0xff]
    %v5011 = vld [vmem:[#allocation3 + $0x170] sm:$0xff]
    %v5012 = vld [vmem:[#allocation3 + $0x178] sm:$0xff]
    %v5013 = vld [vmem:[#allocation3 + $0x180] sm:$0xff]
    %v5014 = vld [vmem:[#allocation3 + $0x188] sm:$0xff]
    %v5015 = vld [vmem:[#allocation3 + $0x190] sm:$0xff]
    %v5016 = vld [vmem:[#allocation3 + $0x198] sm:$0xff]
    %v5017 = vld [vmem:[#allocation3 + $0x1a0] sm:$0xff]
    %v5018 = vld [vmem:[#allocation3 + $0x1a8] sm:$0xff]
    %v5019 = vld [vmem:[#allocation3 + $0x1b0] sm:$0xff]
    %v5020 = vld [vmem:[#allocation3 + $0x1b8] sm:$0xff]
    %v5021 = vld [vmem:[#allocation3 + $0x1c0] sm:$0xff]
    %v5022 = vld [vmem:[#allocation3 + $0x1c8] sm:$0xff]
    %v5023 = vld [vmem:[#allocation3 + $0x1d0] sm:$0xff]
    %v5024 = vld [vmem:[#allocation3 + $0x1d8] sm:$0xff]
    %v5025 = vld [vmem:[#allocation3 + $0x1e0] sm:$0xff]
    %v5026 = vld [vmem:[#allocation3 + $0x1e8] sm:$0xff]
    %v5027 = vld [vmem:[#allocation3 + $0x1f0] sm:$0xff]
    %v5028 = vld [vmem:[#allocation3 + $0x1f8] sm:$0xff]
    %v5029 = vld [vmem:[#allocation3 + $0x200] sm:$0xff]
    %v5030 = vld [vmem:[#allocation3 + $0x208] sm:$0xff]
    %v5031 = vld [vmem:[#allocation3 + $0x210] sm:$0xff]
    %v5032 = vld [vmem:[#allocation3 + $0x218] sm:$0xff]
    %v5033 = vld [vmem:[#allocation3 + $0x220] sm:$0xff]
    %v5034 = vld [vmem:[#allocation3 + $0x228] sm:$0xff]
    %v5035 = vld [vmem:[#allocation3 + $0x230] sm:$0xff]
    %v5036 = vld [vmem:[#allocation3 + $0x238] sm:$0xff]
    %v5037 = vld [vmem:[#allocation3 + $0x240] sm:$0xff]
    %v5038 = vld [vmem:[#allocation3 + $0x248] sm:$0xff]
    %v5039 = vld [vmem:[#allocation3 + $0x250] sm:$0xff]
    %v5040 = vld [vmem:[#allocation3 + $0x258] sm:$0xff]
    %v5041 = vld [vmem:[#allocation3 + $0x260] sm:$0xff]
    %v5042 = vld [vmem:[#allocation3 + $0x268] sm:$0xff]
    %v5043 = vld [vmem:[#allocation3 + $0x270] sm:$0xff]
    %v5044 = vld [vmem:[#allocation3 + $0x278] sm:$0xff]
    %v5045 = vld [vmem:[#allocation3 + $0x280] sm:$0xff]
    %v5046 = vld [vmem:[#allocation2 + $0x18] sm:$0xff]
    %v5047 = vld [vmem:[#allocation2 + $0x20] sm:$0xff]
    %v5048 = vld [vmem:[#allocation2 + $0x28] sm:$0xff]
    %v5049 = vld [vmem:[#allocation2 + $0x30] sm:$0xff]
    %v5050 = vld [vmem:[#allocation2 + $0x38] sm:$0xff]
    %v5051 = vld [vmem:[#allocation2 + $0x40] sm:$0xff]
    %v5052 = vld [vmem:[#allocation2 + $0x48] sm:$0xff]
    %v5053 = vld [vmem:[#allocation2 + $0x50] sm:$0xff]
    %v5054 = vld [vmem:[#allocation2 + $0x58] sm:$0xff]
    %v5055 = vld [vmem:[#allocation2 + $0x60] sm:$0xff]
    %v5056 = vld [vmem:[#allocation2 + $0x68] sm:$0xff]
    %v5057 = vld [vmem:[#allocation2 + $0x70] sm:$0xff]
    %v5058 = vld [vmem:[#allocation2 + $0x78] sm:$0xff]
    %v5059 = vld [vmem:[#allocation2 + $0x80] sm:$0xff]
    %v5060 = vld [vmem:[#allocation2 + $0x88] sm:$0xff]
    %v5061 = vld [vmem:[#allocation2 + $0x90] sm:$0xff]
    %v5062 = vld [vmem:[#allocation2 + $0x98] sm:$0xff]
    %v5063 = vld [vmem:[#allocation2 + $0xa0] sm:$0xff]
    %v5064 = vld [vmem:[#allocation2 + $0xa8] sm:$0xff]
    %v5065 = vld [vmem:[#allocation2 + $0xb0] sm:$0xff]
    %v5066 = vld [vmem:[#allocation2 + $0xb8] sm:$0xff]
    %v5067 = vld [vmem:[#allocation2 + $0xc0] sm:$0xff]
    %v5068 = vld [vmem:[#allocation2 + $0xc8] sm:$0xff]
    %v5069 = vld [vmem:[#allocation2 + $0xd0] sm:$0xff]
    %v5070 = vld [vmem:[#allocation2 + $0xd8] sm:$0xff]
    %v5071 = vld [vmem:[#allocation2 + $0xe0] sm:$0xff]
    %v5072 = vld [vmem:[#allocation2 + $0xe8] sm:$0xff]
    %v5073 = vld [vmem:[#allocation2 + $0xf0] sm:$0xff]
    %v5074 = vld [vmem:[#allocation2 + $0xf8] sm:$0xff]
    %v5075 = vld [vmem:[#allocation2 + $0x100] sm:$0xff]
    %v5076 = vld [vmem:[#allocation2 + $0x108] sm:$0xff]
    %v5077 = vld [vmem:[#allocation2 + $0x110] sm:$0xff]
    %v5078 = vld [vmem:[#allocation2 + $0x118] sm:$0xff]
    %v5079 = vld [vmem:[#allocation2 + $0x120] sm:$0xff]
    %v5080 = vld [vmem:[#allocation2 + $0x128] sm:$0xff]
    %v5081 = vld [vmem:[#allocation2 + $0x130] sm:$0xff]
    %v5082 = vld [vmem:[#allocation2 + $0x138] sm:$0xff]
    %v5083 = vld [vmem:[#allocation2 + $0x140] sm:$0xff]
    %v5084 = vld [vmem:[#allocation2 + $0x148] sm:$0xff]
    %v5085 = vld [vmem:[#allocation2 + $0x150] sm:$0xff]
    %v5086 = vld [vmem:[#allocation2 + $0x158] sm:$0xff]
    %v5087 = vld [vmem:[#allocation2 + $0x160] sm:$0xff]
    %v5088 = vld [vmem:[#allocation2 + $0x168] sm:$0xff]
    %v5089 = vld [vmem:[#allocation2 + $0x170] sm:$0xff]
    %v5090 = vld [vmem:[#allocation2 + $0x178] sm:$0xff]
    %v5091 = vld [vmem:[#allocation2 + $0x180] sm:$0xff]
    %v5092 = vld [vmem:[#allocation2 + $0x188] sm:$0xff]
    %v5093 = vld [vmem:[#allocation2 + $0x190] sm:$0xff]
    %v5094 = vld [vmem:[#allocation2 + $0x198] sm:$0xff]
    %v5095 = vld [vmem:[#allocation2 + $0x1a0] sm:$0xff]
    %v5096 = vld [vmem:[#allocation2 + $0x1a8] sm:$0xff]
    %v5097 = vld [vmem:[#allocation2 + $0x1b0] sm:$0xff]
    %v5098 = vld [vmem:[#allocation2 + $0x1b8] sm:$0xff]
    %v5099 = vld [vmem:[#allocation2 + $0x1c0] sm:$0xff]
    %v5100 = vld [vmem:[#allocation2 + $0x1c8] sm:$0xff]
    %v5101 = vld [vmem:[#allocation2 + $0x1d0] sm:$0xff]
    %v5102 = vld [vmem:[#allocation2 + $0x1d8] sm:$0xff]
    %v5103 = vld [vmem:[#allocation2 + $0x1e0] sm:$0xff]
    %v5104 = vld [vmem:[#allocation2 + $0x1e8] sm:$0xff]
    %v5105 = vld [vmem:[#allocation2 + $0x1f0] sm:$0xff]
    %v5106 = vld [vmem:[#allocation2 + $0x1f8] sm:$0xff]
    %v5107 = vld [vmem:[#allocation2 + $0x200] sm:$0xff]
    %v5108 = vld [vmem:[#allocation2 + $0x208] sm:$0xff]
    %v5109 = vld [vmem:[#allocation2 + $0x210] sm:$0xff]
    %v5110 = vld [vmem:[#allocation2 + $0x218] sm:$0xff]
    %v5111 = vld [vmem:[#allocation2 + $0x220] sm:$0xff]
    %v5112 = vld [vmem:[#allocation2 + $0x228] sm:$0xff]
    %v5113 = vld [vmem:[#allocation2 + $0x230] sm:$0xff]
    %v5114 = vld [vmem:[#allocation2 + $0x238] sm:$0xff]
    %v5115 = vld [vmem:[#allocation2 + $0x240] sm:$0xff]
    %v5116 = vld [vmem:[#allocation2 + $0x248] sm:$0xff]
    %v5117 = vld [vmem:[#allocation2 + $0x250] sm:$0xff]
    %v5118 = vld [vmem:[#allocation2 + $0x258] sm:$0xff]
    %v5119 = vld [vmem:[#allocation2 + $0x260] sm:$0xff]
    %v5120 = vld [vmem:[#allocation2 + $0x268] sm:$0xff]
    %v5121 = vld [vmem:[#allocation2 + $0x270] sm:$0xff]
    %v5122 = vld [vmem:[#allocation2 + $0x278] sm:$0xff]
    %v5123 = vld [vmem:[#allocation2 + $0x280] sm:$0xff]
    %v5124 = vpack.c.bf16 %v5047, %v5046
    %v5125 = vpack.c.bf16 %v5049, %v5048
    %v5126 = vpack.c.bf16 %v5051, %v5050
    %v5127 = vpack.c.bf16 %v5053, %v5052
    %v5128 = vpack.c.bf16 %v5055, %v5054
    %v5129 = vpack.c.bf16 %v5057, %v5056
    %v5130 = vpack.c.bf16 %v5059, %v5058
    %v5131 = vpack.c.bf16 %v5061, %v5060
    %v5132 = vpack.c.bf16 %v5063, %v5062
    %v5133 = vpack.c.bf16 %v5065, %v5064
    %v5134 = vpack.c.bf16 %v5067, %v5066
    %v5135 = vpack.c.bf16 %v5069, %v5068
    %v5136 = vpack.c.bf16 %v5071, %v5070
    %v5137 = vpack.c.bf16 %v5073, %v5072
    %v5138 = vpack.c.bf16 %v5075, %v5074
    %v5139 = vpack.c.bf16 %v5077, %v5076
    %v5140 = vpack.c.bf16 %v5079, %v5078
    %v5141 = vpack.c.bf16 %v5081, %v5080
    %v5142 = vpack.c.bf16 %v5083, %v5082
    %v5143 = vpack.c.bf16 %v5085, %v5084
    %v5144 = vpack.c.bf16 %v5087, %v5086
    %v5145 = vpack.c.bf16 %v5089, %v5088
    %v5146 = vpack.c.bf16 %v5091, %v5090
    %v5147 = vpack.c.bf16 %v5093, %v5092
    %v5148 = vpack.c.bf16 %v5095, %v5094
    %v5149 = vpack.c.bf16 %v5097, %v5096
    %v5150 = vpack.c.bf16 %v5099, %v5098
    %v5151 = vpack.c.bf16 %v5101, %v5100
    %v5152 = vpack.c.bf16 %v5103, %v5102
    %v5153 = vpack.c.bf16 %v5105, %v5104
    %v5154 = vpack.c.bf16 %v5107, %v5106
    %v5155 = vpack.c.bf16 %v5109, %v5108
    %v5156 = vpack.c.bf16 %v5111, %v5110
    %v5157 = vpack.c.bf16 %v5113, %v5112
    %v5158 = vpack.c.bf16 %v5115, %v5114
    %v5159 = vpack.c.bf16 %v5117, %v5116
    %v5160 = vpack.c.bf16 %v5119, %v5118
    %v5161 = vpack.c.bf16 %v5121, %v5120
    %v5162 = vpack.c.bf16 %v5123, %v5122
    %s5163 = scalar_lea.vmem %s4, 16
    %v5164 = vld [vmem:[%s5163] sm:$0xf]
    %v5166 = vsel %vm1527, %v5124, 0
    %v5169 = vsel %vm1527, %v5125, 0
    %v5172 = vsel %vm1527, %v5126, 0
    %v5175 = vsel %vm1527, %v5127, 0
    %v5178 = vsel %vm1527, %v5128, 0
    %v5181 = vsel %vm1527, %v5129, 0
    %v5184 = vsel %vm1527, %v5130, 0
    %v5187 = vsel %vm1527, %v5131, 0
    %v5190 = vsel %vm1527, %v5132, 0
    %v5193 = vsel %vm1527, %v5133, 0
    %v5196 = vsel %vm1527, %v5134, 0
    %v5199 = vsel %vm1527, %v5135, 0
    %v5202 = vsel %vm1527, %v5136, 0
    %v5205 = vsel %vm1527, %v5137, 0
    %v5208 = vsel %vm1527, %v5138, 0
    %v5211 = vsel %vm1527, %v5139, 0
    %v5214 = vsel %vm1527, %v5140, 0
    %v5217 = vsel %vm1527, %v5141, 0
    %v5220 = vsel %vm1527, %v5142, 0
    %v5223 = vsel %vm1527, %v5143, 0
    %v5226 = vsel %vm1527, %v5144, 0
    %v5229 = vsel %vm1527, %v5145, 0
    %v5232 = vsel %vm1527, %v5146, 0
    %v5235 = vsel %vm1527, %v5147, 0
    %v5238 = vsel %vm1527, %v5148, 0
    %v5241 = vsel %vm1527, %v5149, 0
    %v5244 = vsel %vm1527, %v5150, 0
    %v5247 = vsel %vm1527, %v5151, 0
    %v5250 = vsel %vm1527, %v5152, 0
    %v5253 = vsel %vm1527, %v5153, 0
    %v5256 = vsel %vm1527, %v5154, 0
    %v5259 = vsel %vm1527, %v5155, 0
    %v5262 = vsel %vm1527, %v5156, 0
    %v5265 = vsel %vm1527, %v5157, 0
    %v5268 = vsel %vm1527, %v5158, 0
    %v5271 = vsel %vm1527, %v5159, 0
    %v5274 = vsel %vm1527, %v5160, 0
    %v5277 = vsel %vm1527, %v5161, 0
    %v5280 = vsel %vm1527, %v5162, 0
    %v5283 = vsel %vm2009, %v5164, 0
    %5285 = vmatprep.subr.bf16.mxu0 0
    %5286 = vmatpush1.bf16.msra.mxu0 %v5283
    %5287 = vmatprep.subr.bf16.mxu0 0
    %5288 = vmatpush1.bf16.msra.mxu0 0
    %5289 = vmatprep.subr.bf16.mxu0 0
    %5290 = vmatpush1.bf16.msra.mxu0 0
    %5291 = vmatprep.subr.bf16.mxu0 0
    %5292 = vmatpush1.bf16.msra.mxu0 0
    %5293 = vmatprep.subr.bf16.mxu0 0
    %5294 = vmatpush1.bf16.msra.mxu0 0
    %5295 = vmatprep.subr.bf16.mxu0 0
    %5296 = vmatpush1.bf16.msra.mxu0 0
    %5297 = vmatprep.subr.bf16.mxu0 0
    %5298 = vmatpush1.bf16.msra.mxu0 0
    %5299 = vmatprep.subr.bf16.mxu0 0
    %5300 = vmatpush1.bf16.msra.mxu0 0
    %5301 = vmatprep.subr.bf16.mxu0 0
    %5302 = vmatpush1.bf16.msra.mxu0 0
    %5303 = vmatprep.subr.bf16.mxu0 0
    %5304 = vmatpush1.bf16.msra.mxu0 0
    %5305 = vmatprep.subr.bf16.mxu0 0
    %5306 = vmatpush1.bf16.msra.mxu0 0
    %5307 = vmatprep.subr.bf16.mxu0 0
    %5308 = vmatpush1.bf16.msra.mxu0 0
    %5309 = vmatprep.subr.bf16.mxu0 0
    %5310 = vmatpush1.bf16.msra.mxu0 0
    %5311 = vmatprep.subr.bf16.mxu0 0
    %5312 = vmatpush1.bf16.msra.mxu0 0
    %5313 = vmatprep.subr.bf16.mxu0 0
    %5314 = vmatpush1.bf16.msra.mxu0 0
    %5315 = vmatprep.subr.bf16.mxu0 0
    %5316 = vmatpush1.bf16.msra.mxu0 0
    %5317 = vmatprep.mubr.bf16.mxu0 0
    %5318 = vmatmul.mubr.bf16.gmra.mrb[0].mxu0 %v5166
    %v5319 = vpop.f32.mrb[0].mxu0
    %v5320 = vadd.f32 0.0, %v5319
    %v5321 = vpop.f32.mrb[0].mxu0
    %v5322 = vpop.f32.mrb[0].mxu0
    %v5323 = vadd.f32 0.0, %v5322
    %v5324 = vpop.f32.mrb[0].mxu0
    %5325 = vmatprep.mubr.bf16.mxu0 0
    %5326 = vmatmul.mubr.bf16.gmra.mrb[0].mxu0 %v5169
    %v5327 = vpop.f32.mrb[0].mxu0
    %v5328 = vadd.f32 0.0, %v5327
    %v5329 = vpop.f32.mrb[0].mxu0
    %v5330 = vpop.f32.mrb[0].mxu0
    %v5331 = vadd.f32 0.0, %v5330
    %v5332 = vpop.f32.mrb[0].mxu0
    %5333 = vmatprep.mubr.bf16.mxu0 0
    %5334 = vmatmul.mubr.bf16.gmra.mrb[0].mxu0 %v5172
    %v5335 = vpop.f32.mrb[0].mxu0
    %v5336 = vadd.f32 0.0, %v5335
    %v5337 = vpop.f32.mrb[0].mxu0
    %v5338 = vpop.f32.mrb[0].mxu0
    %v5339 = vadd.f32 0.0, %v5338
    %v5340 = vpop.f32.mrb[0].mxu0
    %5341 = vmatprep.mubr.bf16.mxu0 0
    %5342 = vmatmul.mubr.bf16.gmra.mrb[0].mxu0 %v5175
    %v5343 = vpop.f32.mrb[0].mxu0
    %v5344 = vadd.f32 0.0, %v5343
    %v5345 = vpop.f32.mrb[0].mxu0
    %v5346 = vpop.f32.mrb[0].mxu0
    %v5347 = vadd.f32 0.0, %v5346
    %v5348 = vpop.f32.mrb[0].mxu0
    %5349 = vmatprep.mubr.bf16.mxu0 0
    %5350 = vmatmul.mubr.bf16.gmra.mrb[0].mxu0 %v5178
    %v5351 = vpop.f32.mrb[0].mxu0
    %v5352 = vadd.f32 0.0, %v5351
    %v5353 = vpop.f32.mrb[0].mxu0
    %v5354 = vpop.f32.mrb[0].mxu0
    %v5355 = vadd.f32 0.0, %v5354
    %v5356 = vpop.f32.mrb[0].mxu0
    %5357 = vmatprep.mubr.bf16.mxu0 0
    %5358 = vmatmul.mubr.bf16.gmra.mrb[0].mxu0 %v5181
    %v5359 = vpop.f32.mrb[0].mxu0
    %v5360 = vadd.f32 0.0, %v5359
    %v5361 = vpop.f32.mrb[0].mxu0
    %v5362 = vpop.f32.mrb[0].mxu0
    %v5363 = vadd.f32 0.0, %v5362
    %v5364 = vpop.f32.mrb[0].mxu0
    %5365 = vmatprep.mubr.bf16.mxu0 0
    %5366 = vmatmul.mubr.bf16.gmra.mrb[0].mxu0 %v5184
    %v5367 = vpop.f32.mrb[0].mxu0
    %v5368 = vadd.f32 0.0, %v5367
    %v5369 = vpop.f32.mrb[0].mxu0
    %v5370 = vpop.f32.mrb[0].mxu0
    %v5371 = vadd.f32 0.0, %v5370
    %v5372 = vpop.f32.mrb[0].mxu0
    %5373 = vmatprep.mubr.bf16.mxu0 0
    %5374 = vmatmul.mubr.bf16.gmra.mrb[0].mxu0 %v5187
    %v5375 = vpop.f32.mrb[0].mxu0
    %v5376 = vadd.f32 0.0, %v5375
    %v5377 = vpop.f32.mrb[0].mxu0
    %v5378 = vpop.f32.mrb[0].mxu0
    %v5379 = vadd.f32 0.0, %v5378
    %v5380 = vpop.f32.mrb[0].mxu0
    %5381 = vmatprep.mubr.bf16.mxu0 0
    %5382 = vmatmul.mubr.bf16.gmra.mrb[0].mxu0 %v5190
    %v5383 = vpop.f32.mrb[0].mxu0
    %v5384 = vadd.f32 0.0, %v5383
    %v5385 = vpop.f32.mrb[0].mxu0
    %v5386 = vpop.f32.mrb[0].mxu0
    %v5387 = vadd.f32 0.0, %v5386
    %v5388 = vpop.f32.mrb[0].mxu0
    %5389 = vmatprep.mubr.bf16.mxu0 0
    %5390 = vmatmul.mubr.bf16.gmra.mrb[0].mxu0 %v5193
    %v5391 = vpop.f32.mrb[0].mxu0
    %v5392 = vadd.f32 0.0, %v5391
    %v5393 = vpop.f32.mrb[0].mxu0
    %v5394 = vpop.f32.mrb[0].mxu0
    %v5395 = vadd.f32 0.0, %v5394
    %v5396 = vpop.f32.mrb[0].mxu0
    %5397 = vmatprep.mubr.bf16.mxu0 0
    %5398 = vmatmul.mubr.bf16.gmra.mrb[0].mxu0 %v5196
    %v5399 = vpop.f32.mrb[0].mxu0
    %v5400 = vadd.f32 0.0, %v5399
    %v5401 = vpop.f32.mrb[0].mxu0
    %v5402 = vpop.f32.mrb[0].mxu0
    %v5403 = vadd.f32 0.0, %v5402
    %v5404 = vpop.f32.mrb[0].mxu0
    %5405 = vmatprep.mubr.bf16.mxu0 0
    %5406 = vmatmul.mubr.bf16.gmra.mrb[0].mxu0 %v5199
    %v5407 = vpop.f32.mrb[0].mxu0
    %v5408 = vadd.f32 0.0, %v5407
    %v5409 = vpop.f32.mrb[0].mxu0
    %v5410 = vpop.f32.mrb[0].mxu0
    %v5411 = vadd.f32 0.0, %v5410
    %v5412 = vpop.f32.mrb[0].mxu0
    %5413 = vmatprep.mubr.bf16.mxu0 0
    %5414 = vmatmul.mubr.bf16.gmra.mrb[0].mxu0 %v5202
    %v5415 = vpop.f32.mrb[0].mxu0
    %v5416 = vadd.f32 0.0, %v5415
    %v5417 = vpop.f32.mrb[0].mxu0
    %v5418 = vpop.f32.mrb[0].mxu0
    %v5419 = vadd.f32 0.0, %v5418
    %v5420 = vpop.f32.mrb[0].mxu0
    %5421 = vmatprep.mubr.bf16.mxu0 0
    %5422 = vmatmul.mubr.bf16.gmra.mrb[0].mxu0 %v5205
    %v5423 = vpop.f32.mrb[0].mxu0
    %v5424 = vadd.f32 0.0, %v5423
    %v5425 = vpop.f32.mrb[0].mxu0
    %v5426 = vpop.f32.mrb[0].mxu0
    %v5427 = vadd.f32 0.0, %v5426
    %v5428 = vpop.f32.mrb[0].mxu0
    %5429 = vmatprep.mubr.bf16.mxu0 0
    %5430 = vmatmul.mubr.bf16.gmra.mrb[0].mxu0 %v5208
    %v5431 = vpop.f32.mrb[0].mxu0
    %v5432 = vadd.f32 0.0, %v5431
    %v5433 = vpop.f32.mrb[0].mxu0
    %v5434 = vpop.f32.mrb[0].mxu0
    %v5435 = vadd.f32 0.0, %v5434
    %v5436 = vpop.f32.mrb[0].mxu0
    %5437 = vmatprep.mubr.bf16.mxu0 0
    %5438 = vmatmul.mubr.bf16.gmra.mrb[0].mxu0 %v5211
    %v5439 = vpop.f32.mrb[0].mxu0
    %v5440 = vadd.f32 0.0, %v5439
    %v5441 = vpop.f32.mrb[0].mxu0
    %v5442 = vpop.f32.mrb[0].mxu0
    %v5443 = vadd.f32 0.0, %v5442
    %v5444 = vpop.f32.mrb[0].mxu0
    %5445 = vmatprep.mubr.bf16.mxu0 0
    %5446 = vmatmul.mubr.bf16.gmra.mrb[0].mxu0 %v5214
    %v5447 = vpop.f32.mrb[0].mxu0
    %v5448 = vadd.f32 0.0, %v5447
    %v5449 = vpop.f32.mrb[0].mxu0
    %v5450 = vpop.f32.mrb[0].mxu0
    %v5451 = vadd.f32 0.0, %v5450
    %v5452 = vpop.f32.mrb[0].mxu0
    %5453 = vmatprep.mubr.bf16.mxu0 0
    %5454 = vmatmul.mubr.bf16.gmra.mrb[0].mxu0 %v5217
    %v5455 = vpop.f32.mrb[0].mxu0
    %v5456 = vadd.f32 0.0, %v5455
    %v5457 = vpop.f32.mrb[0].mxu0
    %v5458 = vpop.f32.mrb[0].mxu0
    %v5459 = vadd.f32 0.0, %v5458
    %v5460 = vpop.f32.mrb[0].mxu0
    %5461 = vmatprep.mubr.bf16.mxu0 0
    %5462 = vmatmul.mubr.bf16.gmra.mrb[0].mxu0 %v5220
    %v5463 = vpop.f32.mrb[0].mxu0
    %v5464 = vadd.f32 0.0, %v5463
    %v5465 = vpop.f32.mrb[0].mxu0
    %v5466 = vpop.f32.mrb[0].mxu0
    %v5467 = vadd.f32 0.0, %v5466
    %v5468 = vpop.f32.mrb[0].mxu0
    %5469 = vmatprep.mubr.bf16.mxu0 0
    %5470 = vmatmul.mubr.bf16.gmra.mrb[0].mxu0 %v5223
    %v5471 = vpop.f32.mrb[0].mxu0
    %v5472 = vadd.f32 0.0, %v5471
    %v5473 = vpop.f32.mrb[0].mxu0
    %v5474 = vpop.f32.mrb[0].mxu0
    %v5475 = vadd.f32 0.0, %v5474
    %v5476 = vpop.f32.mrb[0].mxu0
    %5477 = vmatprep.mubr.bf16.mxu0 0
    %5478 = vmatmul.mubr.bf16.gmra.mrb[0].mxu0 %v5226
    %v5479 = vpop.f32.mrb[0].mxu0
    %v5480 = vadd.f32 0.0, %v5479
    %v5481 = vpop.f32.mrb[0].mxu0
    %v5482 = vpop.f32.mrb[0].mxu0
    %v5483 = vadd.f32 0.0, %v5482
    %v5484 = vpop.f32.mrb[0].mxu0
    %5485 = vmatprep.mubr.bf16.mxu0 0
    %5486 = vmatmul.mubr.bf16.gmra.mrb[0].mxu0 %v5229
    %v5487 = vpop.f32.mrb[0].mxu0
    %v5488 = vadd.f32 0.0, %v5487
    %v5489 = vpop.f32.mrb[0].mxu0
    %v5490 = vpop.f32.mrb[0].mxu0
    %v5491 = vadd.f32 0.0, %v5490
    %v5492 = vpop.f32.mrb[0].mxu0
    %5493 = vmatprep.mubr.bf16.mxu0 0
    %5494 = vmatmul.mubr.bf16.gmra.mrb[0].mxu0 %v5232
    %v5495 = vpop.f32.mrb[0].mxu0
    %v5496 = vadd.f32 0.0, %v5495
    %v5497 = vpop.f32.mrb[0].mxu0
    %v5498 = vpop.f32.mrb[0].mxu0
    %v5499 = vadd.f32 0.0, %v5498
    %v5500 = vpop.f32.mrb[0].mxu0
    %5501 = vmatprep.mubr.bf16.mxu0 0
    %5502 = vmatmul.mubr.bf16.gmra.mrb[0].mxu0 %v5235
    %v5503 = vpop.f32.mrb[0].mxu0
    %v5504 = vadd.f32 0.0, %v5503
    %v5505 = vpop.f32.mrb[0].mxu0
    %v5506 = vpop.f32.mrb[0].mxu0
    %v5507 = vadd.f32 0.0, %v5506
    %v5508 = vpop.f32.mrb[0].mxu0
    %5509 = vmatprep.mubr.bf16.mxu0 0
    %5510 = vmatmul.mubr.bf16.gmra.mrb[0].mxu0 %v5238
    %v5511 = vpop.f32.mrb[0].mxu0
    %v5512 = vadd.f32 0.0, %v5511
    %v5513 = vpop.f32.mrb[0].mxu0
    %v5514 = vpop.f32.mrb[0].mxu0
    %v5515 = vadd.f32 0.0, %v5514
    %v5516 = vpop.f32.mrb[0].mxu0
    %5517 = vmatprep.mubr.bf16.mxu0 0
    %5518 = vmatmul.mubr.bf16.gmra.mrb[0].mxu0 %v5241
    %v5519 = vpop.f32.mrb[0].mxu0
    %v5520 = vadd.f32 0.0, %v5519
    %v5521 = vpop.f32.mrb[0].mxu0
    %v5522 = vpop.f32.mrb[0].mxu0
    %v5523 = vadd.f32 0.0, %v5522
    %v5524 = vpop.f32.mrb[0].mxu0
    %5525 = vmatprep.mubr.bf16.mxu0 0
    %5526 = vmatmul.mubr.bf16.gmra.mrb[0].mxu0 %v5244
    %v5527 = vpop.f32.mrb[0].mxu0
    %v5528 = vadd.f32 0.0, %v5527
    %v5529 = vpop.f32.mrb[0].mxu0
    %v5530 = vpop.f32.mrb[0].mxu0
    %v5531 = vadd.f32 0.0, %v5530
    %v5532 = vpop.f32.mrb[0].mxu0
    %5533 = vmatprep.mubr.bf16.mxu0 0
    %5534 = vmatmul.mubr.bf16.gmra.mrb[0].mxu0 %v5247
    %v5535 = vpop.f32.mrb[0].mxu0
    %v5536 = vadd.f32 0.0, %v5535
    %v5537 = vpop.f32.mrb[0].mxu0
    %v5538 = vpop.f32.mrb[0].mxu0
    %v5539 = vadd.f32 0.0, %v5538
    %v5540 = vpop.f32.mrb[0].mxu0
    %5541 = vmatprep.mubr.bf16.mxu0 0
    %5542 = vmatmul.mubr.bf16.gmra.mrb[0].mxu0 %v5250
    %v5543 = vpop.f32.mrb[0].mxu0
    %v5544 = vadd.f32 0.0, %v5543
    %v5545 = vpop.f32.mrb[0].mxu0
    %v5546 = vpop.f32.mrb[0].mxu0
    %v5547 = vadd.f32 0.0, %v5546
    %v5548 = vpop.f32.mrb[0].mxu0
    %5549 = vmatprep.mubr.bf16.mxu0 0
    %5550 = vmatmul.mubr.bf16.gmra.mrb[0].mxu0 %v5253
    %v5551 = vpop.f32.mrb[0].mxu0
    %v5552 = vadd.f32 0.0, %v5551
    %v5553 = vpop.f32.mrb[0].mxu0
    %v5554 = vpop.f32.mrb[0].mxu0
    %v5555 = vadd.f32 0.0, %v5554
    %v5556 = vpop.f32.mrb[0].mxu0
    %5557 = vmatprep.mubr.bf16.mxu0 0
    %5558 = vmatmul.mubr.bf16.gmra.mrb[0].mxu0 %v5256
    %v5559 = vpop.f32.mrb[0].mxu0
    %v5560 = vadd.f32 0.0, %v5559
    %v5561 = vpop.f32.mrb[0].mxu0
    %v5562 = vpop.f32.mrb[0].mxu0
    %v5563 = vadd.f32 0.0, %v5562
    %v5564 = vpop.f32.mrb[0].mxu0
    %5565 = vmatprep.mubr.bf16.mxu0 0
    %5566 = vmatmul.mubr.bf16.gmra.mrb[0].mxu0 %v5259
    %v5567 = vpop.f32.mrb[0].mxu0
    %v5568 = vadd.f32 0.0, %v5567
    %v5569 = vpop.f32.mrb[0].mxu0
    %v5570 = vpop.f32.mrb[0].mxu0
    %v5571 = vadd.f32 0.0, %v5570
    %v5572 = vpop.f32.mrb[0].mxu0
    %5573 = vmatprep.mubr.bf16.mxu0 0
    %5574 = vmatmul.mubr.bf16.gmra.mrb[0].mxu0 %v5262
    %v5575 = vpop.f32.mrb[0].mxu0
    %v5576 = vadd.f32 0.0, %v5575
    %v5577 = vpop.f32.mrb[0].mxu0
    %v5578 = vpop.f32.mrb[0].mxu0
    %v5579 = vadd.f32 0.0, %v5578
    %v5580 = vpop.f32.mrb[0].mxu0
    %5581 = vmatprep.mubr.bf16.mxu0 0
    %5582 = vmatmul.mubr.bf16.gmra.mrb[0].mxu0 %v5265
    %v5583 = vpop.f32.mrb[0].mxu0
    %v5584 = vadd.f32 0.0, %v5583
    %v5585 = vpop.f32.mrb[0].mxu0
    %v5586 = vpop.f32.mrb[0].mxu0
    %v5587 = vadd.f32 0.0, %v5586
    %v5588 = vpop.f32.mrb[0].mxu0
    %5589 = vmatprep.mubr.bf16.mxu0 0
    %5590 = vmatmul.mubr.bf16.gmra.mrb[0].mxu0 %v5268
    %v5591 = vpop.f32.mrb[0].mxu0
    %v5592 = vadd.f32 0.0, %v5591
    %v5593 = vpop.f32.mrb[0].mxu0
    %v5594 = vpop.f32.mrb[0].mxu0
    %v5595 = vadd.f32 0.0, %v5594
    %v5596 = vpop.f32.mrb[0].mxu0
    %5597 = vmatprep.mubr.bf16.mxu0 0
    %5598 = vmatmul.mubr.bf16.gmra.mrb[0].mxu0 %v5271
    %v5599 = vpop.f32.mrb[0].mxu0
    %v5600 = vadd.f32 0.0, %v5599
    %v5601 = vpop.f32.mrb[0].mxu0
    %v5602 = vpop.f32.mrb[0].mxu0
    %v5603 = vadd.f32 0.0, %v5602
    %v5604 = vpop.f32.mrb[0].mxu0
    %5605 = vmatprep.mubr.bf16.mxu0 0
    %5606 = vmatmul.mubr.bf16.gmra.mrb[0].mxu0 %v5274
    %v5607 = vpop.f32.mrb[0].mxu0
    %v5608 = vadd.f32 0.0, %v5607
    %v5609 = vpop.f32.mrb[0].mxu0
    %v5610 = vpop.f32.mrb[0].mxu0
    %v5611 = vadd.f32 0.0, %v5610
    %v5612 = vpop.f32.mrb[0].mxu0
    %5613 = vmatprep.mubr.bf16.mxu0 0
    %5614 = vmatmul.mubr.bf16.gmra.mrb[0].mxu0 %v5277
    %v5615 = vpop.f32.mrb[0].mxu0
    %v5616 = vadd.f32 0.0, %v5615
    %v5617 = vpop.f32.mrb[0].mxu0
    %v5618 = vpop.f32.mrb[0].mxu0
    %v5619 = vadd.f32 0.0, %v5618
    %v5620 = vpop.f32.mrb[0].mxu0
    %5621 = vmatprep.mubr.bf16.mxu0 0
    %5622 = vmatmul.mubr.bf16.gmra.mrb[0].mxu0 %v5280
    %v5623 = vpop.f32.mrb[0].mxu0
    %v5624 = vadd.f32 0.0, %v5623
    %v5625 = vpop.f32.mrb[0].mxu0
    %v5626 = vpop.f32.mrb[0].mxu0
    %v5627 = vadd.f32 0.0, %v5626
    %v5628 = vpop.f32.mrb[0].mxu0
    %5629 = vdwg.mxu0
    %v5630 = vadd.f32 %v4968, %v5320
    %v5631 = vadd.f32 %v4969, %v5323
    %v5632 = vadd.f32 %v4970, %v5328
    %v5633 = vadd.f32 %v4971, %v5331
    %v5634 = vadd.f32 %v4972, %v5336
    %v5635 = vadd.f32 %v4973, %v5339
    %v5636 = vadd.f32 %v4974, %v5344
    %v5637 = vadd.f32 %v4975, %v5347
    %v5638 = vadd.f32 %v4976, %v5352
    %v5639 = vadd.f32 %v4977, %v5355
    %v5640 = vadd.f32 %v4978, %v5360
    %v5641 = vadd.f32 %v4979, %v5363
    %v5642 = vadd.f32 %v4980, %v5368
    %v5643 = vadd.f32 %v4981, %v5371
    %v5644 = vadd.f32 %v4982, %v5376
    %v5645 = vadd.f32 %v4983, %v5379
    %v5646 = vadd.f32 %v4984, %v5384
    %v5647 = vadd.f32 %v4985, %v5387
    %v5648 = vadd.f32 %v4986, %v5392
    %v5649 = vadd.f32 %v4987, %v5395
    %v5650 = vadd.f32 %v4988, %v5400
    %v5651 = vadd.f32 %v4989, %v5403
    %v5652 = vadd.f32 %v4990, %v5408
    %v5653 = vadd.f32 %v4991, %v5411
    %v5654 = vadd.f32 %v4992, %v5416
    %v5655 = vadd.f32 %v4993, %v5419
    %v5656 = vadd.f32 %v4994, %v5424
    %v5657 = vadd.f32 %v4995, %v5427
    %v5658 = vadd.f32 %v4996, %v5432
    %v5659 = vadd.f32 %v4997, %v5435
    %v5660 = vadd.f32 %v4998, %v5440
    %v5661 = vadd.f32 %v4999, %v5443
    %v5662 = vadd.f32 %v5000, %v5448
    %v5663 = vadd.f32 %v5001, %v5451
    %v5664 = vadd.f32 %v5002, %v5456
    %v5665 = vadd.f32 %v5003, %v5459
    %v5666 = vadd.f32 %v5004, %v5464
    %v5667 = vadd.f32 %v5005, %v5467
    %v5668 = vadd.f32 %v5006, %v5472
    %v5669 = vadd.f32 %v5007, %v5475
    %v5670 = vadd.f32 %v5008, %v5480
    %v5671 = vadd.f32 %v5009, %v5483
    %v5672 = vadd.f32 %v5010, %v5488
    %v5673 = vadd.f32 %v5011, %v5491
    %v5674 = vadd.f32 %v5012, %v5496
    %v5675 = vadd.f32 %v5013, %v5499
    %v5676 = vadd.f32 %v5014, %v5504
    %v5677 = vadd.f32 %v5015, %v5507
    %v5678 = vadd.f32 %v5016, %v5512
    %v5679 = vadd.f32 %v5017, %v5515
    %v5680 = vadd.f32 %v5018, %v5520
    %v5681 = vadd.f32 %v5019, %v5523
    %v5682 = vadd.f32 %v5020, %v5528
    %v5683 = vadd.f32 %v5021, %v5531
    %v5684 = vadd.f32 %v5022, %v5536
    %v5685 = vadd.f32 %v5023, %v5539
    %v5686 = vadd.f32 %v5024, %v5544
    %v5687 = vadd.f32 %v5025, %v5547
    %v5688 = vadd.f32 %v5026, %v5552
    %v5689 = vadd.f32 %v5027, %v5555
    %v5690 = vadd.f32 %v5028, %v5560
    %v5691 = vadd.f32 %v5029, %v5563
    %v5692 = vadd.f32 %v5030, %v5568
    %v5693 = vadd.f32 %v5031, %v5571
    %v5694 = vadd.f32 %v5032, %v5576
    %v5695 = vadd.f32 %v5033, %v5579
    %v5696 = vadd.f32 %v5034, %v5584
    %v5697 = vadd.f32 %v5035, %v5587
    %v5698 = vadd.f32 %v5036, %v5592
    %v5699 = vadd.f32 %v5037, %v5595
    %v5700 = vadd.f32 %v5038, %v5600
    %v5701 = vadd.f32 %v5039, %v5603
    %v5702 = vadd.f32 %v5040, %v5608
    %v5703 = vadd.f32 %v5041, %v5611
    %v5704 = vadd.f32 %v5042, %v5616
    %v5705 = vadd.f32 %v5043, %v5619
    %v5706 = vadd.f32 %v5044, %v5624
    %v5707 = vadd.f32 %v5045, %v5627
    %5708 = vst.msk [vmem:[#allocation3 + $0x18] sm:$0xff] %vm1527, %v5630
    %5709 = vst.msk [vmem:[#allocation3 + $0x20] sm:$0xff] %vm1527, %v5631
    %5710 = vst.msk [vmem:[#allocation3 + $0x28] sm:$0xff] %vm1527, %v5632
    %5711 = vst.msk [vmem:[#allocation3 + $0x30] sm:$0xff] %vm1527, %v5633
    %5712 = vst.msk [vmem:[#allocation3 + $0x38] sm:$0xff] %vm1527, %v5634
    %5713 = vst.msk [vmem:[#allocation3 + $0x40] sm:$0xff] %vm1527, %v5635
    %5714 = vst.msk [vmem:[#allocation3 + $0x48] sm:$0xff] %vm1527, %v5636
    %5715 = vst.msk [vmem:[#allocation3 + $0x50] sm:$0xff] %vm1527, %v5637
    %5716 = vst.msk [vmem:[#allocation3 + $0x58] sm:$0xff] %vm1527, %v5638
    %5717 = vst.msk [vmem:[#allocation3 + $0x60] sm:$0xff] %vm1527, %v5639
    %5718 = vst.msk [vmem:[#allocation3 + $0x68] sm:$0xff] %vm1527, %v5640
    %5719 = vst.msk [vmem:[#allocation3 + $0x70] sm:$0xff] %vm1527, %v5641
    %5720 = vst.msk [vmem:[#allocation3 + $0x78] sm:$0xff] %vm1527, %v5642
    %5721 = vst.msk [vmem:[#allocation3 + $0x80] sm:$0xff] %vm1527, %v5643
    %5722 = vst.msk [vmem:[#allocation3 + $0x88] sm:$0xff] %vm1527, %v5644
    %5723 = vst.msk [vmem:[#allocation3 + $0x90] sm:$0xff] %vm1527, %v5645
    %5724 = vst.msk [vmem:[#allocation3 + $0x98] sm:$0xff] %vm1527, %v5646
    %5725 = vst.msk [vmem:[#allocation3 + $0xa0] sm:$0xff] %vm1527, %v5647
    %5726 = vst.msk [vmem:[#allocation3 + $0xa8] sm:$0xff] %vm1527, %v5648
    %5727 = vst.msk [vmem:[#allocation3 + $0xb0] sm:$0xff] %vm1527, %v5649
    %5728 = vst.msk [vmem:[#allocation3 + $0xb8] sm:$0xff] %vm1527, %v5650
    %5729 = vst.msk [vmem:[#allocation3 + $0xc0] sm:$0xff] %vm1527, %v5651
    %5730 = vst.msk [vmem:[#allocation3 + $0xc8] sm:$0xff] %vm1527, %v5652
    %5731 = vst.msk [vmem:[#allocation3 + $0xd0] sm:$0xff] %vm1527, %v5653
    %5732 = vst.msk [vmem:[#allocation3 + $0xd8] sm:$0xff] %vm1527, %v5654
    %5733 = vst.msk [vmem:[#allocation3 + $0xe0] sm:$0xff] %vm1527, %v5655
    %5734 = vst.msk [vmem:[#allocation3 + $0xe8] sm:$0xff] %vm1527, %v5656
    %5735 = vst.msk [vmem:[#allocation3 + $0xf0] sm:$0xff] %vm1527, %v5657
    %5736 = vst.msk [vmem:[#allocation3 + $0xf8] sm:$0xff] %vm1527, %v5658
    %5737 = vst.msk [vmem:[#allocation3 + $0x100] sm:$0xff] %vm1527, %v5659
    %5738 = vst.msk [vmem:[#allocation3 + $0x108] sm:$0xff] %vm1527, %v5660
    %5739 = vst.msk [vmem:[#allocation3 + $0x110] sm:$0xff] %vm1527, %v5661
    %5740 = vst.msk [vmem:[#allocation3 + $0x118] sm:$0xff] %vm1527, %v5662
    %5741 = vst.msk [vmem:[#allocation3 + $0x120] sm:$0xff] %vm1527, %v5663
    %5742 = vst.msk [vmem:[#allocation3 + $0x128] sm:$0xff] %vm1527, %v5664
    %5743 = vst.msk [vmem:[#allocation3 + $0x130] sm:$0xff] %vm1527, %v5665
    %5744 = vst.msk [vmem:[#allocation3 + $0x138] sm:$0xff] %vm1527, %v5666
    %5745 = vst.msk [vmem:[#allocation3 + $0x140] sm:$0xff] %vm1527, %v5667
    %5746 = vst.msk [vmem:[#allocation3 + $0x148] sm:$0xff] %vm1527, %v5668
    %5747 = vst.msk [vmem:[#allocation3 + $0x150] sm:$0xff] %vm1527, %v5669
    %5748 = vst.msk [vmem:[#allocation3 + $0x158] sm:$0xff] %vm1527, %v5670
    %5749 = vst.msk [vmem:[#allocation3 + $0x160] sm:$0xff] %vm1527, %v5671
    %5750 = vst.msk [vmem:[#allocation3 + $0x168] sm:$0xff] %vm1527, %v5672
    %5751 = vst.msk [vmem:[#allocation3 + $0x170] sm:$0xff] %vm1527, %v5673
    %5752 = vst.msk [vmem:[#allocation3 + $0x178] sm:$0xff] %vm1527, %v5674
    %5753 = vst.msk [vmem:[#allocation3 + $0x180] sm:$0xff] %vm1527, %v5675
    %5754 = vst.msk [vmem:[#allocation3 + $0x188] sm:$0xff] %vm1527, %v5676
    %5755 = vst.msk [vmem:[#allocation3 + $0x190] sm:$0xff] %vm1527, %v5677
    %5756 = vst.msk [vmem:[#allocation3 + $0x198] sm:$0xff] %vm1527, %v5678
    %5757 = vst.msk [vmem:[#allocation3 + $0x1a0] sm:$0xff] %vm1527, %v5679
    %5758 = vst.msk [vmem:[#allocation3 + $0x1a8] sm:$0xff] %vm1527, %v5680
    %5759 = vst.msk [vmem:[#allocation3 + $0x1b0] sm:$0xff] %vm1527, %v5681
    %5760 = vst.msk [vmem:[#allocation3 + $0x1b8] sm:$0xff] %vm1527, %v5682
    %5761 = vst.msk [vmem:[#allocation3 + $0x1c0] sm:$0xff] %vm1527, %v5683
    %5762 = vst.msk [vmem:[#allocation3 + $0x1c8] sm:$0xff] %vm1527, %v5684
    %5763 = vst.msk [vmem:[#allocation3 + $0x1d0] sm:$0xff] %vm1527, %v5685
    %5764 = vst.msk [vmem:[#allocation3 + $0x1d8] sm:$0xff] %vm1527, %v5686
    %5765 = vst.msk [vmem:[#allocation3 + $0x1e0] sm:$0xff] %vm1527, %v5687
    %5766 = vst.msk [vmem:[#allocation3 + $0x1e8] sm:$0xff] %vm1527, %v5688
    %5767 = vst.msk [vmem:[#allocation3 + $0x1f0] sm:$0xff] %vm1527, %v5689
    %5768 = vst.msk [vmem:[#allocation3 + $0x1f8] sm:$0xff] %vm1527, %v5690
    %5769 = vst.msk [vmem:[#allocation3 + $0x200] sm:$0xff] %vm1527, %v5691
    %5770 = vst.msk [vmem:[#allocation3 + $0x208] sm:$0xff] %vm1527, %v5692
    %5771 = vst.msk [vmem:[#allocation3 + $0x210] sm:$0xff] %vm1527, %v5693
    %5772 = vst.msk [vmem:[#allocation3 + $0x218] sm:$0xff] %vm1527, %v5694
    %5773 = vst.msk [vmem:[#allocation3 + $0x220] sm:$0xff] %vm1527, %v5695
    %5774 = vst.msk [vmem:[#allocation3 + $0x228] sm:$0xff] %vm1527, %v5696
    %5775 = vst.msk [vmem:[#allocation3 + $0x230] sm:$0xff] %vm1527, %v5697
    %5776 = vst.msk [vmem:[#allocation3 + $0x238] sm:$0xff] %vm1527, %v5698
    %5777 = vst.msk [vmem:[#allocation3 + $0x240] sm:$0xff] %vm1527, %v5699
    %5778 = vst.msk [vmem:[#allocation3 + $0x248] sm:$0xff] %vm1527, %v5700
    %5779 = vst.msk [vmem:[#allocation3 + $0x250] sm:$0xff] %vm1527, %v5701
    %5780 = vst.msk [vmem:[#allocation3 + $0x258] sm:$0xff] %vm1527, %v5702
    %5781 = vst.msk [vmem:[#allocation3 + $0x260] sm:$0xff] %vm1527, %v5703
    %5782 = vst.msk [vmem:[#allocation3 + $0x268] sm:$0xff] %vm1527, %v5704
    %5783 = vst.msk [vmem:[#allocation3 + $0x270] sm:$0xff] %vm1527, %v5705
    %5784 = vst.msk [vmem:[#allocation3 + $0x278] sm:$0xff] %vm1527, %v5706
    %5785 = vst.msk [vmem:[#allocation3 + $0x280] sm:$0xff] %vm1527, %v5707
    %v5786 = vld [vmem:[#allocation3 + $0x18] sm:$0xff]
    %v5787 = vld [vmem:[#allocation3 + $0x20] sm:$0xff]
    %v5788 = vld [vmem:[#allocation3 + $0x28] sm:$0xff]
    %v5789 = vld [vmem:[#allocation3 + $0x30] sm:$0xff]
    %v5790 = vld [vmem:[#allocation3 + $0x38] sm:$0xff]
    %v5791 = vld [vmem:[#allocation3 + $0x40] sm:$0xff]
    %v5792 = vld [vmem:[#allocation3 + $0x48] sm:$0xff]
    %v5793 = vld [vmem:[#allocation3 + $0x50] sm:$0xff]
    %v5794 = vld [vmem:[#allocation3 + $0x58] sm:$0xff]
    %v5795 = vld [vmem:[#allocation3 + $0x60] sm:$0xff]
    %v5796 = vld [vmem:[#allocation3 + $0x68] sm:$0xff]
    %v5797 = vld [vmem:[#allocation3 + $0x70] sm:$0xff]
    %v5798 = vld [vmem:[#allocation3 + $0x78] sm:$0xff]
    %v5799 = vld [vmem:[#allocation3 + $0x80] sm:$0xff]
    %v5800 = vld [vmem:[#allocation3 + $0x88] sm:$0xff]
    %v5801 = vld [vmem:[#allocation3 + $0x90] sm:$0xff]
    %v5802 = vld [vmem:[#allocation3 + $0x98] sm:$0xff]
    %v5803 = vld [vmem:[#allocation3 + $0xa0] sm:$0xff]
    %v5804 = vld [vmem:[#allocation3 + $0xa8] sm:$0xff]
    %v5805 = vld [vmem:[#allocation3 + $0xb0] sm:$0xff]
    %v5806 = vld [vmem:[#allocation3 + $0xb8] sm:$0xff]
    %v5807 = vld [vmem:[#allocation3 + $0xc0] sm:$0xff]
    %v5808 = vld [vmem:[#allocation3 + $0xc8] sm:$0xff]
    %v5809 = vld [vmem:[#allocation3 + $0xd0] sm:$0xff]
    %v5810 = vld [vmem:[#allocation3 + $0xd8] sm:$0xff]
    %v5811 = vld [vmem:[#allocation3 + $0xe0] sm:$0xff]
    %v5812 = vld [vmem:[#allocation3 + $0xe8] sm:$0xff]
    %v5813 = vld [vmem:[#allocation3 + $0xf0] sm:$0xff]
    %v5814 = vld [vmem:[#allocation3 + $0xf8] sm:$0xff]
    %v5815 = vld [vmem:[#allocation3 + $0x100] sm:$0xff]
    %v5816 = vld [vmem:[#allocation3 + $0x108] sm:$0xff]
    %v5817 = vld [vmem:[#allocation3 + $0x110] sm:$0xff]
    %v5818 = vld [vmem:[#allocation3 + $0x118] sm:$0xff]
    %v5819 = vld [vmem:[#allocation3 + $0x120] sm:$0xff]
    %v5820 = vld [vmem:[#allocation3 + $0x128] sm:$0xff]
    %v5821 = vld [vmem:[#allocation3 + $0x130] sm:$0xff]
    %v5822 = vld [vmem:[#allocation3 + $0x138] sm:$0xff]
    %v5823 = vld [vmem:[#allocation3 + $0x140] sm:$0xff]
    %v5824 = vld [vmem:[#allocation3 + $0x148] sm:$0xff]
    %v5825 = vld [vmem:[#allocation3 + $0x150] sm:$0xff]
    %v5826 = vld [vmem:[#allocation3 + $0x158] sm:$0xff]
    %v5827 = vld [vmem:[#allocation3 + $0x160] sm:$0xff]
    %v5828 = vld [vmem:[#allocation3 + $0x168] sm:$0xff]
    %v5829 = vld [vmem:[#allocation3 + $0x170] sm:$0xff]
    %v5830 = vld [vmem:[#allocation3 + $0x178] sm:$0xff]
    %v5831 = vld [vmem:[#allocation3 + $0x180] sm:$0xff]
    %v5832 = vld [vmem:[#allocation3 + $0x188] sm:$0xff]
    %v5833 = vld [vmem:[#allocation3 + $0x190] sm:$0xff]
    %v5834 = vld [vmem:[#allocation3 + $0x198] sm:$0xff]
    %v5835 = vld [vmem:[#allocation3 + $0x1a0] sm:$0xff]
    %v5836 = vld [vmem:[#allocation3 + $0x1a8] sm:$0xff]
    %v5837 = vld [vmem:[#allocation3 + $0x1b0] sm:$0xff]
    %v5838 = vld [vmem:[#allocation3 + $0x1b8] sm:$0xff]
    %v5839 = vld [vmem:[#allocation3 + $0x1c0] sm:$0xff]
    %v5840 = vld [vmem:[#allocation3 + $0x1c8] sm:$0xff]
    %v5841 = vld [vmem:[#allocation3 + $0x1d0] sm:$0xff]
    %v5842 = vld [vmem:[#allocation3 + $0x1d8] sm:$0xff]
    %v5843 = vld [vmem:[#allocation3 + $0x1e0] sm:$0xff]
    %v5844 = vld [vmem:[#allocation3 + $0x1e8] sm:$0xff]
    %v5845 = vld [vmem:[#allocation3 + $0x1f0] sm:$0xff]
    %v5846 = vld [vmem:[#allocation3 + $0x1f8] sm:$0xff]
    %v5847 = vld [vmem:[#allocation3 + $0x200] sm:$0xff]
    %v5848 = vld [vmem:[#allocation3 + $0x208] sm:$0xff]
    %v5849 = vld [vmem:[#allocation3 + $0x210] sm:$0xff]
    %v5850 = vld [vmem:[#allocation3 + $0x218] sm:$0xff]
    %v5851 = vld [vmem:[#allocation3 + $0x220] sm:$0xff]
    %v5852 = vld [vmem:[#allocation3 + $0x228] sm:$0xff]
    %v5853 = vld [vmem:[#allocation3 + $0x230] sm:$0xff]
    %v5854 = vld [vmem:[#allocation3 + $0x238] sm:$0xff]
    %v5855 = vld [vmem:[#allocation3 + $0x240] sm:$0xff]
    %v5856 = vld [vmem:[#allocation3 + $0x248] sm:$0xff]
    %v5857 = vld [vmem:[#allocation3 + $0x250] sm:$0xff]
    %v5858 = vld [vmem:[#allocation3 + $0x258] sm:$0xff]
    %v5859 = vld [vmem:[#allocation3 + $0x260] sm:$0xff]
    %v5860 = vld [vmem:[#allocation3 + $0x268] sm:$0xff]
    %v5861 = vld [vmem:[#allocation3 + $0x270] sm:$0xff]
    %v5862 = vld [vmem:[#allocation3 + $0x278] sm:$0xff]
    %v5863 = vld [vmem:[#allocation3 + $0x280] sm:$0xff]
    %v5864 = vld [vmem:[#allocation2 + $0x19] sm:$0xff]
    %v5865 = vld [vmem:[#allocation2 + $0x21] sm:$0xff]
    %v5866 = vld [vmem:[#allocation2 + $0x29] sm:$0xff]
    %v5867 = vld [vmem:[#allocation2 + $0x31] sm:$0xff]
    %v5868 = vld [vmem:[#allocation2 + $0x39] sm:$0xff]
    %v5869 = vld [vmem:[#allocation2 + $0x41] sm:$0xff]
    %v5870 = vld [vmem:[#allocation2 + $0x49] sm:$0xff]
    %v5871 = vld [vmem:[#allocation2 + $0x51] sm:$0xff]
    %v5872 = vld [vmem:[#allocation2 + $0x59] sm:$0xff]
    %v5873 = vld [vmem:[#allocation2 + $0x61] sm:$0xff]
    %v5874 = vld [vmem:[#allocation2 + $0x69] sm:$0xff]
    %v5875 = vld [vmem:[#allocation2 + $0x71] sm:$0xff]
    %v5876 = vld [vmem:[#allocation2 + $0x79] sm:$0xff]
    %v5877 = vld [vmem:[#allocation2 + $0x81] sm:$0xff]
    %v5878 = vld [vmem:[#allocation2 + $0x89] sm:$0xff]
    %v5879 = vld [vmem:[#allocation2 + $0x91] sm:$0xff]
    %v5880 = vld [vmem:[#allocation2 + $0x99] sm:$0xff]
    %v5881 = vld [vmem:[#allocation2 + $0xa1] sm:$0xff]
    %v5882 = vld [vmem:[#allocation2 + $0xa9] sm:$0xff]
    %v5883 = vld [vmem:[#allocation2 + $0xb1] sm:$0xff]
    %v5884 = vld [vmem:[#allocation2 + $0xb9] sm:$0xff]
    %v5885 = vld [vmem:[#allocation2 + $0xc1] sm:$0xff]
    %v5886 = vld [vmem:[#allocation2 + $0xc9] sm:$0xff]
    %v5887 = vld [vmem:[#allocation2 + $0xd1] sm:$0xff]
    %v5888 = vld [vmem:[#allocation2 + $0xd9] sm:$0xff]
    %v5889 = vld [vmem:[#allocation2 + $0xe1] sm:$0xff]
    %v5890 = vld [vmem:[#allocation2 + $0xe9] sm:$0xff]
    %v5891 = vld [vmem:[#allocation2 + $0xf1] sm:$0xff]
    %v5892 = vld [vmem:[#allocation2 + $0xf9] sm:$0xff]
    %v5893 = vld [vmem:[#allocation2 + $0x101] sm:$0xff]
    %v5894 = vld [vmem:[#allocation2 + $0x109] sm:$0xff]
    %v5895 = vld [vmem:[#allocation2 + $0x111] sm:$0xff]
    %v5896 = vld [vmem:[#allocation2 + $0x119] sm:$0xff]
    %v5897 = vld [vmem:[#allocation2 + $0x121] sm:$0xff]
    %v5898 = vld [vmem:[#allocation2 + $0x129] sm:$0xff]
    %v5899 = vld [vmem:[#allocation2 + $0x131] sm:$0xff]
    %v5900 = vld [vmem:[#allocation2 + $0x139] sm:$0xff]
    %v5901 = vld [vmem:[#allocation2 + $0x141] sm:$0xff]
    %v5902 = vld [vmem:[#allocation2 + $0x149] sm:$0xff]
    %v5903 = vld [vmem:[#allocation2 + $0x151] sm:$0xff]
    %v5904 = vld [vmem:[#allocation2 + $0x159] sm:$0xff]
    %v5905 = vld [vmem:[#allocation2 + $0x161] sm:$0xff]
    %v5906 = vld [vmem:[#allocation2 + $0x169] sm:$0xff]
    %v5907 = vld [vmem:[#allocation2 + $0x171] sm:$0xff]
    %v5908 = vld [vmem:[#allocation2 + $0x179] sm:$0xff]
    %v5909 = vld [vmem:[#allocation2 + $0x181] sm:$0xff]
    %v5910 = vld [vmem:[#allocation2 + $0x189] sm:$0xff]
    %v5911 = vld [vmem:[#allocation2 + $0x191] sm:$0xff]
    %v5912 = vld [vmem:[#allocation2 + $0x199] sm:$0xff]
    %v5913 = vld [vmem:[#allocation2 + $0x1a1] sm:$0xff]
    %v5914 = vld [vmem:[#allocation2 + $0x1a9] sm:$0xff]
    %v5915 = vld [vmem:[#allocation2 + $0x1b1] sm:$0xff]
    %v5916 = vld [vmem:[#allocation2 + $0x1b9] sm:$0xff]
    %v5917 = vld [vmem:[#allocation2 + $0x1c1] sm:$0xff]
    %v5918 = vld [vmem:[#allocation2 + $0x1c9] sm:$0xff]
    %v5919 = vld [vmem:[#allocation2 + $0x1d1] sm:$0xff]
    %v5920 = vld [vmem:[#allocation2 + $0x1d9] sm:$0xff]
    %v5921 = vld [vmem:[#allocation2 + $0x1e1] sm:$0xff]
    %v5922 = vld [vmem:[#allocation2 + $0x1e9] sm:$0xff]
    %v5923 = vld [vmem:[#allocation2 + $0x1f1] sm:$0xff]
    %v5924 = vld [vmem:[#allocation2 + $0x1f9] sm:$0xff]
    %v5925 = vld [vmem:[#allocation2 + $0x201] sm:$0xff]
    %v5926 = vld [vmem:[#allocation2 + $0x209] sm:$0xff]
    %v5927 = vld [vmem:[#allocation2 + $0x211] sm:$0xff]
    %v5928 = vld [vmem:[#allocation2 + $0x219] sm:$0xff]
    %v5929 = vld [vmem:[#allocation2 + $0x221] sm:$0xff]
    %v5930 = vld [vmem:[#allocation2 + $0x229] sm:$0xff]
    %v5931 = vld [vmem:[#allocation2 + $0x231] sm:$0xff]
    %v5932 = vld [vmem:[#allocation2 + $0x239] sm:$0xff]
    %v5933 = vld [vmem:[#allocation2 + $0x241] sm:$0xff]
    %v5934 = vld [vmem:[#allocation2 + $0x249] sm:$0xff]
    %v5935 = vld [vmem:[#allocation2 + $0x251] sm:$0xff]
    %v5936 = vld [vmem:[#allocation2 + $0x259] sm:$0xff]
    %v5937 = vld [vmem:[#allocation2 + $0x261] sm:$0xff]
    %v5938 = vld [vmem:[#allocation2 + $0x269] sm:$0xff]
    %v5939 = vld [vmem:[#allocation2 + $0x271] sm:$0xff]
    %v5940 = vld [vmem:[#allocation2 + $0x279] sm:$0xff]
    %v5941 = vld [vmem:[#allocation2 + $0x281] sm:$0xff]
    %v5942 = vpack.c.bf16 %v5865, %v5864
    %v5943 = vpack.c.bf16 %v5867, %v5866
    %v5944 = vpack.c.bf16 %v5869, %v5868
    %v5945 = vpack.c.bf16 %v5871, %v5870
    %v5946 = vpack.c.bf16 %v5873, %v5872
    %v5947 = vpack.c.bf16 %v5875, %v5874
    %v5948 = vpack.c.bf16 %v5877, %v5876
    %v5949 = vpack.c.bf16 %v5879, %v5878
    %v5950 = vpack.c.bf16 %v5881, %v5880
    %v5951 = vpack.c.bf16 %v5883, %v5882
    %v5952 = vpack.c.bf16 %v5885, %v5884
    %v5953 = vpack.c.bf16 %v5887, %v5886
    %v5954 = vpack.c.bf16 %v5889, %v5888
    %v5955 = vpack.c.bf16 %v5891, %v5890
    %v5956 = vpack.c.bf16 %v5893, %v5892
    %v5957 = vpack.c.bf16 %v5895, %v5894
    %v5958 = vpack.c.bf16 %v5897, %v5896
    %v5959 = vpack.c.bf16 %v5899, %v5898
    %v5960 = vpack.c.bf16 %v5901, %v5900
    %v5961 = vpack.c.bf16 %v5903, %v5902
    %v5962 = vpack.c.bf16 %v5905, %v5904
    %v5963 = vpack.c.bf16 %v5907, %v5906
    %v5964 = vpack.c.bf16 %v5909, %v5908
    %v5965 = vpack.c.bf16 %v5911, %v5910
    %v5966 = vpack.c.bf16 %v5913, %v5912
    %v5967 = vpack.c.bf16 %v5915, %v5914
    %v5968 = vpack.c.bf16 %v5917, %v5916
    %v5969 = vpack.c.bf16 %v5919, %v5918
    %v5970 = vpack.c.bf16 %v5921, %v5920
    %v5971 = vpack.c.bf16 %v5923, %v5922
    %v5972 = vpack.c.bf16 %v5925, %v5924
    %v5973 = vpack.c.bf16 %v5927, %v5926
    %v5974 = vpack.c.bf16 %v5929, %v5928
    %v5975 = vpack.c.bf16 %v5931, %v5930
    %v5976 = vpack.c.bf16 %v5933, %v5932
    %v5977 = vpack.c.bf16 %v5935, %v5934
    %v5978 = vpack.c.bf16 %v5937, %v5936
    %v5979 = vpack.c.bf16 %v5939, %v5938
    %v5980 = vpack.c.bf16 %v5941, %v5940
    %s5981 = scalar_lea.vmem %s4, 20
    %v5982 = vld [vmem:[%s5981] sm:$0xf]
    %v5984 = vsel %vm1527, %v5942, 0
    %v5987 = vsel %vm1527, %v5943, 0
    %v5990 = vsel %vm1527, %v5944, 0
    %v5993 = vsel %vm1527, %v5945, 0
    %v5996 = vsel %vm1527, %v5946, 0
    %v5999 = vsel %vm1527, %v5947, 0
    %v6002 = vsel %vm1527, %v5948, 0
    %v6005 = vsel %vm1527, %v5949, 0
    %v6008 = vsel %vm1527, %v5950, 0
    %v6011 = vsel %vm1527, %v5951, 0
    %v6014 = vsel %vm1527, %v5952, 0
    %v6017 = vsel %vm1527, %v5953, 0
    %v6020 = vsel %vm1527, %v5954, 0
    %v6023 = vsel %vm1527, %v5955, 0
    %v6026 = vsel %vm1527, %v5956, 0
    %v6029 = vsel %vm1527, %v5957, 0
    %v6032 = vsel %vm1527, %v5958, 0
    %v6035 = vsel %vm1527, %v5959, 0
    %v6038 = vsel %vm1527, %v5960, 0
    %v6041 = vsel %vm1527, %v5961, 0
    %v6044 = vsel %vm1527, %v5962, 0
    %v6047 = vsel %vm1527, %v5963, 0
    %v6050 = vsel %vm1527, %v5964, 0
    %v6053 = vsel %vm1527, %v5965, 0
    %v6056 = vsel %vm1527, %v5966, 0
    %v6059 = vsel %vm1527, %v5967, 0
    %v6062 = vsel %vm1527, %v5968, 0
    %v6065 = vsel %vm1527, %v5969, 0
    %v6068 = vsel %vm1527, %v5970, 0
    %v6071 = vsel %vm1527, %v5971, 0
    %v6074 = vsel %vm1527, %v5972, 0
    %v6077 = vsel %vm1527, %v5973, 0
    %v6080 = vsel %vm1527, %v5974, 0
    %v6083 = vsel %vm1527, %v5975, 0
    %v6086 = vsel %vm1527, %v5976, 0
    %v6089 = vsel %vm1527, %v5977, 0
    %v6092 = vsel %vm1527, %v5978, 0
    %v6095 = vsel %vm1527, %v5979, 0
    %v6098 = vsel %vm1527, %v5980, 0
    %v6101 = vsel %vm2009, %v5982, 0
    %6103 = vmatprep.subr.bf16.mxu0 0
    %6104 = vmatpush1.bf16.msra.mxu0 %v6101
    %6105 = vmatprep.subr.bf16.mxu0 0
    %6106 = vmatpush1.bf16.msra.mxu0 0
    %6107 = vmatprep.subr.bf16.mxu0 0
    %6108 = vmatpush1.bf16.msra.mxu0 0
    %6109 = vmatprep.subr.bf16.mxu0 0
    %6110 = vmatpush1.bf16.msra.mxu0 0
    %6111 = vmatprep.subr.bf16.mxu0 0
    %6112 = vmatpush1.bf16.msra.mxu0 0
    %6113 = vmatprep.subr.bf16.mxu0 0
    %6114 = vmatpush1.bf16.msra.mxu0 0
    %6115 = vmatprep.subr.bf16.mxu0 0
    %6116 = vmatpush1.bf16.msra.mxu0 0
    %6117 = vmatprep.subr.bf16.mxu0 0
    %6118 = vmatpush1.bf16.msra.mxu0 0
    %6119 = vmatprep.subr.bf16.mxu0 0
    %6120 = vmatpush1.bf16.msra.mxu0 0
    %6121 = vmatprep.subr.bf16.mxu0 0
    %6122 = vmatpush1.bf16.msra.mxu0 0
    %6123 = vmatprep.subr.bf16.mxu0 0
    %6124 = vmatpush1.bf16.msra.mxu0 0
    %6125 = vmatprep.subr.bf16.mxu0 0
    %6126 = vmatpush1.bf16.msra.mxu0 0
    %6127 = vmatprep.subr.bf16.mxu0 0
    %6128 = vmatpush1.bf16.msra.mxu0 0
    %6129 = vmatprep.subr.bf16.mxu0 0
    %6130 = vmatpush1.bf16.msra.mxu0 0
    %6131 = vmatprep.subr.bf16.mxu0 0
    %6132 = vmatpush1.bf16.msra.mxu0 0
    %6133 = vmatprep.subr.bf16.mxu0 0
    %6134 = vmatpush1.bf16.msra.mxu0 0
    %6135 = vmatprep.mubr.bf16.mxu0 0
    %6136 = vmatmul.mubr.bf16.gmra.mrb[0].mxu0 %v5984
    %v6137 = vpop.f32.mrb[0].mxu0
    %v6138 = vadd.f32 0.0, %v6137
    %v6139 = vpop.f32.mrb[0].mxu0
    %v6140 = vpop.f32.mrb[0].mxu0
    %v6141 = vadd.f32 0.0, %v6140
    %v6142 = vpop.f32.mrb[0].mxu0
    %6143 = vmatprep.mubr.bf16.mxu0 0
    %6144 = vmatmul.mubr.bf16.gmra.mrb[0].mxu0 %v5987
    %v6145 = vpop.f32.mrb[0].mxu0
    %v6146 = vadd.f32 0.0, %v6145
    %v6147 = vpop.f32.mrb[0].mxu0
    %v6148 = vpop.f32.mrb[0].mxu0
    %v6149 = vadd.f32 0.0, %v6148
    %v6150 = vpop.f32.mrb[0].mxu0
    %6151 = vmatprep.mubr.bf16.mxu0 0
    %6152 = vmatmul.mubr.bf16.gmra.mrb[0].mxu0 %v5990
    %v6153 = vpop.f32.mrb[0].mxu0
    %v6154 = vadd.f32 0.0, %v6153
    %v6155 = vpop.f32.mrb[0].mxu0
    %v6156 = vpop.f32.mrb[0].mxu0
    %v6157 = vadd.f32 0.0, %v6156
    %v6158 = vpop.f32.mrb[0].mxu0
    %6159 = vmatprep.mubr.bf16.mxu0 0
    %6160 = vmatmul.mubr.bf16.gmra.mrb[0].mxu0 %v5993
    %v6161 = vpop.f32.mrb[0].mxu0
    %v6162 = vadd.f32 0.0, %v6161
    %v6163 = vpop.f32.mrb[0].mxu0
    %v6164 = vpop.f32.mrb[0].mxu0
    %v6165 = vadd.f32 0.0, %v6164
    %v6166 = vpop.f32.mrb[0].mxu0
    %6167 = vmatprep.mubr.bf16.mxu0 0
    %6168 = vmatmul.mubr.bf16.gmra.mrb[0].mxu0 %v5996
    %v6169 = vpop.f32.mrb[0].mxu0
    %v6170 = vadd.f32 0.0, %v6169
    %v6171 = vpop.f32.mrb[0].mxu0
    %v6172 = vpop.f32.mrb[0].mxu0
    %v6173 = vadd.f32 0.0, %v6172
    %v6174 = vpop.f32.mrb[0].mxu0
    %6175 = vmatprep.mubr.bf16.mxu0 0
    %6176 = vmatmul.mubr.bf16.gmra.mrb[0].mxu0 %v5999
    %v6177 = vpop.f32.mrb[0].mxu0
    %v6178 = vadd.f32 0.0, %v6177
    %v6179 = vpop.f32.mrb[0].mxu0
    %v6180 = vpop.f32.mrb[0].mxu0
    %v6181 = vadd.f32 0.0, %v6180
    %v6182 = vpop.f32.mrb[0].mxu0
    %6183 = vmatprep.mubr.bf16.mxu0 0
    %6184 = vmatmul.mubr.bf16.gmra.mrb[0].mxu0 %v6002
    %v6185 = vpop.f32.mrb[0].mxu0
    %v6186 = vadd.f32 0.0, %v6185
    %v6187 = vpop.f32.mrb[0].mxu0
    %v6188 = vpop.f32.mrb[0].mxu0
    %v6189 = vadd.f32 0.0, %v6188
    %v6190 = vpop.f32.mrb[0].mxu0
    %6191 = vmatprep.mubr.bf16.mxu0 0
    %6192 = vmatmul.mubr.bf16.gmra.mrb[0].mxu0 %v6005
    %v6193 = vpop.f32.mrb[0].mxu0
    %v6194 = vadd.f32 0.0, %v6193
    %v6195 = vpop.f32.mrb[0].mxu0
    %v6196 = vpop.f32.mrb[0].mxu0
    %v6197 = vadd.f32 0.0, %v6196
    %v6198 = vpop.f32.mrb[0].mxu0
    %6199 = vmatprep.mubr.bf16.mxu0 0
    %6200 = vmatmul.mubr.bf16.gmra.mrb[0].mxu0 %v6008
    %v6201 = vpop.f32.mrb[0].mxu0
    %v6202 = vadd.f32 0.0, %v6201
    %v6203 = vpop.f32.mrb[0].mxu0
    %v6204 = vpop.f32.mrb[0].mxu0
    %v6205 = vadd.f32 0.0, %v6204
    %v6206 = vpop.f32.mrb[0].mxu0
    %6207 = vmatprep.mubr.bf16.mxu0 0
    %6208 = vmatmul.mubr.bf16.gmra.mrb[0].mxu0 %v6011
    %v6209 = vpop.f32.mrb[0].mxu0
    %v6210 = vadd.f32 0.0, %v6209
    %v6211 = vpop.f32.mrb[0].mxu0
    %v6212 = vpop.f32.mrb[0].mxu0
    %v6213 = vadd.f32 0.0, %v6212
    %v6214 = vpop.f32.mrb[0].mxu0
    %6215 = vmatprep.mubr.bf16.mxu0 0
    %6216 = vmatmul.mubr.bf16.gmra.mrb[0].mxu0 %v6014
    %v6217 = vpop.f32.mrb[0].mxu0
    %v6218 = vadd.f32 0.0, %v6217
    %v6219 = vpop.f32.mrb[0].mxu0
    %v6220 = vpop.f32.mrb[0].mxu0
    %v6221 = vadd.f32 0.0, %v6220
    %v6222 = vpop.f32.mrb[0].mxu0
    %6223 = vmatprep.mubr.bf16.mxu0 0
    %6224 = vmatmul.mubr.bf16.gmra.mrb[0].mxu0 %v6017
    %v6225 = vpop.f32.mrb[0].mxu0
    %v6226 = vadd.f32 0.0, %v6225
    %v6227 = vpop.f32.mrb[0].mxu0
    %v6228 = vpop.f32.mrb[0].mxu0
    %v6229 = vadd.f32 0.0, %v6228
    %v6230 = vpop.f32.mrb[0].mxu0
    %6231 = vmatprep.mubr.bf16.mxu0 0
    %6232 = vmatmul.mubr.bf16.gmra.mrb[0].mxu0 %v6020
    %v6233 = vpop.f32.mrb[0].mxu0
    %v6234 = vadd.f32 0.0, %v6233
    %v6235 = vpop.f32.mrb[0].mxu0
    %v6236 = vpop.f32.mrb[0].mxu0
    %v6237 = vadd.f32 0.0, %v6236
    %v6238 = vpop.f32.mrb[0].mxu0
    %6239 = vmatprep.mubr.bf16.mxu0 0
    %6240 = vmatmul.mubr.bf16.gmra.mrb[0].mxu0 %v6023
    %v6241 = vpop.f32.mrb[0].mxu0
    %v6242 = vadd.f32 0.0, %v6241
    %v6243 = vpop.f32.mrb[0].mxu0
    %v6244 = vpop.f32.mrb[0].mxu0
    %v6245 = vadd.f32 0.0, %v6244
    %v6246 = vpop.f32.mrb[0].mxu0
    %6247 = vmatprep.mubr.bf16.mxu0 0
    %6248 = vmatmul.mubr.bf16.gmra.mrb[0].mxu0 %v6026
    %v6249 = vpop.f32.mrb[0].mxu0
    %v6250 = vadd.f32 0.0, %v6249
    %v6251 = vpop.f32.mrb[0].mxu0
    %v6252 = vpop.f32.mrb[0].mxu0
    %v6253 = vadd.f32 0.0, %v6252
    %v6254 = vpop.f32.mrb[0].mxu0
    %6255 = vmatprep.mubr.bf16.mxu0 0
    %6256 = vmatmul.mubr.bf16.gmra.mrb[0].mxu0 %v6029
    %v6257 = vpop.f32.mrb[0].mxu0
    %v6258 = vadd.f32 0.0, %v6257
    %v6259 = vpop.f32.mrb[0].mxu0
    %v6260 = vpop.f32.mrb[0].mxu0
    %v6261 = vadd.f32 0.0, %v6260
    %v6262 = vpop.f32.mrb[0].mxu0
    %6263 = vmatprep.mubr.bf16.mxu0 0
    %6264 = vmatmul.mubr.bf16.gmra.mrb[0].mxu0 %v6032
    %v6265 = vpop.f32.mrb[0].mxu0
    %v6266 = vadd.f32 0.0, %v6265
    %v6267 = vpop.f32.mrb[0].mxu0
    %v6268 = vpop.f32.mrb[0].mxu0
    %v6269 = vadd.f32 0.0, %v6268
    %v6270 = vpop.f32.mrb[0].mxu0
    %6271 = vmatprep.mubr.bf16.mxu0 0
    %6272 = vmatmul.mubr.bf16.gmra.mrb[0].mxu0 %v6035
    %v6273 = vpop.f32.mrb[0].mxu0
    %v6274 = vadd.f32 0.0, %v6273
    %v6275 = vpop.f32.mrb[0].mxu0
    %v6276 = vpop.f32.mrb[0].mxu0
    %v6277 = vadd.f32 0.0, %v6276
    %v6278 = vpop.f32.mrb[0].mxu0
    %6279 = vmatprep.mubr.bf16.mxu0 0
    %6280 = vmatmul.mubr.bf16.gmra.mrb[0].mxu0 %v6038
    %v6281 = vpop.f32.mrb[0].mxu0
    %v6282 = vadd.f32 0.0, %v6281
    %v6283 = vpop.f32.mrb[0].mxu0
    %v6284 = vpop.f32.mrb[0].mxu0
    %v6285 = vadd.f32 0.0, %v6284
    %v6286 = vpop.f32.mrb[0].mxu0
    %6287 = vmatprep.mubr.bf16.mxu0 0
    %6288 = vmatmul.mubr.bf16.gmra.mrb[0].mxu0 %v6041
    %v6289 = vpop.f32.mrb[0].mxu0
    %v6290 = vadd.f32 0.0, %v6289
    %v6291 = vpop.f32.mrb[0].mxu0
    %v6292 = vpop.f32.mrb[0].mxu0
    %v6293 = vadd.f32 0.0, %v6292
    %v6294 = vpop.f32.mrb[0].mxu0
    %6295 = vmatprep.mubr.bf16.mxu0 0
    %6296 = vmatmul.mubr.bf16.gmra.mrb[0].mxu0 %v6044
    %v6297 = vpop.f32.mrb[0].mxu0
    %v6298 = vadd.f32 0.0, %v6297
    %v6299 = vpop.f32.mrb[0].mxu0
    %v6300 = vpop.f32.mrb[0].mxu0
    %v6301 = vadd.f32 0.0, %v6300
    %v6302 = vpop.f32.mrb[0].mxu0
    %6303 = vmatprep.mubr.bf16.mxu0 0
    %6304 = vmatmul.mubr.bf16.gmra.mrb[0].mxu0 %v6047
    %v6305 = vpop.f32.mrb[0].mxu0
    %v6306 = vadd.f32 0.0, %v6305
    %v6307 = vpop.f32.mrb[0].mxu0
    %v6308 = vpop.f32.mrb[0].mxu0
    %v6309 = vadd.f32 0.0, %v6308
    %v6310 = vpop.f32.mrb[0].mxu0
    %6311 = vmatprep.mubr.bf16.mxu0 0
    %6312 = vmatmul.mubr.bf16.gmra.mrb[0].mxu0 %v6050
    %v6313 = vpop.f32.mrb[0].mxu0
    %v6314 = vadd.f32 0.0, %v6313
    %v6315 = vpop.f32.mrb[0].mxu0
    %v6316 = vpop.f32.mrb[0].mxu0
    %v6317 = vadd.f32 0.0, %v6316
    %v6318 = vpop.f32.mrb[0].mxu0
    %6319 = vmatprep.mubr.bf16.mxu0 0
    %6320 = vmatmul.mubr.bf16.gmra.mrb[0].mxu0 %v6053
    %v6321 = vpop.f32.mrb[0].mxu0
    %v6322 = vadd.f32 0.0, %v6321
    %v6323 = vpop.f32.mrb[0].mxu0
    %v6324 = vpop.f32.mrb[0].mxu0
    %v6325 = vadd.f32 0.0, %v6324
    %v6326 = vpop.f32.mrb[0].mxu0
    %6327 = vmatprep.mubr.bf16.mxu0 0
    %6328 = vmatmul.mubr.bf16.gmra.mrb[0].mxu0 %v6056
    %v6329 = vpop.f32.mrb[0].mxu0
    %v6330 = vadd.f32 0.0, %v6329
    %v6331 = vpop.f32.mrb[0].mxu0
    %v6332 = vpop.f32.mrb[0].mxu0
    %v6333 = vadd.f32 0.0, %v6332
    %v6334 = vpop.f32.mrb[0].mxu0
    %6335 = vmatprep.mubr.bf16.mxu0 0
    %6336 = vmatmul.mubr.bf16.gmra.mrb[0].mxu0 %v6059
    %v6337 = vpop.f32.mrb[0].mxu0
    %v6338 = vadd.f32 0.0, %v6337
    %v6339 = vpop.f32.mrb[0].mxu0
    %v6340 = vpop.f32.mrb[0].mxu0
    %v6341 = vadd.f32 0.0, %v6340
    %v6342 = vpop.f32.mrb[0].mxu0
    %6343 = vmatprep.mubr.bf16.mxu0 0
    %6344 = vmatmul.mubr.bf16.gmra.mrb[0].mxu0 %v6062
    %v6345 = vpop.f32.mrb[0].mxu0
    %v6346 = vadd.f32 0.0, %v6345
    %v6347 = vpop.f32.mrb[0].mxu0
    %v6348 = vpop.f32.mrb[0].mxu0
    %v6349 = vadd.f32 0.0, %v6348
    %v6350 = vpop.f32.mrb[0].mxu0
    %6351 = vmatprep.mubr.bf16.mxu0 0
    %6352 = vmatmul.mubr.bf16.gmra.mrb[0].mxu0 %v6065
    %v6353 = vpop.f32.mrb[0].mxu0
    %v6354 = vadd.f32 0.0, %v6353
    %v6355 = vpop.f32.mrb[0].mxu0
    %v6356 = vpop.f32.mrb[0].mxu0
    %v6357 = vadd.f32 0.0, %v6356
    %v6358 = vpop.f32.mrb[0].mxu0
    %6359 = vmatprep.mubr.bf16.mxu0 0
    %6360 = vmatmul.mubr.bf16.gmra.mrb[0].mxu0 %v6068
    %v6361 = vpop.f32.mrb[0].mxu0
    %v6362 = vadd.f32 0.0, %v6361
    %v6363 = vpop.f32.mrb[0].mxu0
    %v6364 = vpop.f32.mrb[0].mxu0
    %v6365 = vadd.f32 0.0, %v6364
    %v6366 = vpop.f32.mrb[0].mxu0
    %6367 = vmatprep.mubr.bf16.mxu0 0
    %6368 = vmatmul.mubr.bf16.gmra.mrb[0].mxu0 %v6071
    %v6369 = vpop.f32.mrb[0].mxu0
    %v6370 = vadd.f32 0.0, %v6369
    %v6371 = vpop.f32.mrb[0].mxu0
    %v6372 = vpop.f32.mrb[0].mxu0
    %v6373 = vadd.f32 0.0, %v6372
    %v6374 = vpop.f32.mrb[0].mxu0
    %6375 = vmatprep.mubr.bf16.mxu0 0
    %6376 = vmatmul.mubr.bf16.gmra.mrb[0].mxu0 %v6074
    %v6377 = vpop.f32.mrb[0].mxu0
    %v6378 = vadd.f32 0.0, %v6377
    %v6379 = vpop.f32.mrb[0].mxu0
    %v6380 = vpop.f32.mrb[0].mxu0
    %v6381 = vadd.f32 0.0, %v6380
    %v6382 = vpop.f32.mrb[0].mxu0
    %6383 = vmatprep.mubr.bf16.mxu0 0
    %6384 = vmatmul.mubr.bf16.gmra.mrb[0].mxu0 %v6077
    %v6385 = vpop.f32.mrb[0].mxu0
    %v6386 = vadd.f32 0.0, %v6385
    %v6387 = vpop.f32.mrb[0].mxu0
    %v6388 = vpop.f32.mrb[0].mxu0
    %v6389 = vadd.f32 0.0, %v6388
    %v6390 = vpop.f32.mrb[0].mxu0
    %6391 = vmatprep.mubr.bf16.mxu0 0
    %6392 = vmatmul.mubr.bf16.gmra.mrb[0].mxu0 %v6080
    %v6393 = vpop.f32.mrb[0].mxu0
    %v6394 = vadd.f32 0.0, %v6393
    %v6395 = vpop.f32.mrb[0].mxu0
    %v6396 = vpop.f32.mrb[0].mxu0
    %v6397 = vadd.f32 0.0, %v6396
    %v6398 = vpop.f32.mrb[0].mxu0
    %6399 = vmatprep.mubr.bf16.mxu0 0
    %6400 = vmatmul.mubr.bf16.gmra.mrb[0].mxu0 %v6083
    %v6401 = vpop.f32.mrb[0].mxu0
    %v6402 = vadd.f32 0.0, %v6401
    %v6403 = vpop.f32.mrb[0].mxu0
    %v6404 = vpop.f32.mrb[0].mxu0
    %v6405 = vadd.f32 0.0, %v6404
    %v6406 = vpop.f32.mrb[0].mxu0
    %6407 = vmatprep.mubr.bf16.mxu0 0
    %6408 = vmatmul.mubr.bf16.gmra.mrb[0].mxu0 %v6086
    %v6409 = vpop.f32.mrb[0].mxu0
    %v6410 = vadd.f32 0.0, %v6409
    %v6411 = vpop.f32.mrb[0].mxu0
    %v6412 = vpop.f32.mrb[0].mxu0
    %v6413 = vadd.f32 0.0, %v6412
    %v6414 = vpop.f32.mrb[0].mxu0
    %6415 = vmatprep.mubr.bf16.mxu0 0
    %6416 = vmatmul.mubr.bf16.gmra.mrb[0].mxu0 %v6089
    %v6417 = vpop.f32.mrb[0].mxu0
    %v6418 = vadd.f32 0.0, %v6417
    %v6419 = vpop.f32.mrb[0].mxu0
    %v6420 = vpop.f32.mrb[0].mxu0
    %v6421 = vadd.f32 0.0, %v6420
    %v6422 = vpop.f32.mrb[0].mxu0
    %6423 = vmatprep.mubr.bf16.mxu0 0
    %6424 = vmatmul.mubr.bf16.gmra.mrb[0].mxu0 %v6092
    %v6425 = vpop.f32.mrb[0].mxu0
    %v6426 = vadd.f32 0.0, %v6425
    %v6427 = vpop.f32.mrb[0].mxu0
    %v6428 = vpop.f32.mrb[0].mxu0
    %v6429 = vadd.f32 0.0, %v6428
    %v6430 = vpop.f32.mrb[0].mxu0
    %6431 = vmatprep.mubr.bf16.mxu0 0
    %6432 = vmatmul.mubr.bf16.gmra.mrb[0].mxu0 %v6095
    %v6433 = vpop.f32.mrb[0].mxu0
    %v6434 = vadd.f32 0.0, %v6433
    %v6435 = vpop.f32.mrb[0].mxu0
    %v6436 = vpop.f32.mrb[0].mxu0
    %v6437 = vadd.f32 0.0, %v6436
    %v6438 = vpop.f32.mrb[0].mxu0
    %6439 = vmatprep.mubr.bf16.mxu0 0
    %6440 = vmatmul.mubr.bf16.gmra.mrb[0].mxu0 %v6098
    %v6441 = vpop.f32.mrb[0].mxu0
    %v6442 = vadd.f32 0.0, %v6441
    %v6443 = vpop.f32.mrb[0].mxu0
    %v6444 = vpop.f32.mrb[0].mxu0
    %v6445 = vadd.f32 0.0, %v6444
    %v6446 = vpop.f32.mrb[0].mxu0
    %6447 = vdwg.mxu0
    %v6448 = vadd.f32 %v5786, %v6138
    %v6449 = vadd.f32 %v5787, %v6141
    %v6450 = vadd.f32 %v5788, %v6146
    %v6451 = vadd.f32 %v5789, %v6149
    %v6452 = vadd.f32 %v5790, %v6154
    %v6453 = vadd.f32 %v5791, %v6157
    %v6454 = vadd.f32 %v5792, %v6162
    %v6455 = vadd.f32 %v5793, %v6165
    %v6456 = vadd.f32 %v5794, %v6170
    %v6457 = vadd.f32 %v5795, %v6173
    %v6458 = vadd.f32 %v5796, %v6178
    %v6459 = vadd.f32 %v5797, %v6181
    %v6460 = vadd.f32 %v5798, %v6186
    %v6461 = vadd.f32 %v5799, %v6189
    %v6462 = vadd.f32 %v5800, %v6194
    %v6463 = vadd.f32 %v5801, %v6197
    %v6464 = vadd.f32 %v5802, %v6202
    %v6465 = vadd.f32 %v5803, %v6205
    %v6466 = vadd.f32 %v5804, %v6210
    %v6467 = vadd.f32 %v5805, %v6213
    %v6468 = vadd.f32 %v5806, %v6218
    %v6469 = vadd.f32 %v5807, %v6221
    %v6470 = vadd.f32 %v5808, %v6226
    %v6471 = vadd.f32 %v5809, %v6229
    %v6472 = vadd.f32 %v5810, %v6234
    %v6473 = vadd.f32 %v5811, %v6237
    %v6474 = vadd.f32 %v5812, %v6242
    %v6475 = vadd.f32 %v5813, %v6245
    %v6476 = vadd.f32 %v5814, %v6250
    %v6477 = vadd.f32 %v5815, %v6253
    %v6478 = vadd.f32 %v5816, %v6258
    %v6479 = vadd.f32 %v5817, %v6261
    %v6480 = vadd.f32 %v5818, %v6266
    %v6481 = vadd.f32 %v5819, %v6269
    %v6482 = vadd.f32 %v5820, %v6274
    %v6483 = vadd.f32 %v5821, %v6277
    %v6484 = vadd.f32 %v5822, %v6282
    %v6485 = vadd.f32 %v5823, %v6285
    %v6486 = vadd.f32 %v5824, %v6290
    %v6487 = vadd.f32 %v5825, %v6293
    %v6488 = vadd.f32 %v5826, %v6298
    %v6489 = vadd.f32 %v5827, %v6301
    %v6490 = vadd.f32 %v5828, %v6306
    %v6491 = vadd.f32 %v5829, %v6309
    %v6492 = vadd.f32 %v5830, %v6314
    %v6493 = vadd.f32 %v5831, %v6317
    %v6494 = vadd.f32 %v5832, %v6322
    %v6495 = vadd.f32 %v5833, %v6325
    %v6496 = vadd.f32 %v5834, %v6330
    %v6497 = vadd.f32 %v5835, %v6333
    %v6498 = vadd.f32 %v5836, %v6338
    %v6499 = vadd.f32 %v5837, %v6341
    %v6500 = vadd.f32 %v5838, %v6346
    %v6501 = vadd.f32 %v5839, %v6349
    %v6502 = vadd.f32 %v5840, %v6354
    %v6503 = vadd.f32 %v5841, %v6357
    %v6504 = vadd.f32 %v5842, %v6362
    %v6505 = vadd.f32 %v5843, %v6365
    %v6506 = vadd.f32 %v5844, %v6370
    %v6507 = vadd.f32 %v5845, %v6373
    %v6508 = vadd.f32 %v5846, %v6378
    %v6509 = vadd.f32 %v5847, %v6381
    %v6510 = vadd.f32 %v5848, %v6386
    %v6511 = vadd.f32 %v5849, %v6389
    %v6512 = vadd.f32 %v5850, %v6394
    %v6513 = vadd.f32 %v5851, %v6397
    %v6514 = vadd.f32 %v5852, %v6402
    %v6515 = vadd.f32 %v5853, %v6405
    %v6516 = vadd.f32 %v5854, %v6410
    %v6517 = vadd.f32 %v5855, %v6413
    %v6518 = vadd.f32 %v5856, %v6418
    %v6519 = vadd.f32 %v5857, %v6421
    %v6520 = vadd.f32 %v5858, %v6426
    %v6521 = vadd.f32 %v5859, %v6429
    %v6522 = vadd.f32 %v5860, %v6434
    %v6523 = vadd.f32 %v5861, %v6437
    %v6524 = vadd.f32 %v5862, %v6442
    %v6525 = vadd.f32 %v5863, %v6445
    %6526 = vst.msk [vmem:[#allocation3 + $0x18] sm:$0xff] %vm1527, %v6448
    %6527 = vst.msk [vmem:[#allocation3 + $0x20] sm:$0xff] %vm1527, %v6449
    %6528 = vst.msk [vmem:[#allocation3 + $0x28] sm:$0xff] %vm1527, %v6450
    %6529 = vst.msk [vmem:[#allocation3 + $0x30] sm:$0xff] %vm1527, %v6451
    %6530 = vst.msk [vmem:[#allocation3 + $0x38] sm:$0xff] %vm1527, %v6452
    %6531 = vst.msk [vmem:[#allocation3 + $0x40] sm:$0xff] %vm1527, %v6453
    %6532 = vst.msk [vmem:[#allocation3 + $0x48] sm:$0xff] %vm1527, %v6454
    %6533 = vst.msk [vmem:[#allocation3 + $0x50] sm:$0xff] %vm1527, %v6455
    %6534 = vst.msk [vmem:[#allocation3 + $0x58] sm:$0xff] %vm1527, %v6456
    %6535 = vst.msk [vmem:[#allocation3 + $0x60] sm:$0xff] %vm1527, %v6457
    %6536 = vst.msk [vmem:[#allocation3 + $0x68] sm:$0xff] %vm1527, %v6458
    %6537 = vst.msk [vmem:[#allocation3 + $0x70] sm:$0xff] %vm1527, %v6459
    %6538 = vst.msk [vmem:[#allocation3 + $0x78] sm:$0xff] %vm1527, %v6460
    %6539 = vst.msk [vmem:[#allocation3 + $0x80] sm:$0xff] %vm1527, %v6461
    %6540 = vst.msk [vmem:[#allocation3 + $0x88] sm:$0xff] %vm1527, %v6462
    %6541 = vst.msk [vmem:[#allocation3 + $0x90] sm:$0xff] %vm1527, %v6463
    %6542 = vst.msk [vmem:[#allocation3 + $0x98] sm:$0xff] %vm1527, %v6464
    %6543 = vst.msk [vmem:[#allocation3 + $0xa0] sm:$0xff] %vm1527, %v6465
    %6544 = vst.msk [vmem:[#allocation3 + $0xa8] sm:$0xff] %vm1527, %v6466
    %6545 = vst.msk [vmem:[#allocation3 + $0xb0] sm:$0xff] %vm1527, %v6467
    %6546 = vst.msk [vmem:[#allocation3 + $0xb8] sm:$0xff] %vm1527, %v6468
    %6547 = vst.msk [vmem:[#allocation3 + $0xc0] sm:$0xff] %vm1527, %v6469
    %6548 = vst.msk [vmem:[#allocation3 + $0xc8] sm:$0xff] %vm1527, %v6470
    %6549 = vst.msk [vmem:[#allocation3 + $0xd0] sm:$0xff] %vm1527, %v6471
    %6550 = vst.msk [vmem:[#allocation3 + $0xd8] sm:$0xff] %vm1527, %v6472
    %6551 = vst.msk [vmem:[#allocation3 + $0xe0] sm:$0xff] %vm1527, %v6473
    %6552 = vst.msk [vmem:[#allocation3 + $0xe8] sm:$0xff] %vm1527, %v6474
    %6553 = vst.msk [vmem:[#allocation3 + $0xf0] sm:$0xff] %vm1527, %v6475
    %6554 = vst.msk [vmem:[#allocation3 + $0xf8] sm:$0xff] %vm1527, %v6476
    %6555 = vst.msk [vmem:[#allocation3 + $0x100] sm:$0xff] %vm1527, %v6477
    %6556 = vst.msk [vmem:[#allocation3 + $0x108] sm:$0xff] %vm1527, %v6478
    %6557 = vst.msk [vmem:[#allocation3 + $0x110] sm:$0xff] %vm1527, %v6479
    %6558 = vst.msk [vmem:[#allocation3 + $0x118] sm:$0xff] %vm1527, %v6480
    %6559 = vst.msk [vmem:[#allocation3 + $0x120] sm:$0xff] %vm1527, %v6481
    %6560 = vst.msk [vmem:[#allocation3 + $0x128] sm:$0xff] %vm1527, %v6482
    %6561 = vst.msk [vmem:[#allocation3 + $0x130] sm:$0xff] %vm1527, %v6483
    %6562 = vst.msk [vmem:[#allocation3 + $0x138] sm:$0xff] %vm1527, %v6484
    %6563 = vst.msk [vmem:[#allocation3 + $0x140] sm:$0xff] %vm1527, %v6485
    %6564 = vst.msk [vmem:[#allocation3 + $0x148] sm:$0xff] %vm1527, %v6486
    %6565 = vst.msk [vmem:[#allocation3 + $0x150] sm:$0xff] %vm1527, %v6487
    %6566 = vst.msk [vmem:[#allocation3 + $0x158] sm:$0xff] %vm1527, %v6488
    %6567 = vst.msk [vmem:[#allocation3 + $0x160] sm:$0xff] %vm1527, %v6489
    %6568 = vst.msk [vmem:[#allocation3 + $0x168] sm:$0xff] %vm1527, %v6490
    %6569 = vst.msk [vmem:[#allocation3 + $0x170] sm:$0xff] %vm1527, %v6491
    %6570 = vst.msk [vmem:[#allocation3 + $0x178] sm:$0xff] %vm1527, %v6492
    %6571 = vst.msk [vmem:[#allocation3 + $0x180] sm:$0xff] %vm1527, %v6493
    %6572 = vst.msk [vmem:[#allocation3 + $0x188] sm:$0xff] %vm1527, %v6494
    %6573 = vst.msk [vmem:[#allocation3 + $0x190] sm:$0xff] %vm1527, %v6495
    %6574 = vst.msk [vmem:[#allocation3 + $0x198] sm:$0xff] %vm1527, %v6496
    %6575 = vst.msk [vmem:[#allocation3 + $0x1a0] sm:$0xff] %vm1527, %v6497
    %6576 = vst.msk [vmem:[#allocation3 + $0x1a8] sm:$0xff] %vm1527, %v6498
    %6577 = vst.msk [vmem:[#allocation3 + $0x1b0] sm:$0xff] %vm1527, %v6499
    %6578 = vst.msk [vmem:[#allocation3 + $0x1b8] sm:$0xff] %vm1527, %v6500
    %6579 = vst.msk [vmem:[#allocation3 + $0x1c0] sm:$0xff] %vm1527, %v6501
    %6580 = vst.msk [vmem:[#allocation3 + $0x1c8] sm:$0xff] %vm1527, %v6502
    %6581 = vst.msk [vmem:[#allocation3 + $0x1d0] sm:$0xff] %vm1527, %v6503
    %6582 = vst.msk [vmem:[#allocation3 + $0x1d8] sm:$0xff] %vm1527, %v6504
    %6583 = vst.msk [vmem:[#allocation3 + $0x1e0] sm:$0xff] %vm1527, %v6505
    %6584 = vst.msk [vmem:[#allocation3 + $0x1e8] sm:$0xff] %vm1527, %v6506
    %6585 = vst.msk [vmem:[#allocation3 + $0x1f0] sm:$0xff] %vm1527, %v6507
    %6586 = vst.msk [vmem:[#allocation3 + $0x1f8] sm:$0xff] %vm1527, %v6508
    %6587 = vst.msk [vmem:[#allocation3 + $0x200] sm:$0xff] %vm1527, %v6509
    %6588 = vst.msk [vmem:[#allocation3 + $0x208] sm:$0xff] %vm1527, %v6510
    %6589 = vst.msk [vmem:[#allocation3 + $0x210] sm:$0xff] %vm1527, %v6511
    %6590 = vst.msk [vmem:[#allocation3 + $0x218] sm:$0xff] %vm1527, %v6512
    %6591 = vst.msk [vmem:[#allocation3 + $0x220] sm:$0xff] %vm1527, %v6513
    %6592 = vst.msk [vmem:[#allocation3 + $0x228] sm:$0xff] %vm1527, %v6514
    %6593 = vst.msk [vmem:[#allocation3 + $0x230] sm:$0xff] %vm1527, %v6515
    %6594 = vst.msk [vmem:[#allocation3 + $0x238] sm:$0xff] %vm1527, %v6516
    %6595 = vst.msk [vmem:[#allocation3 + $0x240] sm:$0xff] %vm1527, %v6517
    %6596 = vst.msk [vmem:[#allocation3 + $0x248] sm:$0xff] %vm1527, %v6518
    %6597 = vst.msk [vmem:[#allocation3 + $0x250] sm:$0xff] %vm1527, %v6519
    %6598 = vst.msk [vmem:[#allocation3 + $0x258] sm:$0xff] %vm1527, %v6520
    %6599 = vst.msk [vmem:[#allocation3 + $0x260] sm:$0xff] %vm1527, %v6521
    %6600 = vst.msk [vmem:[#allocation3 + $0x268] sm:$0xff] %vm1527, %v6522
    %6601 = vst.msk [vmem:[#allocation3 + $0x270] sm:$0xff] %vm1527, %v6523
    %6602 = vst.msk [vmem:[#allocation3 + $0x278] sm:$0xff] %vm1527, %v6524
    %6603 = vst.msk [vmem:[#allocation3 + $0x280] sm:$0xff] %vm1527, %v6525
    %v6604 = vld [vmem:[#allocation3 + $0x18] sm:$0xff]
    %v6605 = vld [vmem:[#allocation3 + $0x20] sm:$0xff]
    %v6606 = vld [vmem:[#allocation3 + $0x28] sm:$0xff]
    %v6607 = vld [vmem:[#allocation3 + $0x30] sm:$0xff]
    %v6608 = vld [vmem:[#allocation3 + $0x38] sm:$0xff]
    %v6609 = vld [vmem:[#allocation3 + $0x40] sm:$0xff]
    %v6610 = vld [vmem:[#allocation3 + $0x48] sm:$0xff]
    %v6611 = vld [vmem:[#allocation3 + $0x50] sm:$0xff]
    %v6612 = vld [vmem:[#allocation3 + $0x58] sm:$0xff]
    %v6613 = vld [vmem:[#allocation3 + $0x60] sm:$0xff]
    %v6614 = vld [vmem:[#allocation3 + $0x68] sm:$0xff]
    %v6615 = vld [vmem:[#allocation3 + $0x70] sm:$0xff]
    %v6616 = vld [vmem:[#allocation3 + $0x78] sm:$0xff]
    %v6617 = vld [vmem:[#allocation3 + $0x80] sm:$0xff]
    %v6618 = vld [vmem:[#allocation3 + $0x88] sm:$0xff]
    %v6619 = vld [vmem:[#allocation3 + $0x90] sm:$0xff]
    %v6620 = vld [vmem:[#allocation3 + $0x98] sm:$0xff]
    %v6621 = vld [vmem:[#allocation3 + $0xa0] sm:$0xff]
    %v6622 = vld [vmem:[#allocation3 + $0xa8] sm:$0xff]
    %v6623 = vld [vmem:[#allocation3 + $0xb0] sm:$0xff]
    %v6624 = vld [vmem:[#allocation3 + $0xb8] sm:$0xff]
    %v6625 = vld [vmem:[#allocation3 + $0xc0] sm:$0xff]
    %v6626 = vld [vmem:[#allocation3 + $0xc8] sm:$0xff]
    %v6627 = vld [vmem:[#allocation3 + $0xd0] sm:$0xff]
    %v6628 = vld [vmem:[#allocation3 + $0xd8] sm:$0xff]
    %v6629 = vld [vmem:[#allocation3 + $0xe0] sm:$0xff]
    %v6630 = vld [vmem:[#allocation3 + $0xe8] sm:$0xff]
    %v6631 = vld [vmem:[#allocation3 + $0xf0] sm:$0xff]
    %v6632 = vld [vmem:[#allocation3 + $0xf8] sm:$0xff]
    %v6633 = vld [vmem:[#allocation3 + $0x100] sm:$0xff]
    %v6634 = vld [vmem:[#allocation3 + $0x108] sm:$0xff]
    %v6635 = vld [vmem:[#allocation3 + $0x110] sm:$0xff]
    %v6636 = vld [vmem:[#allocation3 + $0x118] sm:$0xff]
    %v6637 = vld [vmem:[#allocation3 + $0x120] sm:$0xff]
    %v6638 = vld [vmem:[#allocation3 + $0x128] sm:$0xff]
    %v6639 = vld [vmem:[#allocation3 + $0x130] sm:$0xff]
    %v6640 = vld [vmem:[#allocation3 + $0x138] sm:$0xff]
    %v6641 = vld [vmem:[#allocation3 + $0x140] sm:$0xff]
    %v6642 = vld [vmem:[#allocation3 + $0x148] sm:$0xff]
    %v6643 = vld [vmem:[#allocation3 + $0x150] sm:$0xff]
    %v6644 = vld [vmem:[#allocation3 + $0x158] sm:$0xff]
    %v6645 = vld [vmem:[#allocation3 + $0x160] sm:$0xff]
    %v6646 = vld [vmem:[#allocation3 + $0x168] sm:$0xff]
    %v6647 = vld [vmem:[#allocation3 + $0x170] sm:$0xff]
    %v6648 = vld [vmem:[#allocation3 + $0x178] sm:$0xff]
    %v6649 = vld [vmem:[#allocation3 + $0x180] sm:$0xff]
    %v6650 = vld [vmem:[#allocation3 + $0x188] sm:$0xff]
    %v6651 = vld [vmem:[#allocation3 + $0x190] sm:$0xff]
    %v6652 = vld [vmem:[#allocation3 + $0x198] sm:$0xff]
    %v6653 = vld [vmem:[#allocation3 + $0x1a0] sm:$0xff]
    %v6654 = vld [vmem:[#allocation3 + $0x1a8] sm:$0xff]
    %v6655 = vld [vmem:[#allocation3 + $0x1b0] sm:$0xff]
    %v6656 = vld [vmem:[#allocation3 + $0x1b8] sm:$0xff]
    %v6657 = vld [vmem:[#allocation3 + $0x1c0] sm:$0xff]
    %v6658 = vld [vmem:[#allocation3 + $0x1c8] sm:$0xff]
    %v6659 = vld [vmem:[#allocation3 + $0x1d0] sm:$0xff]
    %v6660 = vld [vmem:[#allocation3 + $0x1d8] sm:$0xff]
    %v6661 = vld [vmem:[#allocation3 + $0x1e0] sm:$0xff]
    %v6662 = vld [vmem:[#allocation3 + $0x1e8] sm:$0xff]
    %v6663 = vld [vmem:[#allocation3 + $0x1f0] sm:$0xff]
    %v6664 = vld [vmem:[#allocation3 + $0x1f8] sm:$0xff]
    %v6665 = vld [vmem:[#allocation3 + $0x200] sm:$0xff]
    %v6666 = vld [vmem:[#allocation3 + $0x208] sm:$0xff]
    %v6667 = vld [vmem:[#allocation3 + $0x210] sm:$0xff]
    %v6668 = vld [vmem:[#allocation3 + $0x218] sm:$0xff]
    %v6669 = vld [vmem:[#allocation3 + $0x220] sm:$0xff]
    %v6670 = vld [vmem:[#allocation3 + $0x228] sm:$0xff]
    %v6671 = vld [vmem:[#allocation3 + $0x230] sm:$0xff]
    %v6672 = vld [vmem:[#allocation3 + $0x238] sm:$0xff]
    %v6673 = vld [vmem:[#allocation3 + $0x240] sm:$0xff]
    %v6674 = vld [vmem:[#allocation3 + $0x248] sm:$0xff]
    %v6675 = vld [vmem:[#allocation3 + $0x250] sm:$0xff]
    %v6676 = vld [vmem:[#allocation3 + $0x258] sm:$0xff]
    %v6677 = vld [vmem:[#allocation3 + $0x260] sm:$0xff]
    %v6678 = vld [vmem:[#allocation3 + $0x268] sm:$0xff]
    %v6679 = vld [vmem:[#allocation3 + $0x270] sm:$0xff]
    %v6680 = vld [vmem:[#allocation3 + $0x278] sm:$0xff]
    %v6681 = vld [vmem:[#allocation3 + $0x280] sm:$0xff]
    %v6682 = vld [vmem:[#allocation2 + $0x29] sm:$0xff]
    %v6683 = vld [vmem:[#allocation2 + $0x31] sm:$0xff]
    %v6684 = vld [vmem:[#allocation2 + $0x39] sm:$0xff]
    %v6685 = vld [vmem:[#allocation2 + $0x41] sm:$0xff]
    %v6686 = vld [vmem:[#allocation2 + $0x49] sm:$0xff]
    %v6687 = vld [vmem:[#allocation2 + $0x51] sm:$0xff]
    %v6688 = vld [vmem:[#allocation2 + $0x59] sm:$0xff]
    %v6689 = vld [vmem:[#allocation2 + $0x61] sm:$0xff]
    %v6690 = vld [vmem:[#allocation2 + $0x69] sm:$0xff]
    %v6691 = vld [vmem:[#allocation2 + $0x71] sm:$0xff]
    %v6692 = vld [vmem:[#allocation2 + $0x79] sm:$0xff]
    %v6693 = vld [vmem:[#allocation2 + $0x81] sm:$0xff]
    %v6694 = vld [vmem:[#allocation2 + $0x89] sm:$0xff]
    %v6695 = vld [vmem:[#allocation2 + $0x91] sm:$0xff]
    %v6696 = vld [vmem:[#allocation2 + $0x99] sm:$0xff]
    %v6697 = vld [vmem:[#allocation2 + $0xa1] sm:$0xff]
    %v6698 = vld [vmem:[#allocation2 + $0xa9] sm:$0xff]
    %v6699 = vld [vmem:[#allocation2 + $0xb1] sm:$0xff]
    %v6700 = vld [vmem:[#allocation2 + $0xb9] sm:$0xff]
    %v6701 = vld [vmem:[#allocation2 + $0xc1] sm:$0xff]
    %v6702 = vld [vmem:[#allocation2 + $0xc9] sm:$0xff]
    %v6703 = vld [vmem:[#allocation2 + $0xd1] sm:$0xff]
    %v6704 = vld [vmem:[#allocation2 + $0xd9] sm:$0xff]
    %v6705 = vld [vmem:[#allocation2 + $0xe1] sm:$0xff]
    %v6706 = vld [vmem:[#allocation2 + $0xe9] sm:$0xff]
    %v6707 = vld [vmem:[#allocation2 + $0xf1] sm:$0xff]
    %v6708 = vld [vmem:[#allocation2 + $0xf9] sm:$0xff]
    %v6709 = vld [vmem:[#allocation2 + $0x101] sm:$0xff]
    %v6710 = vld [vmem:[#allocation2 + $0x109] sm:$0xff]
    %v6711 = vld [vmem:[#allocation2 + $0x111] sm:$0xff]
    %v6712 = vld [vmem:[#allocation2 + $0x119] sm:$0xff]
    %v6713 = vld [vmem:[#allocation2 + $0x121] sm:$0xff]
    %v6714 = vld [vmem:[#allocation2 + $0x129] sm:$0xff]
    %v6715 = vld [vmem:[#allocation2 + $0x131] sm:$0xff]
    %v6716 = vld [vmem:[#allocation2 + $0x139] sm:$0xff]
    %v6717 = vld [vmem:[#allocation2 + $0x141] sm:$0xff]
    %v6718 = vld [vmem:[#allocation2 + $0x149] sm:$0xff]
    %v6719 = vld [vmem:[#allocation2 + $0x151] sm:$0xff]
    %v6720 = vld [vmem:[#allocation2 + $0x159] sm:$0xff]
    %v6721 = vld [vmem:[#allocation2 + $0x161] sm:$0xff]
    %v6722 = vld [vmem:[#allocation2 + $0x169] sm:$0xff]
    %v6723 = vld [vmem:[#allocation2 + $0x171] sm:$0xff]
    %v6724 = vld [vmem:[#allocation2 + $0x179] sm:$0xff]
    %v6725 = vld [vmem:[#allocation2 + $0x181] sm:$0xff]
    %v6726 = vld [vmem:[#allocation2 + $0x189] sm:$0xff]
    %v6727 = vld [vmem:[#allocation2 + $0x191] sm:$0xff]
    %v6728 = vld [vmem:[#allocation2 + $0x199] sm:$0xff]
    %v6729 = vld [vmem:[#allocation2 + $0x1a1] sm:$0xff]
    %v6730 = vld [vmem:[#allocation2 + $0x1a9] sm:$0xff]
    %v6731 = vld [vmem:[#allocation2 + $0x1b1] sm:$0xff]
    %v6732 = vld [vmem:[#allocation2 + $0x1b9] sm:$0xff]
    %v6733 = vld [vmem:[#allocation2 + $0x1c1] sm:$0xff]
    %v6734 = vld [vmem:[#allocation2 + $0x1c9] sm:$0xff]
    %v6735 = vld [vmem:[#allocation2 + $0x1d1] sm:$0xff]
    %v6736 = vld [vmem:[#allocation2 + $0x1d9] sm:$0xff]
    %v6737 = vld [vmem:[#allocation2 + $0x1e1] sm:$0xff]
    %v6738 = vld [vmem:[#allocation2 + $0x1e9] sm:$0xff]
    %v6739 = vld [vmem:[#allocation2 + $0x1f1] sm:$0xff]
    %v6740 = vld [vmem:[#allocation2 + $0x1f9] sm:$0xff]
    %v6741 = vld [vmem:[#allocation2 + $0x201] sm:$0xff]
    %v6742 = vld [vmem:[#allocation2 + $0x209] sm:$0xff]
    %v6743 = vld [vmem:[#allocation2 + $0x211] sm:$0xff]
    %v6744 = vld [vmem:[#allocation2 + $0x219] sm:$0xff]
    %v6745 = vld [vmem:[#allocation2 + $0x221] sm:$0xff]
    %v6746 = vld [vmem:[#allocation2 + $0x229] sm:$0xff]
    %v6747 = vld [vmem:[#allocation2 + $0x231] sm:$0xff]
    %v6748 = vld [vmem:[#allocation2 + $0x239] sm:$0xff]
    %v6749 = vld [vmem:[#allocation2 + $0x241] sm:$0xff]
    %v6750 = vld [vmem:[#allocation2 + $0x249] sm:$0xff]
    %v6751 = vld [vmem:[#allocation2 + $0x251] sm:$0xff]
    %v6752 = vld [vmem:[#allocation2 + $0x259] sm:$0xff]
    %v6753 = vld [vmem:[#allocation2 + $0x261] sm:$0xff]
    %v6754 = vld [vmem:[#allocation2 + $0x269] sm:$0xff]
    %v6755 = vld [vmem:[#allocation2 + $0x271] sm:$0xff]
    %v6756 = vld [vmem:[#allocation2 + $0x279] sm:$0xff]
    %v6757 = vld [vmem:[#allocation2 + $0x281] sm:$0xff]
    %v6758 = vld [vmem:[#allocation2 + $0x289] sm:$0xff]
    %v6759 = vld [vmem:[#allocation2 + $0x291] sm:$0xff]
    %v6760 = vpack.c.bf16 %v6683, %v6682
    %v6761 = vpack.c.bf16 %v6685, %v6684
    %v6762 = vpack.c.bf16 %v6687, %v6686
    %v6763 = vpack.c.bf16 %v6689, %v6688
    %v6764 = vpack.c.bf16 %v6691, %v6690
    %v6765 = vpack.c.bf16 %v6693, %v6692
    %v6766 = vpack.c.bf16 %v6695, %v6694
    %v6767 = vpack.c.bf16 %v6697, %v6696
    %v6768 = vpack.c.bf16 %v6699, %v6698
    %v6769 = vpack.c.bf16 %v6701, %v6700
    %v6770 = vpack.c.bf16 %v6703, %v6702
    %v6771 = vpack.c.bf16 %v6705, %v6704
    %v6772 = vpack.c.bf16 %v6707, %v6706
    %v6773 = vpack.c.bf16 %v6709, %v6708
    %v6774 = vpack.c.bf16 %v6711, %v6710
    %v6775 = vpack.c.bf16 %v6713, %v6712
    %v6776 = vpack.c.bf16 %v6715, %v6714
    %v6777 = vpack.c.bf16 %v6717, %v6716
    %v6778 = vpack.c.bf16 %v6719, %v6718
    %v6779 = vpack.c.bf16 %v6721, %v6720
    %v6780 = vpack.c.bf16 %v6723, %v6722
    %v6781 = vpack.c.bf16 %v6725, %v6724
    %v6782 = vpack.c.bf16 %v6727, %v6726
    %v6783 = vpack.c.bf16 %v6729, %v6728
    %v6784 = vpack.c.bf16 %v6731, %v6730
    %v6785 = vpack.c.bf16 %v6733, %v6732
    %v6786 = vpack.c.bf16 %v6735, %v6734
    %v6787 = vpack.c.bf16 %v6737, %v6736
    %v6788 = vpack.c.bf16 %v6739, %v6738
    %v6789 = vpack.c.bf16 %v6741, %v6740
    %v6790 = vpack.c.bf16 %v6743, %v6742
    %v6791 = vpack.c.bf16 %v6745, %v6744
    %v6792 = vpack.c.bf16 %v6747, %v6746
    %v6793 = vpack.c.bf16 %v6749, %v6748
    %v6794 = vpack.c.bf16 %v6751, %v6750
    %v6795 = vpack.c.bf16 %v6753, %v6752
    %v6796 = vpack.c.bf16 %v6755, %v6754
    %v6797 = vpack.c.bf16 %v6757, %v6756
    %v6798 = vpack.c.bf16 %v6759, %v6758
    %s6799 = scalar_lea.vmem %s4, 24
    %v6800 = vld [vmem:[%s6799] sm:$0xf]
    %v6802 = vsel %vm1527, %v6760, 0
    %v6805 = vsel %vm1527, %v6761, 0
    %v6808 = vsel %vm1527, %v6762, 0
    %v6811 = vsel %vm1527, %v6763, 0
    %v6814 = vsel %vm1527, %v6764, 0
    %v6817 = vsel %vm1527, %v6765, 0
    %v6820 = vsel %vm1527, %v6766, 0
    %v6823 = vsel %vm1527, %v6767, 0
    %v6826 = vsel %vm1527, %v6768, 0
    %v6829 = vsel %vm1527, %v6769, 0
    %v6832 = vsel %vm1527, %v6770, 0
    %v6835 = vsel %vm1527, %v6771, 0
    %v6838 = vsel %vm1527, %v6772, 0
    %v6841 = vsel %vm1527, %v6773, 0
    %v6844 = vsel %vm1527, %v6774, 0
    %v6847 = vsel %vm1527, %v6775, 0
    %v6850 = vsel %vm1527, %v6776, 0
    %v6853 = vsel %vm1527, %v6777, 0
    %v6856 = vsel %vm1527, %v6778, 0
    %v6859 = vsel %vm1527, %v6779, 0
    %v6862 = vsel %vm1527, %v6780, 0
    %v6865 = vsel %vm1527, %v6781, 0
    %v6868 = vsel %vm1527, %v6782, 0
    %v6871 = vsel %vm1527, %v6783, 0
    %v6874 = vsel %vm1527, %v6784, 0
    %v6877 = vsel %vm1527, %v6785, 0
    %v6880 = vsel %vm1527, %v6786, 0
    %v6883 = vsel %vm1527, %v6787, 0
    %v6886 = vsel %vm1527, %v6788, 0
    %v6889 = vsel %vm1527, %v6789, 0
    %v6892 = vsel %vm1527, %v6790, 0
    %v6895 = vsel %vm1527, %v6791, 0
    %v6898 = vsel %vm1527, %v6792, 0
    %v6901 = vsel %vm1527, %v6793, 0
    %v6904 = vsel %vm1527, %v6794, 0
    %v6907 = vsel %vm1527, %v6795, 0
    %v6910 = vsel %vm1527, %v6796, 0
    %v6913 = vsel %vm1527, %v6797, 0
    %v6916 = vsel %vm1527, %v6798, 0
    %v6919 = vsel %vm2009, %v6800, 0
    %6921 = vmatprep.subr.bf16.mxu0 0
    %6922 = vmatpush1.bf16.msra.mxu0 %v6919
    %6923 = vmatprep.subr.bf16.mxu0 0
    %6924 = vmatpush1.bf16.msra.mxu0 0
    %6925 = vmatprep.subr.bf16.mxu0 0
    %6926 = vmatpush1.bf16.msra.mxu0 0
    %6927 = vmatprep.subr.bf16.mxu0 0
    %6928 = vmatpush1.bf16.msra.mxu0 0
    %6929 = vmatprep.subr.bf16.mxu0 0
    %6930 = vmatpush1.bf16.msra.mxu0 0
    %6931 = vmatprep.subr.bf16.mxu0 0
    %6932 = vmatpush1.bf16.msra.mxu0 0
    %6933 = vmatprep.subr.bf16.mxu0 0
    %6934 = vmatpush1.bf16.msra.mxu0 0
    %6935 = vmatprep.subr.bf16.mxu0 0
    %6936 = vmatpush1.bf16.msra.mxu0 0
    %6937 = vmatprep.subr.bf16.mxu0 0
    %6938 = vmatpush1.bf16.msra.mxu0 0
    %6939 = vmatprep.subr.bf16.mxu0 0
    %6940 = vmatpush1.bf16.msra.mxu0 0
    %6941 = vmatprep.subr.bf16.mxu0 0
    %6942 = vmatpush1.bf16.msra.mxu0 0
    %6943 = vmatprep.subr.bf16.mxu0 0
    %6944 = vmatpush1.bf16.msra.mxu0 0
    %6945 = vmatprep.subr.bf16.mxu0 0
    %6946 = vmatpush1.bf16.msra.mxu0 0
    %6947 = vmatprep.subr.bf16.mxu0 0
    %6948 = vmatpush1.bf16.msra.mxu0 0
    %6949 = vmatprep.subr.bf16.mxu0 0
    %6950 = vmatpush1.bf16.msra.mxu0 0
    %6951 = vmatprep.subr.bf16.mxu0 0
    %6952 = vmatpush1.bf16.msra.mxu0 0
    %6953 = vmatprep.mubr.bf16.mxu0 0
    %6954 = vmatmul.mubr.bf16.gmra.mrb[0].mxu0 %v6802
    %v6955 = vpop.f32.mrb[0].mxu0
    %v6956 = vadd.f32 0.0, %v6955
    %v6957 = vpop.f32.mrb[0].mxu0
    %v6958 = vpop.f32.mrb[0].mxu0
    %v6959 = vadd.f32 0.0, %v6958
    %v6960 = vpop.f32.mrb[0].mxu0
    %6961 = vmatprep.mubr.bf16.mxu0 0
    %6962 = vmatmul.mubr.bf16.gmra.mrb[0].mxu0 %v6805
    %v6963 = vpop.f32.mrb[0].mxu0
    %v6964 = vadd.f32 0.0, %v6963
    %v6965 = vpop.f32.mrb[0].mxu0
    %v6966 = vpop.f32.mrb[0].mxu0
    %v6967 = vadd.f32 0.0, %v6966
    %v6968 = vpop.f32.mrb[0].mxu0
    %6969 = vmatprep.mubr.bf16.mxu0 0
    %6970 = vmatmul.mubr.bf16.gmra.mrb[0].mxu0 %v6808
    %v6971 = vpop.f32.mrb[0].mxu0
    %v6972 = vadd.f32 0.0, %v6971
    %v6973 = vpop.f32.mrb[0].mxu0
    %v6974 = vpop.f32.mrb[0].mxu0
    %v6975 = vadd.f32 0.0, %v6974
    %v6976 = vpop.f32.mrb[0].mxu0
    %6977 = vmatprep.mubr.bf16.mxu0 0
    %6978 = vmatmul.mubr.bf16.gmra.mrb[0].mxu0 %v6811
    %v6979 = vpop.f32.mrb[0].mxu0
    %v6980 = vadd.f32 0.0, %v6979
    %v6981 = vpop.f32.mrb[0].mxu0
    %v6982 = vpop.f32.mrb[0].mxu0
    %v6983 = vadd.f32 0.0, %v6982
    %v6984 = vpop.f32.mrb[0].mxu0
    %6985 = vmatprep.mubr.bf16.mxu0 0
    %6986 = vmatmul.mubr.bf16.gmra.mrb[0].mxu0 %v6814
    %v6987 = vpop.f32.mrb[0].mxu0
    %v6988 = vadd.f32 0.0, %v6987
    %v6989 = vpop.f32.mrb[0].mxu0
    %v6990 = vpop.f32.mrb[0].mxu0
    %v6991 = vadd.f32 0.0, %v6990
    %v6992 = vpop.f32.mrb[0].mxu0
    %6993 = vmatprep.mubr.bf16.mxu0 0
    %6994 = vmatmul.mubr.bf16.gmra.mrb[0].mxu0 %v6817
    %v6995 = vpop.f32.mrb[0].mxu0
    %v6996 = vadd.f32 0.0, %v6995
    %v6997 = vpop.f32.mrb[0].mxu0
    %v6998 = vpop.f32.mrb[0].mxu0
    %v6999 = vadd.f32 0.0, %v6998
    %v7000 = vpop.f32.mrb[0].mxu0
    %7001 = vmatprep.mubr.bf16.mxu0 0
    %7002 = vmatmul.mubr.bf16.gmra.mrb[0].mxu0 %v6820
    %v7003 = vpop.f32.mrb[0].mxu0
    %v7004 = vadd.f32 0.0, %v7003
    %v7005 = vpop.f32.mrb[0].mxu0
    %v7006 = vpop.f32.mrb[0].mxu0
    %v7007 = vadd.f32 0.0, %v7006
    %v7008 = vpop.f32.mrb[0].mxu0
    %7009 = vmatprep.mubr.bf16.mxu0 0
    %7010 = vmatmul.mubr.bf16.gmra.mrb[0].mxu0 %v6823
    %v7011 = vpop.f32.mrb[0].mxu0
    %v7012 = vadd.f32 0.0, %v7011
    %v7013 = vpop.f32.mrb[0].mxu0
    %v7014 = vpop.f32.mrb[0].mxu0
    %v7015 = vadd.f32 0.0, %v7014
    %v7016 = vpop.f32.mrb[0].mxu0
    %7017 = vmatprep.mubr.bf16.mxu0 0
    %7018 = vmatmul.mubr.bf16.gmra.mrb[0].mxu0 %v6826
    %v7019 = vpop.f32.mrb[0].mxu0
    %v7020 = vadd.f32 0.0, %v7019
    %v7021 = vpop.f32.mrb[0].mxu0
    %v7022 = vpop.f32.mrb[0].mxu0
    %v7023 = vadd.f32 0.0, %v7022
    %v7024 = vpop.f32.mrb[0].mxu0
    %7025 = vmatprep.mubr.bf16.mxu0 0
    %7026 = vmatmul.mubr.bf16.gmra.mrb[0].mxu0 %v6829
    %v7027 = vpop.f32.mrb[0].mxu0
    %v7028 = vadd.f32 0.0, %v7027
    %v7029 = vpop.f32.mrb[0].mxu0
    %v7030 = vpop.f32.mrb[0].mxu0
    %v7031 = vadd.f32 0.0, %v7030
    %v7032 = vpop.f32.mrb[0].mxu0
    %7033 = vmatprep.mubr.bf16.mxu0 0
    %7034 = vmatmul.mubr.bf16.gmra.mrb[0].mxu0 %v6832
    %v7035 = vpop.f32.mrb[0].mxu0
    %v7036 = vadd.f32 0.0, %v7035
    %v7037 = vpop.f32.mrb[0].mxu0
    %v7038 = vpop.f32.mrb[0].mxu0
    %v7039 = vadd.f32 0.0, %v7038
    %v7040 = vpop.f32.mrb[0].mxu0
    %7041 = vmatprep.mubr.bf16.mxu0 0
    %7042 = vmatmul.mubr.bf16.gmra.mrb[0].mxu0 %v6835
    %v7043 = vpop.f32.mrb[0].mxu0
    %v7044 = vadd.f32 0.0, %v7043
    %v7045 = vpop.f32.mrb[0].mxu0
    %v7046 = vpop.f32.mrb[0].mxu0
    %v7047 = vadd.f32 0.0, %v7046
    %v7048 = vpop.f32.mrb[0].mxu0
    %7049 = vmatprep.mubr.bf16.mxu0 0
    %7050 = vmatmul.mubr.bf16.gmra.mrb[0].mxu0 %v6838
    %v7051 = vpop.f32.mrb[0].mxu0
    %v7052 = vadd.f32 0.0, %v7051
    %v7053 = vpop.f32.mrb[0].mxu0
    %v7054 = vpop.f32.mrb[0].mxu0
    %v7055 = vadd.f32 0.0, %v7054
    %v7056 = vpop.f32.mrb[0].mxu0
    %7057 = vmatprep.mubr.bf16.mxu0 0
    %7058 = vmatmul.mubr.bf16.gmra.mrb[0].mxu0 %v6841
    %v7059 = vpop.f32.mrb[0].mxu0
    %v7060 = vadd.f32 0.0, %v7059
    %v7061 = vpop.f32.mrb[0].mxu0
    %v7062 = vpop.f32.mrb[0].mxu0
    %v7063 = vadd.f32 0.0, %v7062
    %v7064 = vpop.f32.mrb[0].mxu0
    %7065 = vmatprep.mubr.bf16.mxu0 0
    %7066 = vmatmul.mubr.bf16.gmra.mrb[0].mxu0 %v6844
    %v7067 = vpop.f32.mrb[0].mxu0
    %v7068 = vadd.f32 0.0, %v7067
    %v7069 = vpop.f32.mrb[0].mxu0
    %v7070 = vpop.f32.mrb[0].mxu0
    %v7071 = vadd.f32 0.0, %v7070
    %v7072 = vpop.f32.mrb[0].mxu0
    %7073 = vmatprep.mubr.bf16.mxu0 0
    %7074 = vmatmul.mubr.bf16.gmra.mrb[0].mxu0 %v6847
    %v7075 = vpop.f32.mrb[0].mxu0
    %v7076 = vadd.f32 0.0, %v7075
    %v7077 = vpop.f32.mrb[0].mxu0
    %v7078 = vpop.f32.mrb[0].mxu0
    %v7079 = vadd.f32 0.0, %v7078
    %v7080 = vpop.f32.mrb[0].mxu0
    %7081 = vmatprep.mubr.bf16.mxu0 0
    %7082 = vmatmul.mubr.bf16.gmra.mrb[0].mxu0 %v6850
    %v7083 = vpop.f32.mrb[0].mxu0
    %v7084 = vadd.f32 0.0, %v7083
    %v7085 = vpop.f32.mrb[0].mxu0
    %v7086 = vpop.f32.mrb[0].mxu0
    %v7087 = vadd.f32 0.0, %v7086
    %v7088 = vpop.f32.mrb[0].mxu0
    %7089 = vmatprep.mubr.bf16.mxu0 0
    %7090 = vmatmul.mubr.bf16.gmra.mrb[0].mxu0 %v6853
    %v7091 = vpop.f32.mrb[0].mxu0
    %v7092 = vadd.f32 0.0, %v7091
    %v7093 = vpop.f32.mrb[0].mxu0
    %v7094 = vpop.f32.mrb[0].mxu0
    %v7095 = vadd.f32 0.0, %v7094
    %v7096 = vpop.f32.mrb[0].mxu0
    %7097 = vmatprep.mubr.bf16.mxu0 0
    %7098 = vmatmul.mubr.bf16.gmra.mrb[0].mxu0 %v6856
    %v7099 = vpop.f32.mrb[0].mxu0
    %v7100 = vadd.f32 0.0, %v7099
    %v7101 = vpop.f32.mrb[0].mxu0
    %v7102 = vpop.f32.mrb[0].mxu0
    %v7103 = vadd.f32 0.0, %v7102
    %v7104 = vpop.f32.mrb[0].mxu0
    %7105 = vmatprep.mubr.bf16.mxu0 0
    %7106 = vmatmul.mubr.bf16.gmra.mrb[0].mxu0 %v6859
    %v7107 = vpop.f32.mrb[0].mxu0
    %v7108 = vadd.f32 0.0, %v7107
    %v7109 = vpop.f32.mrb[0].mxu0
    %v7110 = vpop.f32.mrb[0].mxu0
    %v7111 = vadd.f32 0.0, %v7110
    %v7112 = vpop.f32.mrb[0].mxu0
    %7113 = vmatprep.mubr.bf16.mxu0 0
    %7114 = vmatmul.mubr.bf16.gmra.mrb[0].mxu0 %v6862
    %v7115 = vpop.f32.mrb[0].mxu0
    %v7116 = vadd.f32 0.0, %v7115
    %v7117 = vpop.f32.mrb[0].mxu0
    %v7118 = vpop.f32.mrb[0].mxu0
    %v7119 = vadd.f32 0.0, %v7118
    %v7120 = vpop.f32.mrb[0].mxu0
    %7121 = vmatprep.mubr.bf16.mxu0 0
    %7122 = vmatmul.mubr.bf16.gmra.mrb[0].mxu0 %v6865
    %v7123 = vpop.f32.mrb[0].mxu0
    %v7124 = vadd.f32 0.0, %v7123
    %v7125 = vpop.f32.mrb[0].mxu0
    %v7126 = vpop.f32.mrb[0].mxu0
    %v7127 = vadd.f32 0.0, %v7126
    %v7128 = vpop.f32.mrb[0].mxu0
    %7129 = vmatprep.mubr.bf16.mxu0 0
    %7130 = vmatmul.mubr.bf16.gmra.mrb[0].mxu0 %v6868
    %v7131 = vpop.f32.mrb[0].mxu0
    %v7132 = vadd.f32 0.0, %v7131
    %v7133 = vpop.f32.mrb[0].mxu0
    %v7134 = vpop.f32.mrb[0].mxu0
    %v7135 = vadd.f32 0.0, %v7134
    %v7136 = vpop.f32.mrb[0].mxu0
    %7137 = vmatprep.mubr.bf16.mxu0 0
    %7138 = vmatmul.mubr.bf16.gmra.mrb[0].mxu0 %v6871
    %v7139 = vpop.f32.mrb[0].mxu0
    %v7140 = vadd.f32 0.0, %v7139
    %v7141 = vpop.f32.mrb[0].mxu0
    %v7142 = vpop.f32.mrb[0].mxu0
    %v7143 = vadd.f32 0.0, %v7142
    %v7144 = vpop.f32.mrb[0].mxu0
    %7145 = vmatprep.mubr.bf16.mxu0 0
    %7146 = vmatmul.mubr.bf16.gmra.mrb[0].mxu0 %v6874
    %v7147 = vpop.f32.mrb[0].mxu0
    %v7148 = vadd.f32 0.0, %v7147
    %v7149 = vpop.f32.mrb[0].mxu0
    %v7150 = vpop.f32.mrb[0].mxu0
    %v7151 = vadd.f32 0.0, %v7150
    %v7152 = vpop.f32.mrb[0].mxu0
    %7153 = vmatprep.mubr.bf16.mxu0 0
    %7154 = vmatmul.mubr.bf16.gmra.mrb[0].mxu0 %v6877
    %v7155 = vpop.f32.mrb[0].mxu0
    %v7156 = vadd.f32 0.0, %v7155
    %v7157 = vpop.f32.mrb[0].mxu0
    %v7158 = vpop.f32.mrb[0].mxu0
    %v7159 = vadd.f32 0.0, %v7158
    %v7160 = vpop.f32.mrb[0].mxu0
    %7161 = vmatprep.mubr.bf16.mxu0 0
    %7162 = vmatmul.mubr.bf16.gmra.mrb[0].mxu0 %v6880
    %v7163 = vpop.f32.mrb[0].mxu0
    %v7164 = vadd.f32 0.0, %v7163
    %v7165 = vpop.f32.mrb[0].mxu0
    %v7166 = vpop.f32.mrb[0].mxu0
    %v7167 = vadd.f32 0.0, %v7166
    %v7168 = vpop.f32.mrb[0].mxu0
    %7169 = vmatprep.mubr.bf16.mxu0 0
    %7170 = vmatmul.mubr.bf16.gmra.mrb[0].mxu0 %v6883
    %v7171 = vpop.f32.mrb[0].mxu0
    %v7172 = vadd.f32 0.0, %v7171
    %v7173 = vpop.f32.mrb[0].mxu0
    %v7174 = vpop.f32.mrb[0].mxu0
    %v7175 = vadd.f32 0.0, %v7174
    %v7176 = vpop.f32.mrb[0].mxu0
    %7177 = vmatprep.mubr.bf16.mxu0 0
    %7178 = vmatmul.mubr.bf16.gmra.mrb[0].mxu0 %v6886
    %v7179 = vpop.f32.mrb[0].mxu0
    %v7180 = vadd.f32 0.0, %v7179
    %v7181 = vpop.f32.mrb[0].mxu0
    %v7182 = vpop.f32.mrb[0].mxu0
    %v7183 = vadd.f32 0.0, %v7182
    %v7184 = vpop.f32.mrb[0].mxu0
    %7185 = vmatprep.mubr.bf16.mxu0 0
    %7186 = vmatmul.mubr.bf16.gmra.mrb[0].mxu0 %v6889
    %v7187 = vpop.f32.mrb[0].mxu0
    %v7188 = vadd.f32 0.0, %v7187
    %v7189 = vpop.f32.mrb[0].mxu0
    %v7190 = vpop.f32.mrb[0].mxu0
    %v7191 = vadd.f32 0.0, %v7190
    %v7192 = vpop.f32.mrb[0].mxu0
    %7193 = vmatprep.mubr.bf16.mxu0 0
    %7194 = vmatmul.mubr.bf16.gmra.mrb[0].mxu0 %v6892
    %v7195 = vpop.f32.mrb[0].mxu0
    %v7196 = vadd.f32 0.0, %v7195
    %v7197 = vpop.f32.mrb[0].mxu0
    %v7198 = vpop.f32.mrb[0].mxu0
    %v7199 = vadd.f32 0.0, %v7198
    %v7200 = vpop.f32.mrb[0].mxu0
    %7201 = vmatprep.mubr.bf16.mxu0 0
    %7202 = vmatmul.mubr.bf16.gmra.mrb[0].mxu0 %v6895
    %v7203 = vpop.f32.mrb[0].mxu0
    %v7204 = vadd.f32 0.0, %v7203
    %v7205 = vpop.f32.mrb[0].mxu0
    %v7206 = vpop.f32.mrb[0].mxu0
    %v7207 = vadd.f32 0.0, %v7206
    %v7208 = vpop.f32.mrb[0].mxu0
    %7209 = vmatprep.mubr.bf16.mxu0 0
    %7210 = vmatmul.mubr.bf16.gmra.mrb[0].mxu0 %v6898
    %v7211 = vpop.f32.mrb[0].mxu0
    %v7212 = vadd.f32 0.0, %v7211
    %v7213 = vpop.f32.mrb[0].mxu0
    %v7214 = vpop.f32.mrb[0].mxu0
    %v7215 = vadd.f32 0.0, %v7214
    %v7216 = vpop.f32.mrb[0].mxu0
    %7217 = vmatprep.mubr.bf16.mxu0 0
    %7218 = vmatmul.mubr.bf16.gmra.mrb[0].mxu0 %v6901
    %v7219 = vpop.f32.mrb[0].mxu0
    %v7220 = vadd.f32 0.0, %v7219
    %v7221 = vpop.f32.mrb[0].mxu0
    %v7222 = vpop.f32.mrb[0].mxu0
    %v7223 = vadd.f32 0.0, %v7222
    %v7224 = vpop.f32.mrb[0].mxu0
    %7225 = vmatprep.mubr.bf16.mxu0 0
    %7226 = vmatmul.mubr.bf16.gmra.mrb[0].mxu0 %v6904
    %v7227 = vpop.f32.mrb[0].mxu0
    %v7228 = vadd.f32 0.0, %v7227
    %v7229 = vpop.f32.mrb[0].mxu0
    %v7230 = vpop.f32.mrb[0].mxu0
    %v7231 = vadd.f32 0.0, %v7230
    %v7232 = vpop.f32.mrb[0].mxu0
    %7233 = vmatprep.mubr.bf16.mxu0 0
    %7234 = vmatmul.mubr.bf16.gmra.mrb[0].mxu0 %v6907
    %v7235 = vpop.f32.mrb[0].mxu0
    %v7236 = vadd.f32 0.0, %v7235
    %v7237 = vpop.f32.mrb[0].mxu0
    %v7238 = vpop.f32.mrb[0].mxu0
    %v7239 = vadd.f32 0.0, %v7238
    %v7240 = vpop.f32.mrb[0].mxu0
    %7241 = vmatprep.mubr.bf16.mxu0 0
    %7242 = vmatmul.mubr.bf16.gmra.mrb[0].mxu0 %v6910
    %v7243 = vpop.f32.mrb[0].mxu0
    %v7244 = vadd.f32 0.0, %v7243
    %v7245 = vpop.f32.mrb[0].mxu0
    %v7246 = vpop.f32.mrb[0].mxu0
    %v7247 = vadd.f32 0.0, %v7246
    %v7248 = vpop.f32.mrb[0].mxu0
    %7249 = vmatprep.mubr.bf16.mxu0 0
    %7250 = vmatmul.mubr.bf16.gmra.mrb[0].mxu0 %v6913
    %v7251 = vpop.f32.mrb[0].mxu0
    %v7252 = vadd.f32 0.0, %v7251
    %v7253 = vpop.f32.mrb[0].mxu0
    %v7254 = vpop.f32.mrb[0].mxu0
    %v7255 = vadd.f32 0.0, %v7254
    %v7256 = vpop.f32.mrb[0].mxu0
    %7257 = vmatprep.mubr.bf16.mxu0 0
    %7258 = vmatmul.mubr.bf16.gmra.mrb[0].mxu0 %v6916
    %v7259 = vpop.f32.mrb[0].mxu0
    %v7260 = vadd.f32 0.0, %v7259
    %v7261 = vpop.f32.mrb[0].mxu0
    %v7262 = vpop.f32.mrb[0].mxu0
    %v7263 = vadd.f32 0.0, %v7262
    %v7264 = vpop.f32.mrb[0].mxu0
    %7265 = vdwg.mxu0
    %v7266 = vadd.f32 %v6604, %v6956
    %v7267 = vadd.f32 %v6605, %v6959
    %v7268 = vadd.f32 %v6606, %v6964
    %v7269 = vadd.f32 %v6607, %v6967
    %v7270 = vadd.f32 %v6608, %v6972
    %v7271 = vadd.f32 %v6609, %v6975
    %v7272 = vadd.f32 %v6610, %v6980
    %v7273 = vadd.f32 %v6611, %v6983
    %v7274 = vadd.f32 %v6612, %v6988
    %v7275 = vadd.f32 %v6613, %v6991
    %v7276 = vadd.f32 %v6614, %v6996
    %v7277 = vadd.f32 %v6615, %v6999
    %v7278 = vadd.f32 %v6616, %v7004
    %v7279 = vadd.f32 %v6617, %v7007
    %v7280 = vadd.f32 %v6618, %v7012
    %v7281 = vadd.f32 %v6619, %v7015
    %v7282 = vadd.f32 %v6620, %v7020
    %v7283 = vadd.f32 %v6621, %v7023
    %v7284 = vadd.f32 %v6622, %v7028
    %v7285 = vadd.f32 %v6623, %v7031
    %v7286 = vadd.f32 %v6624, %v7036
    %v7287 = vadd.f32 %v6625, %v7039
    %v7288 = vadd.f32 %v6626, %v7044
    %v7289 = vadd.f32 %v6627, %v7047
    %v7290 = vadd.f32 %v6628, %v7052
    %v7291 = vadd.f32 %v6629, %v7055
    %v7292 = vadd.f32 %v6630, %v7060
    %v7293 = vadd.f32 %v6631, %v7063
    %v7294 = vadd.f32 %v6632, %v7068
    %v7295 = vadd.f32 %v6633, %v7071
    %v7296 = vadd.f32 %v6634, %v7076
    %v7297 = vadd.f32 %v6635, %v7079
    %v7298 = vadd.f32 %v6636, %v7084
    %v7299 = vadd.f32 %v6637, %v7087
    %v7300 = vadd.f32 %v6638, %v7092
    %v7301 = vadd.f32 %v6639, %v7095
    %v7302 = vadd.f32 %v6640, %v7100
    %v7303 = vadd.f32 %v6641, %v7103
    %v7304 = vadd.f32 %v6642, %v7108
    %v7305 = vadd.f32 %v6643, %v7111
    %v7306 = vadd.f32 %v6644, %v7116
    %v7307 = vadd.f32 %v6645, %v7119
    %v7308 = vadd.f32 %v6646, %v7124
    %v7309 = vadd.f32 %v6647, %v7127
    %v7310 = vadd.f32 %v6648, %v7132
    %v7311 = vadd.f32 %v6649, %v7135
    %v7312 = vadd.f32 %v6650, %v7140
    %v7313 = vadd.f32 %v6651, %v7143
    %v7314 = vadd.f32 %v6652, %v7148
    %v7315 = vadd.f32 %v6653, %v7151
    %v7316 = vadd.f32 %v6654, %v7156
    %v7317 = vadd.f32 %v6655, %v7159
    %v7318 = vadd.f32 %v6656, %v7164
    %v7319 = vadd.f32 %v6657, %v7167
    %v7320 = vadd.f32 %v6658, %v7172
    %v7321 = vadd.f32 %v6659, %v7175
    %v7322 = vadd.f32 %v6660, %v7180
    %v7323 = vadd.f32 %v6661, %v7183
    %v7324 = vadd.f32 %v6662, %v7188
    %v7325 = vadd.f32 %v6663, %v7191
    %v7326 = vadd.f32 %v6664, %v7196
    %v7327 = vadd.f32 %v6665, %v7199
    %v7328 = vadd.f32 %v6666, %v7204
    %v7329 = vadd.f32 %v6667, %v7207
    %v7330 = vadd.f32 %v6668, %v7212
    %v7331 = vadd.f32 %v6669, %v7215
    %v7332 = vadd.f32 %v6670, %v7220
    %v7333 = vadd.f32 %v6671, %v7223
    %v7334 = vadd.f32 %v6672, %v7228
    %v7335 = vadd.f32 %v6673, %v7231
    %v7336 = vadd.f32 %v6674, %v7236
    %v7337 = vadd.f32 %v6675, %v7239
    %v7338 = vadd.f32 %v6676, %v7244
    %v7339 = vadd.f32 %v6677, %v7247
    %v7340 = vadd.f32 %v6678, %v7252
    %v7341 = vadd.f32 %v6679, %v7255
    %v7342 = vadd.f32 %v6680, %v7260
    %v7343 = vadd.f32 %v6681, %v7263
    %7344 = vst.msk [vmem:[#allocation3 + $0x18] sm:$0xff] %vm1527, %v7266
    %7345 = vst.msk [vmem:[#allocation3 + $0x20] sm:$0xff] %vm1527, %v7267
    %7346 = vst.msk [vmem:[#allocation3 + $0x28] sm:$0xff] %vm1527, %v7268
    %7347 = vst.msk [vmem:[#allocation3 + $0x30] sm:$0xff] %vm1527, %v7269
    %7348 = vst.msk [vmem:[#allocation3 + $0x38] sm:$0xff] %vm1527, %v7270
    %7349 = vst.msk [vmem:[#allocation3 + $0x40] sm:$0xff] %vm1527, %v7271
    %7350 = vst.msk [vmem:[#allocation3 + $0x48] sm:$0xff] %vm1527, %v7272
    %7351 = vst.msk [vmem:[#allocation3 + $0x50] sm:$0xff] %vm1527, %v7273
    %7352 = vst.msk [vmem:[#allocation3 + $0x58] sm:$0xff] %vm1527, %v7274
    %7353 = vst.msk [vmem:[#allocation3 + $0x60] sm:$0xff] %vm1527, %v7275
    %7354 = vst.msk [vmem:[#allocation3 + $0x68] sm:$0xff] %vm1527, %v7276
    %7355 = vst.msk [vmem:[#allocation3 + $0x70] sm:$0xff] %vm1527, %v7277
    %7356 = vst.msk [vmem:[#allocation3 + $0x78] sm:$0xff] %vm1527, %v7278
    %7357 = vst.msk [vmem:[#allocation3 + $0x80] sm:$0xff] %vm1527, %v7279
    %7358 = vst.msk [vmem:[#allocation3 + $0x88] sm:$0xff] %vm1527, %v7280
    %7359 = vst.msk [vmem:[#allocation3 + $0x90] sm:$0xff] %vm1527, %v7281
    %7360 = vst.msk [vmem:[#allocation3 + $0x98] sm:$0xff] %vm1527, %v7282
    %7361 = vst.msk [vmem:[#allocation3 + $0xa0] sm:$0xff] %vm1527, %v7283
    %7362 = vst.msk [vmem:[#allocation3 + $0xa8] sm:$0xff] %vm1527, %v7284
    %7363 = vst.msk [vmem:[#allocation3 + $0xb0] sm:$0xff] %vm1527, %v7285
    %7364 = vst.msk [vmem:[#allocation3 + $0xb8] sm:$0xff] %vm1527, %v7286
    %7365 = vst.msk [vmem:[#allocation3 + $0xc0] sm:$0xff] %vm1527, %v7287
    %7366 = vst.msk [vmem:[#allocation3 + $0xc8] sm:$0xff] %vm1527, %v7288
    %7367 = vst.msk [vmem:[#allocation3 + $0xd0] sm:$0xff] %vm1527, %v7289
    %7368 = vst.msk [vmem:[#allocation3 + $0xd8] sm:$0xff] %vm1527, %v7290
    %7369 = vst.msk [vmem:[#allocation3 + $0xe0] sm:$0xff] %vm1527, %v7291
    %7370 = vst.msk [vmem:[#allocation3 + $0xe8] sm:$0xff] %vm1527, %v7292
    %7371 = vst.msk [vmem:[#allocation3 + $0xf0] sm:$0xff] %vm1527, %v7293
    %7372 = vst.msk [vmem:[#allocation3 + $0xf8] sm:$0xff] %vm1527, %v7294
    %7373 = vst.msk [vmem:[#allocation3 + $0x100] sm:$0xff] %vm1527, %v7295
    %7374 = vst.msk [vmem:[#allocation3 + $0x108] sm:$0xff] %vm1527, %v7296
    %7375 = vst.msk [vmem:[#allocation3 + $0x110] sm:$0xff] %vm1527, %v7297
    %7376 = vst.msk [vmem:[#allocation3 + $0x118] sm:$0xff] %vm1527, %v7298
    %7377 = vst.msk [vmem:[#allocation3 + $0x120] sm:$0xff] %vm1527, %v7299
    %7378 = vst.msk [vmem:[#allocation3 + $0x128] sm:$0xff] %vm1527, %v7300
    %7379 = vst.msk [vmem:[#allocation3 + $0x130] sm:$0xff] %vm1527, %v7301
    %7380 = vst.msk [vmem:[#allocation3 + $0x138] sm:$0xff] %vm1527, %v7302
    %7381 = vst.msk [vmem:[#allocation3 + $0x140] sm:$0xff] %vm1527, %v7303
    %7382 = vst.msk [vmem:[#allocation3 + $0x148] sm:$0xff] %vm1527, %v7304
    %7383 = vst.msk [vmem:[#allocation3 + $0x150] sm:$0xff] %vm1527, %v7305
    %7384 = vst.msk [vmem:[#allocation3 + $0x158] sm:$0xff] %vm1527, %v7306
    %7385 = vst.msk [vmem:[#allocation3 + $0x160] sm:$0xff] %vm1527, %v7307
    %7386 = vst.msk [vmem:[#allocation3 + $0x168] sm:$0xff] %vm1527, %v7308
    %7387 = vst.msk [vmem:[#allocation3 + $0x170] sm:$0xff] %vm1527, %v7309
    %7388 = vst.msk [vmem:[#allocation3 + $0x178] sm:$0xff] %vm1527, %v7310
    %7389 = vst.msk [vmem:[#allocation3 + $0x180] sm:$0xff] %vm1527, %v7311
    %7390 = vst.msk [vmem:[#allocation3 + $0x188] sm:$0xff] %vm1527, %v7312
    %7391 = vst.msk [vmem:[#allocation3 + $0x190] sm:$0xff] %vm1527, %v7313
    %7392 = vst.msk [vmem:[#allocation3 + $0x198] sm:$0xff] %vm1527, %v7314
    %7393 = vst.msk [vmem:[#allocation3 + $0x1a0] sm:$0xff] %vm1527, %v7315
    %7394 = vst.msk [vmem:[#allocation3 + $0x1a8] sm:$0xff] %vm1527, %v7316
    %7395 = vst.msk [vmem:[#allocation3 + $0x1b0] sm:$0xff] %vm1527, %v7317
    %7396 = vst.msk [vmem:[#allocation3 + $0x1b8] sm:$0xff] %vm1527, %v7318
    %7397 = vst.msk [vmem:[#allocation3 + $0x1c0] sm:$0xff] %vm1527, %v7319
    %7398 = vst.msk [vmem:[#allocation3 + $0x1c8] sm:$0xff] %vm1527, %v7320
    %7399 = vst.msk [vmem:[#allocation3 + $0x1d0] sm:$0xff] %vm1527, %v7321
    %7400 = vst.msk [vmem:[#allocation3 + $0x1d8] sm:$0xff] %vm1527, %v7322
    %7401 = vst.msk [vmem:[#allocation3 + $0x1e0] sm:$0xff] %vm1527, %v7323
    %7402 = vst.msk [vmem:[#allocation3 + $0x1e8] sm:$0xff] %vm1527, %v7324
    %7403 = vst.msk [vmem:[#allocation3 + $0x1f0] sm:$0xff] %vm1527, %v7325
    %7404 = vst.msk [vmem:[#allocation3 + $0x1f8] sm:$0xff] %vm1527, %v7326
    %7405 = vst.msk [vmem:[#allocation3 + $0x200] sm:$0xff] %vm1527, %v7327
    %7406 = vst.msk [vmem:[#allocation3 + $0x208] sm:$0xff] %vm1527, %v7328
    %7407 = vst.msk [vmem:[#allocation3 + $0x210] sm:$0xff] %vm1527, %v7329
    %7408 = vst.msk [vmem:[#allocation3 + $0x218] sm:$0xff] %vm1527, %v7330
    %7409 = vst.msk [vmem:[#allocation3 + $0x220] sm:$0xff] %vm1527, %v7331
    %7410 = vst.msk [vmem:[#allocation3 + $0x228] sm:$0xff] %vm1527, %v7332
    %7411 = vst.msk [vmem:[#allocation3 + $0x230] sm:$0xff] %vm1527, %v7333
    %7412 = vst.msk [vmem:[#allocation3 + $0x238] sm:$0xff] %vm1527, %v7334
    %7413 = vst.msk [vmem:[#allocation3 + $0x240] sm:$0xff] %vm1527, %v7335
    %7414 = vst.msk [vmem:[#allocation3 + $0x248] sm:$0xff] %vm1527, %v7336
    %7415 = vst.msk [vmem:[#allocation3 + $0x250] sm:$0xff] %vm1527, %v7337
    %7416 = vst.msk [vmem:[#allocation3 + $0x258] sm:$0xff] %vm1527, %v7338
    %7417 = vst.msk [vmem:[#allocation3 + $0x260] sm:$0xff] %vm1527, %v7339
    %7418 = vst.msk [vmem:[#allocation3 + $0x268] sm:$0xff] %vm1527, %v7340
    %7419 = vst.msk [vmem:[#allocation3 + $0x270] sm:$0xff] %vm1527, %v7341
    %7420 = vst.msk [vmem:[#allocation3 + $0x278] sm:$0xff] %vm1527, %v7342
    %7421 = vst.msk [vmem:[#allocation3 + $0x280] sm:$0xff] %vm1527, %v7343
    %v7422 = vld [vmem:[#allocation3 + $0x18] sm:$0xff]
    %v7423 = vld [vmem:[#allocation3 + $0x20] sm:$0xff]
    %v7424 = vld [vmem:[#allocation3 + $0x28] sm:$0xff]
    %v7425 = vld [vmem:[#allocation3 + $0x30] sm:$0xff]
    %v7426 = vld [vmem:[#allocation3 + $0x38] sm:$0xff]
    %v7427 = vld [vmem:[#allocation3 + $0x40] sm:$0xff]
    %v7428 = vld [vmem:[#allocation3 + $0x48] sm:$0xff]
    %v7429 = vld [vmem:[#allocation3 + $0x50] sm:$0xff]
    %v7430 = vld [vmem:[#allocation3 + $0x58] sm:$0xff]
    %v7431 = vld [vmem:[#allocation3 + $0x60] sm:$0xff]
    %v7432 = vld [vmem:[#allocation3 + $0x68] sm:$0xff]
    %v7433 = vld [vmem:[#allocation3 + $0x70] sm:$0xff]
    %v7434 = vld [vmem:[#allocation3 + $0x78] sm:$0xff]
    %v7435 = vld [vmem:[#allocation3 + $0x80] sm:$0xff]
    %v7436 = vld [vmem:[#allocation3 + $0x88] sm:$0xff]
    %v7437 = vld [vmem:[#allocation3 + $0x90] sm:$0xff]
    %v7438 = vld [vmem:[#allocation3 + $0x98] sm:$0xff]
    %v7439 = vld [vmem:[#allocation3 + $0xa0] sm:$0xff]
    %v7440 = vld [vmem:[#allocation3 + $0xa8] sm:$0xff]
    %v7441 = vld [vmem:[#allocation3 + $0xb0] sm:$0xff]
    %v7442 = vld [vmem:[#allocation3 + $0xb8] sm:$0xff]
    %v7443 = vld [vmem:[#allocation3 + $0xc0] sm:$0xff]
    %v7444 = vld [vmem:[#allocation3 + $0xc8] sm:$0xff]
    %v7445 = vld [vmem:[#allocation3 + $0xd0] sm:$0xff]
    %v7446 = vld [vmem:[#allocation3 + $0xd8] sm:$0xff]
    %v7447 = vld [vmem:[#allocation3 + $0xe0] sm:$0xff]
    %v7448 = vld [vmem:[#allocation3 + $0xe8] sm:$0xff]
    %v7449 = vld [vmem:[#allocation3 + $0xf0] sm:$0xff]
    %v7450 = vld [vmem:[#allocation3 + $0xf8] sm:$0xff]
    %v7451 = vld [vmem:[#allocation3 + $0x100] sm:$0xff]
    %v7452 = vld [vmem:[#allocation3 + $0x108] sm:$0xff]
    %v7453 = vld [vmem:[#allocation3 + $0x110] sm:$0xff]
    %v7454 = vld [vmem:[#allocation3 + $0x118] sm:$0xff]
    %v7455 = vld [vmem:[#allocation3 + $0x120] sm:$0xff]
    %v7456 = vld [vmem:[#allocation3 + $0x128] sm:$0xff]
    %v7457 = vld [vmem:[#allocation3 + $0x130] sm:$0xff]
    %v7458 = vld [vmem:[#allocation3 + $0x138] sm:$0xff]
    %v7459 = vld [vmem:[#allocation3 + $0x140] sm:$0xff]
    %v7460 = vld [vmem:[#allocation3 + $0x148] sm:$0xff]
    %v7461 = vld [vmem:[#allocation3 + $0x150] sm:$0xff]
    %v7462 = vld [vmem:[#allocation3 + $0x158] sm:$0xff]
    %v7463 = vld [vmem:[#allocation3 + $0x160] sm:$0xff]
    %v7464 = vld [vmem:[#allocation3 + $0x168] sm:$0xff]
    %v7465 = vld [vmem:[#allocation3 + $0x170] sm:$0xff]
    %v7466 = vld [vmem:[#allocation3 + $0x178] sm:$0xff]
    %v7467 = vld [vmem:[#allocation3 + $0x180] sm:$0xff]
    %v7468 = vld [vmem:[#allocation3 + $0x188] sm:$0xff]
    %v7469 = vld [vmem:[#allocation3 + $0x190] sm:$0xff]
    %v7470 = vld [vmem:[#allocation3 + $0x198] sm:$0xff]
    %v7471 = vld [vmem:[#allocation3 + $0x1a0] sm:$0xff]
    %v7472 = vld [vmem:[#allocation3 + $0x1a8] sm:$0xff]
    %v7473 = vld [vmem:[#allocation3 + $0x1b0] sm:$0xff]
    %v7474 = vld [vmem:[#allocation3 + $0x1b8] sm:$0xff]
    %v7475 = vld [vmem:[#allocation3 + $0x1c0] sm:$0xff]
    %v7476 = vld [vmem:[#allocation3 + $0x1c8] sm:$0xff]
    %v7477 = vld [vmem:[#allocation3 + $0x1d0] sm:$0xff]
    %v7478 = vld [vmem:[#allocation3 + $0x1d8] sm:$0xff]
    %v7479 = vld [vmem:[#allocation3 + $0x1e0] sm:$0xff]
    %v7480 = vld [vmem:[#allocation3 + $0x1e8] sm:$0xff]
    %v7481 = vld [vmem:[#allocation3 + $0x1f0] sm:$0xff]
    %v7482 = vld [vmem:[#allocation3 + $0x1f8] sm:$0xff]
    %v7483 = vld [vmem:[#allocation3 + $0x200] sm:$0xff]
    %v7484 = vld [vmem:[#allocation3 + $0x208] sm:$0xff]
    %v7485 = vld [vmem:[#allocation3 + $0x210] sm:$0xff]
    %v7486 = vld [vmem:[#allocation3 + $0x218] sm:$0xff]
    %v7487 = vld [vmem:[#allocation3 + $0x220] sm:$0xff]
    %v7488 = vld [vmem:[#allocation3 + $0x228] sm:$0xff]
    %v7489 = vld [vmem:[#allocation3 + $0x230] sm:$0xff]
    %v7490 = vld [vmem:[#allocation3 + $0x238] sm:$0xff]
    %v7491 = vld [vmem:[#allocation3 + $0x240] sm:$0xff]
    %v7492 = vld [vmem:[#allocation3 + $0x248] sm:$0xff]
    %v7493 = vld [vmem:[#allocation3 + $0x250] sm:$0xff]
    %v7494 = vld [vmem:[#allocation3 + $0x258] sm:$0xff]
    %v7495 = vld [vmem:[#allocation3 + $0x260] sm:$0xff]
    %v7496 = vld [vmem:[#allocation3 + $0x268] sm:$0xff]
    %v7497 = vld [vmem:[#allocation3 + $0x270] sm:$0xff]
    %v7498 = vld [vmem:[#allocation3 + $0x278] sm:$0xff]
    %v7499 = vld [vmem:[#allocation3 + $0x280] sm:$0xff]
    %v7500 = vld [vmem:[#allocation2 + $0x2a] sm:$0xff]
    %v7501 = vld [vmem:[#allocation2 + $0x32] sm:$0xff]
    %v7502 = vld [vmem:[#allocation2 + $0x3a] sm:$0xff]
    %v7503 = vld [vmem:[#allocation2 + $0x42] sm:$0xff]
    %v7504 = vld [vmem:[#allocation2 + $0x4a] sm:$0xff]
    %v7505 = vld [vmem:[#allocation2 + $0x52] sm:$0xff]
    %v7506 = vld [vmem:[#allocation2 + $0x5a] sm:$0xff]
    %v7507 = vld [vmem:[#allocation2 + $0x62] sm:$0xff]
    %v7508 = vld [vmem:[#allocation2 + $0x6a] sm:$0xff]
    %v7509 = vld [vmem:[#allocation2 + $0x72] sm:$0xff]
    %v7510 = vld [vmem:[#allocation2 + $0x7a] sm:$0xff]
    %v7511 = vld [vmem:[#allocation2 + $0x82] sm:$0xff]
    %v7512 = vld [vmem:[#allocation2 + $0x8a] sm:$0xff]
    %v7513 = vld [vmem:[#allocation2 + $0x92] sm:$0xff]
    %v7514 = vld [vmem:[#allocation2 + $0x9a] sm:$0xff]
    %v7515 = vld [vmem:[#allocation2 + $0xa2] sm:$0xff]
    %v7516 = vld [vmem:[#allocation2 + $0xaa] sm:$0xff]
    %v7517 = vld [vmem:[#allocation2 + $0xb2] sm:$0xff]
    %v7518 = vld [vmem:[#allocation2 + $0xba] sm:$0xff]
    %v7519 = vld [vmem:[#allocation2 + $0xc2] sm:$0xff]
    %v7520 = vld [vmem:[#allocation2 + $0xca] sm:$0xff]
    %v7521 = vld [vmem:[#allocation2 + $0xd2] sm:$0xff]
    %v7522 = vld [vmem:[#allocation2 + $0xda] sm:$0xff]
    %v7523 = vld [vmem:[#allocation2 + $0xe2] sm:$0xff]
    %v7524 = vld [vmem:[#allocation2 + $0xea] sm:$0xff]
    %v7525 = vld [vmem:[#allocation2 + $0xf2] sm:$0xff]
    %v7526 = vld [vmem:[#allocation2 + $0xfa] sm:$0xff]
    %v7527 = vld [vmem:[#allocation2 + $0x102] sm:$0xff]
    %v7528 = vld [vmem:[#allocation2 + $0x10a] sm:$0xff]
    %v7529 = vld [vmem:[#allocation2 + $0x112] sm:$0xff]
    %v7530 = vld [vmem:[#allocation2 + $0x11a] sm:$0xff]
    %v7531 = vld [vmem:[#allocation2 + $0x122] sm:$0xff]
    %v7532 = vld [vmem:[#allocation2 + $0x12a] sm:$0xff]
    %v7533 = vld [vmem:[#allocation2 + $0x132] sm:$0xff]
    %v7534 = vld [vmem:[#allocation2 + $0x13a] sm:$0xff]
    %v7535 = vld [vmem:[#allocation2 + $0x142] sm:$0xff]
    %v7536 = vld [vmem:[#allocation2 + $0x14a] sm:$0xff]
    %v7537 = vld [vmem:[#allocation2 + $0x152] sm:$0xff]
    %v7538 = vld [vmem:[#allocation2 + $0x15a] sm:$0xff]
    %v7539 = vld [vmem:[#allocation2 + $0x162] sm:$0xff]
    %v7540 = vld [vmem:[#allocation2 + $0x16a] sm:$0xff]
    %v7541 = vld [vmem:[#allocation2 + $0x172] sm:$0xff]
    %v7542 = vld [vmem:[#allocation2 + $0x17a] sm:$0xff]
    %v7543 = vld [vmem:[#allocation2 + $0x182] sm:$0xff]
    %v7544 = vld [vmem:[#allocation2 + $0x18a] sm:$0xff]
    %v7545 = vld [vmem:[#allocation2 + $0x192] sm:$0xff]
    %v7546 = vld [vmem:[#allocation2 + $0x19a] sm:$0xff]
    %v7547 = vld [vmem:[#allocation2 + $0x1a2] sm:$0xff]
    %v7548 = vld [vmem:[#allocation2 + $0x1aa] sm:$0xff]
    %v7549 = vld [vmem:[#allocation2 + $0x1b2] sm:$0xff]
    %v7550 = vld [vmem:[#allocation2 + $0x1ba] sm:$0xff]
    %v7551 = vld [vmem:[#allocation2 + $0x1c2] sm:$0xff]
    %v7552 = vld [vmem:[#allocation2 + $0x1ca] sm:$0xff]
    %v7553 = vld [vmem:[#allocation2 + $0x1d2] sm:$0xff]
    %v7554 = vld [vmem:[#allocation2 + $0x1da] sm:$0xff]
    %v7555 = vld [vmem:[#allocation2 + $0x1e2] sm:$0xff]
    %v7556 = vld [vmem:[#allocation2 + $0x1ea] sm:$0xff]
    %v7557 = vld [vmem:[#allocation2 + $0x1f2] sm:$0xff]
    %v7558 = vld [vmem:[#allocation2 + $0x1fa] sm:$0xff]
    %v7559 = vld [vmem:[#allocation2 + $0x202] sm:$0xff]
    %v7560 = vld [vmem:[#allocation2 + $0x20a] sm:$0xff]
    %v7561 = vld [vmem:[#allocation2 + $0x212] sm:$0xff]
    %v7562 = vld [vmem:[#allocation2 + $0x21a] sm:$0xff]
    %v7563 = vld [vmem:[#allocation2 + $0x222] sm:$0xff]
    %v7564 = vld [vmem:[#allocation2 + $0x22a] sm:$0xff]
    %v7565 = vld [vmem:[#allocation2 + $0x232] sm:$0xff]
    %v7566 = vld [vmem:[#allocation2 + $0x23a] sm:$0xff]
    %v7567 = vld [vmem:[#allocation2 + $0x242] sm:$0xff]
    %v7568 = vld [vmem:[#allocation2 + $0x24a] sm:$0xff]
    %v7569 = vld [vmem:[#allocation2 + $0x252] sm:$0xff]
    %v7570 = vld [vmem:[#allocation2 + $0x25a] sm:$0xff]
    %v7571 = vld [vmem:[#allocation2 + $0x262] sm:$0xff]
    %v7572 = vld [vmem:[#allocation2 + $0x26a] sm:$0xff]
    %v7573 = vld [vmem:[#allocation2 + $0x272] sm:$0xff]
    %v7574 = vld [vmem:[#allocation2 + $0x27a] sm:$0xff]
    %v7575 = vld [vmem:[#allocation2 + $0x282] sm:$0xff]
    %v7576 = vld [vmem:[#allocation2 + $0x28a] sm:$0xff]
    %v7577 = vld [vmem:[#allocation2 + $0x292] sm:$0xff]
    %v7578 = vpack.c.bf16 %v7501, %v7500
    %v7579 = vpack.c.bf16 %v7503, %v7502
    %v7580 = vpack.c.bf16 %v7505, %v7504
    %v7581 = vpack.c.bf16 %v7507, %v7506
    %v7582 = vpack.c.bf16 %v7509, %v7508
    %v7583 = vpack.c.bf16 %v7511, %v7510
    %v7584 = vpack.c.bf16 %v7513, %v7512
    %v7585 = vpack.c.bf16 %v7515, %v7514
    %v7586 = vpack.c.bf16 %v7517, %v7516
    %v7587 = vpack.c.bf16 %v7519, %v7518
    %v7588 = vpack.c.bf16 %v7521, %v7520
    %v7589 = vpack.c.bf16 %v7523, %v7522
    %v7590 = vpack.c.bf16 %v7525, %v7524
    %v7591 = vpack.c.bf16 %v7527, %v7526
    %v7592 = vpack.c.bf16 %v7529, %v7528
    %v7593 = vpack.c.bf16 %v7531, %v7530
    %v7594 = vpack.c.bf16 %v7533, %v7532
    %v7595 = vpack.c.bf16 %v7535, %v7534
    %v7596 = vpack.c.bf16 %v7537, %v7536
    %v7597 = vpack.c.bf16 %v7539, %v7538
    %v7598 = vpack.c.bf16 %v7541, %v7540
    %v7599 = vpack.c.bf16 %v7543, %v7542
    %v7600 = vpack.c.bf16 %v7545, %v7544
    %v7601 = vpack.c.bf16 %v7547, %v7546
    %v7602 = vpack.c.bf16 %v7549, %v7548
    %v7603 = vpack.c.bf16 %v7551, %v7550
    %v7604 = vpack.c.bf16 %v7553, %v7552
    %v7605 = vpack.c.bf16 %v7555, %v7554
    %v7606 = vpack.c.bf16 %v7557, %v7556
    %v7607 = vpack.c.bf16 %v7559, %v7558
    %v7608 = vpack.c.bf16 %v7561, %v7560
    %v7609 = vpack.c.bf16 %v7563, %v7562
    %v7610 = vpack.c.bf16 %v7565, %v7564
    %v7611 = vpack.c.bf16 %v7567, %v7566
    %v7612 = vpack.c.bf16 %v7569, %v7568
    %v7613 = vpack.c.bf16 %v7571, %v7570
    %v7614 = vpack.c.bf16 %v7573, %v7572
    %v7615 = vpack.c.bf16 %v7575, %v7574
    %v7616 = vpack.c.bf16 %v7577, %v7576
    %s7617 = scalar_lea.vmem %s4, 28
    %v7618 = vld [vmem:[%s7617] sm:$0xf]
    %v7620 = vsel %vm1527, %v7578, 0
    %v7623 = vsel %vm1527, %v7579, 0
    %v7626 = vsel %vm1527, %v7580, 0
    %v7629 = vsel %vm1527, %v7581, 0
    %v7632 = vsel %vm1527, %v7582, 0
    %v7635 = vsel %vm1527, %v7583, 0
    %v7638 = vsel %vm1527, %v7584, 0
    %v7641 = vsel %vm1527, %v7585, 0
    %v7644 = vsel %vm1527, %v7586, 0
    %v7647 = vsel %vm1527, %v7587, 0
    %v7650 = vsel %vm1527, %v7588, 0
    %v7653 = vsel %vm1527, %v7589, 0
    %v7656 = vsel %vm1527, %v7590, 0
    %v7659 = vsel %vm1527, %v7591, 0
    %v7662 = vsel %vm1527, %v7592, 0
    %v7665 = vsel %vm1527, %v7593, 0
    %v7668 = vsel %vm1527, %v7594, 0
    %v7671 = vsel %vm1527, %v7595, 0
    %v7674 = vsel %vm1527, %v7596, 0
    %v7677 = vsel %vm1527, %v7597, 0
    %v7680 = vsel %vm1527, %v7598, 0
    %v7683 = vsel %vm1527, %v7599, 0
    %v7686 = vsel %vm1527, %v7600, 0
    %v7689 = vsel %vm1527, %v7601, 0
    %v7692 = vsel %vm1527, %v7602, 0
    %v7695 = vsel %vm1527, %v7603, 0
    %v7698 = vsel %vm1527, %v7604, 0
    %v7701 = vsel %vm1527, %v7605, 0
    %v7704 = vsel %vm1527, %v7606, 0
    %v7707 = vsel %vm1527, %v7607, 0
    %v7710 = vsel %vm1527, %v7608, 0
    %v7713 = vsel %vm1527, %v7609, 0
    %v7716 = vsel %vm1527, %v7610, 0
    %v7719 = vsel %vm1527, %v7611, 0
    %v7722 = vsel %vm1527, %v7612, 0
    %v7725 = vsel %vm1527, %v7613, 0
    %v7728 = vsel %vm1527, %v7614, 0
    %v7731 = vsel %vm1527, %v7615, 0
    %v7734 = vsel %vm1527, %v7616, 0
    %v7737 = vsel %vm2009, %v7618, 0
    %7739 = vmatprep.subr.bf16.mxu0 0
    %7740 = vmatpush1.bf16.msra.mxu0 %v7737
    %7741 = vmatprep.subr.bf16.mxu0 0
    %7742 = vmatpush1.bf16.msra.mxu0 0
    %7743 = vmatprep.subr.bf16.mxu0 0
    %7744 = vmatpush1.bf16.msra.mxu0 0
    %7745 = vmatprep.subr.bf16.mxu0 0
    %7746 = vmatpush1.bf16.msra.mxu0 0
    %7747 = vmatprep.subr.bf16.mxu0 0
    %7748 = vmatpush1.bf16.msra.mxu0 0
    %7749 = vmatprep.subr.bf16.mxu0 0
    %7750 = vmatpush1.bf16.msra.mxu0 0
    %7751 = vmatprep.subr.bf16.mxu0 0
    %7752 = vmatpush1.bf16.msra.mxu0 0
    %7753 = vmatprep.subr.bf16.mxu0 0
    %7754 = vmatpush1.bf16.msra.mxu0 0
    %7755 = vmatprep.subr.bf16.mxu0 0
    %7756 = vmatpush1.bf16.msra.mxu0 0
    %7757 = vmatprep.subr.bf16.mxu0 0
    %7758 = vmatpush1.bf16.msra.mxu0 0
    %7759 = vmatprep.subr.bf16.mxu0 0
    %7760 = vmatpush1.bf16.msra.mxu0 0
    %7761 = vmatprep.subr.bf16.mxu0 0
    %7762 = vmatpush1.bf16.msra.mxu0 0
    %7763 = vmatprep.subr.bf16.mxu0 0
    %7764 = vmatpush1.bf16.msra.mxu0 0
    %7765 = vmatprep.subr.bf16.mxu0 0
    %7766 = vmatpush1.bf16.msra.mxu0 0
    %7767 = vmatprep.subr.bf16.mxu0 0
    %7768 = vmatpush1.bf16.msra.mxu0 0
    %7769 = vmatprep.subr.bf16.mxu0 0
    %7770 = vmatpush1.bf16.msra.mxu0 0
    %7771 = vmatprep.mubr.bf16.mxu0 0
    %7772 = vmatmul.mubr.bf16.gmra.mrb[0].mxu0 %v7620
    %v7773 = vpop.f32.mrb[0].mxu0
    %v7774 = vadd.f32 0.0, %v7773
    %v7775 = vpop.f32.mrb[0].mxu0
    %v7776 = vpop.f32.mrb[0].mxu0
    %v7777 = vadd.f32 0.0, %v7776
    %v7778 = vpop.f32.mrb[0].mxu0
    %7779 = vmatprep.mubr.bf16.mxu0 0
    %7780 = vmatmul.mubr.bf16.gmra.mrb[0].mxu0 %v7623
    %v7781 = vpop.f32.mrb[0].mxu0
    %v7782 = vadd.f32 0.0, %v7781
    %v7783 = vpop.f32.mrb[0].mxu0
    %v7784 = vpop.f32.mrb[0].mxu0
    %v7785 = vadd.f32 0.0, %v7784
    %v7786 = vpop.f32.mrb[0].mxu0
    %7787 = vmatprep.mubr.bf16.mxu0 0
    %7788 = vmatmul.mubr.bf16.gmra.mrb[0].mxu0 %v7626
    %v7789 = vpop.f32.mrb[0].mxu0
    %v7790 = vadd.f32 0.0, %v7789
    %v7791 = vpop.f32.mrb[0].mxu0
    %v7792 = vpop.f32.mrb[0].mxu0
    %v7793 = vadd.f32 0.0, %v7792
    %v7794 = vpop.f32.mrb[0].mxu0
    %7795 = vmatprep.mubr.bf16.mxu0 0
    %7796 = vmatmul.mubr.bf16.gmra.mrb[0].mxu0 %v7629
    %v7797 = vpop.f32.mrb[0].mxu0
    %v7798 = vadd.f32 0.0, %v7797
    %v7799 = vpop.f32.mrb[0].mxu0
    %v7800 = vpop.f32.mrb[0].mxu0
    %v7801 = vadd.f32 0.0, %v7800
    %v7802 = vpop.f32.mrb[0].mxu0
    %7803 = vmatprep.mubr.bf16.mxu0 0
    %7804 = vmatmul.mubr.bf16.gmra.mrb[0].mxu0 %v7632
    %v7805 = vpop.f32.mrb[0].mxu0
    %v7806 = vadd.f32 0.0, %v7805
    %v7807 = vpop.f32.mrb[0].mxu0
    %v7808 = vpop.f32.mrb[0].mxu0
    %v7809 = vadd.f32 0.0, %v7808
    %v7810 = vpop.f32.mrb[0].mxu0
    %7811 = vmatprep.mubr.bf16.mxu0 0
    %7812 = vmatmul.mubr.bf16.gmra.mrb[0].mxu0 %v7635
    %v7813 = vpop.f32.mrb[0].mxu0
    %v7814 = vadd.f32 0.0, %v7813
    %v7815 = vpop.f32.mrb[0].mxu0
    %v7816 = vpop.f32.mrb[0].mxu0
    %v7817 = vadd.f32 0.0, %v7816
    %v7818 = vpop.f32.mrb[0].mxu0
    %7819 = vmatprep.mubr.bf16.mxu0 0
    %7820 = vmatmul.mubr.bf16.gmra.mrb[0].mxu0 %v7638
    %v7821 = vpop.f32.mrb[0].mxu0
    %v7822 = vadd.f32 0.0, %v7821
    %v7823 = vpop.f32.mrb[0].mxu0
    %v7824 = vpop.f32.mrb[0].mxu0
    %v7825 = vadd.f32 0.0, %v7824
    %v7826 = vpop.f32.mrb[0].mxu0
    %7827 = vmatprep.mubr.bf16.mxu0 0
    %7828 = vmatmul.mubr.bf16.gmra.mrb[0].mxu0 %v7641
    %v7829 = vpop.f32.mrb[0].mxu0
    %v7830 = vadd.f32 0.0, %v7829
    %v7831 = vpop.f32.mrb[0].mxu0
    %v7832 = vpop.f32.mrb[0].mxu0
    %v7833 = vadd.f32 0.0, %v7832
    %v7834 = vpop.f32.mrb[0].mxu0
    %7835 = vmatprep.mubr.bf16.mxu0 0
    %7836 = vmatmul.mubr.bf16.gmra.mrb[0].mxu0 %v7644
    %v7837 = vpop.f32.mrb[0].mxu0
    %v7838 = vadd.f32 0.0, %v7837
    %v7839 = vpop.f32.mrb[0].mxu0
    %v7840 = vpop.f32.mrb[0].mxu0
    %v7841 = vadd.f32 0.0, %v7840
    %v7842 = vpop.f32.mrb[0].mxu0
    %7843 = vmatprep.mubr.bf16.mxu0 0
    %7844 = vmatmul.mubr.bf16.gmra.mrb[0].mxu0 %v7647
    %v7845 = vpop.f32.mrb[0].mxu0
    %v7846 = vadd.f32 0.0, %v7845
    %v7847 = vpop.f32.mrb[0].mxu0
    %v7848 = vpop.f32.mrb[0].mxu0
    %v7849 = vadd.f32 0.0, %v7848
    %v7850 = vpop.f32.mrb[0].mxu0
    %7851 = vmatprep.mubr.bf16.mxu0 0
    %7852 = vmatmul.mubr.bf16.gmra.mrb[0].mxu0 %v7650
    %v7853 = vpop.f32.mrb[0].mxu0
    %v7854 = vadd.f32 0.0, %v7853
    %v7855 = vpop.f32.mrb[0].mxu0
    %v7856 = vpop.f32.mrb[0].mxu0
    %v7857 = vadd.f32 0.0, %v7856
    %v7858 = vpop.f32.mrb[0].mxu0
    %7859 = vmatprep.mubr.bf16.mxu0 0
    %7860 = vmatmul.mubr.bf16.gmra.mrb[0].mxu0 %v7653
    %v7861 = vpop.f32.mrb[0].mxu0
    %v7862 = vadd.f32 0.0, %v7861
    %v7863 = vpop.f32.mrb[0].mxu0
    %v7864 = vpop.f32.mrb[0].mxu0
    %v7865 = vadd.f32 0.0, %v7864
    %v7866 = vpop.f32.mrb[0].mxu0
    %7867 = vmatprep.mubr.bf16.mxu0 0
    %7868 = vmatmul.mubr.bf16.gmra.mrb[0].mxu0 %v7656
    %v7869 = vpop.f32.mrb[0].mxu0
    %v7870 = vadd.f32 0.0, %v7869
    %v7871 = vpop.f32.mrb[0].mxu0
    %v7872 = vpop.f32.mrb[0].mxu0
    %v7873 = vadd.f32 0.0, %v7872
    %v7874 = vpop.f32.mrb[0].mxu0
    %7875 = vmatprep.mubr.bf16.mxu0 0
    %7876 = vmatmul.mubr.bf16.gmra.mrb[0].mxu0 %v7659
    %v7877 = vpop.f32.mrb[0].mxu0
    %v7878 = vadd.f32 0.0, %v7877
    %v7879 = vpop.f32.mrb[0].mxu0
    %v7880 = vpop.f32.mrb[0].mxu0
    %v7881 = vadd.f32 0.0, %v7880
    %v7882 = vpop.f32.mrb[0].mxu0
    %7883 = vmatprep.mubr.bf16.mxu0 0
    %7884 = vmatmul.mubr.bf16.gmra.mrb[0].mxu0 %v7662
    %v7885 = vpop.f32.mrb[0].mxu0
    %v7886 = vadd.f32 0.0, %v7885
    %v7887 = vpop.f32.mrb[0].mxu0
    %v7888 = vpop.f32.mrb[0].mxu0
    %v7889 = vadd.f32 0.0, %v7888
    %v7890 = vpop.f32.mrb[0].mxu0
    %7891 = vmatprep.mubr.bf16.mxu0 0
    %7892 = vmatmul.mubr.bf16.gmra.mrb[0].mxu0 %v7665
    %v7893 = vpop.f32.mrb[0].mxu0
    %v7894 = vadd.f32 0.0, %v7893
    %v7895 = vpop.f32.mrb[0].mxu0
    %v7896 = vpop.f32.mrb[0].mxu0
    %v7897 = vadd.f32 0.0, %v7896
    %v7898 = vpop.f32.mrb[0].mxu0
    %7899 = vmatprep.mubr.bf16.mxu0 0
    %7900 = vmatmul.mubr.bf16.gmra.mrb[0].mxu0 %v7668
    %v7901 = vpop.f32.mrb[0].mxu0
    %v7902 = vadd.f32 0.0, %v7901
    %v7903 = vpop.f32.mrb[0].mxu0
    %v7904 = vpop.f32.mrb[0].mxu0
    %v7905 = vadd.f32 0.0, %v7904
    %v7906 = vpop.f32.mrb[0].mxu0
    %7907 = vmatprep.mubr.bf16.mxu0 0
    %7908 = vmatmul.mubr.bf16.gmra.mrb[0].mxu0 %v7671
    %v7909 = vpop.f32.mrb[0].mxu0
    %v7910 = vadd.f32 0.0, %v7909
    %v7911 = vpop.f32.mrb[0].mxu0
    %v7912 = vpop.f32.mrb[0].mxu0
    %v7913 = vadd.f32 0.0, %v7912
    %v7914 = vpop.f32.mrb[0].mxu0
    %7915 = vmatprep.mubr.bf16.mxu0 0
    %7916 = vmatmul.mubr.bf16.gmra.mrb[0].mxu0 %v7674
    %v7917 = vpop.f32.mrb[0].mxu0
    %v7918 = vadd.f32 0.0, %v7917
    %v7919 = vpop.f32.mrb[0].mxu0
    %v7920 = vpop.f32.mrb[0].mxu0
    %v7921 = vadd.f32 0.0, %v7920
    %v7922 = vpop.f32.mrb[0].mxu0
    %7923 = vmatprep.mubr.bf16.mxu0 0
    %7924 = vmatmul.mubr.bf16.gmra.mrb[0].mxu0 %v7677
    %v7925 = vpop.f32.mrb[0].mxu0
    %v7926 = vadd.f32 0.0, %v7925
    %v7927 = vpop.f32.mrb[0].mxu0
    %v7928 = vpop.f32.mrb[0].mxu0
    %v7929 = vadd.f32 0.0, %v7928
    %v7930 = vpop.f32.mrb[0].mxu0
    %7931 = vmatprep.mubr.bf16.mxu0 0
    %7932 = vmatmul.mubr.bf16.gmra.mrb[0].mxu0 %v7680
    %v7933 = vpop.f32.mrb[0].mxu0
    %v7934 = vadd.f32 0.0, %v7933
    %v7935 = vpop.f32.mrb[0].mxu0
    %v7936 = vpop.f32.mrb[0].mxu0
    %v7937 = vadd.f32 0.0, %v7936
    %v7938 = vpop.f32.mrb[0].mxu0
    %7939 = vmatprep.mubr.bf16.mxu0 0
    %7940 = vmatmul.mubr.bf16.gmra.mrb[0].mxu0 %v7683
    %v7941 = vpop.f32.mrb[0].mxu0
    %v7942 = vadd.f32 0.0, %v7941
    %v7943 = vpop.f32.mrb[0].mxu0
    %v7944 = vpop.f32.mrb[0].mxu0
    %v7945 = vadd.f32 0.0, %v7944
    %v7946 = vpop.f32.mrb[0].mxu0
    %7947 = vmatprep.mubr.bf16.mxu0 0
    %7948 = vmatmul.mubr.bf16.gmra.mrb[0].mxu0 %v7686
    %v7949 = vpop.f32.mrb[0].mxu0
    %v7950 = vadd.f32 0.0, %v7949
    %v7951 = vpop.f32.mrb[0].mxu0
    %v7952 = vpop.f32.mrb[0].mxu0
    %v7953 = vadd.f32 0.0, %v7952
    %v7954 = vpop.f32.mrb[0].mxu0
    %7955 = vmatprep.mubr.bf16.mxu0 0
    %7956 = vmatmul.mubr.bf16.gmra.mrb[0].mxu0 %v7689
    %v7957 = vpop.f32.mrb[0].mxu0
    %v7958 = vadd.f32 0.0, %v7957
    %v7959 = vpop.f32.mrb[0].mxu0
    %v7960 = vpop.f32.mrb[0].mxu0
    %v7961 = vadd.f32 0.0, %v7960
    %v7962 = vpop.f32.mrb[0].mxu0
    %7963 = vmatprep.mubr.bf16.mxu0 0
    %7964 = vmatmul.mubr.bf16.gmra.mrb[0].mxu0 %v7692
    %v7965 = vpop.f32.mrb[0].mxu0
    %v7966 = vadd.f32 0.0, %v7965
    %v7967 = vpop.f32.mrb[0].mxu0
    %v7968 = vpop.f32.mrb[0].mxu0
    %v7969 = vadd.f32 0.0, %v7968
    %v7970 = vpop.f32.mrb[0].mxu0
    %7971 = vmatprep.mubr.bf16.mxu0 0
    %7972 = vmatmul.mubr.bf16.gmra.mrb[0].mxu0 %v7695
    %v7973 = vpop.f32.mrb[0].mxu0
    %v7974 = vadd.f32 0.0, %v7973
    %v7975 = vpop.f32.mrb[0].mxu0
    %v7976 = vpop.f32.mrb[0].mxu0
    %v7977 = vadd.f32 0.0, %v7976
    %v7978 = vpop.f32.mrb[0].mxu0
    %7979 = vmatprep.mubr.bf16.mxu0 0
    %7980 = vmatmul.mubr.bf16.gmra.mrb[0].mxu0 %v7698
    %v7981 = vpop.f32.mrb[0].mxu0
    %v7982 = vadd.f32 0.0, %v7981
    %v7983 = vpop.f32.mrb[0].mxu0
    %v7984 = vpop.f32.mrb[0].mxu0
    %v7985 = vadd.f32 0.0, %v7984
    %v7986 = vpop.f32.mrb[0].mxu0
    %7987 = vmatprep.mubr.bf16.mxu0 0
    %7988 = vmatmul.mubr.bf16.gmra.mrb[0].mxu0 %v7701
    %v7989 = vpop.f32.mrb[0].mxu0
    %v7990 = vadd.f32 0.0, %v7989
    %v7991 = vpop.f32.mrb[0].mxu0
    %v7992 = vpop.f32.mrb[0].mxu0
    %v7993 = vadd.f32 0.0, %v7992
    %v7994 = vpop.f32.mrb[0].mxu0
    %7995 = vmatprep.mubr.bf16.mxu0 0
    %7996 = vmatmul.mubr.bf16.gmra.mrb[0].mxu0 %v7704
    %v7997 = vpop.f32.mrb[0].mxu0
    %v7998 = vadd.f32 0.0, %v7997
    %v7999 = vpop.f32.mrb[0].mxu0
    %v8000 = vpop.f32.mrb[0].mxu0
    %v8001 = vadd.f32 0.0, %v8000
    %v8002 = vpop.f32.mrb[0].mxu0
    %8003 = vmatprep.mubr.bf16.mxu0 0
    %8004 = vmatmul.mubr.bf16.gmra.mrb[0].mxu0 %v7707
    %v8005 = vpop.f32.mrb[0].mxu0
    %v8006 = vadd.f32 0.0, %v8005
    %v8007 = vpop.f32.mrb[0].mxu0
    %v8008 = vpop.f32.mrb[0].mxu0
    %v8009 = vadd.f32 0.0, %v8008
    %v8010 = vpop.f32.mrb[0].mxu0
    %8011 = vmatprep.mubr.bf16.mxu0 0
    %8012 = vmatmul.mubr.bf16.gmra.mrb[0].mxu0 %v7710
    %v8013 = vpop.f32.mrb[0].mxu0
    %v8014 = vadd.f32 0.0, %v8013
    %v8015 = vpop.f32.mrb[0].mxu0
    %v8016 = vpop.f32.mrb[0].mxu0
    %v8017 = vadd.f32 0.0, %v8016
    %v8018 = vpop.f32.mrb[0].mxu0
    %8019 = vmatprep.mubr.bf16.mxu0 0
    %8020 = vmatmul.mubr.bf16.gmra.mrb[0].mxu0 %v7713
    %v8021 = vpop.f32.mrb[0].mxu0
    %v8022 = vadd.f32 0.0, %v8021
    %v8023 = vpop.f32.mrb[0].mxu0
    %v8024 = vpop.f32.mrb[0].mxu0
    %v8025 = vadd.f32 0.0, %v8024
    %v8026 = vpop.f32.mrb[0].mxu0
    %8027 = vmatprep.mubr.bf16.mxu0 0
    %8028 = vmatmul.mubr.bf16.gmra.mrb[0].mxu0 %v7716
    %v8029 = vpop.f32.mrb[0].mxu0
    %v8030 = vadd.f32 0.0, %v8029
    %v8031 = vpop.f32.mrb[0].mxu0
    %v8032 = vpop.f32.mrb[0].mxu0
    %v8033 = vadd.f32 0.0, %v8032
    %v8034 = vpop.f32.mrb[0].mxu0
    %8035 = vmatprep.mubr.bf16.mxu0 0
    %8036 = vmatmul.mubr.bf16.gmra.mrb[0].mxu0 %v7719
    %v8037 = vpop.f32.mrb[0].mxu0
    %v8038 = vadd.f32 0.0, %v8037
    %v8039 = vpop.f32.mrb[0].mxu0
    %v8040 = vpop.f32.mrb[0].mxu0
    %v8041 = vadd.f32 0.0, %v8040
    %v8042 = vpop.f32.mrb[0].mxu0
    %8043 = vmatprep.mubr.bf16.mxu0 0
    %8044 = vmatmul.mubr.bf16.gmra.mrb[0].mxu0 %v7722
    %v8045 = vpop.f32.mrb[0].mxu0
    %v8046 = vadd.f32 0.0, %v8045
    %v8047 = vpop.f32.mrb[0].mxu0
    %v8048 = vpop.f32.mrb[0].mxu0
    %v8049 = vadd.f32 0.0, %v8048
    %v8050 = vpop.f32.mrb[0].mxu0
    %8051 = vmatprep.mubr.bf16.mxu0 0
    %8052 = vmatmul.mubr.bf16.gmra.mrb[0].mxu0 %v7725
    %v8053 = vpop.f32.mrb[0].mxu0
    %v8054 = vadd.f32 0.0, %v8053
    %v8055 = vpop.f32.mrb[0].mxu0
    %v8056 = vpop.f32.mrb[0].mxu0
    %v8057 = vadd.f32 0.0, %v8056
    %v8058 = vpop.f32.mrb[0].mxu0
    %8059 = vmatprep.mubr.bf16.mxu0 0
    %8060 = vmatmul.mubr.bf16.gmra.mrb[0].mxu0 %v7728
    %v8061 = vpop.f32.mrb[0].mxu0
    %v8062 = vadd.f32 0.0, %v8061
    %v8063 = vpop.f32.mrb[0].mxu0
    %v8064 = vpop.f32.mrb[0].mxu0
    %v8065 = vadd.f32 0.0, %v8064
    %v8066 = vpop.f32.mrb[0].mxu0
    %8067 = vmatprep.mubr.bf16.mxu0 0
    %8068 = vmatmul.mubr.bf16.gmra.mrb[0].mxu0 %v7731
    %v8069 = vpop.f32.mrb[0].mxu0
    %v8070 = vadd.f32 0.0, %v8069
    %v8071 = vpop.f32.mrb[0].mxu0
    %v8072 = vpop.f32.mrb[0].mxu0
    %v8073 = vadd.f32 0.0, %v8072
    %v8074 = vpop.f32.mrb[0].mxu0
    %8075 = vmatprep.mubr.bf16.mxu0 0
    %8076 = vmatmul.mubr.bf16.gmra.mrb[0].mxu0 %v7734
    %v8077 = vpop.f32.mrb[0].mxu0
    %v8078 = vadd.f32 0.0, %v8077
    %v8079 = vpop.f32.mrb[0].mxu0
    %v8080 = vpop.f32.mrb[0].mxu0
    %v8081 = vadd.f32 0.0, %v8080
    %v8082 = vpop.f32.mrb[0].mxu0
    %8083 = vdwg.mxu0
    %v8084 = vadd.f32 %v7422, %v7774
    %v8085 = vadd.f32 %v7423, %v7777
    %v8086 = vadd.f32 %v7424, %v7782
    %v8087 = vadd.f32 %v7425, %v7785
    %v8088 = vadd.f32 %v7426, %v7790
    %v8089 = vadd.f32 %v7427, %v7793
    %v8090 = vadd.f32 %v7428, %v7798
    %v8091 = vadd.f32 %v7429, %v7801
    %v8092 = vadd.f32 %v7430, %v7806
    %v8093 = vadd.f32 %v7431, %v7809
    %v8094 = vadd.f32 %v7432, %v7814
    %v8095 = vadd.f32 %v7433, %v7817
    %v8096 = vadd.f32 %v7434, %v7822
    %v8097 = vadd.f32 %v7435, %v7825
    %v8098 = vadd.f32 %v7436, %v7830
    %v8099 = vadd.f32 %v7437, %v7833
    %v8100 = vadd.f32 %v7438, %v7838
    %v8101 = vadd.f32 %v7439, %v7841
    %v8102 = vadd.f32 %v7440, %v7846
    %v8103 = vadd.f32 %v7441, %v7849
    %v8104 = vadd.f32 %v7442, %v7854
    %v8105 = vadd.f32 %v7443, %v7857
    %v8106 = vadd.f32 %v7444, %v7862
    %v8107 = vadd.f32 %v7445, %v7865
    %v8108 = vadd.f32 %v7446, %v7870
    %v8109 = vadd.f32 %v7447, %v7873
    %v8110 = vadd.f32 %v7448, %v7878
    %v8111 = vadd.f32 %v7449, %v7881
    %v8112 = vadd.f32 %v7450, %v7886
    %v8113 = vadd.f32 %v7451, %v7889
    %v8114 = vadd.f32 %v7452, %v7894
    %v8115 = vadd.f32 %v7453, %v7897
    %v8116 = vadd.f32 %v7454, %v7902
    %v8117 = vadd.f32 %v7455, %v7905
    %v8118 = vadd.f32 %v7456, %v7910
    %v8119 = vadd.f32 %v7457, %v7913
    %v8120 = vadd.f32 %v7458, %v7918
    %v8121 = vadd.f32 %v7459, %v7921
    %v8122 = vadd.f32 %v7460, %v7926
    %v8123 = vadd.f32 %v7461, %v7929
    %v8124 = vadd.f32 %v7462, %v7934
    %v8125 = vadd.f32 %v7463, %v7937
    %v8126 = vadd.f32 %v7464, %v7942
    %v8127 = vadd.f32 %v7465, %v7945
    %v8128 = vadd.f32 %v7466, %v7950
    %v8129 = vadd.f32 %v7467, %v7953
    %v8130 = vadd.f32 %v7468, %v7958
    %v8131 = vadd.f32 %v7469, %v7961
    %v8132 = vadd.f32 %v7470, %v7966
    %v8133 = vadd.f32 %v7471, %v7969
    %v8134 = vadd.f32 %v7472, %v7974
    %v8135 = vadd.f32 %v7473, %v7977
    %v8136 = vadd.f32 %v7474, %v7982
    %v8137 = vadd.f32 %v7475, %v7985
    %v8138 = vadd.f32 %v7476, %v7990
    %v8139 = vadd.f32 %v7477, %v7993
    %v8140 = vadd.f32 %v7478, %v7998
    %v8141 = vadd.f32 %v7479, %v8001
    %v8142 = vadd.f32 %v7480, %v8006
    %v8143 = vadd.f32 %v7481, %v8009
    %v8144 = vadd.f32 %v7482, %v8014
    %v8145 = vadd.f32 %v7483, %v8017
    %v8146 = vadd.f32 %v7484, %v8022
    %v8147 = vadd.f32 %v7485, %v8025
    %v8148 = vadd.f32 %v7486, %v8030
    %v8149 = vadd.f32 %v7487, %v8033
    %v8150 = vadd.f32 %v7488, %v8038
    %v8151 = vadd.f32 %v7489, %v8041
    %v8152 = vadd.f32 %v7490, %v8046
    %v8153 = vadd.f32 %v7491, %v8049
    %v8154 = vadd.f32 %v7492, %v8054
    %v8155 = vadd.f32 %v7493, %v8057
    %v8156 = vadd.f32 %v7494, %v8062
    %v8157 = vadd.f32 %v7495, %v8065
    %v8158 = vadd.f32 %v7496, %v8070
    %v8159 = vadd.f32 %v7497, %v8073
    %v8160 = vadd.f32 %v7498, %v8078
    %v8161 = vadd.f32 %v7499, %v8081
    %8162 = vst.msk [vmem:[#allocation3 + $0x18] sm:$0xff] %vm1527, %v8084
    %8163 = vst.msk [vmem:[#allocation3 + $0x20] sm:$0xff] %vm1527, %v8085
    %8164 = vst.msk [vmem:[#allocation3 + $0x28] sm:$0xff] %vm1527, %v8086
    %8165 = vst.msk [vmem:[#allocation3 + $0x30] sm:$0xff] %vm1527, %v8087
    %8166 = vst.msk [vmem:[#allocation3 + $0x38] sm:$0xff] %vm1527, %v8088
    %8167 = vst.msk [vmem:[#allocation3 + $0x40] sm:$0xff] %vm1527, %v8089
    %8168 = vst.msk [vmem:[#allocation3 + $0x48] sm:$0xff] %vm1527, %v8090
    %8169 = vst.msk [vmem:[#allocation3 + $0x50] sm:$0xff] %vm1527, %v8091
    %8170 = vst.msk [vmem:[#allocation3 + $0x58] sm:$0xff] %vm1527, %v8092
    %8171 = vst.msk [vmem:[#allocation3 + $0x60] sm:$0xff] %vm1527, %v8093
    %8172 = vst.msk [vmem:[#allocation3 + $0x68] sm:$0xff] %vm1527, %v8094
    %8173 = vst.msk [vmem:[#allocation3 + $0x70] sm:$0xff] %vm1527, %v8095
    %8174 = vst.msk [vmem:[#allocation3 + $0x78] sm:$0xff] %vm1527, %v8096
    %8175 = vst.msk [vmem:[#allocation3 + $0x80] sm:$0xff] %vm1527, %v8097
    %8176 = vst.msk [vmem:[#allocation3 + $0x88] sm:$0xff] %vm1527, %v8098
    %8177 = vst.msk [vmem:[#allocation3 + $0x90] sm:$0xff] %vm1527, %v8099
    %8178 = vst.msk [vmem:[#allocation3 + $0x98] sm:$0xff] %vm1527, %v8100
    %8179 = vst.msk [vmem:[#allocation3 + $0xa0] sm:$0xff] %vm1527, %v8101
    %8180 = vst.msk [vmem:[#allocation3 + $0xa8] sm:$0xff] %vm1527, %v8102
    %8181 = vst.msk [vmem:[#allocation3 + $0xb0] sm:$0xff] %vm1527, %v8103
    %8182 = vst.msk [vmem:[#allocation3 + $0xb8] sm:$0xff] %vm1527, %v8104
    %8183 = vst.msk [vmem:[#allocation3 + $0xc0] sm:$0xff] %vm1527, %v8105
    %8184 = vst.msk [vmem:[#allocation3 + $0xc8] sm:$0xff] %vm1527, %v8106
    %8185 = vst.msk [vmem:[#allocation3 + $0xd0] sm:$0xff] %vm1527, %v8107
    %8186 = vst.msk [vmem:[#allocation3 + $0xd8] sm:$0xff] %vm1527, %v8108
    %8187 = vst.msk [vmem:[#allocation3 + $0xe0] sm:$0xff] %vm1527, %v8109
    %8188 = vst.msk [vmem:[#allocation3 + $0xe8] sm:$0xff] %vm1527, %v8110
    %8189 = vst.msk [vmem:[#allocation3 + $0xf0] sm:$0xff] %vm1527, %v8111
    %8190 = vst.msk [vmem:[#allocation3 + $0xf8] sm:$0xff] %vm1527, %v8112
    %8191 = vst.msk [vmem:[#allocation3 + $0x100] sm:$0xff] %vm1527, %v8113
    %8192 = vst.msk [vmem:[#allocation3 + $0x108] sm:$0xff] %vm1527, %v8114
    %8193 = vst.msk [vmem:[#allocation3 + $0x110] sm:$0xff] %vm1527, %v8115
    %8194 = vst.msk [vmem:[#allocation3 + $0x118] sm:$0xff] %vm1527, %v8116
    %8195 = vst.msk [vmem:[#allocation3 + $0x120] sm:$0xff] %vm1527, %v8117
    %8196 = vst.msk [vmem:[#allocation3 + $0x128] sm:$0xff] %vm1527, %v8118
    %8197 = vst.msk [vmem:[#allocation3 + $0x130] sm:$0xff] %vm1527, %v8119
    %8198 = vst.msk [vmem:[#allocation3 + $0x138] sm:$0xff] %vm1527, %v8120
    %8199 = vst.msk [vmem:[#allocation3 + $0x140] sm:$0xff] %vm1527, %v8121
    %8200 = vst.msk [vmem:[#allocation3 + $0x148] sm:$0xff] %vm1527, %v8122
    %8201 = vst.msk [vmem:[#allocation3 + $0x150] sm:$0xff] %vm1527, %v8123
    %8202 = vst.msk [vmem:[#allocation3 + $0x158] sm:$0xff] %vm1527, %v8124
    %8203 = vst.msk [vmem:[#allocation3 + $0x160] sm:$0xff] %vm1527, %v8125
    %8204 = vst.msk [vmem:[#allocation3 + $0x168] sm:$0xff] %vm1527, %v8126
    %8205 = vst.msk [vmem:[#allocation3 + $0x170] sm:$0xff] %vm1527, %v8127
    %8206 = vst.msk [vmem:[#allocation3 + $0x178] sm:$0xff] %vm1527, %v8128
    %8207 = vst.msk [vmem:[#allocation3 + $0x180] sm:$0xff] %vm1527, %v8129
    %8208 = vst.msk [vmem:[#allocation3 + $0x188] sm:$0xff] %vm1527, %v8130
    %8209 = vst.msk [vmem:[#allocation3 + $0x190] sm:$0xff] %vm1527, %v8131
    %8210 = vst.msk [vmem:[#allocation3 + $0x198] sm:$0xff] %vm1527, %v8132
    %8211 = vst.msk [vmem:[#allocation3 + $0x1a0] sm:$0xff] %vm1527, %v8133
    %8212 = vst.msk [vmem:[#allocation3 + $0x1a8] sm:$0xff] %vm1527, %v8134
    %8213 = vst.msk [vmem:[#allocation3 + $0x1b0] sm:$0xff] %vm1527, %v8135
    %8214 = vst.msk [vmem:[#allocation3 + $0x1b8] sm:$0xff] %vm1527, %v8136
    %8215 = vst.msk [vmem:[#allocation3 + $0x1c0] sm:$0xff] %vm1527, %v8137
    %8216 = vst.msk [vmem:[#allocation3 + $0x1c8] sm:$0xff] %vm1527, %v8138
    %8217 = vst.msk [vmem:[#allocation3 + $0x1d0] sm:$0xff] %vm1527, %v8139
    %8218 = vst.msk [vmem:[#allocation3 + $0x1d8] sm:$0xff] %vm1527, %v8140
    %8219 = vst.msk [vmem:[#allocation3 + $0x1e0] sm:$0xff] %vm1527, %v8141
    %8220 = vst.msk [vmem:[#allocation3 + $0x1e8] sm:$0xff] %vm1527, %v8142
    %8221 = vst.msk [vmem:[#allocation3 + $0x1f0] sm:$0xff] %vm1527, %v8143
    %8222 = vst.msk [vmem:[#allocation3 + $0x1f8] sm:$0xff] %vm1527, %v8144
    %8223 = vst.msk [vmem:[#allocation3 + $0x200] sm:$0xff] %vm1527, %v8145
    %8224 = vst.msk [vmem:[#allocation3 + $0x208] sm:$0xff] %vm1527, %v8146
    %8225 = vst.msk [vmem:[#allocation3 + $0x210] sm:$0xff] %vm1527, %v8147
    %8226 = vst.msk [vmem:[#allocation3 + $0x218] sm:$0xff] %vm1527, %v8148
    %8227 = vst.msk [vmem:[#allocation3 + $0x220] sm:$0xff] %vm1527, %v8149
    %8228 = vst.msk [vmem:[#allocation3 + $0x228] sm:$0xff] %vm1527, %v8150
    %8229 = vst.msk [vmem:[#allocation3 + $0x230] sm:$0xff] %vm1527, %v8151
    %8230 = vst.msk [vmem:[#allocation3 + $0x238] sm:$0xff] %vm1527, %v8152
    %8231 = vst.msk [vmem:[#allocation3 + $0x240] sm:$0xff] %vm1527, %v8153
    %8232 = vst.msk [vmem:[#allocation3 + $0x248] sm:$0xff] %vm1527, %v8154
    %8233 = vst.msk [vmem:[#allocation3 + $0x250] sm:$0xff] %vm1527, %v8155
    %8234 = vst.msk [vmem:[#allocation3 + $0x258] sm:$0xff] %vm1527, %v8156
    %8235 = vst.msk [vmem:[#allocation3 + $0x260] sm:$0xff] %vm1527, %v8157
    %8236 = vst.msk [vmem:[#allocation3 + $0x268] sm:$0xff] %vm1527, %v8158
    %8237 = vst.msk [vmem:[#allocation3 + $0x270] sm:$0xff] %vm1527, %v8159
    %8238 = vst.msk [vmem:[#allocation3 + $0x278] sm:$0xff] %vm1527, %v8160
    %8239 = vst.msk [vmem:[#allocation3 + $0x280] sm:$0xff] %vm1527, %v8161
    %v8240 = vld [vmem:[#allocation3 + $0x18] sm:$0xff]
    %v8241 = vld [vmem:[#allocation3 + $0x20] sm:$0xff]
    %v8242 = vld [vmem:[#allocation3 + $0x28] sm:$0xff]
    %v8243 = vld [vmem:[#allocation3 + $0x30] sm:$0xff]
    %v8244 = vld [vmem:[#allocation3 + $0x38] sm:$0xff]
    %v8245 = vld [vmem:[#allocation3 + $0x40] sm:$0xff]
    %v8246 = vld [vmem:[#allocation3 + $0x48] sm:$0xff]
    %v8247 = vld [vmem:[#allocation3 + $0x50] sm:$0xff]
    %v8248 = vld [vmem:[#allocation3 + $0x58] sm:$0xff]
    %v8249 = vld [vmem:[#allocation3 + $0x60] sm:$0xff]
    %v8250 = vld [vmem:[#allocation3 + $0x68] sm:$0xff]
    %v8251 = vld [vmem:[#allocation3 + $0x70] sm:$0xff]
    %v8252 = vld [vmem:[#allocation3 + $0x78] sm:$0xff]
    %v8253 = vld [vmem:[#allocation3 + $0x80] sm:$0xff]
    %v8254 = vld [vmem:[#allocation3 + $0x88] sm:$0xff]
    %v8255 = vld [vmem:[#allocation3 + $0x90] sm:$0xff]
    %v8256 = vld [vmem:[#allocation3 + $0x98] sm:$0xff]
    %v8257 = vld [vmem:[#allocation3 + $0xa0] sm:$0xff]
    %v8258 = vld [vmem:[#allocation3 + $0xa8] sm:$0xff]
    %v8259 = vld [vmem:[#allocation3 + $0xb0] sm:$0xff]
    %v8260 = vld [vmem:[#allocation3 + $0xb8] sm:$0xff]
    %v8261 = vld [vmem:[#allocation3 + $0xc0] sm:$0xff]
    %v8262 = vld [vmem:[#allocation3 + $0xc8] sm:$0xff]
    %v8263 = vld [vmem:[#allocation3 + $0xd0] sm:$0xff]
    %v8264 = vld [vmem:[#allocation3 + $0xd8] sm:$0xff]
    %v8265 = vld [vmem:[#allocation3 + $0xe0] sm:$0xff]
    %v8266 = vld [vmem:[#allocation3 + $0xe8] sm:$0xff]
    %v8267 = vld [vmem:[#allocation3 + $0xf0] sm:$0xff]
    %v8268 = vld [vmem:[#allocation3 + $0xf8] sm:$0xff]
    %v8269 = vld [vmem:[#allocation3 + $0x100] sm:$0xff]
    %v8270 = vld [vmem:[#allocation3 + $0x108] sm:$0xff]
    %v8271 = vld [vmem:[#allocation3 + $0x110] sm:$0xff]
    %v8272 = vld [vmem:[#allocation3 + $0x118] sm:$0xff]
    %v8273 = vld [vmem:[#allocation3 + $0x120] sm:$0xff]
    %v8274 = vld [vmem:[#allocation3 + $0x128] sm:$0xff]
    %v8275 = vld [vmem:[#allocation3 + $0x130] sm:$0xff]
    %v8276 = vld [vmem:[#allocation3 + $0x138] sm:$0xff]
    %v8277 = vld [vmem:[#allocation3 + $0x140] sm:$0xff]
    %v8278 = vld [vmem:[#allocation3 + $0x148] sm:$0xff]
    %v8279 = vld [vmem:[#allocation3 + $0x150] sm:$0xff]
    %v8280 = vld [vmem:[#allocation3 + $0x158] sm:$0xff]
    %v8281 = vld [vmem:[#allocation3 + $0x160] sm:$0xff]
    %v8282 = vld [vmem:[#allocation3 + $0x168] sm:$0xff]
    %v8283 = vld [vmem:[#allocation3 + $0x170] sm:$0xff]
    %v8284 = vld [vmem:[#allocation3 + $0x178] sm:$0xff]
    %v8285 = vld [vmem:[#allocation3 + $0x180] sm:$0xff]
    %v8286 = vld [vmem:[#allocation3 + $0x188] sm:$0xff]
    %v8287 = vld [vmem:[#allocation3 + $0x190] sm:$0xff]
    %v8288 = vld [vmem:[#allocation3 + $0x198] sm:$0xff]
    %v8289 = vld [vmem:[#allocation3 + $0x1a0] sm:$0xff]
    %v8290 = vld [vmem:[#allocation3 + $0x1a8] sm:$0xff]
    %v8291 = vld [vmem:[#allocation3 + $0x1b0] sm:$0xff]
    %v8292 = vld [vmem:[#allocation3 + $0x1b8] sm:$0xff]
    %v8293 = vld [vmem:[#allocation3 + $0x1c0] sm:$0xff]
    %v8294 = vld [vmem:[#allocation3 + $0x1c8] sm:$0xff]
    %v8295 = vld [vmem:[#allocation3 + $0x1d0] sm:$0xff]
    %v8296 = vld [vmem:[#allocation3 + $0x1d8] sm:$0xff]
    %v8297 = vld [vmem:[#allocation3 + $0x1e0] sm:$0xff]
    %v8298 = vld [vmem:[#allocation3 + $0x1e8] sm:$0xff]
    %v8299 = vld [vmem:[#allocation3 + $0x1f0] sm:$0xff]
    %v8300 = vld [vmem:[#allocation3 + $0x1f8] sm:$0xff]
    %v8301 = vld [vmem:[#allocation3 + $0x200] sm:$0xff]
    %v8302 = vld [vmem:[#allocation3 + $0x208] sm:$0xff]
    %v8303 = vld [vmem:[#allocation3 + $0x210] sm:$0xff]
    %v8304 = vld [vmem:[#allocation3 + $0x218] sm:$0xff]
    %v8305 = vld [vmem:[#allocation3 + $0x220] sm:$0xff]
    %v8306 = vld [vmem:[#allocation3 + $0x228] sm:$0xff]
    %v8307 = vld [vmem:[#allocation3 + $0x230] sm:$0xff]
    %v8308 = vld [vmem:[#allocation3 + $0x238] sm:$0xff]
    %v8309 = vld [vmem:[#allocation3 + $0x240] sm:$0xff]
    %v8310 = vld [vmem:[#allocation3 + $0x248] sm:$0xff]
    %v8311 = vld [vmem:[#allocation3 + $0x250] sm:$0xff]
    %v8312 = vld [vmem:[#allocation3 + $0x258] sm:$0xff]
    %v8313 = vld [vmem:[#allocation3 + $0x260] sm:$0xff]
    %v8314 = vld [vmem:[#allocation3 + $0x268] sm:$0xff]
    %v8315 = vld [vmem:[#allocation3 + $0x270] sm:$0xff]
    %v8316 = vld [vmem:[#allocation3 + $0x278] sm:$0xff]
    %v8317 = vld [vmem:[#allocation3 + $0x280] sm:$0xff]
    %v8318 = vld [vmem:[#allocation2 + $0x2b] sm:$0xff]
    %v8319 = vld [vmem:[#allocation2 + $0x33] sm:$0xff]
    %v8320 = vld [vmem:[#allocation2 + $0x3b] sm:$0xff]
    %v8321 = vld [vmem:[#allocation2 + $0x43] sm:$0xff]
    %v8322 = vld [vmem:[#allocation2 + $0x4b] sm:$0xff]
    %v8323 = vld [vmem:[#allocation2 + $0x53] sm:$0xff]
    %v8324 = vld [vmem:[#allocation2 + $0x5b] sm:$0xff]
    %v8325 = vld [vmem:[#allocation2 + $0x63] sm:$0xff]
    %v8326 = vld [vmem:[#allocation2 + $0x6b] sm:$0xff]
    %v8327 = vld [vmem:[#allocation2 + $0x73] sm:$0xff]
    %v8328 = vld [vmem:[#allocation2 + $0x7b] sm:$0xff]
    %v8329 = vld [vmem:[#allocation2 + $0x83] sm:$0xff]
    %v8330 = vld [vmem:[#allocation2 + $0x8b] sm:$0xff]
    %v8331 = vld [vmem:[#allocation2 + $0x93] sm:$0xff]
    %v8332 = vld [vmem:[#allocation2 + $0x9b] sm:$0xff]
    %v8333 = vld [vmem:[#allocation2 + $0xa3] sm:$0xff]
    %v8334 = vld [vmem:[#allocation2 + $0xab] sm:$0xff]
    %v8335 = vld [vmem:[#allocation2 + $0xb3] sm:$0xff]
    %v8336 = vld [vmem:[#allocation2 + $0xbb] sm:$0xff]
    %v8337 = vld [vmem:[#allocation2 + $0xc3] sm:$0xff]
    %v8338 = vld [vmem:[#allocation2 + $0xcb] sm:$0xff]
    %v8339 = vld [vmem:[#allocation2 + $0xd3] sm:$0xff]
    %v8340 = vld [vmem:[#allocation2 + $0xdb] sm:$0xff]
    %v8341 = vld [vmem:[#allocation2 + $0xe3] sm:$0xff]
    %v8342 = vld [vmem:[#allocation2 + $0xeb] sm:$0xff]
    %v8343 = vld [vmem:[#allocation2 + $0xf3] sm:$0xff]
    %v8344 = vld [vmem:[#allocation2 + $0xfb] sm:$0xff]
    %v8345 = vld [vmem:[#allocation2 + $0x103] sm:$0xff]
    %v8346 = vld [vmem:[#allocation2 + $0x10b] sm:$0xff]
    %v8347 = vld [vmem:[#allocation2 + $0x113] sm:$0xff]
    %v8348 = vld [vmem:[#allocation2 + $0x11b] sm:$0xff]
    %v8349 = vld [vmem:[#allocation2 + $0x123] sm:$0xff]
    %v8350 = vld [vmem:[#allocation2 + $0x12b] sm:$0xff]
    %v8351 = vld [vmem:[#allocation2 + $0x133] sm:$0xff]
    %v8352 = vld [vmem:[#allocation2 + $0x13b] sm:$0xff]
    %v8353 = vld [vmem:[#allocation2 + $0x143] sm:$0xff]
    %v8354 = vld [vmem:[#allocation2 + $0x14b] sm:$0xff]
    %v8355 = vld [vmem:[#allocation2 + $0x153] sm:$0xff]
    %v8356 = vld [vmem:[#allocation2 + $0x15b] sm:$0xff]
    %v8357 = vld [vmem:[#allocation2 + $0x163] sm:$0xff]
    %v8358 = vld [vmem:[#allocation2 + $0x16b] sm:$0xff]
    %v8359 = vld [vmem:[#allocation2 + $0x173] sm:$0xff]
    %v8360 = vld [vmem:[#allocation2 + $0x17b] sm:$0xff]
    %v8361 = vld [vmem:[#allocation2 + $0x183] sm:$0xff]
    %v8362 = vld [vmem:[#allocation2 + $0x18b] sm:$0xff]
    %v8363 = vld [vmem:[#allocation2 + $0x193] sm:$0xff]
    %v8364 = vld [vmem:[#allocation2 + $0x19b] sm:$0xff]
    %v8365 = vld [vmem:[#allocation2 + $0x1a3] sm:$0xff]
    %v8366 = vld [vmem:[#allocation2 + $0x1ab] sm:$0xff]
    %v8367 = vld [vmem:[#allocation2 + $0x1b3] sm:$0xff]
    %v8368 = vld [vmem:[#allocation2 + $0x1bb] sm:$0xff]
    %v8369 = vld [vmem:[#allocation2 + $0x1c3] sm:$0xff]
    %v8370 = vld [vmem:[#allocation2 + $0x1cb] sm:$0xff]
    %v8371 = vld [vmem:[#allocation2 + $0x1d3] sm:$0xff]
    %v8372 = vld [vmem:[#allocation2 + $0x1db] sm:$0xff]
    %v8373 = vld [vmem:[#allocation2 + $0x1e3] sm:$0xff]
    %v8374 = vld [vmem:[#allocation2 + $0x1eb] sm:$0xff]
    %v8375 = vld [vmem:[#allocation2 + $0x1f3] sm:$0xff]
    %v8376 = vld [vmem:[#allocation2 + $0x1fb] sm:$0xff]
    %v8377 = vld [vmem:[#allocation2 + $0x203] sm:$0xff]
    %v8378 = vld [vmem:[#allocation2 + $0x20b] sm:$0xff]
    %v8379 = vld [vmem:[#allocation2 + $0x213] sm:$0xff]
    %v8380 = vld [vmem:[#allocation2 + $0x21b] sm:$0xff]
    %v8381 = vld [vmem:[#allocation2 + $0x223] sm:$0xff]
    %v8382 = vld [vmem:[#allocation2 + $0x22b] sm:$0xff]
    %v8383 = vld [vmem:[#allocation2 + $0x233] sm:$0xff]
    %v8384 = vld [vmem:[#allocation2 + $0x23b] sm:$0xff]
    %v8385 = vld [vmem:[#allocation2 + $0x243] sm:$0xff]
    %v8386 = vld [vmem:[#allocation2 + $0x24b] sm:$0xff]
    %v8387 = vld [vmem:[#allocation2 + $0x253] sm:$0xff]
    %v8388 = vld [vmem:[#allocation2 + $0x25b] sm:$0xff]
    %v8389 = vld [vmem:[#allocation2 + $0x263] sm:$0xff]
    %v8390 = vld [vmem:[#allocation2 + $0x26b] sm:$0xff]
    %v8391 = vld [vmem:[#allocation2 + $0x273] sm:$0xff]
    %v8392 = vld [vmem:[#allocation2 + $0x27b] sm:$0xff]
    %v8393 = vld [vmem:[#allocation2 + $0x283] sm:$0xff]
    %v8394 = vld [vmem:[#allocation2 + $0x28b] sm:$0xff]
    %v8395 = vld [vmem:[#allocation2 + $0x293] sm:$0xff]
    %v8396 = vpack.c.bf16 %v8319, %v8318
    %v8397 = vpack.c.bf16 %v8321, %v8320
    %v8398 = vpack.c.bf16 %v8323, %v8322
    %v8399 = vpack.c.bf16 %v8325, %v8324
    %v8400 = vpack.c.bf16 %v8327, %v8326
    %v8401 = vpack.c.bf16 %v8329, %v8328
    %v8402 = vpack.c.bf16 %v8331, %v8330
    %v8403 = vpack.c.bf16 %v8333, %v8332
    %v8404 = vpack.c.bf16 %v8335, %v8334
    %v8405 = vpack.c.bf16 %v8337, %v8336
    %v8406 = vpack.c.bf16 %v8339, %v8338
    %v8407 = vpack.c.bf16 %v8341, %v8340
    %v8408 = vpack.c.bf16 %v8343, %v8342
    %v8409 = vpack.c.bf16 %v8345, %v8344
    %v8410 = vpack.c.bf16 %v8347, %v8346
    %v8411 = vpack.c.bf16 %v8349, %v8348
    %v8412 = vpack.c.bf16 %v8351, %v8350
    %v8413 = vpack.c.bf16 %v8353, %v8352
    %v8414 = vpack.c.bf16 %v8355, %v8354
    %v8415 = vpack.c.bf16 %v8357, %v8356
    %v8416 = vpack.c.bf16 %v8359, %v8358
    %v8417 = vpack.c.bf16 %v8361, %v8360
    %v8418 = vpack.c.bf16 %v8363, %v8362
    %v8419 = vpack.c.bf16 %v8365, %v8364
    %v8420 = vpack.c.bf16 %v8367, %v8366
    %v8421 = vpack.c.bf16 %v8369, %v8368
    %v8422 = vpack.c.bf16 %v8371, %v8370
    %v8423 = vpack.c.bf16 %v8373, %v8372
    %v8424 = vpack.c.bf16 %v8375, %v8374
    %v8425 = vpack.c.bf16 %v8377, %v8376
    %v8426 = vpack.c.bf16 %v8379, %v8378
    %v8427 = vpack.c.bf16 %v8381, %v8380
    %v8428 = vpack.c.bf16 %v8383, %v8382
    %v8429 = vpack.c.bf16 %v8385, %v8384
    %v8430 = vpack.c.bf16 %v8387, %v8386
    %v8431 = vpack.c.bf16 %v8389, %v8388
    %v8432 = vpack.c.bf16 %v8391, %v8390
    %v8433 = vpack.c.bf16 %v8393, %v8392
    %v8434 = vpack.c.bf16 %v8395, %v8394
    %s8435 = scalar_lea.vmem %s4, 32
    %v8436 = vld [vmem:[%s8435] sm:$0xf]
    %v8438 = vsel %vm1527, %v8396, 0
    %v8441 = vsel %vm1527, %v8397, 0
    %v8444 = vsel %vm1527, %v8398, 0
    %v8447 = vsel %vm1527, %v8399, 0
    %v8450 = vsel %vm1527, %v8400, 0
    %v8453 = vsel %vm1527, %v8401, 0
    %v8456 = vsel %vm1527, %v8402, 0
    %v8459 = vsel %vm1527, %v8403, 0
    %v8462 = vsel %vm1527, %v8404, 0
    %v8465 = vsel %vm1527, %v8405, 0
    %v8468 = vsel %vm1527, %v8406, 0
    %v8471 = vsel %vm1527, %v8407, 0
    %v8474 = vsel %vm1527, %v8408, 0
    %v8477 = vsel %vm1527, %v8409, 0
    %v8480 = vsel %vm1527, %v8410, 0
    %v8483 = vsel %vm1527, %v8411, 0
    %v8486 = vsel %vm1527, %v8412, 0
    %v8489 = vsel %vm1527, %v8413, 0
    %v8492 = vsel %vm1527, %v8414, 0
    %v8495 = vsel %vm1527, %v8415, 0
    %v8498 = vsel %vm1527, %v8416, 0
    %v8501 = vsel %vm1527, %v8417, 0
    %v8504 = vsel %vm1527, %v8418, 0
    %v8507 = vsel %vm1527, %v8419, 0
    %v8510 = vsel %vm1527, %v8420, 0
    %v8513 = vsel %vm1527, %v8421, 0
    %v8516 = vsel %vm1527, %v8422, 0
    %v8519 = vsel %vm1527, %v8423, 0
    %v8522 = vsel %vm1527, %v8424, 0
    %v8525 = vsel %vm1527, %v8425, 0
    %v8528 = vsel %vm1527, %v8426, 0
    %v8531 = vsel %vm1527, %v8427, 0
    %v8534 = vsel %vm1527, %v8428, 0
    %v8537 = vsel %vm1527, %v8429, 0
    %v8540 = vsel %vm1527, %v8430, 0
    %v8543 = vsel %vm1527, %v8431, 0
    %v8546 = vsel %vm1527, %v8432, 0
    %v8549 = vsel %vm1527, %v8433, 0
    %v8552 = vsel %vm1527, %v8434, 0
    %v8555 = vsel %vm2009, %v8436, 0
    %8557 = vmatprep.subr.bf16.mxu0 0
    %8558 = vmatpush1.bf16.msra.mxu0 %v8555
    %8559 = vmatprep.subr.bf16.mxu0 0
    %8560 = vmatpush1.bf16.msra.mxu0 0
    %8561 = vmatprep.subr.bf16.mxu0 0
    %8562 = vmatpush1.bf16.msra.mxu0 0
    %8563 = vmatprep.subr.bf16.mxu0 0
    %8564 = vmatpush1.bf16.msra.mxu0 0
    %8565 = vmatprep.subr.bf16.mxu0 0
    %8566 = vmatpush1.bf16.msra.mxu0 0
    %8567 = vmatprep.subr.bf16.mxu0 0
    %8568 = vmatpush1.bf16.msra.mxu0 0
    %8569 = vmatprep.subr.bf16.mxu0 0
    %8570 = vmatpush1.bf16.msra.mxu0 0
    %8571 = vmatprep.subr.bf16.mxu0 0
    %8572 = vmatpush1.bf16.msra.mxu0 0
    %8573 = vmatprep.subr.bf16.mxu0 0
    %8574 = vmatpush1.bf16.msra.mxu0 0
    %8575 = vmatprep.subr.bf16.mxu0 0
    %8576 = vmatpush1.bf16.msra.mxu0 0
    %8577 = vmatprep.subr.bf16.mxu0 0
    %8578 = vmatpush1.bf16.msra.mxu0 0
    %8579 = vmatprep.subr.bf16.mxu0 0
    %8580 = vmatpush1.bf16.msra.mxu0 0
    %8581 = vmatprep.subr.bf16.mxu0 0
    %8582 = vmatpush1.bf16.msra.mxu0 0
    %8583 = vmatprep.subr.bf16.mxu0 0
    %8584 = vmatpush1.bf16.msra.mxu0 0
    %8585 = vmatprep.subr.bf16.mxu0 0
    %8586 = vmatpush1.bf16.msra.mxu0 0
    %8587 = vmatprep.subr.bf16.mxu0 0
    %8588 = vmatpush1.bf16.msra.mxu0 0
    %8589 = vmatprep.mubr.bf16.mxu0 0
    %8590 = vmatmul.mubr.bf16.gmra.mrb[0].mxu0 %v8438
    %v8591 = vpop.f32.mrb[0].mxu0
    %v8592 = vadd.f32 0.0, %v8591
    %v8593 = vpop.f32.mrb[0].mxu0
    %v8594 = vpop.f32.mrb[0].mxu0
    %v8595 = vadd.f32 0.0, %v8594
    %v8596 = vpop.f32.mrb[0].mxu0
    %8597 = vmatprep.mubr.bf16.mxu0 0
    %8598 = vmatmul.mubr.bf16.gmra.mrb[0].mxu0 %v8441
    %v8599 = vpop.f32.mrb[0].mxu0
    %v8600 = vadd.f32 0.0, %v8599
    %v8601 = vpop.f32.mrb[0].mxu0
    %v8602 = vpop.f32.mrb[0].mxu0
    %v8603 = vadd.f32 0.0, %v8602
    %v8604 = vpop.f32.mrb[0].mxu0
    %8605 = vmatprep.mubr.bf16.mxu0 0
    %8606 = vmatmul.mubr.bf16.gmra.mrb[0].mxu0 %v8444
    %v8607 = vpop.f32.mrb[0].mxu0
    %v8608 = vadd.f32 0.0, %v8607
    %v8609 = vpop.f32.mrb[0].mxu0
    %v8610 = vpop.f32.mrb[0].mxu0
    %v8611 = vadd.f32 0.0, %v8610
    %v8612 = vpop.f32.mrb[0].mxu0
    %8613 = vmatprep.mubr.bf16.mxu0 0
    %8614 = vmatmul.mubr.bf16.gmra.mrb[0].mxu0 %v8447
    %v8615 = vpop.f32.mrb[0].mxu0
    %v8616 = vadd.f32 0.0, %v8615
    %v8617 = vpop.f32.mrb[0].mxu0
    %v8618 = vpop.f32.mrb[0].mxu0
    %v8619 = vadd.f32 0.0, %v8618
    %v8620 = vpop.f32.mrb[0].mxu0
    %8621 = vmatprep.mubr.bf16.mxu0 0
    %8622 = vmatmul.mubr.bf16.gmra.mrb[0].mxu0 %v8450
    %v8623 = vpop.f32.mrb[0].mxu0
    %v8624 = vadd.f32 0.0, %v8623
    %v8625 = vpop.f32.mrb[0].mxu0
    %v8626 = vpop.f32.mrb[0].mxu0
    %v8627 = vadd.f32 0.0, %v8626
    %v8628 = vpop.f32.mrb[0].mxu0
    %8629 = vmatprep.mubr.bf16.mxu0 0
    %8630 = vmatmul.mubr.bf16.gmra.mrb[0].mxu0 %v8453
    %v8631 = vpop.f32.mrb[0].mxu0
    %v8632 = vadd.f32 0.0, %v8631
    %v8633 = vpop.f32.mrb[0].mxu0
    %v8634 = vpop.f32.mrb[0].mxu0
    %v8635 = vadd.f32 0.0, %v8634
    %v8636 = vpop.f32.mrb[0].mxu0
    %8637 = vmatprep.mubr.bf16.mxu0 0
    %8638 = vmatmul.mubr.bf16.gmra.mrb[0].mxu0 %v8456
    %v8639 = vpop.f32.mrb[0].mxu0
    %v8640 = vadd.f32 0.0, %v8639
    %v8641 = vpop.f32.mrb[0].mxu0
    %v8642 = vpop.f32.mrb[0].mxu0
    %v8643 = vadd.f32 0.0, %v8642
    %v8644 = vpop.f32.mrb[0].mxu0
    %8645 = vmatprep.mubr.bf16.mxu0 0
    %8646 = vmatmul.mubr.bf16.gmra.mrb[0].mxu0 %v8459
    %v8647 = vpop.f32.mrb[0].mxu0
    %v8648 = vadd.f32 0.0, %v8647
    %v8649 = vpop.f32.mrb[0].mxu0
    %v8650 = vpop.f32.mrb[0].mxu0
    %v8651 = vadd.f32 0.0, %v8650
    %v8652 = vpop.f32.mrb[0].mxu0
    %8653 = vmatprep.mubr.bf16.mxu0 0
    %8654 = vmatmul.mubr.bf16.gmra.mrb[0].mxu0 %v8462
    %v8655 = vpop.f32.mrb[0].mxu0
    %v8656 = vadd.f32 0.0, %v8655
    %v8657 = vpop.f32.mrb[0].mxu0
    %v8658 = vpop.f32.mrb[0].mxu0
    %v8659 = vadd.f32 0.0, %v8658
    %v8660 = vpop.f32.mrb[0].mxu0
    %8661 = vmatprep.mubr.bf16.mxu0 0
    %8662 = vmatmul.mubr.bf16.gmra.mrb[0].mxu0 %v8465
    %v8663 = vpop.f32.mrb[0].mxu0
    %v8664 = vadd.f32 0.0, %v8663
    %v8665 = vpop.f32.mrb[0].mxu0
    %v8666 = vpop.f32.mrb[0].mxu0
    %v8667 = vadd.f32 0.0, %v8666
    %v8668 = vpop.f32.mrb[0].mxu0
    %8669 = vmatprep.mubr.bf16.mxu0 0
    %8670 = vmatmul.mubr.bf16.gmra.mrb[0].mxu0 %v8468
    %v8671 = vpop.f32.mrb[0].mxu0
    %v8672 = vadd.f32 0.0, %v8671
    %v8673 = vpop.f32.mrb[0].mxu0
    %v8674 = vpop.f32.mrb[0].mxu0
    %v8675 = vadd.f32 0.0, %v8674
    %v8676 = vpop.f32.mrb[0].mxu0
    %8677 = vmatprep.mubr.bf16.mxu0 0
    %8678 = vmatmul.mubr.bf16.gmra.mrb[0].mxu0 %v8471
    %v8679 = vpop.f32.mrb[0].mxu0
    %v8680 = vadd.f32 0.0, %v8679
    %v8681 = vpop.f32.mrb[0].mxu0
    %v8682 = vpop.f32.mrb[0].mxu0
    %v8683 = vadd.f32 0.0, %v8682
    %v8684 = vpop.f32.mrb[0].mxu0
    %8685 = vmatprep.mubr.bf16.mxu0 0
    %8686 = vmatmul.mubr.bf16.gmra.mrb[0].mxu0 %v8474
    %v8687 = vpop.f32.mrb[0].mxu0
    %v8688 = vadd.f32 0.0, %v8687
    %v8689 = vpop.f32.mrb[0].mxu0
    %v8690 = vpop.f32.mrb[0].mxu0
    %v8691 = vadd.f32 0.0, %v8690
    %v8692 = vpop.f32.mrb[0].mxu0
    %8693 = vmatprep.mubr.bf16.mxu0 0
    %8694 = vmatmul.mubr.bf16.gmra.mrb[0].mxu0 %v8477
    %v8695 = vpop.f32.mrb[0].mxu0
    %v8696 = vadd.f32 0.0, %v8695
    %v8697 = vpop.f32.mrb[0].mxu0
    %v8698 = vpop.f32.mrb[0].mxu0
    %v8699 = vadd.f32 0.0, %v8698
    %v8700 = vpop.f32.mrb[0].mxu0
    %8701 = vmatprep.mubr.bf16.mxu0 0
    %8702 = vmatmul.mubr.bf16.gmra.mrb[0].mxu0 %v8480
    %v8703 = vpop.f32.mrb[0].mxu0
    %v8704 = vadd.f32 0.0, %v8703
    %v8705 = vpop.f32.mrb[0].mxu0
    %v8706 = vpop.f32.mrb[0].mxu0
    %v8707 = vadd.f32 0.0, %v8706
    %v8708 = vpop.f32.mrb[0].mxu0
    %8709 = vmatprep.mubr.bf16.mxu0 0
    %8710 = vmatmul.mubr.bf16.gmra.mrb[0].mxu0 %v8483
    %v8711 = vpop.f32.mrb[0].mxu0
    %v8712 = vadd.f32 0.0, %v8711
    %v8713 = vpop.f32.mrb[0].mxu0
    %v8714 = vpop.f32.mrb[0].mxu0
    %v8715 = vadd.f32 0.0, %v8714
    %v8716 = vpop.f32.mrb[0].mxu0
    %8717 = vmatprep.mubr.bf16.mxu0 0
    %8718 = vmatmul.mubr.bf16.gmra.mrb[0].mxu0 %v8486
    %v8719 = vpop.f32.mrb[0].mxu0
    %v8720 = vadd.f32 0.0, %v8719
    %v8721 = vpop.f32.mrb[0].mxu0
    %v8722 = vpop.f32.mrb[0].mxu0
    %v8723 = vadd.f32 0.0, %v8722
    %v8724 = vpop.f32.mrb[0].mxu0
    %8725 = vmatprep.mubr.bf16.mxu0 0
    %8726 = vmatmul.mubr.bf16.gmra.mrb[0].mxu0 %v8489
    %v8727 = vpop.f32.mrb[0].mxu0
    %v8728 = vadd.f32 0.0, %v8727
    %v8729 = vpop.f32.mrb[0].mxu0
    %v8730 = vpop.f32.mrb[0].mxu0
    %v8731 = vadd.f32 0.0, %v8730
    %v8732 = vpop.f32.mrb[0].mxu0
    %8733 = vmatprep.mubr.bf16.mxu0 0
    %8734 = vmatmul.mubr.bf16.gmra.mrb[0].mxu0 %v8492
    %v8735 = vpop.f32.mrb[0].mxu0
    %v8736 = vadd.f32 0.0, %v8735
    %v8737 = vpop.f32.mrb[0].mxu0
    %v8738 = vpop.f32.mrb[0].mxu0
    %v8739 = vadd.f32 0.0, %v8738
    %v8740 = vpop.f32.mrb[0].mxu0
    %8741 = vmatprep.mubr.bf16.mxu0 0
    %8742 = vmatmul.mubr.bf16.gmra.mrb[0].mxu0 %v8495
    %v8743 = vpop.f32.mrb[0].mxu0
    %v8744 = vadd.f32 0.0, %v8743
    %v8745 = vpop.f32.mrb[0].mxu0
    %v8746 = vpop.f32.mrb[0].mxu0
    %v8747 = vadd.f32 0.0, %v8746
    %v8748 = vpop.f32.mrb[0].mxu0
    %8749 = vmatprep.mubr.bf16.mxu0 0
    %8750 = vmatmul.mubr.bf16.gmra.mrb[0].mxu0 %v8498
    %v8751 = vpop.f32.mrb[0].mxu0
    %v8752 = vadd.f32 0.0, %v8751
    %v8753 = vpop.f32.mrb[0].mxu0
    %v8754 = vpop.f32.mrb[0].mxu0
    %v8755 = vadd.f32 0.0, %v8754
    %v8756 = vpop.f32.mrb[0].mxu0
    %8757 = vmatprep.mubr.bf16.mxu0 0
    %8758 = vmatmul.mubr.bf16.gmra.mrb[0].mxu0 %v8501
    %v8759 = vpop.f32.mrb[0].mxu0
    %v8760 = vadd.f32 0.0, %v8759
    %v8761 = vpop.f32.mrb[0].mxu0
    %v8762 = vpop.f32.mrb[0].mxu0
    %v8763 = vadd.f32 0.0, %v8762
    %v8764 = vpop.f32.mrb[0].mxu0
    %8765 = vmatprep.mubr.bf16.mxu0 0
    %8766 = vmatmul.mubr.bf16.gmra.mrb[0].mxu0 %v8504
    %v8767 = vpop.f32.mrb[0].mxu0
    %v8768 = vadd.f32 0.0, %v8767
    %v8769 = vpop.f32.mrb[0].mxu0
    %v8770 = vpop.f32.mrb[0].mxu0
    %v8771 = vadd.f32 0.0, %v8770
    %v8772 = vpop.f32.mrb[0].mxu0
    %8773 = vmatprep.mubr.bf16.mxu0 0
    %8774 = vmatmul.mubr.bf16.gmra.mrb[0].mxu0 %v8507
    %v8775 = vpop.f32.mrb[0].mxu0
    %v8776 = vadd.f32 0.0, %v8775
    %v8777 = vpop.f32.mrb[0].mxu0
    %v8778 = vpop.f32.mrb[0].mxu0
    %v8779 = vadd.f32 0.0, %v8778
    %v8780 = vpop.f32.mrb[0].mxu0
    %8781 = vmatprep.mubr.bf16.mxu0 0
    %8782 = vmatmul.mubr.bf16.gmra.mrb[0].mxu0 %v8510
    %v8783 = vpop.f32.mrb[0].mxu0
    %v8784 = vadd.f32 0.0, %v8783
    %v8785 = vpop.f32.mrb[0].mxu0
    %v8786 = vpop.f32.mrb[0].mxu0
    %v8787 = vadd.f32 0.0, %v8786
    %v8788 = vpop.f32.mrb[0].mxu0
    %8789 = vmatprep.mubr.bf16.mxu0 0
    %8790 = vmatmul.mubr.bf16.gmra.mrb[0].mxu0 %v8513
    %v8791 = vpop.f32.mrb[0].mxu0
    %v8792 = vadd.f32 0.0, %v8791
    %v8793 = vpop.f32.mrb[0].mxu0
    %v8794 = vpop.f32.mrb[0].mxu0
    %v8795 = vadd.f32 0.0, %v8794
    %v8796 = vpop.f32.mrb[0].mxu0
    %8797 = vmatprep.mubr.bf16.mxu0 0
    %8798 = vmatmul.mubr.bf16.gmra.mrb[0].mxu0 %v8516
    %v8799 = vpop.f32.mrb[0].mxu0
    %v8800 = vadd.f32 0.0, %v8799
    %v8801 = vpop.f32.mrb[0].mxu0
    %v8802 = vpop.f32.mrb[0].mxu0
    %v8803 = vadd.f32 0.0, %v8802
    %v8804 = vpop.f32.mrb[0].mxu0
    %8805 = vmatprep.mubr.bf16.mxu0 0
    %8806 = vmatmul.mubr.bf16.gmra.mrb[0].mxu0 %v8519
    %v8807 = vpop.f32.mrb[0].mxu0
    %v8808 = vadd.f32 0.0, %v8807
    %v8809 = vpop.f32.mrb[0].mxu0
    %v8810 = vpop.f32.mrb[0].mxu0
    %v8811 = vadd.f32 0.0, %v8810
    %v8812 = vpop.f32.mrb[0].mxu0
    %8813 = vmatprep.mubr.bf16.mxu0 0
    %8814 = vmatmul.mubr.bf16.gmra.mrb[0].mxu0 %v8522
    %v8815 = vpop.f32.mrb[0].mxu0
    %v8816 = vadd.f32 0.0, %v8815
    %v8817 = vpop.f32.mrb[0].mxu0
    %v8818 = vpop.f32.mrb[0].mxu0
    %v8819 = vadd.f32 0.0, %v8818
    %v8820 = vpop.f32.mrb[0].mxu0
    %8821 = vmatprep.mubr.bf16.mxu0 0
    %8822 = vmatmul.mubr.bf16.gmra.mrb[0].mxu0 %v8525
    %v8823 = vpop.f32.mrb[0].mxu0
    %v8824 = vadd.f32 0.0, %v8823
    %v8825 = vpop.f32.mrb[0].mxu0
    %v8826 = vpop.f32.mrb[0].mxu0
    %v8827 = vadd.f32 0.0, %v8826
    %v8828 = vpop.f32.mrb[0].mxu0
    %8829 = vmatprep.mubr.bf16.mxu0 0
    %8830 = vmatmul.mubr.bf16.gmra.mrb[0].mxu0 %v8528
    %v8831 = vpop.f32.mrb[0].mxu0
    %v8832 = vadd.f32 0.0, %v8831
    %v8833 = vpop.f32.mrb[0].mxu0
    %v8834 = vpop.f32.mrb[0].mxu0
    %v8835 = vadd.f32 0.0, %v8834
    %v8836 = vpop.f32.mrb[0].mxu0
    %8837 = vmatprep.mubr.bf16.mxu0 0
    %8838 = vmatmul.mubr.bf16.gmra.mrb[0].mxu0 %v8531
    %v8839 = vpop.f32.mrb[0].mxu0
    %v8840 = vadd.f32 0.0, %v8839
    %v8841 = vpop.f32.mrb[0].mxu0
    %v8842 = vpop.f32.mrb[0].mxu0
    %v8843 = vadd.f32 0.0, %v8842
    %v8844 = vpop.f32.mrb[0].mxu0
    %8845 = vmatprep.mubr.bf16.mxu0 0
    %8846 = vmatmul.mubr.bf16.gmra.mrb[0].mxu0 %v8534
    %v8847 = vpop.f32.mrb[0].mxu0
    %v8848 = vadd.f32 0.0, %v8847
    %v8849 = vpop.f32.mrb[0].mxu0
    %v8850 = vpop.f32.mrb[0].mxu0
    %v8851 = vadd.f32 0.0, %v8850
    %v8852 = vpop.f32.mrb[0].mxu0
    %8853 = vmatprep.mubr.bf16.mxu0 0
    %8854 = vmatmul.mubr.bf16.gmra.mrb[0].mxu0 %v8537
    %v8855 = vpop.f32.mrb[0].mxu0
    %v8856 = vadd.f32 0.0, %v8855
    %v8857 = vpop.f32.mrb[0].mxu0
    %v8858 = vpop.f32.mrb[0].mxu0
    %v8859 = vadd.f32 0.0, %v8858
    %v8860 = vpop.f32.mrb[0].mxu0
    %8861 = vmatprep.mubr.bf16.mxu0 0
    %8862 = vmatmul.mubr.bf16.gmra.mrb[0].mxu0 %v8540
    %v8863 = vpop.f32.mrb[0].mxu0
    %v8864 = vadd.f32 0.0, %v8863
    %v8865 = vpop.f32.mrb[0].mxu0
    %v8866 = vpop.f32.mrb[0].mxu0
    %v8867 = vadd.f32 0.0, %v8866
    %v8868 = vpop.f32.mrb[0].mxu0
    %8869 = vmatprep.mubr.bf16.mxu0 0
    %8870 = vmatmul.mubr.bf16.gmra.mrb[0].mxu0 %v8543
    %v8871 = vpop.f32.mrb[0].mxu0
    %v8872 = vadd.f32 0.0, %v8871
    %v8873 = vpop.f32.mrb[0].mxu0
    %v8874 = vpop.f32.mrb[0].mxu0
    %v8875 = vadd.f32 0.0, %v8874
    %v8876 = vpop.f32.mrb[0].mxu0
    %8877 = vmatprep.mubr.bf16.mxu0 0
    %8878 = vmatmul.mubr.bf16.gmra.mrb[0].mxu0 %v8546
    %v8879 = vpop.f32.mrb[0].mxu0
    %v8880 = vadd.f32 0.0, %v8879
    %v8881 = vpop.f32.mrb[0].mxu0
    %v8882 = vpop.f32.mrb[0].mxu0
    %v8883 = vadd.f32 0.0, %v8882
    %v8884 = vpop.f32.mrb[0].mxu0
    %8885 = vmatprep.mubr.bf16.mxu0 0
    %8886 = vmatmul.mubr.bf16.gmra.mrb[0].mxu0 %v8549
    %v8887 = vpop.f32.mrb[0].mxu0
    %v8888 = vadd.f32 0.0, %v8887
    %v8889 = vpop.f32.mrb[0].mxu0
    %v8890 = vpop.f32.mrb[0].mxu0
    %v8891 = vadd.f32 0.0, %v8890
    %v8892 = vpop.f32.mrb[0].mxu0
    %8893 = vmatprep.mubr.bf16.mxu0 0
    %8894 = vmatmul.mubr.bf16.gmra.mrb[0].mxu0 %v8552
    %v8895 = vpop.f32.mrb[0].mxu0
    %v8896 = vadd.f32 0.0, %v8895
    %v8897 = vpop.f32.mrb[0].mxu0
    %v8898 = vpop.f32.mrb[0].mxu0
    %v8899 = vadd.f32 0.0, %v8898
    %v8900 = vpop.f32.mrb[0].mxu0
    %8901 = vdwg.mxu0
    %v8902 = vadd.f32 %v8240, %v8592
    %v8903 = vadd.f32 %v8241, %v8595
    %v8904 = vadd.f32 %v8242, %v8600
    %v8905 = vadd.f32 %v8243, %v8603
    %v8906 = vadd.f32 %v8244, %v8608
    %v8907 = vadd.f32 %v8245, %v8611
    %v8908 = vadd.f32 %v8246, %v8616
    %v8909 = vadd.f32 %v8247, %v8619
    %v8910 = vadd.f32 %v8248, %v8624
    %v8911 = vadd.f32 %v8249, %v8627
    %v8912 = vadd.f32 %v8250, %v8632
    %v8913 = vadd.f32 %v8251, %v8635
    %v8914 = vadd.f32 %v8252, %v8640
    %v8915 = vadd.f32 %v8253, %v8643
    %v8916 = vadd.f32 %v8254, %v8648
    %v8917 = vadd.f32 %v8255, %v8651
    %v8918 = vadd.f32 %v8256, %v8656
    %v8919 = vadd.f32 %v8257, %v8659
    %v8920 = vadd.f32 %v8258, %v8664
    %v8921 = vadd.f32 %v8259, %v8667
    %v8922 = vadd.f32 %v8260, %v8672
    %v8923 = vadd.f32 %v8261, %v8675
    %v8924 = vadd.f32 %v8262, %v8680
    %v8925 = vadd.f32 %v8263, %v8683
    %v8926 = vadd.f32 %v8264, %v8688
    %v8927 = vadd.f32 %v8265, %v8691
    %v8928 = vadd.f32 %v8266, %v8696
    %v8929 = vadd.f32 %v8267, %v8699
    %v8930 = vadd.f32 %v8268, %v8704
    %v8931 = vadd.f32 %v8269, %v8707
    %v8932 = vadd.f32 %v8270, %v8712
    %v8933 = vadd.f32 %v8271, %v8715
    %v8934 = vadd.f32 %v8272, %v8720
    %v8935 = vadd.f32 %v8273, %v8723
    %v8936 = vadd.f32 %v8274, %v8728
    %v8937 = vadd.f32 %v8275, %v8731
    %v8938 = vadd.f32 %v8276, %v8736
    %v8939 = vadd.f32 %v8277, %v8739
    %v8940 = vadd.f32 %v8278, %v8744
    %v8941 = vadd.f32 %v8279, %v8747
    %v8942 = vadd.f32 %v8280, %v8752
    %v8943 = vadd.f32 %v8281, %v8755
    %v8944 = vadd.f32 %v8282, %v8760
    %v8945 = vadd.f32 %v8283, %v8763
    %v8946 = vadd.f32 %v8284, %v8768
    %v8947 = vadd.f32 %v8285, %v8771
    %v8948 = vadd.f32 %v8286, %v8776
    %v8949 = vadd.f32 %v8287, %v8779
    %v8950 = vadd.f32 %v8288, %v8784
    %v8951 = vadd.f32 %v8289, %v8787
    %v8952 = vadd.f32 %v8290, %v8792
    %v8953 = vadd.f32 %v8291, %v8795
    %v8954 = vadd.f32 %v8292, %v8800
    %v8955 = vadd.f32 %v8293, %v8803
    %v8956 = vadd.f32 %v8294, %v8808
    %v8957 = vadd.f32 %v8295, %v8811
    %v8958 = vadd.f32 %v8296, %v8816
    %v8959 = vadd.f32 %v8297, %v8819
    %v8960 = vadd.f32 %v8298, %v8824
    %v8961 = vadd.f32 %v8299, %v8827
    %v8962 = vadd.f32 %v8300, %v8832
    %v8963 = vadd.f32 %v8301, %v8835
    %v8964 = vadd.f32 %v8302, %v8840
    %v8965 = vadd.f32 %v8303, %v8843
    %v8966 = vadd.f32 %v8304, %v8848
    %v8967 = vadd.f32 %v8305, %v8851
    %v8968 = vadd.f32 %v8306, %v8856
    %v8969 = vadd.f32 %v8307, %v8859
    %v8970 = vadd.f32 %v8308, %v8864
    %v8971 = vadd.f32 %v8309, %v8867
    %v8972 = vadd.f32 %v8310, %v8872
    %v8973 = vadd.f32 %v8311, %v8875
    %v8974 = vadd.f32 %v8312, %v8880
    %v8975 = vadd.f32 %v8313, %v8883
    %v8976 = vadd.f32 %v8314, %v8888
    %v8977 = vadd.f32 %v8315, %v8891
    %v8978 = vadd.f32 %v8316, %v8896
    %v8979 = vadd.f32 %v8317, %v8899
    %8980 = vst.msk [vmem:[#allocation3 + $0x18] sm:$0xff] %vm1527, %v8902
    %8981 = vst.msk [vmem:[#allocation3 + $0x20] sm:$0xff] %vm1527, %v8903
    %8982 = vst.msk [vmem:[#allocation3 + $0x28] sm:$0xff] %vm1527, %v8904
    %8983 = vst.msk [vmem:[#allocation3 + $0x30] sm:$0xff] %vm1527, %v8905
    %8984 = vst.msk [vmem:[#allocation3 + $0x38] sm:$0xff] %vm1527, %v8906
    %8985 = vst.msk [vmem:[#allocation3 + $0x40] sm:$0xff] %vm1527, %v8907
    %8986 = vst.msk [vmem:[#allocation3 + $0x48] sm:$0xff] %vm1527, %v8908
    %8987 = vst.msk [vmem:[#allocation3 + $0x50] sm:$0xff] %vm1527, %v8909
    %8988 = vst.msk [vmem:[#allocation3 + $0x58] sm:$0xff] %vm1527, %v8910
    %8989 = vst.msk [vmem:[#allocation3 + $0x60] sm:$0xff] %vm1527, %v8911
    %8990 = vst.msk [vmem:[#allocation3 + $0x68] sm:$0xff] %vm1527, %v8912
    %8991 = vst.msk [vmem:[#allocation3 + $0x70] sm:$0xff] %vm1527, %v8913
    %8992 = vst.msk [vmem:[#allocation3 + $0x78] sm:$0xff] %vm1527, %v8914
    %8993 = vst.msk [vmem:[#allocation3 + $0x80] sm:$0xff] %vm1527, %v8915
    %8994 = vst.msk [vmem:[#allocation3 + $0x88] sm:$0xff] %vm1527, %v8916
    %8995 = vst.msk [vmem:[#allocation3 + $0x90] sm:$0xff] %vm1527, %v8917
    %8996 = vst.msk [vmem:[#allocation3 + $0x98] sm:$0xff] %vm1527, %v8918
    %8997 = vst.msk [vmem:[#allocation3 + $0xa0] sm:$0xff] %vm1527, %v8919
    %8998 = vst.msk [vmem:[#allocation3 + $0xa8] sm:$0xff] %vm1527, %v8920
    %8999 = vst.msk [vmem:[#allocation3 + $0xb0] sm:$0xff] %vm1527, %v8921
    %9000 = vst.msk [vmem:[#allocation3 + $0xb8] sm:$0xff] %vm1527, %v8922
    %9001 = vst.msk [vmem:[#allocation3 + $0xc0] sm:$0xff] %vm1527, %v8923
    %9002 = vst.msk [vmem:[#allocation3 + $0xc8] sm:$0xff] %vm1527, %v8924
    %9003 = vst.msk [vmem:[#allocation3 + $0xd0] sm:$0xff] %vm1527, %v8925
    %9004 = vst.msk [vmem:[#allocation3 + $0xd8] sm:$0xff] %vm1527, %v8926
    %9005 = vst.msk [vmem:[#allocation3 + $0xe0] sm:$0xff] %vm1527, %v8927
    %9006 = vst.msk [vmem:[#allocation3 + $0xe8] sm:$0xff] %vm1527, %v8928
    %9007 = vst.msk [vmem:[#allocation3 + $0xf0] sm:$0xff] %vm1527, %v8929
    %9008 = vst.msk [vmem:[#allocation3 + $0xf8] sm:$0xff] %vm1527, %v8930
    %9009 = vst.msk [vmem:[#allocation3 + $0x100] sm:$0xff] %vm1527, %v8931
    %9010 = vst.msk [vmem:[#allocation3 + $0x108] sm:$0xff] %vm1527, %v8932
    %9011 = vst.msk [vmem:[#allocation3 + $0x110] sm:$0xff] %vm1527, %v8933
    %9012 = vst.msk [vmem:[#allocation3 + $0x118] sm:$0xff] %vm1527, %v8934
    %9013 = vst.msk [vmem:[#allocation3 + $0x120] sm:$0xff] %vm1527, %v8935
    %9014 = vst.msk [vmem:[#allocation3 + $0x128] sm:$0xff] %vm1527, %v8936
    %9015 = vst.msk [vmem:[#allocation3 + $0x130] sm:$0xff] %vm1527, %v8937
    %9016 = vst.msk [vmem:[#allocation3 + $0x138] sm:$0xff] %vm1527, %v8938
    %9017 = vst.msk [vmem:[#allocation3 + $0x140] sm:$0xff] %vm1527, %v8939
    %9018 = vst.msk [vmem:[#allocation3 + $0x148] sm:$0xff] %vm1527, %v8940
    %9019 = vst.msk [vmem:[#allocation3 + $0x150] sm:$0xff] %vm1527, %v8941
    %9020 = vst.msk [vmem:[#allocation3 + $0x158] sm:$0xff] %vm1527, %v8942
    %9021 = vst.msk [vmem:[#allocation3 + $0x160] sm:$0xff] %vm1527, %v8943
    %9022 = vst.msk [vmem:[#allocation3 + $0x168] sm:$0xff] %vm1527, %v8944
    %9023 = vst.msk [vmem:[#allocation3 + $0x170] sm:$0xff] %vm1527, %v8945
    %9024 = vst.msk [vmem:[#allocation3 + $0x178] sm:$0xff] %vm1527, %v8946
    %9025 = vst.msk [vmem:[#allocation3 + $0x180] sm:$0xff] %vm1527, %v8947
    %9026 = vst.msk [vmem:[#allocation3 + $0x188] sm:$0xff] %vm1527, %v8948
    %9027 = vst.msk [vmem:[#allocation3 + $0x190] sm:$0xff] %vm1527, %v8949
    %9028 = vst.msk [vmem:[#allocation3 + $0x198] sm:$0xff] %vm1527, %v8950
    %9029 = vst.msk [vmem:[#allocation3 + $0x1a0] sm:$0xff] %vm1527, %v8951
    %9030 = vst.msk [vmem:[#allocation3 + $0x1a8] sm:$0xff] %vm1527, %v8952
    %9031 = vst.msk [vmem:[#allocation3 + $0x1b0] sm:$0xff] %vm1527, %v8953
    %9032 = vst.msk [vmem:[#allocation3 + $0x1b8] sm:$0xff] %vm1527, %v8954
    %9033 = vst.msk [vmem:[#allocation3 + $0x1c0] sm:$0xff] %vm1527, %v8955
    %9034 = vst.msk [vmem:[#allocation3 + $0x1c8] sm:$0xff] %vm1527, %v8956
    %9035 = vst.msk [vmem:[#allocation3 + $0x1d0] sm:$0xff] %vm1527, %v8957
    %9036 = vst.msk [vmem:[#allocation3 + $0x1d8] sm:$0xff] %vm1527, %v8958
    %9037 = vst.msk [vmem:[#allocation3 + $0x1e0] sm:$0xff] %vm1527, %v8959
    %9038 = vst.msk [vmem:[#allocation3 + $0x1e8] sm:$0xff] %vm1527, %v8960
    %9039 = vst.msk [vmem:[#allocation3 + $0x1f0] sm:$0xff] %vm1527, %v8961
    %9040 = vst.msk [vmem:[#allocation3 + $0x1f8] sm:$0xff] %vm1527, %v8962
    %9041 = vst.msk [vmem:[#allocation3 + $0x200] sm:$0xff] %vm1527, %v8963
    %9042 = vst.msk [vmem:[#allocation3 + $0x208] sm:$0xff] %vm1527, %v8964
    %9043 = vst.msk [vmem:[#allocation3 + $0x210] sm:$0xff] %vm1527, %v8965
    %9044 = vst.msk [vmem:[#allocation3 + $0x218] sm:$0xff] %vm1527, %v8966
    %9045 = vst.msk [vmem:[#allocation3 + $0x220] sm:$0xff] %vm1527, %v8967
    %9046 = vst.msk [vmem:[#allocation3 + $0x228] sm:$0xff] %vm1527, %v8968
    %9047 = vst.msk [vmem:[#allocation3 + $0x230] sm:$0xff] %vm1527, %v8969
    %9048 = vst.msk [vmem:[#allocation3 + $0x238] sm:$0xff] %vm1527, %v8970
    %9049 = vst.msk [vmem:[#allocation3 + $0x240] sm:$0xff] %vm1527, %v8971
    %9050 = vst.msk [vmem:[#allocation3 + $0x248] sm:$0xff] %vm1527, %v8972
    %9051 = vst.msk [vmem:[#allocation3 + $0x250] sm:$0xff] %vm1527, %v8973
    %9052 = vst.msk [vmem:[#allocation3 + $0x258] sm:$0xff] %vm1527, %v8974
    %9053 = vst.msk [vmem:[#allocation3 + $0x260] sm:$0xff] %vm1527, %v8975
    %9054 = vst.msk [vmem:[#allocation3 + $0x268] sm:$0xff] %vm1527, %v8976
    %9055 = vst.msk [vmem:[#allocation3 + $0x270] sm:$0xff] %vm1527, %v8977
    %9056 = vst.msk [vmem:[#allocation3 + $0x278] sm:$0xff] %vm1527, %v8978
    %9057 = vst.msk [vmem:[#allocation3 + $0x280] sm:$0xff] %vm1527, %v8979
    %v9058 = vld [vmem:[%s1] sm:$0xf]
    %v9059 = vld [vmem:[%s1 + $0x4] sm:$0xf]
    %v9060 = vld [vmem:[%s1 + $0x8] sm:$0xf]
    %v9061 = vld [vmem:[%s1 + $0xc] sm:$0xf]
    %v9062 = vld [vmem:[%s1 + $0x10] sm:$0xf]
    %v9063 = vld [vmem:[%s1 + $0x14] sm:$0xf]
    %v9064 = vld [vmem:[%s1 + $0x18] sm:$0xf]
    %v9065 = vld [vmem:[%s1 + $0x1c] sm:$0xf]
    %v9066 = vld [vmem:[%s1 + $0x20] sm:$0xf]
    %v9067 = vld [vmem:[%s1 + $0x24] sm:$0xf]
    %v9068 = vld [vmem:[%s1 + $0x28] sm:$0xf]
    %v9069 = vld [vmem:[%s1 + $0x2c] sm:$0xf]
    %v9070 = vld [vmem:[%s1 + $0x30] sm:$0xf]
    %v9071 = vld [vmem:[%s1 + $0x34] sm:$0xf]
    %v9072 = vld [vmem:[%s1 + $0x38] sm:$0xf]
    %v9073 = vld [vmem:[%s1 + $0x3c] sm:$0xf]
    %v9074 = vld [vmem:[%s1 + $0x40] sm:$0xf]
    %v9075 = vld [vmem:[%s1 + $0x44] sm:$0xf]
    %v9076 = vld [vmem:[%s1 + $0x48] sm:$0xf]
    %v9077 = vld [vmem:[%s1 + $0x4c] sm:$0xf]
    %v9078 = vld [vmem:[%s1 + $0x50] sm:$0xf]
    %v9079 = vld [vmem:[%s1 + $0x54] sm:$0xf]
    %v9080 = vld [vmem:[%s1 + $0x58] sm:$0xf]
    %v9081 = vld [vmem:[%s1 + $0x5c] sm:$0xf]
    %v9082 = vld [vmem:[%s1 + $0x60] sm:$0xf]
    %v9083 = vld [vmem:[%s1 + $0x64] sm:$0xf]
    %v9084 = vld [vmem:[%s1 + $0x68] sm:$0xf]
    %v9085 = vld [vmem:[%s1 + $0x6c] sm:$0xf]
    %v9086 = vld [vmem:[%s1 + $0x70] sm:$0xf]
    %v9087 = vld [vmem:[%s1 + $0x74] sm:$0xf]
    %v9088 = vld [vmem:[%s1 + $0x78] sm:$0xf]
    %v9089 = vld [vmem:[%s1 + $0x7c] sm:$0xf]
    %v9090 = vld [vmem:[%s1 + $0x80] sm:$0xf]
    %v9091 = vld [vmem:[%s1 + $0x84] sm:$0xf]
    %v9092 = vld [vmem:[%s1 + $0x88] sm:$0xf]
    %v9093 = vld [vmem:[%s1 + $0x8c] sm:$0xf]
    %v9094 = vld [vmem:[%s1 + $0x90] sm:$0xf]
    %v9095 = vld [vmem:[%s1 + $0x94] sm:$0xf]
    %v9096 = vld [vmem:[%s1 + $0x98] sm:$0xf]
    %v9097 = vld [vmem:[%s1 + $0x9c] sm:$0xf]
    %v9098 = vld [vmem:[%s1 + $0xa0] sm:$0xf]
    %v9099 = vld [vmem:[%s1 + $0xa4] sm:$0xf]
    %v9100 = vld [vmem:[%s1 + $0xa8] sm:$0xf]
    %v9101 = vld [vmem:[%s1 + $0xac] sm:$0xf]
    %v9102 = vld [vmem:[%s1 + $0xb0] sm:$0xf]
    %v9103 = vld [vmem:[%s1 + $0xb4] sm:$0xf]
    %v9104 = vld [vmem:[%s1 + $0xb8] sm:$0xf]
    %v9105 = vld [vmem:[%s1 + $0xbc] sm:$0xf]
    %v9106 = vld [vmem:[%s1 + $0xc0] sm:$0xf]
    %v9107 = vld [vmem:[%s1 + $0xc4] sm:$0xf]
    %v9108 = vld [vmem:[%s1 + $0xc8] sm:$0xf]
    %v9109 = vld [vmem:[%s1 + $0xcc] sm:$0xf]
    %v9110 = vld [vmem:[%s1 + $0xd0] sm:$0xf]
    %v9111 = vld [vmem:[%s1 + $0xd4] sm:$0xf]
    %v9112 = vld [vmem:[%s1 + $0xd8] sm:$0xf]
    %v9113 = vld [vmem:[%s1 + $0xdc] sm:$0xf]
    %v9114 = vld [vmem:[%s1 + $0xe0] sm:$0xf]
    %v9115 = vld [vmem:[%s1 + $0xe4] sm:$0xf]
    %v9116 = vld [vmem:[%s1 + $0xe8] sm:$0xf]
    %v9117 = vld [vmem:[%s1 + $0xec] sm:$0xf]
    %v9118 = vld [vmem:[%s1 + $0xf0] sm:$0xf]
    %v9119 = vld [vmem:[%s1 + $0xf4] sm:$0xf]
    %v9120 = vld [vmem:[%s1 + $0xf8] sm:$0xf]
    %v9121 = vld [vmem:[%s1 + $0xfc] sm:$0xf]
    %v9122 = vld [vmem:[%s1 + $0x100] sm:$0xf]
    %v9123 = vld [vmem:[%s1 + $0x104] sm:$0xf]
    %v9124 = vld [vmem:[%s1 + $0x108] sm:$0xf]
    %v9125 = vld [vmem:[%s1 + $0x10c] sm:$0xf]
    %v9126 = vld [vmem:[%s1 + $0x110] sm:$0xf]
    %v9127 = vld [vmem:[%s1 + $0x114] sm:$0xf]
    %v9128 = vld [vmem:[%s1 + $0x118] sm:$0xf]
    %v9129 = vld [vmem:[%s1 + $0x11c] sm:$0xf]
    %v9130 = vld [vmem:[%s1 + $0x120] sm:$0xf]
    %v9131 = vld [vmem:[%s1 + $0x124] sm:$0xf]
    %v9132 = vld [vmem:[%s1 + $0x128] sm:$0xf]
    %v9133 = vld [vmem:[%s1 + $0x12c] sm:$0xf]
    %v9134 = vld [vmem:[%s1 + $0x130] sm:$0xf]
    %v9135 = vld [vmem:[%s1 + $0x134] sm:$0xf]
    %v9136 = vld [vmem:[%s1 + $0x138] sm:$0xf]
    %v9137 = vld [vmem:[%s1 + $0x13c] sm:$0xf]
    %v9138 = vld [vmem:[%s1 + $0x140] sm:$0xf]
    %v9139 = vld [vmem:[%s1 + $0x144] sm:$0xf]
    %v9140 = vld [vmem:[%s1 + $0x148] sm:$0xf]
    %v9141 = vld [vmem:[%s1 + $0x14c] sm:$0xf]
    %v9142 = vld [vmem:[%s6] sm:$0x3]
    %v9143 = vld [vmem:[%s7] sm:$0x1]
    %v9145 = vlaneseq
    %v9146 = vshrl.u32 %v9145, 7
    %v9147 = vsub.s32 0, %v9146
    %v9148 = vrot.slane %v9143, %v9147
    %v9234 = vunpack.c.l.b16 %v9058
    %v9235 = vunpack.c.l.b16 %v9059
    %v9236 = vunpack.c.l.b16 %v9060
    %v9237 = vunpack.c.l.b16 %v9061
    %v9238 = vunpack.c.l.b16 %v9062
    %v9239 = vunpack.c.l.b16 %v9063
    %v9240 = vunpack.c.l.b16 %v9064
    %v9241 = vunpack.c.l.b16 %v9065
    %v9242 = vunpack.c.l.b16 %v9066
    %v9243 = vunpack.c.l.b16 %v9067
    %v9244 = vunpack.c.l.b16 %v9068
    %v9245 = vunpack.c.l.b16 %v9069
    %v9246 = vunpack.c.l.b16 %v9070
    %v9247 = vunpack.c.l.b16 %v9071
    %v9248 = vunpack.c.l.b16 %v9072
    %v9249 = vunpack.c.l.b16 %v9073
    %v9250 = vunpack.c.l.b16 %v9074
    %v9251 = vunpack.c.l.b16 %v9075
    %v9252 = vunpack.c.l.b16 %v9076
    %v9253 = vunpack.c.l.b16 %v9077
    %v9254 = vunpack.c.l.b16 %v9078
    %v9255 = vunpack.c.l.b16 %v9079
    %v9256 = vunpack.c.l.b16 %v9080
    %v9257 = vunpack.c.l.b16 %v9081
    %v9258 = vunpack.c.l.b16 %v9082
    %v9259 = vunpack.c.l.b16 %v9083
    %v9260 = vunpack.c.l.b16 %v9084
    %v9261 = vunpack.c.l.b16 %v9085
    %v9262 = vunpack.c.l.b16 %v9086
    %v9263 = vunpack.c.l.b16 %v9087
    %v9264 = vunpack.c.l.b16 %v9088
    %v9265 = vunpack.c.l.b16 %v9089
    %v9266 = vunpack.c.l.b16 %v9090
    %v9267 = vunpack.c.l.b16 %v9091
    %v9268 = vunpack.c.l.b16 %v9092
    %v9269 = vunpack.c.l.b16 %v9093
    %v9270 = vunpack.c.l.b16 %v9094
    %v9271 = vunpack.c.l.b16 %v9095
    %v9272 = vunpack.c.l.b16 %v9096
    %v9273 = vunpack.c.l.b16 %v9097
    %v9274 = vunpack.c.l.b16 %v9098
    %v9275 = vunpack.c.l.b16 %v9099
    %v9276 = vunpack.c.l.b16 %v9100
    %v9277 = vunpack.c.l.b16 %v9101
    %v9278 = vunpack.c.l.b16 %v9102
    %v9279 = vunpack.c.l.b16 %v9103
    %v9280 = vunpack.c.l.b16 %v9104
    %v9281 = vunpack.c.l.b16 %v9105
    %v9282 = vunpack.c.l.b16 %v9106
    %v9283 = vunpack.c.l.b16 %v9107
    %v9284 = vunpack.c.l.b16 %v9108
    %v9285 = vunpack.c.l.b16 %v9109
    %v9286 = vunpack.c.l.b16 %v9110
    %v9287 = vunpack.c.l.b16 %v9111
    %v9288 = vunpack.c.l.b16 %v9112
    %v9289 = vunpack.c.l.b16 %v9113
    %v9290 = vunpack.c.l.b16 %v9114
    %v9291 = vunpack.c.l.b16 %v9115
    %v9292 = vunpack.c.l.b16 %v9116
    %v9293 = vunpack.c.l.b16 %v9117
    %v9294 = vunpack.c.l.b16 %v9118
    %v9295 = vunpack.c.l.b16 %v9119
    %v9296 = vunpack.c.l.b16 %v9120
    %v9297 = vunpack.c.l.b16 %v9121
    %v9298 = vunpack.c.l.b16 %v9122
    %v9299 = vunpack.c.l.b16 %v9123
    %v9300 = vunpack.c.l.b16 %v9124
    %v9301 = vunpack.c.l.b16 %v9125
    %v9302 = vunpack.c.l.b16 %v9126
    %v9303 = vunpack.c.l.b16 %v9127
    %v9304 = vunpack.c.l.b16 %v9128
    %v9305 = vunpack.c.l.b16 %v9129
    %v9306 = vunpack.c.l.b16 %v9130
    %v9307 = vunpack.c.l.b16 %v9131
    %v9308 = vunpack.c.l.b16 %v9132
    %v9309 = vunpack.c.l.b16 %v9133
    %v9310 = vunpack.c.l.b16 %v9134
    %v9311 = vunpack.c.l.b16 %v9135
    %v9312 = vunpack.c.l.b16 %v9136
    %v9313 = vunpack.c.l.b16 %v9137
    %v9314 = vunpack.c.l.b16 %v9138
    %v9315 = vunpack.c.l.b16 %v9139
    %v9316 = vunpack.c.l.b16 %v9140
    %v9317 = vunpack.c.l.b16 %v9141
    %v9318 = vpack.c.b16 %v9235, %v9234
    %v9319 = vpack.c.b16 %v9237, %v9236
    %v9320 = vpack.c.b16 %v9239, %v9238
    %v9321 = vpack.c.b16 %v9241, %v9240
    %v9322 = vpack.c.b16 %v9243, %v9242
    %v9323 = vpack.c.b16 %v9245, %v9244
    %v9324 = vpack.c.b16 %v9247, %v9246
    %v9325 = vpack.c.b16 %v9249, %v9248
    %v9326 = vpack.c.b16 %v9251, %v9250
    %v9327 = vpack.c.b16 %v9253, %v9252
    %v9328 = vpack.c.b16 %v9255, %v9254
    %v9329 = vpack.c.b16 %v9257, %v9256
    %v9330 = vpack.c.b16 %v9259, %v9258
    %v9331 = vpack.c.b16 %v9261, %v9260
    %v9332 = vpack.c.b16 %v9263, %v9262
    %v9333 = vpack.c.b16 %v9265, %v9264
    %v9334 = vpack.c.b16 %v9267, %v9266
    %v9335 = vpack.c.b16 %v9269, %v9268
    %v9336 = vpack.c.b16 %v9271, %v9270
    %v9337 = vpack.c.b16 %v9273, %v9272
    %v9338 = vpack.c.b16 %v9275, %v9274
    %v9339 = vpack.c.b16 %v9277, %v9276
    %v9340 = vpack.c.b16 %v9279, %v9278
    %v9341 = vpack.c.b16 %v9281, %v9280
    %v9342 = vpack.c.b16 %v9283, %v9282
    %v9343 = vpack.c.b16 %v9285, %v9284
    %v9344 = vpack.c.b16 %v9287, %v9286
    %v9345 = vpack.c.b16 %v9289, %v9288
    %v9346 = vpack.c.b16 %v9291, %v9290
    %v9347 = vpack.c.b16 %v9293, %v9292
    %v9348 = vpack.c.b16 %v9295, %v9294
    %v9349 = vpack.c.b16 %v9297, %v9296
    %v9350 = vpack.c.b16 %v9299, %v9298
    %v9351 = vpack.c.b16 %v9301, %v9300
    %v9352 = vpack.c.b16 %v9303, %v9302
    %v9353 = vpack.c.b16 %v9305, %v9304
    %v9354 = vpack.c.b16 %v9307, %v9306
    %v9355 = vpack.c.b16 %v9309, %v9308
    %v9356 = vpack.c.b16 %v9311, %v9310
    %v9357 = vpack.c.b16 %v9313, %v9312
    %v9358 = vpack.c.b16 %v9315, %v9314
    %v9359 = vpack.c.b16 %v9317, %v9316
    %vm9360 = vcmask 31744
    %v9362 = vsel %vm9360, %v9318, 0
    %v9365 = vsel %vm9360, %v9319, 0
    %v9368 = vsel %vm9360, %v9320, 0
    %v9371 = vsel %vm9360, %v9321, 0
    %v9374 = vsel %vm9360, %v9322, 0
    %v9377 = vsel %vm9360, %v9323, 0
    %v9380 = vsel %vm9360, %v9324, 0
    %v9383 = vsel %vm9360, %v9325, 0
    %v9386 = vsel %vm9360, %v9326, 0
    %v9389 = vsel %vm9360, %v9327, 0
    %v9392 = vsel %vm9360, %v9328, 0
    %v9395 = vsel %vm9360, %v9329, 0
    %v9398 = vsel %vm9360, %v9330, 0
    %v9401 = vsel %vm9360, %v9331, 0
    %v9404 = vsel %vm9360, %v9332, 0
    %v9407 = vsel %vm9360, %v9333, 0
    %v9410 = vsel %vm9360, %v9334, 0
    %v9413 = vsel %vm9360, %v9335, 0
    %v9416 = vsel %vm9360, %v9336, 0
    %v9419 = vsel %vm9360, %v9337, 0
    %v9422 = vsel %vm9360, %v9338, 0
    %v9425 = vsel %vm9360, %v9339, 0
    %v9428 = vsel %vm9360, %v9340, 0
    %v9431 = vsel %vm9360, %v9341, 0
    %v9434 = vsel %vm9360, %v9342, 0
    %v9437 = vsel %vm9360, %v9343, 0
    %v9440 = vsel %vm9360, %v9344, 0
    %v9443 = vsel %vm9360, %v9345, 0
    %v9446 = vsel %vm9360, %v9346, 0
    %v9449 = vsel %vm9360, %v9347, 0
    %v9452 = vsel %vm9360, %v9348, 0
    %v9455 = vsel %vm9360, %v9349, 0
    %v9458 = vsel %vm9360, %v9350, 0
    %v9461 = vsel %vm9360, %v9351, 0
    %v9464 = vsel %vm9360, %v9352, 0
    %v9467 = vsel %vm9360, %v9353, 0
    %v9470 = vsel %vm9360, %v9354, 0
    %v9473 = vsel %vm9360, %v9355, 0
    %v9476 = vsel %vm9360, %v9356, 0
    %v9479 = vsel %vm9360, %v9357, 0
    %v9482 = vsel %vm9360, %v9358, 0
    %v9485 = vsel %vm9360, %v9359, 0
    %v9488 = vsel %vm482, %v9142, 0
    %9490 = vmatprep.subr.bf16.mxu0 0
    %9491 = vmatpush1.bf16.msra.mxu0 %v9488
    %9492 = vmatprep.subr.bf16.mxu0 0
    %9493 = vmatpush1.bf16.msra.mxu0 0
    %9494 = vmatprep.subr.bf16.mxu0 0
    %9495 = vmatpush1.bf16.msra.mxu0 0
    %9496 = vmatprep.subr.bf16.mxu0 0
    %9497 = vmatpush1.bf16.msra.mxu0 0
    %9498 = vmatprep.subr.bf16.mxu0 0
    %9499 = vmatpush1.bf16.msra.mxu0 0
    %9500 = vmatprep.subr.bf16.mxu0 0
    %9501 = vmatpush1.bf16.msra.mxu0 0
    %9502 = vmatprep.subr.bf16.mxu0 0
    %9503 = vmatpush1.bf16.msra.mxu0 0
    %9504 = vmatprep.subr.bf16.mxu0 0
    %9505 = vmatpush1.bf16.msra.mxu0 0
    %9506 = vmatprep.subr.bf16.mxu0 0
    %9507 = vmatpush1.bf16.msra.mxu0 0
    %9508 = vmatprep.subr.bf16.mxu0 0
    %9509 = vmatpush1.bf16.msra.mxu0 0
    %9510 = vmatprep.subr.bf16.mxu0 0
    %9511 = vmatpush1.bf16.msra.mxu0 0
    %9512 = vmatprep.subr.bf16.mxu0 0
    %9513 = vmatpush1.bf16.msra.mxu0 0
    %9514 = vmatprep.subr.bf16.mxu0 0
    %9515 = vmatpush1.bf16.msra.mxu0 0
    %9516 = vmatprep.subr.bf16.mxu0 0
    %9517 = vmatpush1.bf16.msra.mxu0 0
    %9518 = vmatprep.subr.bf16.mxu0 0
    %9519 = vmatpush1.bf16.msra.mxu0 0
    %9520 = vmatprep.subr.bf16.mxu0 0
    %9521 = vmatpush1.bf16.msra.mxu0 0
    %9522 = vmatprep.mubr.bf16.mxu0 0
    %9523 = vmatmul.mubr.bf16.gmra.mrb[0].mxu0 %v9362
    %v9524 = vpop.f32.mrb[0].mxu0
    %v9525 = vadd.f32 %v9148, %v9524
    %v9526 = vpop.f32.mrb[0].mxu0
    %v9527 = vpop.f32.mrb[0].mxu0
    %v9528 = vadd.f32 %v9148, %v9527
    %v9529 = vpop.f32.mrb[0].mxu0
    %9530 = vmatprep.mubr.bf16.mxu0 0
    %9531 = vmatmul.mubr.bf16.gmra.mrb[0].mxu0 %v9365
    %v9532 = vpop.f32.mrb[0].mxu0
    %v9533 = vadd.f32 %v9148, %v9532
    %v9534 = vpop.f32.mrb[0].mxu0
    %v9535 = vpop.f32.mrb[0].mxu0
    %v9536 = vadd.f32 %v9148, %v9535
    %v9537 = vpop.f32.mrb[0].mxu0
    %9538 = vmatprep.mubr.bf16.mxu0 0
    %9539 = vmatmul.mubr.bf16.gmra.mrb[0].mxu0 %v9368
    %v9540 = vpop.f32.mrb[0].mxu0
    %v9541 = vadd.f32 %v9148, %v9540
    %v9542 = vpop.f32.mrb[0].mxu0
    %v9543 = vpop.f32.mrb[0].mxu0
    %v9544 = vadd.f32 %v9148, %v9543
    %v9545 = vpop.f32.mrb[0].mxu0
    %9546 = vmatprep.mubr.bf16.mxu0 0
    %9547 = vmatmul.mubr.bf16.gmra.mrb[0].mxu0 %v9371
    %v9548 = vpop.f32.mrb[0].mxu0
    %v9549 = vadd.f32 %v9148, %v9548
    %v9550 = vpop.f32.mrb[0].mxu0
    %v9551 = vpop.f32.mrb[0].mxu0
    %v9552 = vadd.f32 %v9148, %v9551
    %v9553 = vpop.f32.mrb[0].mxu0
    %9554 = vmatprep.mubr.bf16.mxu0 0
    %9555 = vmatmul.mubr.bf16.gmra.mrb[0].mxu0 %v9374
    %v9556 = vpop.f32.mrb[0].mxu0
    %v9557 = vadd.f32 %v9148, %v9556
    %v9558 = vpop.f32.mrb[0].mxu0
    %v9559 = vpop.f32.mrb[0].mxu0
    %v9560 = vadd.f32 %v9148, %v9559
    %v9561 = vpop.f32.mrb[0].mxu0
    %9562 = vmatprep.mubr.bf16.mxu0 0
    %9563 = vmatmul.mubr.bf16.gmra.mrb[0].mxu0 %v9377
    %v9564 = vpop.f32.mrb[0].mxu0
    %v9565 = vadd.f32 %v9148, %v9564
    %v9566 = vpop.f32.mrb[0].mxu0
    %v9567 = vpop.f32.mrb[0].mxu0
    %v9568 = vadd.f32 %v9148, %v9567
    %v9569 = vpop.f32.mrb[0].mxu0
    %9570 = vmatprep.mubr.bf16.mxu0 0
    %9571 = vmatmul.mubr.bf16.gmra.mrb[0].mxu0 %v9380
    %v9572 = vpop.f32.mrb[0].mxu0
    %v9573 = vadd.f32 %v9148, %v9572
    %v9574 = vpop.f32.mrb[0].mxu0
    %v9575 = vpop.f32.mrb[0].mxu0
    %v9576 = vadd.f32 %v9148, %v9575
    %v9577 = vpop.f32.mrb[0].mxu0
    %9578 = vmatprep.mubr.bf16.mxu0 0
    %9579 = vmatmul.mubr.bf16.gmra.mrb[0].mxu0 %v9383
    %v9580 = vpop.f32.mrb[0].mxu0
    %v9581 = vadd.f32 %v9148, %v9580
    %v9582 = vpop.f32.mrb[0].mxu0
    %v9583 = vpop.f32.mrb[0].mxu0
    %v9584 = vadd.f32 %v9148, %v9583
    %v9585 = vpop.f32.mrb[0].mxu0
    %9586 = vmatprep.mubr.bf16.mxu0 0
    %9587 = vmatmul.mubr.bf16.gmra.mrb[0].mxu0 %v9386
    %v9588 = vpop.f32.mrb[0].mxu0
    %v9589 = vadd.f32 %v9148, %v9588
    %v9590 = vpop.f32.mrb[0].mxu0
    %v9591 = vpop.f32.mrb[0].mxu0
    %v9592 = vadd.f32 %v9148, %v9591
    %v9593 = vpop.f32.mrb[0].mxu0
    %9594 = vmatprep.mubr.bf16.mxu0 0
    %9595 = vmatmul.mubr.bf16.gmra.mrb[0].mxu0 %v9389
    %v9596 = vpop.f32.mrb[0].mxu0
    %v9597 = vadd.f32 %v9148, %v9596
    %v9598 = vpop.f32.mrb[0].mxu0
    %v9599 = vpop.f32.mrb[0].mxu0
    %v9600 = vadd.f32 %v9148, %v9599
    %v9601 = vpop.f32.mrb[0].mxu0
    %9602 = vmatprep.mubr.bf16.mxu0 0
    %9603 = vmatmul.mubr.bf16.gmra.mrb[0].mxu0 %v9392
    %v9604 = vpop.f32.mrb[0].mxu0
    %v9605 = vadd.f32 %v9148, %v9604
    %v9606 = vpop.f32.mrb[0].mxu0
    %v9607 = vpop.f32.mrb[0].mxu0
    %v9608 = vadd.f32 %v9148, %v9607
    %v9609 = vpop.f32.mrb[0].mxu0
    %9610 = vmatprep.mubr.bf16.mxu0 0
    %9611 = vmatmul.mubr.bf16.gmra.mrb[0].mxu0 %v9395
    %v9612 = vpop.f32.mrb[0].mxu0
    %v9613 = vadd.f32 %v9148, %v9612
    %v9614 = vpop.f32.mrb[0].mxu0
    %v9615 = vpop.f32.mrb[0].mxu0
    %v9616 = vadd.f32 %v9148, %v9615
    %v9617 = vpop.f32.mrb[0].mxu0
    %9618 = vmatprep.mubr.bf16.mxu0 0
    %9619 = vmatmul.mubr.bf16.gmra.mrb[0].mxu0 %v9398
    %v9620 = vpop.f32.mrb[0].mxu0
    %v9621 = vadd.f32 %v9148, %v9620
    %v9622 = vpop.f32.mrb[0].mxu0
    %v9623 = vpop.f32.mrb[0].mxu0
    %v9624 = vadd.f32 %v9148, %v9623
    %v9625 = vpop.f32.mrb[0].mxu0
    %9626 = vmatprep.mubr.bf16.mxu0 0
    %9627 = vmatmul.mubr.bf16.gmra.mrb[0].mxu0 %v9401
    %v9628 = vpop.f32.mrb[0].mxu0
    %v9629 = vadd.f32 %v9148, %v9628
    %v9630 = vpop.f32.mrb[0].mxu0
    %v9631 = vpop.f32.mrb[0].mxu0
    %v9632 = vadd.f32 %v9148, %v9631
    %v9633 = vpop.f32.mrb[0].mxu0
    %9634 = vmatprep.mubr.bf16.mxu0 0
    %9635 = vmatmul.mubr.bf16.gmra.mrb[0].mxu0 %v9404
    %v9636 = vpop.f32.mrb[0].mxu0
    %v9637 = vadd.f32 %v9148, %v9636
    %v9638 = vpop.f32.mrb[0].mxu0
    %v9639 = vpop.f32.mrb[0].mxu0
    %v9640 = vadd.f32 %v9148, %v9639
    %v9641 = vpop.f32.mrb[0].mxu0
    %9642 = vmatprep.mubr.bf16.mxu0 0
    %9643 = vmatmul.mubr.bf16.gmra.mrb[0].mxu0 %v9407
    %v9644 = vpop.f32.mrb[0].mxu0
    %v9645 = vadd.f32 %v9148, %v9644
    %v9646 = vpop.f32.mrb[0].mxu0
    %v9647 = vpop.f32.mrb[0].mxu0
    %v9648 = vadd.f32 %v9148, %v9647
    %v9649 = vpop.f32.mrb[0].mxu0
    %9650 = vmatprep.mubr.bf16.mxu0 0
    %9651 = vmatmul.mubr.bf16.gmra.mrb[0].mxu0 %v9410
    %v9652 = vpop.f32.mrb[0].mxu0
    %v9653 = vadd.f32 %v9148, %v9652
    %v9654 = vpop.f32.mrb[0].mxu0
    %v9655 = vpop.f32.mrb[0].mxu0
    %v9656 = vadd.f32 %v9148, %v9655
    %v9657 = vpop.f32.mrb[0].mxu0
    %9658 = vmatprep.mubr.bf16.mxu0 0
    %9659 = vmatmul.mubr.bf16.gmra.mrb[0].mxu0 %v9413
    %v9660 = vpop.f32.mrb[0].mxu0
    %v9661 = vadd.f32 %v9148, %v9660
    %v9662 = vpop.f32.mrb[0].mxu0
    %v9663 = vpop.f32.mrb[0].mxu0
    %v9664 = vadd.f32 %v9148, %v9663
    %v9665 = vpop.f32.mrb[0].mxu0
    %9666 = vmatprep.mubr.bf16.mxu0 0
    %9667 = vmatmul.mubr.bf16.gmra.mrb[0].mxu0 %v9416
    %v9668 = vpop.f32.mrb[0].mxu0
    %v9669 = vadd.f32 %v9148, %v9668
    %v9670 = vpop.f32.mrb[0].mxu0
    %v9671 = vpop.f32.mrb[0].mxu0
    %v9672 = vadd.f32 %v9148, %v9671
    %v9673 = vpop.f32.mrb[0].mxu0
    %9674 = vmatprep.mubr.bf16.mxu0 0
    %9675 = vmatmul.mubr.bf16.gmra.mrb[0].mxu0 %v9419
    %v9676 = vpop.f32.mrb[0].mxu0
    %v9677 = vadd.f32 %v9148, %v9676
    %v9678 = vpop.f32.mrb[0].mxu0
    %v9679 = vpop.f32.mrb[0].mxu0
    %v9680 = vadd.f32 %v9148, %v9679
    %v9681 = vpop.f32.mrb[0].mxu0
    %9682 = vmatprep.mubr.bf16.mxu0 0
    %9683 = vmatmul.mubr.bf16.gmra.mrb[0].mxu0 %v9422
    %v9684 = vpop.f32.mrb[0].mxu0
    %v9685 = vadd.f32 %v9148, %v9684
    %v9686 = vpop.f32.mrb[0].mxu0
    %v9687 = vpop.f32.mrb[0].mxu0
    %v9688 = vadd.f32 %v9148, %v9687
    %v9689 = vpop.f32.mrb[0].mxu0
    %9690 = vmatprep.mubr.bf16.mxu0 0
    %9691 = vmatmul.mubr.bf16.gmra.mrb[0].mxu0 %v9425
    %v9692 = vpop.f32.mrb[0].mxu0
    %v9693 = vadd.f32 %v9148, %v9692
    %v9694 = vpop.f32.mrb[0].mxu0
    %v9695 = vpop.f32.mrb[0].mxu0
    %v9696 = vadd.f32 %v9148, %v9695
    %v9697 = vpop.f32.mrb[0].mxu0
    %9698 = vmatprep.mubr.bf16.mxu0 0
    %9699 = vmatmul.mubr.bf16.gmra.mrb[0].mxu0 %v9428
    %v9700 = vpop.f32.mrb[0].mxu0
    %v9701 = vadd.f32 %v9148, %v9700
    %v9702 = vpop.f32.mrb[0].mxu0
    %v9703 = vpop.f32.mrb[0].mxu0
    %v9704 = vadd.f32 %v9148, %v9703
    %v9705 = vpop.f32.mrb[0].mxu0
    %9706 = vmatprep.mubr.bf16.mxu0 0
    %9707 = vmatmul.mubr.bf16.gmra.mrb[0].mxu0 %v9431
    %v9708 = vpop.f32.mrb[0].mxu0
    %v9709 = vadd.f32 %v9148, %v9708
    %v9710 = vpop.f32.mrb[0].mxu0
    %v9711 = vpop.f32.mrb[0].mxu0
    %v9712 = vadd.f32 %v9148, %v9711
    %v9713 = vpop.f32.mrb[0].mxu0
    %9714 = vmatprep.mubr.bf16.mxu0 0
    %9715 = vmatmul.mubr.bf16.gmra.mrb[0].mxu0 %v9434
    %v9716 = vpop.f32.mrb[0].mxu0
    %v9717 = vadd.f32 %v9148, %v9716
    %v9718 = vpop.f32.mrb[0].mxu0
    %v9719 = vpop.f32.mrb[0].mxu0
    %v9720 = vadd.f32 %v9148, %v9719
    %v9721 = vpop.f32.mrb[0].mxu0
    %9722 = vmatprep.mubr.bf16.mxu0 0
    %9723 = vmatmul.mubr.bf16.gmra.mrb[0].mxu0 %v9437
    %v9724 = vpop.f32.mrb[0].mxu0
    %v9725 = vadd.f32 %v9148, %v9724
    %v9726 = vpop.f32.mrb[0].mxu0
    %v9727 = vpop.f32.mrb[0].mxu0
    %v9728 = vadd.f32 %v9148, %v9727
    %v9729 = vpop.f32.mrb[0].mxu0
    %9730 = vmatprep.mubr.bf16.mxu0 0
    %9731 = vmatmul.mubr.bf16.gmra.mrb[0].mxu0 %v9440
    %v9732 = vpop.f32.mrb[0].mxu0
    %v9733 = vadd.f32 %v9148, %v9732
    %v9734 = vpop.f32.mrb[0].mxu0
    %v9735 = vpop.f32.mrb[0].mxu0
    %v9736 = vadd.f32 %v9148, %v9735
    %v9737 = vpop.f32.mrb[0].mxu0
    %9738 = vmatprep.mubr.bf16.mxu0 0
    %9739 = vmatmul.mubr.bf16.gmra.mrb[0].mxu0 %v9443
    %v9740 = vpop.f32.mrb[0].mxu0
    %v9741 = vadd.f32 %v9148, %v9740
    %v9742 = vpop.f32.mrb[0].mxu0
    %v9743 = vpop.f32.mrb[0].mxu0
    %v9744 = vadd.f32 %v9148, %v9743
    %v9745 = vpop.f32.mrb[0].mxu0
    %9746 = vmatprep.mubr.bf16.mxu0 0
    %9747 = vmatmul.mubr.bf16.gmra.mrb[0].mxu0 %v9446
    %v9748 = vpop.f32.mrb[0].mxu0
    %v9749 = vadd.f32 %v9148, %v9748
    %v9750 = vpop.f32.mrb[0].mxu0
    %v9751 = vpop.f32.mrb[0].mxu0
    %v9752 = vadd.f32 %v9148, %v9751
    %v9753 = vpop.f32.mrb[0].mxu0
    %9754 = vmatprep.mubr.bf16.mxu0 0
    %9755 = vmatmul.mubr.bf16.gmra.mrb[0].mxu0 %v9449
    %v9756 = vpop.f32.mrb[0].mxu0
    %v9757 = vadd.f32 %v9148, %v9756
    %v9758 = vpop.f32.mrb[0].mxu0
    %v9759 = vpop.f32.mrb[0].mxu0
    %v9760 = vadd.f32 %v9148, %v9759
    %v9761 = vpop.f32.mrb[0].mxu0
    %9762 = vmatprep.mubr.bf16.mxu0 0
    %9763 = vmatmul.mubr.bf16.gmra.mrb[0].mxu0 %v9452
    %v9764 = vpop.f32.mrb[0].mxu0
    %v9765 = vadd.f32 %v9148, %v9764
    %v9766 = vpop.f32.mrb[0].mxu0
    %v9767 = vpop.f32.mrb[0].mxu0
    %v9768 = vadd.f32 %v9148, %v9767
    %v9769 = vpop.f32.mrb[0].mxu0
    %9770 = vmatprep.mubr.bf16.mxu0 0
    %9771 = vmatmul.mubr.bf16.gmra.mrb[0].mxu0 %v9455
    %v9772 = vpop.f32.mrb[0].mxu0
    %v9773 = vadd.f32 %v9148, %v9772
    %v9774 = vpop.f32.mrb[0].mxu0
    %v9775 = vpop.f32.mrb[0].mxu0
    %v9776 = vadd.f32 %v9148, %v9775
    %v9777 = vpop.f32.mrb[0].mxu0
    %9778 = vmatprep.mubr.bf16.mxu0 0
    %9779 = vmatmul.mubr.bf16.gmra.mrb[0].mxu0 %v9458
    %v9780 = vpop.f32.mrb[0].mxu0
    %v9781 = vadd.f32 %v9148, %v9780
    %v9782 = vpop.f32.mrb[0].mxu0
    %v9783 = vpop.f32.mrb[0].mxu0
    %v9784 = vadd.f32 %v9148, %v9783
    %v9785 = vpop.f32.mrb[0].mxu0
    %9786 = vmatprep.mubr.bf16.mxu0 0
    %9787 = vmatmul.mubr.bf16.gmra.mrb[0].mxu0 %v9461
    %v9788 = vpop.f32.mrb[0].mxu0
    %v9789 = vadd.f32 %v9148, %v9788
    %v9790 = vpop.f32.mrb[0].mxu0
    %v9791 = vpop.f32.mrb[0].mxu0
    %v9792 = vadd.f32 %v9148, %v9791
    %v9793 = vpop.f32.mrb[0].mxu0
    %9794 = vmatprep.mubr.bf16.mxu0 0
    %9795 = vmatmul.mubr.bf16.gmra.mrb[0].mxu0 %v9464
    %v9796 = vpop.f32.mrb[0].mxu0
    %v9797 = vadd.f32 %v9148, %v9796
    %v9798 = vpop.f32.mrb[0].mxu0
    %v9799 = vpop.f32.mrb[0].mxu0
    %v9800 = vadd.f32 %v9148, %v9799
    %v9801 = vpop.f32.mrb[0].mxu0
    %9802 = vmatprep.mubr.bf16.mxu0 0
    %9803 = vmatmul.mubr.bf16.gmra.mrb[0].mxu0 %v9467
    %v9804 = vpop.f32.mrb[0].mxu0
    %v9805 = vadd.f32 %v9148, %v9804
    %v9806 = vpop.f32.mrb[0].mxu0
    %v9807 = vpop.f32.mrb[0].mxu0
    %v9808 = vadd.f32 %v9148, %v9807
    %v9809 = vpop.f32.mrb[0].mxu0
    %9810 = vmatprep.mubr.bf16.mxu0 0
    %9811 = vmatmul.mubr.bf16.gmra.mrb[0].mxu0 %v9470
    %v9812 = vpop.f32.mrb[0].mxu0
    %v9813 = vadd.f32 %v9148, %v9812
    %v9814 = vpop.f32.mrb[0].mxu0
    %v9815 = vpop.f32.mrb[0].mxu0
    %v9816 = vadd.f32 %v9148, %v9815
    %v9817 = vpop.f32.mrb[0].mxu0
    %9818 = vmatprep.mubr.bf16.mxu0 0
    %9819 = vmatmul.mubr.bf16.gmra.mrb[0].mxu0 %v9473
    %v9820 = vpop.f32.mrb[0].mxu0
    %v9821 = vadd.f32 %v9148, %v9820
    %v9822 = vpop.f32.mrb[0].mxu0
    %v9823 = vpop.f32.mrb[0].mxu0
    %v9824 = vadd.f32 %v9148, %v9823
    %v9825 = vpop.f32.mrb[0].mxu0
    %9826 = vmatprep.mubr.bf16.mxu0 0
    %9827 = vmatmul.mubr.bf16.gmra.mrb[0].mxu0 %v9476
    %v9828 = vpop.f32.mrb[0].mxu0
    %v9829 = vadd.f32 %v9148, %v9828
    %v9830 = vpop.f32.mrb[0].mxu0
    %v9831 = vpop.f32.mrb[0].mxu0
    %v9832 = vadd.f32 %v9148, %v9831
    %v9833 = vpop.f32.mrb[0].mxu0
    %9834 = vmatprep.mubr.bf16.mxu0 0
    %9835 = vmatmul.mubr.bf16.gmra.mrb[0].mxu0 %v9479
    %v9836 = vpop.f32.mrb[0].mxu0
    %v9837 = vadd.f32 %v9148, %v9836
    %v9838 = vpop.f32.mrb[0].mxu0
    %v9839 = vpop.f32.mrb[0].mxu0
    %v9840 = vadd.f32 %v9148, %v9839
    %v9841 = vpop.f32.mrb[0].mxu0
    %9842 = vmatprep.mubr.bf16.mxu0 0
    %9843 = vmatmul.mubr.bf16.gmra.mrb[0].mxu0 %v9482
    %v9844 = vpop.f32.mrb[0].mxu0
    %v9845 = vadd.f32 %v9148, %v9844
    %v9846 = vpop.f32.mrb[0].mxu0
    %v9847 = vpop.f32.mrb[0].mxu0
    %v9848 = vadd.f32 %v9148, %v9847
    %v9849 = vpop.f32.mrb[0].mxu0
    %9850 = vmatprep.mubr.bf16.mxu0 0
    %9851 = vmatmul.mubr.bf16.gmra.mrb[0].mxu0 %v9485
    %v9852 = vpop.f32.mrb[0].mxu0
    %v9853 = vadd.f32 %v9148, %v9852
    %v9854 = vpop.f32.mrb[0].mxu0
    %v9855 = vpop.f32.mrb[0].mxu0
    %v9856 = vadd.f32 %v9148, %v9855
    %v9857 = vpop.f32.mrb[0].mxu0
    %9858 = vdwg.mxu0
    %v9859 = vld [vmem:[#allocation3] sm:$0xff]
    %v9860 = vld [vmem:[#allocation3 + $0x8] sm:$0xff]
    %v9861 = vld [vmem:[#allocation3 + $0x10] sm:$0xff]
    %v9862 = vld [vmem:[#allocation3 + $0x18] sm:$0xff]
    %v9863 = vld [vmem:[#allocation3 + $0x20] sm:$0xff]
    %v9864 = vld [vmem:[#allocation3 + $0x28] sm:$0xff]
    %v9865 = vld [vmem:[#allocation3 + $0x30] sm:$0xff]
    %v9866 = vld [vmem:[#allocation3 + $0x38] sm:$0xff]
    %v9867 = vld [vmem:[#allocation3 + $0x40] sm:$0xff]
    %v9868 = vld [vmem:[#allocation3 + $0x48] sm:$0xff]
    %v9869 = vld [vmem:[#allocation3 + $0x50] sm:$0xff]
    %v9870 = vld [vmem:[#allocation3 + $0x58] sm:$0xff]
    %v9871 = vld [vmem:[#allocation3 + $0x60] sm:$0xff]
    %v9872 = vld [vmem:[#allocation3 + $0x68] sm:$0xff]
    %v9873 = vld [vmem:[#allocation3 + $0x70] sm:$0xff]
    %v9874 = vld [vmem:[#allocation3 + $0x78] sm:$0xff]
    %v9875 = vld [vmem:[#allocation3 + $0x80] sm:$0xff]
    %v9876 = vld [vmem:[#allocation3 + $0x88] sm:$0xff]
    %v9877 = vld [vmem:[#allocation3 + $0x90] sm:$0xff]
    %v9878 = vld [vmem:[#allocation3 + $0x98] sm:$0xff]
    %v9879 = vld [vmem:[#allocation3 + $0xa0] sm:$0xff]
    %v9880 = vld [vmem:[#allocation3 + $0xa8] sm:$0xff]
    %v9881 = vld [vmem:[#allocation3 + $0xb0] sm:$0xff]
    %v9882 = vld [vmem:[#allocation3 + $0xb8] sm:$0xff]
    %v9883 = vld [vmem:[#allocation3 + $0xc0] sm:$0xff]
    %v9884 = vld [vmem:[#allocation3 + $0xc8] sm:$0xff]
    %v9885 = vld [vmem:[#allocation3 + $0xd0] sm:$0xff]
    %v9886 = vld [vmem:[#allocation3 + $0xd8] sm:$0xff]
    %v9887 = vld [vmem:[#allocation3 + $0xe0] sm:$0xff]
    %v9888 = vld [vmem:[#allocation3 + $0xe8] sm:$0xff]
    %v9889 = vld [vmem:[#allocation3 + $0xf0] sm:$0xff]
    %v9890 = vld [vmem:[#allocation3 + $0xf8] sm:$0xff]
    %v9891 = vld [vmem:[#allocation3 + $0x100] sm:$0xff]
    %v9892 = vld [vmem:[#allocation3 + $0x108] sm:$0xff]
    %v9893 = vld [vmem:[#allocation3 + $0x110] sm:$0xff]
    %v9894 = vld [vmem:[#allocation3 + $0x118] sm:$0xff]
    %v9895 = vld [vmem:[#allocation3 + $0x120] sm:$0xff]
    %v9896 = vld [vmem:[#allocation3 + $0x128] sm:$0xff]
    %v9897 = vld [vmem:[#allocation3 + $0x130] sm:$0xff]
    %v9898 = vld [vmem:[#allocation3 + $0x138] sm:$0xff]
    %v9899 = vld [vmem:[#allocation3 + $0x140] sm:$0xff]
    %v9900 = vld [vmem:[#allocation3 + $0x148] sm:$0xff]
    %v9901 = vld [vmem:[#allocation3 + $0x150] sm:$0xff]
    %v9902 = vld [vmem:[#allocation3 + $0x158] sm:$0xff]
    %v9903 = vld [vmem:[#allocation3 + $0x160] sm:$0xff]
    %v9904 = vld [vmem:[#allocation3 + $0x168] sm:$0xff]
    %v9905 = vld [vmem:[#allocation3 + $0x170] sm:$0xff]
    %v9906 = vld [vmem:[#allocation3 + $0x178] sm:$0xff]
    %v9907 = vld [vmem:[#allocation3 + $0x180] sm:$0xff]
    %v9908 = vld [vmem:[#allocation3 + $0x188] sm:$0xff]
    %v9909 = vld [vmem:[#allocation3 + $0x190] sm:$0xff]
    %v9910 = vld [vmem:[#allocation3 + $0x198] sm:$0xff]
    %v9911 = vld [vmem:[#allocation3 + $0x1a0] sm:$0xff]
    %v9912 = vld [vmem:[#allocation3 + $0x1a8] sm:$0xff]
    %v9913 = vld [vmem:[#allocation3 + $0x1b0] sm:$0xff]
    %v9914 = vld [vmem:[#allocation3 + $0x1b8] sm:$0xff]
    %v9915 = vld [vmem:[#allocation3 + $0x1c0] sm:$0xff]
    %v9916 = vld [vmem:[#allocation3 + $0x1c8] sm:$0xff]
    %v9917 = vld [vmem:[#allocation3 + $0x1d0] sm:$0xff]
    %v9918 = vld [vmem:[#allocation3 + $0x1d8] sm:$0xff]
    %v9919 = vld [vmem:[#allocation3 + $0x1e0] sm:$0xff]
    %v9920 = vld [vmem:[#allocation3 + $0x1e8] sm:$0xff]
    %v9921 = vld [vmem:[#allocation3 + $0x1f0] sm:$0xff]
    %v9922 = vld [vmem:[#allocation3 + $0x1f8] sm:$0xff]
    %v9923 = vld [vmem:[#allocation3 + $0x200] sm:$0xff]
    %v9924 = vld [vmem:[#allocation3 + $0x208] sm:$0xff]
    %v9925 = vld [vmem:[#allocation3 + $0x210] sm:$0xff]
    %v9926 = vld [vmem:[#allocation3 + $0x218] sm:$0xff]
    %v9927 = vld [vmem:[#allocation3 + $0x220] sm:$0xff]
    %v9928 = vld [vmem:[#allocation3 + $0x228] sm:$0xff]
    %v9929 = vld [vmem:[#allocation3 + $0x230] sm:$0xff]
    %v9930 = vld [vmem:[#allocation3 + $0x238] sm:$0xff]
    %v9931 = vld [vmem:[#allocation3 + $0x240] sm:$0xff]
    %v9932 = vld [vmem:[#allocation3 + $0x248] sm:$0xff]
    %v9933 = vld [vmem:[#allocation3 + $0x250] sm:$0xff]
    %v9934 = vld [vmem:[#allocation3 + $0x258] sm:$0xff]
    %v9935 = vld [vmem:[#allocation3 + $0x260] sm:$0xff]
    %v9936 = vld [vmem:[#allocation3 + $0x268] sm:$0xff]
    %v9937 = vld [vmem:[#allocation3 + $0x270] sm:$0xff]
    %v9938 = vld [vmem:[#allocation3 + $0x278] sm:$0xff]
    %v9939 = vld [vmem:[#allocation3 + $0x280] sm:$0xff]
    %v9940 = vld [vmem:[#allocation3 + $0x288] sm:$0xff]
    %v9941 = vld [vmem:[#allocation3 + $0x290] sm:$0xff]
    %v9942 = vld [vmem:[#allocation3 + $0x298] sm:$0xff]
    %v9943 = vld [vmem:[%s5] sm:$0x1]
    %v9945 = vlaneseq
    %v9946 = vshrl.u32 %v9945, 7
    %v9947 = vsub.s32 0, %v9946
    %v9948 = vrot.slane %v9943, %v9947
    %v9950 = vadd.f32 %v9525, %v9948
    %v9951 = vadd.f32 %v9528, %v9948
    %v9952 = vadd.f32 %v9533, %v9948
    %v9953 = vadd.f32 %v9536, %v9948
    %v9954 = vadd.f32 %v9541, %v9948
    %v9955 = vadd.f32 %v9544, %v9948
    %v9956 = vadd.f32 %v9549, %v9948
    %v9957 = vadd.f32 %v9552, %v9948
    %v9958 = vadd.f32 %v9557, %v9948
    %v9959 = vadd.f32 %v9560, %v9948
    %v9960 = vadd.f32 %v9565, %v9948
    %v9961 = vadd.f32 %v9568, %v9948
    %v9962 = vadd.f32 %v9573, %v9948
    %v9963 = vadd.f32 %v9576, %v9948
    %v9964 = vadd.f32 %v9581, %v9948
    %v9965 = vadd.f32 %v9584, %v9948
    %v9966 = vadd.f32 %v9589, %v9948
    %v9967 = vadd.f32 %v9592, %v9948
    %v9968 = vadd.f32 %v9597, %v9948
    %v9969 = vadd.f32 %v9600, %v9948
    %v9970 = vadd.f32 %v9605, %v9948
    %v9971 = vadd.f32 %v9608, %v9948
    %v9972 = vadd.f32 %v9613, %v9948
    %v9973 = vadd.f32 %v9616, %v9948
    %v9974 = vadd.f32 %v9621, %v9948
    %v9975 = vadd.f32 %v9624, %v9948
    %v9976 = vadd.f32 %v9629, %v9948
    %v9977 = vadd.f32 %v9632, %v9948
    %v9978 = vadd.f32 %v9637, %v9948
    %v9979 = vadd.f32 %v9640, %v9948
    %v9980 = vadd.f32 %v9645, %v9948
    %v9981 = vadd.f32 %v9648, %v9948
    %v9982 = vadd.f32 %v9653, %v9948
    %v9983 = vadd.f32 %v9656, %v9948
    %v9984 = vadd.f32 %v9661, %v9948
    %v9985 = vadd.f32 %v9664, %v9948
    %v9986 = vadd.f32 %v9669, %v9948
    %v9987 = vadd.f32 %v9672, %v9948
    %v9988 = vadd.f32 %v9677, %v9948
    %v9989 = vadd.f32 %v9680, %v9948
    %v9990 = vadd.f32 %v9685, %v9948
    %v9991 = vadd.f32 %v9688, %v9948
    %v9992 = vadd.f32 %v9693, %v9948
    %v9993 = vadd.f32 %v9696, %v9948
    %v9994 = vadd.f32 %v9701, %v9948
    %v9995 = vadd.f32 %v9704, %v9948
    %v9996 = vadd.f32 %v9709, %v9948
    %v9997 = vadd.f32 %v9712, %v9948
    %v9998 = vadd.f32 %v9717, %v9948
    %v9999 = vadd.f32 %v9720, %v9948
    %v10000 = vadd.f32 %v9725, %v9948
    %v10001 = vadd.f32 %v9728, %v9948
    %v10002 = vadd.f32 %v9733, %v9948
    %v10003 = vadd.f32 %v9736, %v9948
    %v10004 = vadd.f32 %v9741, %v9948
    %v10005 = vadd.f32 %v9744, %v9948
    %v10006 = vadd.f32 %v9749, %v9948
    %v10007 = vadd.f32 %v9752, %v9948
    %v10008 = vadd.f32 %v9757, %v9948
    %v10009 = vadd.f32 %v9760, %v9948
    %v10010 = vadd.f32 %v9765, %v9948
    %v10011 = vadd.f32 %v9768, %v9948
    %v10012 = vadd.f32 %v9773, %v9948
    %v10013 = vadd.f32 %v9776, %v9948
    %v10014 = vadd.f32 %v9781, %v9948
    %v10015 = vadd.f32 %v9784, %v9948
    %v10016 = vadd.f32 %v9789, %v9948
    %v10017 = vadd.f32 %v9792, %v9948
    %v10018 = vadd.f32 %v9797, %v9948
    %v10019 = vadd.f32 %v9800, %v9948
    %v10020 = vadd.f32 %v9805, %v9948
    %v10021 = vadd.f32 %v9808, %v9948
    %v10022 = vadd.f32 %v9813, %v9948
    %v10023 = vadd.f32 %v9816, %v9948
    %v10024 = vadd.f32 %v9821, %v9948
    %v10025 = vadd.f32 %v9824, %v9948
    %v10026 = vadd.f32 %v9829, %v9948
    %v10027 = vadd.f32 %v9832, %v9948
    %v10028 = vadd.f32 %v9837, %v9948
    %v10029 = vadd.f32 %v9840, %v9948
    %v10030 = vadd.f32 %v9845, %v9948
    %v10031 = vadd.f32 %v9848, %v9948
    %v10032 = vadd.f32 %v9853, %v9948
    %v10033 = vadd.f32 %v9856, %v9948
    %v10034 = vadd.f32 %v9859, %v9950
    %v10035 = vadd.f32 %v9860, %v9951
    %v10036 = vadd.f32 %v9861, %v9952
    %v10037 = vadd.f32 %v9862, %v9953
    %v10038 = vadd.f32 %v9863, %v9954
    %v10039 = vadd.f32 %v9864, %v9955
    %v10040 = vadd.f32 %v9865, %v9956
    %v10041 = vadd.f32 %v9866, %v9957
    %v10042 = vadd.f32 %v9867, %v9958
    %v10043 = vadd.f32 %v9868, %v9959
    %v10044 = vadd.f32 %v9869, %v9960
    %v10045 = vadd.f32 %v9870, %v9961
    %v10046 = vadd.f32 %v9871, %v9962
    %v10047 = vadd.f32 %v9872, %v9963
    %v10048 = vadd.f32 %v9873, %v9964
    %v10049 = vadd.f32 %v9874, %v9965
    %v10050 = vadd.f32 %v9875, %v9966
    %v10051 = vadd.f32 %v9876, %v9967
    %v10052 = vadd.f32 %v9877, %v9968
    %v10053 = vadd.f32 %v9878, %v9969
    %v10054 = vadd.f32 %v9879, %v9970
    %v10055 = vadd.f32 %v9880, %v9971
    %v10056 = vadd.f32 %v9881, %v9972
    %v10057 = vadd.f32 %v9882, %v9973
    %v10058 = vadd.f32 %v9883, %v9974
    %v10059 = vadd.f32 %v9884, %v9975
    %v10060 = vadd.f32 %v9885, %v9976
    %v10061 = vadd.f32 %v9886, %v9977
    %v10062 = vadd.f32 %v9887, %v9978
    %v10063 = vadd.f32 %v9888, %v9979
    %v10064 = vadd.f32 %v9889, %v9980
    %v10065 = vadd.f32 %v9890, %v9981
    %v10066 = vadd.f32 %v9891, %v9982
    %v10067 = vadd.f32 %v9892, %v9983
    %v10068 = vadd.f32 %v9893, %v9984
    %v10069 = vadd.f32 %v9894, %v9985
    %v10070 = vadd.f32 %v9895, %v9986
    %v10071 = vadd.f32 %v9896, %v9987
    %v10072 = vadd.f32 %v9897, %v9988
    %v10073 = vadd.f32 %v9898, %v9989
    %v10074 = vadd.f32 %v9899, %v9990
    %v10075 = vadd.f32 %v9900, %v9991
    %v10076 = vadd.f32 %v9901, %v9992
    %v10077 = vadd.f32 %v9902, %v9993
    %v10078 = vadd.f32 %v9903, %v9994
    %v10079 = vadd.f32 %v9904, %v9995
    %v10080 = vadd.f32 %v9905, %v9996
    %v10081 = vadd.f32 %v9906, %v9997
    %v10082 = vadd.f32 %v9907, %v9998
    %v10083 = vadd.f32 %v9908, %v9999
    %v10084 = vadd.f32 %v9909, %v10000
    %v10085 = vadd.f32 %v9910, %v10001
    %v10086 = vadd.f32 %v9911, %v10002
    %v10087 = vadd.f32 %v9912, %v10003
    %v10088 = vadd.f32 %v9913, %v10004
    %v10089 = vadd.f32 %v9914, %v10005
    %v10090 = vadd.f32 %v9915, %v10006
    %v10091 = vadd.f32 %v9916, %v10007
    %v10092 = vadd.f32 %v9917, %v10008
    %v10093 = vadd.f32 %v9918, %v10009
    %v10094 = vadd.f32 %v9919, %v10010
    %v10095 = vadd.f32 %v9920, %v10011
    %v10096 = vadd.f32 %v9921, %v10012
    %v10097 = vadd.f32 %v9922, %v10013
    %v10098 = vadd.f32 %v9923, %v10014
    %v10099 = vadd.f32 %v9924, %v10015
    %v10100 = vadd.f32 %v9925, %v10016
    %v10101 = vadd.f32 %v9926, %v10017
    %v10102 = vadd.f32 %v9927, %v10018
    %v10103 = vadd.f32 %v9928, %v10019
    %v10104 = vadd.f32 %v9929, %v10020
    %v10105 = vadd.f32 %v9930, %v10021
    %v10106 = vadd.f32 %v9931, %v10022
    %v10107 = vadd.f32 %v9932, %v10023
    %v10108 = vadd.f32 %v9933, %v10024
    %v10109 = vadd.f32 %v9934, %v10025
    %v10110 = vadd.f32 %v9935, %v10026
    %v10111 = vadd.f32 %v9936, %v10027
    %v10112 = vadd.f32 %v9937, %v10028
    %v10113 = vadd.f32 %v9938, %v10029
    %v10114 = vadd.f32 %v9939, %v10030
    %v10115 = vadd.f32 %v9940, %v10031
    %v10116 = vadd.f32 %v9941, %v10032
    %v10117 = vadd.f32 %v9942, %v10033
    %10118 = vst.msk [vmem:[#allocation3] sm:$0xff] %vm1527, %v10034
    %10119 = vst.msk [vmem:[#allocation3 + $0x8] sm:$0xff] %vm1527, %v10035
    %10120 = vst.msk [vmem:[#allocation3 + $0x10] sm:$0xff] %vm1527, %v10036
    %10121 = vst.msk [vmem:[#allocation3 + $0x18] sm:$0xff] %vm1527, %v10037
    %10122 = vst.msk [vmem:[#allocation3 + $0x20] sm:$0xff] %vm1527, %v10038
    %10123 = vst.msk [vmem:[#allocation3 + $0x28] sm:$0xff] %vm1527, %v10039
    %10124 = vst.msk [vmem:[#allocation3 + $0x30] sm:$0xff] %vm1527, %v10040
    %10125 = vst.msk [vmem:[#allocation3 + $0x38] sm:$0xff] %vm1527, %v10041
    %10126 = vst.msk [vmem:[#allocation3 + $0x40] sm:$0xff] %vm1527, %v10042
    %10127 = vst.msk [vmem:[#allocation3 + $0x48] sm:$0xff] %vm1527, %v10043
    %10128 = vst.msk [vmem:[#allocation3 + $0x50] sm:$0xff] %vm1527, %v10044
    %10129 = vst.msk [vmem:[#allocation3 + $0x58] sm:$0xff] %vm1527, %v10045
    %10130 = vst.msk [vmem:[#allocation3 + $0x60] sm:$0xff] %vm1527, %v10046
    %10131 = vst.msk [vmem:[#allocation3 + $0x68] sm:$0xff] %vm1527, %v10047
    %10132 = vst.msk [vmem:[#allocation3 + $0x70] sm:$0xff] %vm1527, %v10048
    %10133 = vst.msk [vmem:[#allocation3 + $0x78] sm:$0xff] %vm1527, %v10049
    %10134 = vst.msk [vmem:[#allocation3 + $0x80] sm:$0xff] %vm1527, %v10050
    %10135 = vst.msk [vmem:[#allocation3 + $0x88] sm:$0xff] %vm1527, %v10051
    %10136 = vst.msk [vmem:[#allocation3 + $0x90] sm:$0xff] %vm1527, %v10052
    %10137 = vst.msk [vmem:[#allocation3 + $0x98] sm:$0xff] %vm1527, %v10053
    %10138 = vst.msk [vmem:[#allocation3 + $0xa0] sm:$0xff] %vm1527, %v10054
    %10139 = vst.msk [vmem:[#allocation3 + $0xa8] sm:$0xff] %vm1527, %v10055
    %10140 = vst.msk [vmem:[#allocation3 + $0xb0] sm:$0xff] %vm1527, %v10056
    %10141 = vst.msk [vmem:[#allocation3 + $0xb8] sm:$0xff] %vm1527, %v10057
    %10142 = vst.msk [vmem:[#allocation3 + $0xc0] sm:$0xff] %vm1527, %v10058
    %10143 = vst.msk [vmem:[#allocation3 + $0xc8] sm:$0xff] %vm1527, %v10059
    %10144 = vst.msk [vmem:[#allocation3 + $0xd0] sm:$0xff] %vm1527, %v10060
    %10145 = vst.msk [vmem:[#allocation3 + $0xd8] sm:$0xff] %vm1527, %v10061
    %10146 = vst.msk [vmem:[#allocation3 + $0xe0] sm:$0xff] %vm1527, %v10062
    %10147 = vst.msk [vmem:[#allocation3 + $0xe8] sm:$0xff] %vm1527, %v10063
    %10148 = vst.msk [vmem:[#allocation3 + $0xf0] sm:$0xff] %vm1527, %v10064
    %10149 = vst.msk [vmem:[#allocation3 + $0xf8] sm:$0xff] %vm1527, %v10065
    %10150 = vst.msk [vmem:[#allocation3 + $0x100] sm:$0xff] %vm1527, %v10066
    %10151 = vst.msk [vmem:[#allocation3 + $0x108] sm:$0xff] %vm1527, %v10067
    %10152 = vst.msk [vmem:[#allocation3 + $0x110] sm:$0xff] %vm1527, %v10068
    %10153 = vst.msk [vmem:[#allocation3 + $0x118] sm:$0xff] %vm1527, %v10069
    %10154 = vst.msk [vmem:[#allocation3 + $0x120] sm:$0xff] %vm1527, %v10070
    %10155 = vst.msk [vmem:[#allocation3 + $0x128] sm:$0xff] %vm1527, %v10071
    %10156 = vst.msk [vmem:[#allocation3 + $0x130] sm:$0xff] %vm1527, %v10072
    %10157 = vst.msk [vmem:[#allocation3 + $0x138] sm:$0xff] %vm1527, %v10073
    %10158 = vst.msk [vmem:[#allocation3 + $0x140] sm:$0xff] %vm1527, %v10074
    %10159 = vst.msk [vmem:[#allocation3 + $0x148] sm:$0xff] %vm1527, %v10075
    %10160 = vst.msk [vmem:[#allocation3 + $0x150] sm:$0xff] %vm1527, %v10076
    %10161 = vst.msk [vmem:[#allocation3 + $0x158] sm:$0xff] %vm1527, %v10077
    %10162 = vst.msk [vmem:[#allocation3 + $0x160] sm:$0xff] %vm1527, %v10078
    %10163 = vst.msk [vmem:[#allocation3 + $0x168] sm:$0xff] %vm1527, %v10079
    %10164 = vst.msk [vmem:[#allocation3 + $0x170] sm:$0xff] %vm1527, %v10080
    %10165 = vst.msk [vmem:[#allocation3 + $0x178] sm:$0xff] %vm1527, %v10081
    %10166 = vst.msk [vmem:[#allocation3 + $0x180] sm:$0xff] %vm1527, %v10082
    %10167 = vst.msk [vmem:[#allocation3 + $0x188] sm:$0xff] %vm1527, %v10083
    %10168 = vst.msk [vmem:[#allocation3 + $0x190] sm:$0xff] %vm1527, %v10084
    %10169 = vst.msk [vmem:[#allocation3 + $0x198] sm:$0xff] %vm1527, %v10085
    %10170 = vst.msk [vmem:[#allocation3 + $0x1a0] sm:$0xff] %vm1527, %v10086
    %10171 = vst.msk [vmem:[#allocation3 + $0x1a8] sm:$0xff] %vm1527, %v10087
    %10172 = vst.msk [vmem:[#allocation3 + $0x1b0] sm:$0xff] %vm1527, %v10088
    %10173 = vst.msk [vmem:[#allocation3 + $0x1b8] sm:$0xff] %vm1527, %v10089
    %10174 = vst.msk [vmem:[#allocation3 + $0x1c0] sm:$0xff] %vm1527, %v10090
    %10175 = vst.msk [vmem:[#allocation3 + $0x1c8] sm:$0xff] %vm1527, %v10091
    %10176 = vst.msk [vmem:[#allocation3 + $0x1d0] sm:$0xff] %vm1527, %v10092
    %10177 = vst.msk [vmem:[#allocation3 + $0x1d8] sm:$0xff] %vm1527, %v10093
    %10178 = vst.msk [vmem:[#allocation3 + $0x1e0] sm:$0xff] %vm1527, %v10094
    %10179 = vst.msk [vmem:[#allocation3 + $0x1e8] sm:$0xff] %vm1527, %v10095
    %10180 = vst.msk [vmem:[#allocation3 + $0x1f0] sm:$0xff] %vm1527, %v10096
    %10181 = vst.msk [vmem:[#allocation3 + $0x1f8] sm:$0xff] %vm1527, %v10097
    %10182 = vst.msk [vmem:[#allocation3 + $0x200] sm:$0xff] %vm1527, %v10098
    %10183 = vst.msk [vmem:[#allocation3 + $0x208] sm:$0xff] %vm1527, %v10099
    %10184 = vst.msk [vmem:[#allocation3 + $0x210] sm:$0xff] %vm1527, %v10100
    %10185 = vst.msk [vmem:[#allocation3 + $0x218] sm:$0xff] %vm1527, %v10101
    %10186 = vst.msk [vmem:[#allocation3 + $0x220] sm:$0xff] %vm1527, %v10102
    %10187 = vst.msk [vmem:[#allocation3 + $0x228] sm:$0xff] %vm1527, %v10103
    %10188 = vst.msk [vmem:[#allocation3 + $0x230] sm:$0xff] %vm1527, %v10104
    %10189 = vst.msk [vmem:[#allocation3 + $0x238] sm:$0xff] %vm1527, %v10105
    %10190 = vst.msk [vmem:[#allocation3 + $0x240] sm:$0xff] %vm1527, %v10106
    %10191 = vst.msk [vmem:[#allocation3 + $0x248] sm:$0xff] %vm1527, %v10107
    %10192 = vst.msk [vmem:[#allocation3 + $0x250] sm:$0xff] %vm1527, %v10108
    %10193 = vst.msk [vmem:[#allocation3 + $0x258] sm:$0xff] %vm1527, %v10109
    %10194 = vst.msk [vmem:[#allocation3 + $0x260] sm:$0xff] %vm1527, %v10110
    %10195 = vst.msk [vmem:[#allocation3 + $0x268] sm:$0xff] %vm1527, %v10111
    %10196 = vst.msk [vmem:[#allocation3 + $0x270] sm:$0xff] %vm1527, %v10112
    %10197 = vst.msk [vmem:[#allocation3 + $0x278] sm:$0xff] %vm1527, %v10113
    %10198 = vst.msk [vmem:[#allocation3 + $0x280] sm:$0xff] %vm1527, %v10114
    %10199 = vst.msk [vmem:[#allocation3 + $0x288] sm:$0xff] %vm1527, %v10115
    %10200 = vst.msk [vmem:[#allocation3 + $0x290] sm:$0xff] %vm1527, %v10116
    %10201 = vst.msk [vmem:[#allocation3 + $0x298] sm:$0xff] %vm1527, %v10117
    %s10202 = scalar_lea.vmem [#allocation3], 24
    %v10203 = vld [vmem:[%s10202] ss:$2 sm:$0xff]
    %s10204 = scalar_lea.vmem [#allocation3], 25
    %v10205 = vld [vmem:[%s10204] ss:$2 sm:$0xff]
    %s10206 = scalar_lea.vmem [#allocation3], 42
    %v10207 = vld [vmem:[%s10206] ss:$2 sm:$0xff]
    %s10208 = scalar_lea.vmem [#allocation3], 43
    %v10209 = vld [vmem:[%s10208] ss:$2 sm:$0xff]
    %v10210 = vadd.f32 %v10203, %v10205
    %v10211 = vadd.f32 %v10210, %v10207
    %v10212 = vadd.f32 %v10211, %v10209
    %v10213 = vmul.f32 %v10212, 0.25
    %s10214 = scalar_lea.vmem [#allocation3], 60
    %v10215 = vld [vmem:[%s10214] ss:$2 sm:$0xff]
    %s10216 = scalar_lea.vmem [#allocation3], 61
    %v10217 = vld [vmem:[%s10216] ss:$2 sm:$0xff]
    %s10218 = scalar_lea.vmem [#allocation3], 78
    %v10219 = vld [vmem:[%s10218] ss:$2 sm:$0xff]
    %s10220 = scalar_lea.vmem [#allocation3], 79
    %v10221 = vld [vmem:[%s10220] ss:$2 sm:$0xff]
    %v10222 = vadd.f32 %v10215, %v10217
    %v10223 = vadd.f32 %v10222, %v10219
    %v10224 = vadd.f32 %v10223, %v10221
    %v10225 = vmul.f32 %v10224, 0.25
    %s10226 = scalar_lea.vmem [#allocation3], 96
    %v10227 = vld [vmem:[%s10226] ss:$2 sm:$0xff]
    %s10228 = scalar_lea.vmem [#allocation3], 97
    %v10229 = vld [vmem:[%s10228] ss:$2 sm:$0xff]
    %s10230 = scalar_lea.vmem [#allocation3], 114
    %v10231 = vld [vmem:[%s10230] ss:$2 sm:$0xff]
    %s10232 = scalar_lea.vmem [#allocation3], 115
    %v10233 = vld [vmem:[%s10232] ss:$2 sm:$0xff]
    %v10234 = vadd.f32 %v10227, %v10229
    %v10235 = vadd.f32 %v10234, %v10231
    %v10236 = vadd.f32 %v10235, %v10233
    %v10237 = vmul.f32 %v10236, 0.25
    %s10238 = scalar_lea.vmem [#allocation3], 132
    %v10239 = vld [vmem:[%s10238] ss:$2 sm:$0xff]
    %s10240 = scalar_lea.vmem [#allocation3], 133
    %v10241 = vld [vmem:[%s10240] ss:$2 sm:$0xff]
    %s10242 = scalar_lea.vmem [#allocation3], 150
    %v10243 = vld [vmem:[%s10242] ss:$2 sm:$0xff]
    %s10244 = scalar_lea.vmem [#allocation3], 151
    %v10245 = vld [vmem:[%s10244] ss:$2 sm:$0xff]
    %v10246 = vadd.f32 %v10239, %v10241
    %v10247 = vadd.f32 %v10246, %v10243
    %v10248 = vadd.f32 %v10247, %v10245
    %v10249 = vmul.f32 %v10248, 0.25
    %s10250 = scalar_lea.vmem [#allocation3], 168
    %v10251 = vld [vmem:[%s10250] ss:$2 sm:$0xff]
    %s10252 = scalar_lea.vmem [#allocation3], 169
    %v10253 = vld [vmem:[%s10252] ss:$2 sm:$0xff]
    %s10254 = scalar_lea.vmem [#allocation3], 186
    %v10255 = vld [vmem:[%s10254] ss:$2 sm:$0xff]
    %s10256 = scalar_lea.vmem [#allocation3], 187
    %v10257 = vld [vmem:[%s10256] ss:$2 sm:$0xff]
    %v10258 = vadd.f32 %v10251, %v10253
    %v10259 = vadd.f32 %v10258, %v10255
    %v10260 = vadd.f32 %v10259, %v10257
    %v10261 = vmul.f32 %v10260, 0.25
    %s10262 = scalar_lea.vmem [#allocation3], 204
    %v10263 = vld [vmem:[%s10262] ss:$2 sm:$0xff]
    %s10264 = scalar_lea.vmem [#allocation3], 205
    %v10265 = vld [vmem:[%s10264] ss:$2 sm:$0xff]
    %s10266 = scalar_lea.vmem [#allocation3], 222
    %v10267 = vld [vmem:[%s10266] ss:$2 sm:$0xff]
    %s10268 = scalar_lea.vmem [#allocation3], 223
    %v10269 = vld [vmem:[%s10268] ss:$2 sm:$0xff]
    %v10270 = vadd.f32 %v10263, %v10265
    %v10271 = vadd.f32 %v10270, %v10267
    %v10272 = vadd.f32 %v10271, %v10269
    %v10273 = vmul.f32 %v10272, 0.25
    %s10274 = scalar_lea.vmem [#allocation3], 240
    %v10275 = vld [vmem:[%s10274] ss:$2 sm:$0xff]
    %s10276 = scalar_lea.vmem [#allocation3], 241
    %v10277 = vld [vmem:[%s10276] ss:$2 sm:$0xff]
    %s10278 = scalar_lea.vmem [#allocation3], 258
    %v10279 = vld [vmem:[%s10278] ss:$2 sm:$0xff]
    %s10280 = scalar_lea.vmem [#allocation3], 259
    %v10281 = vld [vmem:[%s10280] ss:$2 sm:$0xff]
    %v10282 = vadd.f32 %v10275, %v10277
    %v10283 = vadd.f32 %v10282, %v10279
    %v10284 = vadd.f32 %v10283, %v10281
    %v10285 = vmul.f32 %v10284, 0.25
    %s10286 = scalar_lea.vmem [#allocation3], 276
    %v10287 = vld [vmem:[%s10286] ss:$2 sm:$0xff]
    %s10288 = scalar_lea.vmem [#allocation3], 277
    %v10289 = vld [vmem:[%s10288] ss:$2 sm:$0xff]
    %s10290 = scalar_lea.vmem [#allocation3], 294
    %v10291 = vld [vmem:[%s10290] ss:$2 sm:$0xff]
    %s10292 = scalar_lea.vmem [#allocation3], 295
    %v10293 = vld [vmem:[%s10292] ss:$2 sm:$0xff]
    %v10294 = vadd.f32 %v10287, %v10289
    %v10295 = vadd.f32 %v10294, %v10291
    %v10296 = vadd.f32 %v10295, %v10293
    %v10297 = vmul.f32 %v10296, 0.25
    %s10298 = scalar_lea.vmem [#allocation3], 360
    %v10299 = vld [vmem:[%s10298] ss:$2 sm:$0xff]
    %s10300 = scalar_lea.vmem [#allocation3], 361
    %v10301 = vld [vmem:[%s10300] ss:$2 sm:$0xff]
    %s10302 = scalar_lea.vmem [#allocation3], 378
    %v10303 = vld [vmem:[%s10302] ss:$2 sm:$0xff]
    %s10304 = scalar_lea.vmem [#allocation3], 379
    %v10305 = vld [vmem:[%s10304] ss:$2 sm:$0xff]
    %v10306 = vadd.f32 %v10299, %v10301
    %v10307 = vadd.f32 %v10306, %v10303
    %v10308 = vadd.f32 %v10307, %v10305
    %v10309 = vmul.f32 %v10308, 0.25
    %s10310 = scalar_lea.vmem [#allocation3], 396
    %v10311 = vld [vmem:[%s10310] ss:$2 sm:$0xff]
    %s10312 = scalar_lea.vmem [#allocation3], 397
    %v10313 = vld [vmem:[%s10312] ss:$2 sm:$0xff]
    %s10314 = scalar_lea.vmem [#allocation3], 414
    %v10315 = vld [vmem:[%s10314] ss:$2 sm:$0xff]
    %s10316 = scalar_lea.vmem [#allocation3], 415
    %v10317 = vld [vmem:[%s10316] ss:$2 sm:$0xff]
    %v10318 = vadd.f32 %v10311, %v10313
    %v10319 = vadd.f32 %v10318, %v10315
    %v10320 = vadd.f32 %v10319, %v10317
    %v10321 = vmul.f32 %v10320, 0.25
    %s10322 = scalar_lea.vmem [#allocation3], 432
    %v10323 = vld [vmem:[%s10322] ss:$2 sm:$0xff]
    %s10324 = scalar_lea.vmem [#allocation3], 433
    %v10325 = vld [vmem:[%s10324] ss:$2 sm:$0xff]
    %s10326 = scalar_lea.vmem [#allocation3], 450
    %v10327 = vld [vmem:[%s10326] ss:$2 sm:$0xff]
    %s10328 = scalar_lea.vmem [#allocation3], 451
    %v10329 = vld [vmem:[%s10328] ss:$2 sm:$0xff]
    %v10330 = vadd.f32 %v10323, %v10325
    %v10331 = vadd.f32 %v10330, %v10327
    %v10332 = vadd.f32 %v10331, %v10329
    %v10333 = vmul.f32 %v10332, 0.25
    %s10334 = scalar_lea.vmem [#allocation3], 468
    %v10335 = vld [vmem:[%s10334] ss:$2 sm:$0xff]
    %s10336 = scalar_lea.vmem [#allocation3], 469
    %v10337 = vld [vmem:[%s10336] ss:$2 sm:$0xff]
    %s10338 = scalar_lea.vmem [#allocation3], 486
    %v10339 = vld [vmem:[%s10338] ss:$2 sm:$0xff]
    %s10340 = scalar_lea.vmem [#allocation3], 487
    %v10341 = vld [vmem:[%s10340] ss:$2 sm:$0xff]
    %v10342 = vadd.f32 %v10335, %v10337
    %v10343 = vadd.f32 %v10342, %v10339
    %v10344 = vadd.f32 %v10343, %v10341
    %v10345 = vmul.f32 %v10344, 0.25
    %s10346 = scalar_lea.vmem [#allocation3], 504
    %v10347 = vld [vmem:[%s10346] ss:$2 sm:$0xff]
    %s10348 = scalar_lea.vmem [#allocation3], 505
    %v10349 = vld [vmem:[%s10348] ss:$2 sm:$0xff]
    %s10350 = scalar_lea.vmem [#allocation3], 522
    %v10351 = vld [vmem:[%s10350] ss:$2 sm:$0xff]
    %s10352 = scalar_lea.vmem [#allocation3], 523
    %v10353 = vld [vmem:[%s10352] ss:$2 sm:$0xff]
    %v10354 = vadd.f32 %v10347, %v10349
    %v10355 = vadd.f32 %v10354, %v10351
    %v10356 = vadd.f32 %v10355, %v10353
    %v10357 = vmul.f32 %v10356, 0.25
    %s10358 = scalar_lea.vmem [#allocation3], 540
    %v10359 = vld [vmem:[%s10358] ss:$2 sm:$0xff]
    %s10360 = scalar_lea.vmem [#allocation3], 541
    %v10361 = vld [vmem:[%s10360] ss:$2 sm:$0xff]
    %s10362 = scalar_lea.vmem [#allocation3], 558
    %v10363 = vld [vmem:[%s10362] ss:$2 sm:$0xff]
    %s10364 = scalar_lea.vmem [#allocation3], 559
    %v10365 = vld [vmem:[%s10364] ss:$2 sm:$0xff]
    %v10366 = vadd.f32 %v10359, %v10361
    %v10367 = vadd.f32 %v10366, %v10363
    %v10368 = vadd.f32 %v10367, %v10365
    %v10369 = vmul.f32 %v10368, 0.25
    %s10370 = scalar_lea.vmem [#allocation3], 576
    %v10371 = vld [vmem:[%s10370] ss:$2 sm:$0xff]
    %s10372 = scalar_lea.vmem [#allocation3], 577
    %v10373 = vld [vmem:[%s10372] ss:$2 sm:$0xff]
    %s10374 = scalar_lea.vmem [#allocation3], 594
    %v10375 = vld [vmem:[%s10374] ss:$2 sm:$0xff]
    %s10376 = scalar_lea.vmem [#allocation3], 595
    %v10377 = vld [vmem:[%s10376] ss:$2 sm:$0xff]
    %v10378 = vadd.f32 %v10371, %v10373
    %v10379 = vadd.f32 %v10378, %v10375
    %v10380 = vadd.f32 %v10379, %v10377
    %v10381 = vmul.f32 %v10380, 0.25
    %s10382 = scalar_lea.vmem [#allocation3], 612
    %v10383 = vld [vmem:[%s10382] ss:$2 sm:$0xff]
    %s10384 = scalar_lea.vmem [#allocation3], 613
    %v10385 = vld [vmem:[%s10384] ss:$2 sm:$0xff]
    %s10386 = scalar_lea.vmem [#allocation3], 630
    %v10387 = vld [vmem:[%s10386] ss:$2 sm:$0xff]
    %s10388 = scalar_lea.vmem [#allocation3], 631
    %v10389 = vld [vmem:[%s10388] ss:$2 sm:$0xff]
    %v10390 = vadd.f32 %v10383, %v10385
    %v10391 = vadd.f32 %v10390, %v10387
    %v10392 = vadd.f32 %v10391, %v10389
    %v10393 = vmul.f32 %v10392, 0.25
    %v10394 = vlaneseq
    %v10395 = vshrl.u32 %v10394, 7
    %v10396 = vlaneseq
    %v10397 = vand.u32 %v10396, 127
    %vm10398 = vcmp.eq.s32.totalorder %v10395, %v10397
    %v10399 = vsel %vm10398, 1, 0
    %v10400 = vcvt.s32.f32 %v10399
    %v10402 = vsel %vm1527, %v10400, 0
    %v10405 = vsel %vm1527, %v10213, 0
    %v10408 = vsel %vm1527, %v10225, 0
    %v10411 = vsel %vm1527, %v10237, 0
    %v10414 = vsel %vm1527, %v10249, 0
    %v10417 = vsel %vm1527, %v10261, 0
    %v10420 = vsel %vm1527, %v10273, 0
    %v10423 = vsel %vm1527, %v10285, 0
    %v10426 = vsel %vm1527, %v10297, 0
    %v10429 = vsel %vm1527, %v10309, 0
    %v10432 = vsel %vm1527, %v10321, 0
    %v10435 = vsel %vm1527, %v10333, 0
    %v10438 = vsel %vm1527, %v10345, 0
    %v10441 = vsel %vm1527, %v10357, 0
    %v10444 = vsel %vm1527, %v10369, 0
    %v10447 = vsel %vm1527, %v10381, 0
    %v10450 = vsel %vm1527, %v10393, 0
    %10452 = vmatprep.subr.mxu0 0.0
    %10453 = vmatpush1.xpose.msra.mxu0 %v10405
    %10454 = vmatprep.subr.mxu0 0.0
    %10455 = vmatpush1.xpose.msra.mxu0 %v10408
    %10456 = vmatprep.subr.mxu0 0.0
    %10457 = vmatpush1.xpose.msra.mxu0 %v10411
    %10458 = vmatprep.subr.mxu0 0.0
    %10459 = vmatpush1.xpose.msra.mxu0 %v10414
    %10460 = vmatprep.subr.mxu0 0.0
    %10461 = vmatpush1.xpose.msra.mxu0 %v10417
    %10462 = vmatprep.subr.mxu0 0.0
    %10463 = vmatpush1.xpose.msra.mxu0 %v10420
    %10464 = vmatprep.subr.mxu0 0.0
    %10465 = vmatpush1.xpose.msra.mxu0 %v10423
    %10466 = vmatprep.subr.mxu0 0.0
    %10467 = vmatpush1.xpose.msra.mxu0 %v10426
    %10468 = vmatprep.subr.mxu0 0.0
    %10469 = vmatpush1.xpose.msra.mxu0 %v10429
    %10470 = vmatprep.subr.mxu0 0.0
    %10471 = vmatpush1.xpose.msra.mxu0 %v10432
    %10472 = vmatprep.subr.mxu0 0.0
    %10473 = vmatpush1.xpose.msra.mxu0 %v10435
    %10474 = vmatprep.subr.mxu0 0.0
    %10475 = vmatpush1.xpose.msra.mxu0 %v10438
    %10476 = vmatprep.subr.mxu0 0.0
    %10477 = vmatpush1.xpose.msra.mxu0 %v10441
    %10478 = vmatprep.subr.mxu0 0.0
    %10479 = vmatpush1.xpose.msra.mxu0 %v10444
    %10480 = vmatprep.subr.mxu0 0.0
    %10481 = vmatpush1.xpose.msra.mxu0 %v10447
    %10482 = vmatprep.subr.mxu0 0.0
    %10483 = vmatpush1.xpose.msra.mxu0 %v10450
    %10484 = vmatprep.subr.mxu0 0.0
    %10485 = vmatpush1.xpose.msra.mxu0 0.0
    %10486 = vmatprep.subr.mxu0 0.0
    %10487 = vmatpush1.xpose.msra.mxu0 0.0
    %10488 = vmatprep.subr.mxu0 0.0
    %10489 = vmatpush1.xpose.msra.mxu0 0.0
    %10490 = vmatprep.subr.mxu0 0.0
    %10491 = vmatpush1.xpose.msra.mxu0 0.0
    %10492 = vmatprep.subr.mxu0 0.0
    %10493 = vmatpush1.xpose.msra.mxu0 0.0
    %10494 = vmatprep.subr.mxu0 0.0
    %10495 = vmatpush1.xpose.msra.mxu0 0.0
    %10496 = vmatprep.subr.mxu0 0.0
    %10497 = vmatpush1.xpose.msra.mxu0 0.0
    %10498 = vmatprep.subr.mxu0 0.0
    %10499 = vmatpush1.xpose.msra.mxu0 0.0
    %10500 = vmatprep.subr.mxu0 0.0
    %10501 = vmatpush1.xpose.msra.mxu0 0.0
    %10502 = vmatprep.subr.mxu0 0.0
    %10503 = vmatpush1.xpose.msra.mxu0 0.0
    %10504 = vmatprep.subr.mxu0 0.0
    %10505 = vmatpush1.xpose.msra.mxu0 0.0
    %10506 = vmatprep.subr.mxu0 0.0
    %10507 = vmatpush1.xpose.msra.mxu0 0.0
    %10508 = vmatprep.subr.mxu0 0.0
    %10509 = vmatpush1.xpose.msra.mxu0 0.0
    %10510 = vmatprep.subr.mxu0 0.0
    %10511 = vmatpush1.xpose.msra.mxu0 0.0
    %10512 = vmatprep.subr.mxu0 0.0
    %10513 = vmatpush1.xpose.msra.mxu0 0.0
    %10514 = vmatprep.subr.mxu0 0.0
    %10515 = vmatpush1.xpose.msra.mxu0 0.0
    %10516 = vmatprep.mubr.f32.mxu0 0.0
    %10517 = vmatmul.mubr.f32.gmra.mrb[0].mxu0 %v10402
    %v10518 = vpop.f32.mrb[0].mxu0
    %v10519 = vadd.f32 0.0, %v10518
    %v10520 = vpop.f32.mrb[0].mxu0
    %10521 = vdwg.mxu0
    %10522 = vst [vmem:[#allocation4] sm:$0xff] %v10519
    // Predicated region
    $region38: #{tpu_custom_call.1} parent=1 // pred_check
      _
    $region39: #{tpu_custom_call.1} parent=1 // pred_check_branch
      %10524 = sbr.rel (0) target = $region41
    $region40: #{tpu_custom_call.1} parent=1 // pred_region
      %s10526 = ssub.s32 128, 128
      %10527 = vsyncadd [#allocation5], %s10526
      %s10529 = sshll.u32 [#allocation4], 4
      %s10530 = int_to_ptr.vmem [resolvable:$true] %s10529
      %10532 = dma.vmem_to_hbm [thread:$0]  %s10530, 128, %s9, [#allocation5]
    $region41: #{tpu_custom_call.1} parent=1 // pred_fallthru
      _
    // Predicated region
    $region42: #{tpu_custom_call.1} parent=1 // pred_check
      _
    $region43: #{tpu_custom_call.1} parent=1 // pred_check_branch
      %10534 = sbr.rel (0) target = $region45
    $region44: #{tpu_custom_call.1} parent=1 // pred_region
      %10535 = dma.done [#allocation5], 128
    $region45: #{tpu_custom_call.1} parent=1 // pred_fallthru
      _
    %10536 = vsyncpa [#allocation5], 1

</llo_original>
